<compile_context>
chip_gen: v5e
topology: v5e:2x2
jax: 0.10.0
libtpu: 0.0.40
codegen_flags: <defaults>
</compile_context>

<pallas_src>
from functools import partial

import jax
import jax.numpy as jnp
from jax.experimental import pallas as pl
from jax.experimental.pallas import tpu as pltpu


def basic_block_kernel(x_ref, w1_ref, b1_ref, w2_ref, b2_ref, out_ref, xb_scr,
                       *, H, W, C):
    """One batch element per grid step.

    x_ref   : (1, Hp*Wp, C) f32   spatially padded, channel-padded input, flattened
    w1_ref  : (9, C, C)     bf16  conv1 weights (BN1 scale folded), flattened taps
    b1_ref  : (1, C)        f32   folded BN1 shift
    w2_ref  : (9, C, C)     bf16  conv2 weights (BN2 scale folded)
    b2_ref  : (1, C)        f32   folded BN2 shift
    out_ref : (1, H*Wp, C)  f32   extended output rows (junk halo cols sliced off by host)
    xb_scr  : (SCR, C)      bf16  flat staging: padded input, then padded intermediate
    """
    Wp = W + 2
    Hp = H + 2
    M = H * Wp          # extended output rows (keeps 2 junk columns per image row)
    Nflat = Hp * Wp

    # One-time f32 -> bf16 cast of the whole padded input (replaces per-tap casts).
    xb_scr[pl.ds(0, Nflat), :] = x_ref[0].astype(jnp.bfloat16)

    # Column-validity mask for extended rows: flat row o -> column u = o % Wp.
    col = jax.lax.broadcasted_iota(jnp.int32, (M, 1), 0) % Wp
    valid = col < W

    # ---- conv1 (3x3, pad=1, stride=1): 9 flat-offset MXU matmuls, f32 accumulation ----
    acc = jnp.zeros((M, C), jnp.float32)
    for dy in range(3):
        for dx in range(3):
            lhs = xb_scr[pl.ds(dy * Wp + dx, M), :]
            acc = acc + jnp.dot(lhs, w1_ref[dy * 3 + dx],
                                preferred_element_type=jnp.float32)

    # bn1 shift + relu; junk columns forced to 0 so the shifted store below also
    # writes the left/right halo zeros of the padded intermediate.
    h1 = jnp.where(valid, jnp.maximum(acc + b1_ref[0, :], 0.0), 0.0)

    # Overwrite the staging buffer in place with the padded intermediate interior.
    # Top/bottom halo rows keep the zero spatial padding already present from x.
    xb_scr[pl.ds(Wp + 1, M), :] = h1.astype(jnp.bfloat16)

    # ---- conv2 (3x3, pad=1, stride=1), residual + bn2 shift folded into the init ----
    acc2 = x_ref[0, pl.ds(Wp + 1, M), :] + b2_ref[0, :]   # exact f32 identity
    for dy in range(3):
        for dx in range(3):
            lhs = xb_scr[pl.ds(dy * Wp + dx, M), :]
            acc2 = acc2 + jnp.dot(lhs, w2_ref[dy * 3 + dx],
                                  preferred_element_type=jnp.float32)

    out_ref[0] = jnp.maximum(acc2, 0.0).astype(out_ref.dtype)


def basic_block_forward(x_nchw, params, eps=1e-5):
    """BasicBlock forward (eval-mode BN, stride=1, downsample=None => Cin == Cout)."""
    (w1, g1, be1, m1, v1, w2, g2, be2, m2, v2) = params

    # Fold BN (eval mode): scale into the conv weights, keep only the shift.
    s1 = g1 / jnp.sqrt(v1 + eps)
    b1 = be1 - m1 * s1
    s2 = g2 / jnp.sqrt(v2 + eps)
    b2 = be2 - m2 * s2

    # NCHW -> NHWC
    x = jnp.transpose(x_nchw, (0, 2, 3, 1))
    B, H, W, Cin = x.shape
    Cout = w1.shape[-1]
    assert Cin == Cout, "stride=1 BasicBlock without downsample requires Cin == Cout"

    # Channel pad to a lane-dense multiple of 128 (zero channels stay zero through
    # conv / BN-shift / relu / residual, sliced off afterwards).
    C = max(128, ((Cout + 127) // 128) * 128)
    Hp, Wp = H + 2, W + 2
    Nflat = Hp * Wp
    M = H * Wp
    SCR = ((Nflat + 2 + 15) // 16) * 16   # +2 rows of slack for tap over-read (junk cols only)

    # Spatial pad by 1 (conv3x3 "same") + channel pad, then flatten the spatial dims.
    xp = jnp.pad(x, ((0, 0), (1, 1), (1, 1), (0, C - Cin))).reshape(B, Nflat, C)

    # Fold BN scale into weights, pad, flatten taps, cast bf16.
    w1p = jnp.pad(w1 * s1, ((0, 0), (0, 0), (0, C - Cin), (0, C - Cout))
                  ).reshape(9, C, C).astype(jnp.bfloat16)
    w2p = jnp.pad(w2 * s2, ((0, 0), (0, 0), (0, C - Cout), (0, C - Cout))
                  ).reshape(9, C, C).astype(jnp.bfloat16)
    b1p = jnp.pad(b1, (0, C - Cout)).reshape(1, C).astype(jnp.float32)
    b2p = jnp.pad(b2, (0, C - Cout)).reshape(1, C).astype(jnp.float32)

    # VMEM budget derived from actual block / scratch sizes (keep well under v7x's
    # 64 MiB physical VMEM; v5e/v6e have 128 MiB so the cap never hurts there).
    x_block = Nflat * C * 4
    o_block = M * C * 4
    w_bytes = 9 * C * C * 2
    scr_bytes = SCR * C * 2
    tmp_bytes = 6 * M * C * 4          # acc / acc2 / h1 + operand relayout copies
    est = 2 * x_block + 2 * o_block + 2 * 2 * w_bytes + scr_bytes + tmp_bytes
    vmem_limit = int(min(max(est + (8 << 20), 32 << 20), 48 << 20))

    kernel = partial(basic_block_kernel, H=H, W=W, C=C)

    out_flat = pl.pallas_call(
        kernel,
        out_shape=jax.ShapeDtypeStruct((B, M, C), x.dtype),
        grid=(B,),
        in_specs=[
            pl.BlockSpec((1, Nflat, C), lambda b: (b, 0, 0)),
            pl.BlockSpec((9, C, C), lambda b: (0, 0, 0)),
            pl.BlockSpec((1, C), lambda b: (0, 0)),
            pl.BlockSpec((9, C, C), lambda b: (0, 0, 0)),
            pl.BlockSpec((1, C), lambda b: (0, 0)),
        ],
        out_specs=pl.BlockSpec((1, M, C), lambda b: (b, 0, 0)),
        scratch_shapes=[pltpu.VMEM((SCR, C), jnp.bfloat16)],
        compiler_params=pltpu.CompilerParams(
            dimension_semantics=("parallel",),   # batch elements are independent
            vmem_limit_bytes=vmem_limit,
        ),
    )(xp, w1p, b1p, w2p, b2p)

    # Drop junk halo columns + channel padding, NHWC -> NCHW.
    out = out_flat.reshape(B, H, Wp, C)[:, :, :W, :Cout]
    return jnp.transpose(out, (0, 3, 1, 2))


def basic_block_reference(x_nchw, params, eps=1e-5):
    """Pure-JAX reference (same eval-mode BN semantics, f32 throughout)."""
    (w1, g1, be1, m1, v1, w2, g2, be2, m2, v2) = params
    x = jnp.transpose(x_nchw, (0, 2, 3, 1))  # NHWC
    dn = ('NHWC', 'HWIO', 'NHWC')

    def bn(y, g, be, m, v):
        return (y - m) / jnp.sqrt(v + eps) * g + be

    out = jax.lax.conv_general_dilated(x, w1, (1, 1), 'SAME', dimension_numbers=dn)
    out = jnp.maximum(bn(out, g1, be1, m1, v1), 0.0)
    out = jax.lax.conv_general_dilated(out, w2, (1, 1), 'SAME', dimension_numbers=dn)
    out = bn(out, g2, be2, m2, v2)
    out = jnp.maximum(out + x, 0.0)
    return jnp.transpose(out, (0, 3, 1, 2))


if __name__ == "__main__":
    # Small shapes: batch=2, inplanes=planes=8, spatial 16x16, stride=1,
    # downsample=None (identity shortcut is the raw input).
    B, C, H, W = 2, 8, 16, 16

    key = jax.random.PRNGKey(0)
    k = jax.random.split(key, 12)

    x = jax.random.normal(k[0], (B, C, H, W), jnp.float32)

    # conv weights stored HWIO = (3, 3, Cin, Cout)
    w1 = 0.1 * jax.random.normal(k[1], (3, 3, C, C), jnp.float32)
    w2 = 0.1 * jax.random.normal(k[2], (3, 3, C, C), jnp.float32)

    # BatchNorm parameters / running stats (deterministic, nontrivial, distinct keys).
    gamma1 = 1.0 + 0.1 * jax.random.normal(k[3], (C,), jnp.float32)
    beta1 = 0.05 * jax.random.normal(k[4], (C,), jnp.float32)
    mean1 = 0.1 * jax.random.normal(k[5], (C,), jnp.float32)
    var1 = 1.0 + 0.1 * jax.random.uniform(k[6], (C,), jnp.float32)
    gamma2 = 1.0 + 0.1 * jax.random.normal(k[7], (C,), jnp.float32)
    beta2 = 0.05 * jax.random.normal(k[8], (C,), jnp.float32)
    mean2 = 0.1 * jax.random.normal(k[9], (C,), jnp.float32)
    var2 = 1.0 + 0.1 * jax.random.uniform(k[10], (C,), jnp.float32)

    params = (w1, gamma1, beta1, mean1, var1,
              w2, gamma2, beta2, mean2, var2)

    out = basic_block_forward(x, params)
    out = jax.block_until_ready(out)

    ref = jax.block_until_ready(basic_block_reference(x, params))
    assert out.shape == (B, C, H, W)
    # Tolerance relaxed vs a pure-f32 kernel because matmul inputs are bf16
    # (f32 accumulation); typical max error observed is <1e-2 at these shapes.
    assert jnp.allclose(out, ref, rtol=2e-2, atol=2e-2), (
        float(jnp.max(jnp.abs(out - ref))))

    print("KERNEL_OK")
</pallas_src>

<mosaic_0001>
module attributes {stable_mosaic.version = 11 : i64} {
  func.func @basic_block_kernel(%arg0: i32, %arg1: memref<1x324x128xf32, #tpu.memory_space<vmem>>, %arg2: memref<9x128x128xbf16, #tpu.memory_space<vmem>>, %arg3: memref<1x128xf32, #tpu.memory_space<vmem>>, %arg4: memref<9x128x128xbf16, #tpu.memory_space<vmem>>, %arg5: memref<1x128xf32, #tpu.memory_space<vmem>>, %arg6: memref<1x288x128xf32, #tpu.memory_space<vmem>>, %arg7: memref<336x128xbf16, #tpu.memory_space<vmem>>) attributes {dimension_semantics = [#tpu.dimension_semantics<parallel>], iteration_bounds = array<i64: 2>, scalar_prefetch = 0 : i64, scratch_operands = 1 : i64, tpu.core_type = #tpu.core_type<tc>, window_params = [{transform_indices = @transform_0, window_bounds = array<i64: 1, 324, 128>}, {pipeline_mode = #tpu.pipeline_mode<synchronous>, transform_indices = @transform_1, window_bounds = array<i64: 9, 128, 128>}, {pipeline_mode = #tpu.pipeline_mode<synchronous>, transform_indices = @transform_2, window_bounds = array<i64: 1, 128>}, {pipeline_mode = #tpu.pipeline_mode<synchronous>, transform_indices = @transform_3, window_bounds = array<i64: 9, 128, 128>}, {pipeline_mode = #tpu.pipeline_mode<synchronous>, transform_indices = @transform_4, window_bounds = array<i64: 1, 128>}, {transform_indices = @transform_5, window_bounds = array<i64: 1, 288, 128>}]} {
    %c0 = arith.constant 0 : index
    %c0_0 = arith.constant 0 : index
    %c0_1 = arith.constant 0 : index
    %0 = vector.load %arg1[%c0, %c0_0, %c0_1] : memref<1x324x128xf32, #tpu.memory_space<vmem>>, vector<1x324x128xf32>
    %1 = vector.shape_cast %0 : vector<1x324x128xf32> to vector<324x128xf32>
    %2 = arith.truncf %1 : vector<324x128xf32> to vector<324x128xbf16>
    %c0_2 = arith.constant 0 : index
    %c0_3 = arith.constant 0 : index
    %3 = vector.load %arg7[%c0_2, %c0_3] : memref<336x128xbf16, #tpu.memory_space<vmem>>, vector<324x128xbf16>
    tpu.vector_store %arg7[%c0_2, %c0_3], %2 {strides = array<i32>} : memref<336x128xbf16, #tpu.memory_space<vmem>>, vector<324x128xbf16>,
    %4 = tpu.iota {dimensions = array<i32: 0>} : vector<288x1xi32>
    %c18_i32 = arith.constant 18 : i32
    %c0_i32 = arith.constant 0 : i32
    %5 = arith.cmpi eq, %c18_i32, %c0_i32 : i32
    %c1_i32 = arith.constant 1 : i32
    %6 = arith.select %5, %c1_i32, %c18_i32 : i32
    %7 = vector.broadcast %6 : i32 to vector<288x1xi32>
    %8 = arith.remsi %4, %7 : vector<288x1xi32>
    %c0_i32_4 = arith.constant 0 : i32
    %9 = vector.broadcast %c0_i32_4 : i32 to vector<288x1xi32>
    %10 = arith.cmpi ne, %8, %9 : vector<288x1xi32>
    %c0_i32_5 = arith.constant 0 : i32
    %11 = vector.broadcast %c0_i32_5 : i32 to vector<288x1xi32>
    %12 = arith.cmpi slt, %8, %11 : vector<288x1xi32>
    %c0_i32_6 = arith.constant 0 : i32
    %13 = arith.cmpi slt, %6, %c0_i32_6 : i32
    %14 = vector.broadcast %13 : i1 to vector<288x1xi1>
    %15 = vector.broadcast %14 : vector<288x1xi1> to vector<288x1xi1>
    %16 = arith.xori %12, %15 : vector<288x1xi1>
    %17 = arith.andi %16, %10 : vector<288x1xi1>
    %18 = vector.broadcast %6 : i32 to vector<288x1xi32>
    %19 = arith.addi %8, %18 : vector<288x1xi32>
    %20 = arith.select %17, %19, %8 : vector<288x1xi1>, vector<288x1xi32>
    %c16_i32 = arith.constant 16 : i32
    %21 = vector.broadcast %c16_i32 : i32 to vector<288x1xi32>
    %22 = arith.cmpi slt, %20, %21 : vector<288x1xi32>
    %cst = arith.constant 0.000000e+00 : f32
    %23 = vector.broadcast %cst : f32 to vector<288x128xf32>
    %c0_7 = arith.constant 0 : index
    %c0_8 = arith.constant 0 : index
    %24 = vector.load %arg7[%c0_7, %c0_8] : memref<336x128xbf16, #tpu.memory_space<vmem>>, vector<288x128xbf16>
    %c0_9 = arith.constant 0 : index
    %c0_10 = arith.constant 0 : index
    %c0_11 = arith.constant 0 : index
    %25 = vector.load %arg2[%c0_9, %c0_10, %c0_11] : memref<9x128x128xbf16, #tpu.memory_space<vmem>>, vector<1x128x128xbf16>
    %26 = vector.shape_cast %25 : vector<1x128x128xbf16> to vector<128x128xbf16>
    %cst_12 = arith.constant dense<0.000000e+00> : vector<288x128xf32>
    %27 = tpu.matmul %24, %26, %cst_12 {dimension_numbers = #tpu.dot_dimension_numbers<[1], [0], [0], [1], [0, 0, 1, 1], [], []>} : vector<288x128xbf16>, vector<128x128xbf16>, vector<288x128xf32> -> vector<288x128xf32>
    %28 = arith.addf %23, %27 : vector<288x128xf32>
    %c1 = arith.constant 1 : index
    %c0_13 = arith.constant 0 : index
    %29 = vector.load %arg7[%c1, %c0_13] : memref<336x128xbf16, #tpu.memory_space<vmem>>, vector<288x128xbf16>
    %c1_14 = arith.constant 1 : index
    %c0_15 = arith.constant 0 : index
    %c0_16 = arith.constant 0 : index
    %30 = vector.load %arg2[%c1_14, %c0_15, %c0_16] : memref<9x128x128xbf16, #tpu.memory_space<vmem>>, vector<1x128x128xbf16>
    %31 = vector.shape_cast %30 : vector<1x128x128xbf16> to vector<128x128xbf16>
    %cst_17 = arith.constant dense<0.000000e+00> : vector<288x128xf32>
    %32 = tpu.matmul %29, %31, %cst_17 {dimension_numbers = #tpu.dot_dimension_numbers<[1], [0], [0], [1], [0, 0, 1, 1], [], []>} : vector<288x128xbf16>, vector<128x128xbf16>, vector<288x128xf32> -> vector<288x128xf32>
    %33 = arith.addf %28, %32 : vector<288x128xf32>
    %c2 = arith.constant 2 : index
    %c0_18 = arith.constant 0 : index
    %34 = vector.load %arg7[%c2, %c0_18] : memref<336x128xbf16, #tpu.memory_space<vmem>>, vector<288x128xbf16>
    %c2_19 = arith.constant 2 : index
    %c0_20 = arith.constant 0 : index
    %c0_21 = arith.constant 0 : index
    %35 = vector.load %arg2[%c2_19, %c0_20, %c0_21] : memref<9x128x128xbf16, #tpu.memory_space<vmem>>, vector<1x128x128xbf16>
    %36 = vector.shape_cast %35 : vector<1x128x128xbf16> to vector<128x128xbf16>
    %cst_22 = arith.constant dense<0.000000e+00> : vector<288x128xf32>
    %37 = tpu.matmul %34, %36, %cst_22 {dimension_numbers = #tpu.dot_dimension_numbers<[1], [0], [0], [1], [0, 0, 1, 1], [], []>} : vector<288x128xbf16>, vector<128x128xbf16>, vector<288x128xf32> -> vector<288x128xf32>
    %38 = arith.addf %33, %37 : vector<288x128xf32>
    %c18 = arith.constant 18 : index
    %c0_23 = arith.constant 0 : index
    %39 = vector.load %arg7[%c18, %c0_23] : memref<336x128xbf16, #tpu.memory_space<vmem>>, vector<288x128xbf16>
    %c3 = arith.constant 3 : index
    %c0_24 = arith.constant 0 : index
    %c0_25 = arith.constant 0 : index
    %40 = vector.load %arg2[%c3, %c0_24, %c0_25] : memref<9x128x128xbf16, #tpu.memory_space<vmem>>, vector<1x128x128xbf16>
    %41 = vector.shape_cast %40 : vector<1x128x128xbf16> to vector<128x128xbf16>
    %cst_26 = arith.constant dense<0.000000e+00> : vector<288x128xf32>
    %42 = tpu.matmul %39, %41, %cst_26 {dimension_numbers = #tpu.dot_dimension_numbers<[1], [0], [0], [1], [0, 0, 1, 1], [], []>} : vector<288x128xbf16>, vector<128x128xbf16>, vector<288x128xf32> -> vector<288x128xf32>
    %43 = arith.addf %38, %42 : vector<288x128xf32>
    %c19 = arith.constant 19 : index
    %c0_27 = arith.constant 0 : index
    %44 = vector.load %arg7[%c19, %c0_27] : memref<336x128xbf16, #tpu.memory_space<vmem>>, vector<288x128xbf16>
    %c4 = arith.constant 4 : index
    %c0_28 = arith.constant 0 : index
    %c0_29 = arith.constant 0 : index
    %45 = vector.load %arg2[%c4, %c0_28, %c0_29] : memref<9x128x128xbf16, #tpu.memory_space<vmem>>, vector<1x128x128xbf16>
    %46 = vector.shape_cast %45 : vector<1x128x128xbf16> to vector<128x128xbf16>
    %cst_30 = arith.constant dense<0.000000e+00> : vector<288x128xf32>
    %47 = tpu.matmul %44, %46, %cst_30 {dimension_numbers = #tpu.dot_dimension_numbers<[1], [0], [0], [1], [0, 0, 1, 1], [], []>} : vector<288x128xbf16>, vector<128x128xbf16>, vector<288x128xf32> -> vector<288x128xf32>
    %48 = arith.addf %43, %47 : vector<288x128xf32>
    %c20 = arith.constant 20 : index
    %c0_31 = arith.constant 0 : index
    %49 = vector.load %arg7[%c20, %c0_31] : memref<336x128xbf16, #tpu.memory_space<vmem>>, vector<288x128xbf16>
    %c5 = arith.constant 5 : index
    %c0_32 = arith.constant 0 : index
    %c0_33 = arith.constant 0 : index
    %50 = vector.load %arg2[%c5, %c0_32, %c0_33] : memref<9x128x128xbf16, #tpu.memory_space<vmem>>, vector<1x128x128xbf16>
    %51 = vector.shape_cast %50 : vector<1x128x128xbf16> to vector<128x128xbf16>
    %cst_34 = arith.constant dense<0.000000e+00> : vector<288x128xf32>
    %52 = tpu.matmul %49, %51, %cst_34 {dimension_numbers = #tpu.dot_dimension_numbers<[1], [0], [0], [1], [0, 0, 1, 1], [], []>} : vector<288x128xbf16>, vector<128x128xbf16>, vector<288x128xf32> -> vector<288x128xf32>
    %53 = arith.addf %48, %52 : vector<288x128xf32>
    %c36 = arith.constant 36 : index
    %c0_35 = arith.constant 0 : index
    %54 = vector.load %arg7[%c36, %c0_35] : memref<336x128xbf16, #tpu.memory_space<vmem>>, vector<288x128xbf16>
    %c6 = arith.constant 6 : index
    %c0_36 = arith.constant 0 : index
    %c0_37 = arith.constant 0 : index
    %55 = vector.load %arg2[%c6, %c0_36, %c0_37] : memref<9x128x128xbf16, #tpu.memory_space<vmem>>, vector<1x128x128xbf16>
    %56 = vector.shape_cast %55 : vector<1x128x128xbf16> to vector<128x128xbf16>
    %cst_38 = arith.constant dense<0.000000e+00> : vector<288x128xf32>
    %57 = tpu.matmul %54, %56, %cst_38 {dimension_numbers = #tpu.dot_dimension_numbers<[1], [0], [0], [1], [0, 0, 1, 1], [], []>} : vector<288x128xbf16>, vector<128x128xbf16>, vector<288x128xf32> -> vector<288x128xf32>
    %58 = arith.addf %53, %57 : vector<288x128xf32>
    %c37 = arith.constant 37 : index
    %c0_39 = arith.constant 0 : index
    %59 = vector.load %arg7[%c37, %c0_39] : memref<336x128xbf16, #tpu.memory_space<vmem>>, vector<288x128xbf16>
    %c7 = arith.constant 7 : index
    %c0_40 = arith.constant 0 : index
    %c0_41 = arith.constant 0 : index
    %60 = vector.load %arg2[%c7, %c0_40, %c0_41] : memref<9x128x128xbf16, #tpu.memory_space<vmem>>, vector<1x128x128xbf16>
    %61 = vector.shape_cast %60 : vector<1x128x128xbf16> to vector<128x128xbf16>
    %cst_42 = arith.constant dense<0.000000e+00> : vector<288x128xf32>
    %62 = tpu.matmul %59, %61, %cst_42 {dimension_numbers = #tpu.dot_dimension_numbers<[1], [0], [0], [1], [0, 0, 1, 1], [], []>} : vector<288x128xbf16>, vector<128x128xbf16>, vector<288x128xf32> -> vector<288x128xf32>
    %63 = arith.addf %58, %62 : vector<288x128xf32>
    %c38 = arith.constant 38 : index
    %c0_43 = arith.constant 0 : index
    %64 = vector.load %arg7[%c38, %c0_43] : memref<336x128xbf16, #tpu.memory_space<vmem>>, vector<288x128xbf16>
    %c8 = arith.constant 8 : index
    %c0_44 = arith.constant 0 : index
    %c0_45 = arith.constant 0 : index
    %65 = vector.load %arg2[%c8, %c0_44, %c0_45] : memref<9x128x128xbf16, #tpu.memory_space<vmem>>, vector<1x128x128xbf16>
    %66 = vector.shape_cast %65 : vector<1x128x128xbf16> to vector<128x128xbf16>
    %cst_46 = arith.constant dense<0.000000e+00> : vector<288x128xf32>
    %67 = tpu.matmul %64, %66, %cst_46 {dimension_numbers = #tpu.dot_dimension_numbers<[1], [0], [0], [1], [0, 0, 1, 1], [], []>} : vector<288x128xbf16>, vector<128x128xbf16>, vector<288x128xf32> -> vector<288x128xf32>
    %68 = arith.addf %63, %67 : vector<288x128xf32>
    %c0_47 = arith.constant 0 : index
    %c0_48 = arith.constant 0 : index
    %69 = vector.load %arg3[%c0_47, %c0_48] : memref<1x128xf32, #tpu.memory_space<vmem>>, vector<1x128xf32>
    %70 = vector.shape_cast %69 : vector<1x128xf32> to vector<128xf32>
    %71 = vector.shape_cast %70 : vector<128xf32> to vector<1x128xf32>
    %72 = vector.broadcast %71 : vector<1x128xf32> to vector<288x128xf32>
    %73 = arith.addf %68, %72 : vector<288x128xf32>
    %cst_49 = arith.constant 0.000000e+00 : f32
    %74 = vector.broadcast %cst_49 : f32 to vector<288x128xf32>
    %75 = arith.maximumf %73, %74 : vector<288x128xf32>
    %cst_50 = arith.constant 0.000000e+00 : f32
    %76 = vector.shape_cast %22 : vector<288x1xi1> to vector<288x1xi1>
    %77 = vector.broadcast %76 : vector<288x1xi1> to vector<288x128xi1>
    %78 = vector.broadcast %cst_50 : f32 to vector<288x128xf32>
    %79 = arith.select %77, %75, %78 : vector<288x128xi1>, vector<288x128xf32>
    %80 = arith.truncf %79 : vector<288x128xf32> to vector<288x128xbf16>
    %c19_51 = arith.constant 19 : index
    %c0_52 = arith.constant 0 : index
    %81 = vector.load %arg7[%c19_51, %c0_52] : memref<336x128xbf16, #tpu.memory_space<vmem>>, vector<288x128xbf16>
    tpu.vector_store %arg7[%c19_51, %c0_52], %80 {strides = array<i32>} : memref<336x128xbf16, #tpu.memory_space<vmem>>, vector<288x128xbf16>,
    %c0_53 = arith.constant 0 : index
    %c19_54 = arith.constant 19 : index
    %c0_55 = arith.constant 0 : index
    %82 = vector.load %arg1[%c0_53, %c19_54, %c0_55] : memref<1x324x128xf32, #tpu.memory_space<vmem>>, vector<1x288x128xf32>
    %83 = vector.shape_cast %82 : vector<1x288x128xf32> to vector<288x128xf32>
    %c0_56 = arith.constant 0 : index
    %c0_57 = arith.constant 0 : index
    %84 = vector.load %arg5[%c0_56, %c0_57] : memref<1x128xf32, #tpu.memory_space<vmem>>, vector<1x128xf32>
    %85 = vector.shape_cast %84 : vector<1x128xf32> to vector<128xf32>
    %86 = vector.shape_cast %85 : vector<128xf32> to vector<1x128xf32>
    %87 = vector.broadcast %86 : vector<1x128xf32> to vector<288x128xf32>
    %88 = arith.addf %83, %87 : vector<288x128xf32>
    %c0_58 = arith.constant 0 : index
    %c0_59 = arith.constant 0 : index
    %89 = vector.load %arg7[%c0_58, %c0_59] : memref<336x128xbf16, #tpu.memory_space<vmem>>, vector<288x128xbf16>
    %c0_60 = arith.constant 0 : index
    %c0_61 = arith.constant 0 : index
    %c0_62 = arith.constant 0 : index
    %90 = vector.load %arg4[%c0_60, %c0_61, %c0_62] : memref<9x128x128xbf16, #tpu.memory_space<vmem>>, vector<1x128x128xbf16>
    %91 = vector.shape_cast %90 : vector<1x128x128xbf16> to vector<128x128xbf16>
    %cst_63 = arith.constant dense<0.000000e+00> : vector<288x128xf32>
    %92 = tpu.matmul %89, %91, %cst_63 {dimension_numbers = #tpu.dot_dimension_numbers<[1], [0], [0], [1], [0, 0, 1, 1], [], []>} : vector<288x128xbf16>, vector<128x128xbf16>, vector<288x128xf32> -> vector<288x128xf32>
    %93 = arith.addf %88, %92 : vector<288x128xf32>
    %c1_64 = arith.constant 1 : index
    %c0_65 = arith.constant 0 : index
    %94 = vector.load %arg7[%c1_64, %c0_65] : memref<336x128xbf16, #tpu.memory_space<vmem>>, vector<288x128xbf16>
    %c1_66 = arith.constant 1 : index
    %c0_67 = arith.constant 0 : index
    %c0_68 = arith.constant 0 : index
    %95 = vector.load %arg4[%c1_66, %c0_67, %c0_68] : memref<9x128x128xbf16, #tpu.memory_space<vmem>>, vector<1x128x128xbf16>
    %96 = vector.shape_cast %95 : vector<1x128x128xbf16> to vector<128x128xbf16>
    %cst_69 = arith.constant dense<0.000000e+00> : vector<288x128xf32>
    %97 = tpu.matmul %94, %96, %cst_69 {dimension_numbers = #tpu.dot_dimension_numbers<[1], [0], [0], [1], [0, 0, 1, 1], [], []>} : vector<288x128xbf16>, vector<128x128xbf16>, vector<288x128xf32> -> vector<288x128xf32>
    %98 = arith.addf %93, %97 : vector<288x128xf32>
    %c2_70 = arith.constant 2 : index
    %c0_71 = arith.constant 0 : index
    %99 = vector.load %arg7[%c2_70, %c0_71] : memref<336x128xbf16, #tpu.memory_space<vmem>>, vector<288x128xbf16>
    %c2_72 = arith.constant 2 : index
    %c0_73 = arith.constant 0 : index
    %c0_74 = arith.constant 0 : index
    %100 = vector.load %arg4[%c2_72, %c0_73, %c0_74] : memref<9x128x128xbf16, #tpu.memory_space<vmem>>, vector<1x128x128xbf16>
    %101 = vector.shape_cast %100 : vector<1x128x128xbf16> to vector<128x128xbf16>
    %cst_75 = arith.constant dense<0.000000e+00> : vector<288x128xf32>
    %102 = tpu.matmul %99, %101, %cst_75 {dimension_numbers = #tpu.dot_dimension_numbers<[1], [0], [0], [1], [0, 0, 1, 1], [], []>} : vector<288x128xbf16>, vector<128x128xbf16>, vector<288x128xf32> -> vector<288x128xf32>
    %103 = arith.addf %98, %102 : vector<288x128xf32>
    %c18_76 = arith.constant 18 : index
    %c0_77 = arith.constant 0 : index
    %104 = vector.load %arg7[%c18_76, %c0_77] : memref<336x128xbf16, #tpu.memory_space<vmem>>, vector<288x128xbf16>
    %c3_78 = arith.constant 3 : index
    %c0_79 = arith.constant 0 : index
    %c0_80 = arith.constant 0 : index
    %105 = vector.load %arg4[%c3_78, %c0_79, %c0_80] : memref<9x128x128xbf16, #tpu.memory_space<vmem>>, vector<1x128x128xbf16>
    %106 = vector.shape_cast %105 : vector<1x128x128xbf16> to vector<128x128xbf16>
    %cst_81 = arith.constant dense<0.000000e+00> : vector<288x128xf32>
    %107 = tpu.matmul %104, %106, %cst_81 {dimension_numbers = #tpu.dot_dimension_numbers<[1], [0], [0], [1], [0, 0, 1, 1], [], []>} : vector<288x128xbf16>, vector<128x128xbf16>, vector<288x128xf32> -> vector<288x128xf32>
    %108 = arith.addf %103, %107 : vector<288x128xf32>
    %c19_82 = arith.constant 19 : index
    %c0_83 = arith.constant 0 : index
    %109 = vector.load %arg7[%c19_82, %c0_83] : memref<336x128xbf16, #tpu.memory_space<vmem>>, vector<288x128xbf16>
    %c4_84 = arith.constant 4 : index
    %c0_85 = arith.constant 0 : index
    %c0_86 = arith.constant 0 : index
    %110 = vector.load %arg4[%c4_84, %c0_85, %c0_86] : memref<9x128x128xbf16, #tpu.memory_space<vmem>>, vector<1x128x128xbf16>
    %111 = vector.shape_cast %110 : vector<1x128x128xbf16> to vector<128x128xbf16>
    %cst_87 = arith.constant dense<0.000000e+00> : vector<288x128xf32>
    %112 = tpu.matmul %109, %111, %cst_87 {dimension_numbers = #tpu.dot_dimension_numbers<[1], [0], [0], [1], [0, 0, 1, 1], [], []>} : vector<288x128xbf16>, vector<128x128xbf16>, vector<288x128xf32> -> vector<288x128xf32>
    %113 = arith.addf %108, %112 : vector<288x128xf32>
    %c20_88 = arith.constant 20 : index
    %c0_89 = arith.constant 0 : index
    %114 = vector.load %arg7[%c20_88, %c0_89] : memref<336x128xbf16, #tpu.memory_space<vmem>>, vector<288x128xbf16>
    %c5_90 = arith.constant 5 : index
    %c0_91 = arith.constant 0 : index
    %c0_92 = arith.constant 0 : index
    %115 = vector.load %arg4[%c5_90, %c0_91, %c0_92] : memref<9x128x128xbf16, #tpu.memory_space<vmem>>, vector<1x128x128xbf16>
    %116 = vector.shape_cast %115 : vector<1x128x128xbf16> to vector<128x128xbf16>
    %cst_93 = arith.constant dense<0.000000e+00> : vector<288x128xf32>
    %117 = tpu.matmul %114, %116, %cst_93 {dimension_numbers = #tpu.dot_dimension_numbers<[1], [0], [0], [1], [0, 0, 1, 1], [], []>} : vector<288x128xbf16>, vector<128x128xbf16>, vector<288x128xf32> -> vector<288x128xf32>
    %118 = arith.addf %113, %117 : vector<288x128xf32>
    %c36_94 = arith.constant 36 : index
    %c0_95 = arith.constant 0 : index
    %119 = vector.load %arg7[%c36_94, %c0_95] : memref<336x128xbf16, #tpu.memory_space<vmem>>, vector<288x128xbf16>
    %c6_96 = arith.constant 6 : index
    %c0_97 = arith.constant 0 : index
    %c0_98 = arith.constant 0 : index
    %120 = vector.load %arg4[%c6_96, %c0_97, %c0_98] : memref<9x128x128xbf16, #tpu.memory_space<vmem>>, vector<1x128x128xbf16>
    %121 = vector.shape_cast %120 : vector<1x128x128xbf16> to vector<128x128xbf16>
    %cst_99 = arith.constant dense<0.000000e+00> : vector<288x128xf32>
    %122 = tpu.matmul %119, %121, %cst_99 {dimension_numbers = #tpu.dot_dimension_numbers<[1], [0], [0], [1], [0, 0, 1, 1], [], []>} : vector<288x128xbf16>, vector<128x128xbf16>, vector<288x128xf32> -> vector<288x128xf32>
    %123 = arith.addf %118, %122 : vector<288x128xf32>
    %c37_100 = arith.constant 37 : index
    %c0_101 = arith.constant 0 : index
    %124 = vector.load %arg7[%c37_100, %c0_101] : memref<336x128xbf16, #tpu.memory_space<vmem>>, vector<288x128xbf16>
    %c7_102 = arith.constant 7 : index
    %c0_103 = arith.constant 0 : index
    %c0_104 = arith.constant 0 : index
    %125 = vector.load %arg4[%c7_102, %c0_103, %c0_104] : memref<9x128x128xbf16, #tpu.memory_space<vmem>>, vector<1x128x128xbf16>
    %126 = vector.shape_cast %125 : vector<1x128x128xbf16> to vector<128x128xbf16>
    %cst_105 = arith.constant dense<0.000000e+00> : vector<288x128xf32>
    %127 = tpu.matmul %124, %126, %cst_105 {dimension_numbers = #tpu.dot_dimension_numbers<[1], [0], [0], [1], [0, 0, 1, 1], [], []>} : vector<288x128xbf16>, vector<128x128xbf16>, vector<288x128xf32> -> vector<288x128xf32>
    %128 = arith.addf %123, %127 : vector<288x128xf32>
    %c38_106 = arith.constant 38 : index
    %c0_107 = arith.constant 0 : index
    %129 = vector.load %arg7[%c38_106, %c0_107] : memref<336x128xbf16, #tpu.memory_space<vmem>>, vector<288x128xbf16>
    %c8_108 = arith.constant 8 : index
    %c0_109 = arith.constant 0 : index
    %c0_110 = arith.constant 0 : index
    %130 = vector.load %arg4[%c8_108, %c0_109, %c0_110] : memref<9x128x128xbf16, #tpu.memory_space<vmem>>, vector<1x128x128xbf16>
    %131 = vector.shape_cast %130 : vector<1x128x128xbf16> to vector<128x128xbf16>
    %cst_111 = arith.constant dense<0.000000e+00> : vector<288x128xf32>
    %132 = tpu.matmul %129, %131, %cst_111 {dimension_numbers = #tpu.dot_dimension_numbers<[1], [0], [0], [1], [0, 0, 1, 1], [], []>} : vector<288x128xbf16>, vector<128x128xbf16>, vector<288x128xf32> -> vector<288x128xf32>
    %133 = arith.addf %128, %132 : vector<288x128xf32>
    %cst_112 = arith.constant 0.000000e+00 : f32
    %134 = vector.broadcast %cst_112 : f32 to vector<288x128xf32>
    %135 = arith.maximumf %133, %134 : vector<288x128xf32>
    %c0_113 = arith.constant 0 : index
    %c0_114 = arith.constant 0 : index
    %c0_115 = arith.constant 0 : index
    %136 = vector.load %arg6[%c0_113, %c0_114, %c0_115] : memref<1x288x128xf32, #tpu.memory_space<vmem>>, vector<1x288x128xf32>
    %137 = vector.shape_cast %136 : vector<1x288x128xf32> to vector<288x128xf32>
    %138 = vector.shape_cast %135 : vector<288x128xf32> to vector<1x288x128xf32>
    tpu.vector_store %arg6[%c0_113, %c0_114, %c0_115], %138 {strides = array<i32>} : memref<1x288x128xf32, #tpu.memory_space<vmem>>, vector<1x288x128xf32>,
    return
  }
  func.func @transform_0(%arg0: i32) -> (i32, i32, i32) {
    %c0_i32 = arith.constant 0 : i32
    %c0_i32_0 = arith.constant 0 : i32
    %c0_i32_1 = arith.constant 0 : i32
    return %arg0, %c0_i32, %c0_i32_0 : i32, i32, i32
  }
  func.func @transform_1(%arg0: i32) -> (i32, i32, i32) {
    %c0_i32 = arith.constant 0 : i32
    %c0_i32_0 = arith.constant 0 : i32
    %c0_i32_1 = arith.constant 0 : i32
    %c0_i32_2 = arith.constant 0 : i32
    return %c0_i32, %c0_i32_0, %c0_i32_1 : i32, i32, i32
  }
  func.func @transform_2(%arg0: i32) -> (i32, i32) {
    %c0_i32 = arith.constant 0 : i32
    %c0_i32_0 = arith.constant 0 : i32
    %c0_i32_1 = arith.constant 0 : i32
    return %c0_i32, %c0_i32_0 : i32, i32
  }
  func.func @transform_3(%arg0: i32) -> (i32, i32, i32) {
    %c0_i32 = arith.constant 0 : i32
    %c0_i32_0 = arith.constant 0 : i32
    %c0_i32_1 = arith.constant 0 : i32
    %c0_i32_2 = arith.constant 0 : i32
    return %c0_i32, %c0_i32_0, %c0_i32_1 : i32, i32, i32
  }
  func.func @transform_4(%arg0: i32) -> (i32, i32) {
    %c0_i32 = arith.constant 0 : i32
    %c0_i32_0 = arith.constant 0 : i32
    %c0_i32_1 = arith.constant 0 : i32
    return %c0_i32, %c0_i32_0 : i32, i32
  }
  func.func @transform_5(%arg0: i32) -> (i32, i32, i32) {
    %c0_i32 = arith.constant 0 : i32
    %c0_i32_0 = arith.constant 0 : i32
    %c0_i32_1 = arith.constant 0 : i32
    return %arg0, %c0_i32, %c0_i32_0 : i32, i32, i32
  }
}

</mosaic_0001>

<llo_original>
// kernel: tpu_custom_call.1
$region0: #{tpu_custom_call.1}
  #allocation0 [shape = 'u32[]', space=smem, size = 0x4, offset = 0x4, fixed_abs, tag = 'smem constant byte address 0x4 - core index']
  #allocation1 [shape = 'u32[72,128]{1,0:T(1,128)}', space=vmem, size = 0x9000, scoped, tag = 'internal scratch']
  #allocation2 [shape = 'bf16[336,128]{1,0:T(8,128)(2,1)}', space=vmem, size = 0x15000, scoped, tag = 'scratch operand']
  %s0 = inlined_call_operand.vmem [shape: f32[2,324,128], index: 0, kind: input, shape index: {}]
  %s1 = inlined_call_operand.vmem [shape: bf16[9,128,128], index: 1, kind: input, shape index: {}]
  %s2 = inlined_call_operand.vmem [shape: f32[1,128], index: 2, kind: input, shape index: {}]
  %s3 = inlined_call_operand.vmem [shape: bf16[9,128,128], index: 3, kind: input, shape index: {}]
  %s4 = inlined_call_operand.vmem [shape: f32[1,128], index: 4, kind: input, shape index: {}]
  %s5 = inlined_call_operand.hbm [shape: f32[2,288,128], index: 5, kind: output, shape index: {}]
  %s6 = sld [smem:[#allocation0]]
  $region53: #{tpu_custom_call.1} parent=0
    _
  %s8 = ssub.s32 1, %s6
  %s9 = scalar_select 0, %s8, %s6
  $region1: #{tpu_custom_call.1} parent=0
    #allocation3 [shape = 'u8[294912]{0}', space=vmem, size = 0x48000, scoped, tag = 'output window, operand 0']
    #allocation4 [shape = 's32[2]{0}', space=sflag, size = 0x8, scoped, tag = 'scoped memory for tpu_custom_call.1']
    %10 = vsyncpa [#allocation4], 0
    %s11 = scalar_lea.sflag [#allocation4], 1
    %12 = vsyncpa %s11, 0
    loop: start=0, step=1, limit=4
    $region2: #{tpu_custom_call.1} parent=1 // loop_pre_header
      _
    $region3: #{tpu_custom_call.1} parent=1 // loop_header
      %s14 = sphi 0, %s18
      %p15 = scmp.ge.s32.totalorder %s14, 4
      %s24 = sphi 0, %s26
      %s27 = sphi 0, %s24
      %s28 = sphi 0, %s27
      %s44 = sphi 0, %s28
      %s48 = sphi 0, %s48
      %s50 = sphi 0, %s48
      %s51 = sphi 0, %s50
      %s65 = sphi 0, %s51
      %s69 = sphi 0, %s69
      %s71 = sphi 0, %s69
      %s72 = sphi 0, %s71
      %s86 = sphi 0, %s72
      %s90 = sphi 0, %s90
      %s92 = sphi 0, %s90
      %s93 = sphi 0, %s92
      %s107 = sphi 0, %s93
      %s111 = sphi 0, %s111
      %s113 = sphi 0, %s111
      %s114 = sphi 0, %s113
      %s128 = sphi 0, %s114
      %s134 = sphi 0, %s136
      %s137 = sphi 0, %s134
      %s138 = sphi 0, %s137
      %s154 = sphi 0, %s138
    $region4: #{tpu_custom_call.1} parent=1 // loop_header_branch
      %17 = sbr.rel (%p15) target = $region8
    $region5: #{tpu_custom_call.1} parent=1 // loop_body
      %s19 = ssub.s32 %s14, 1
      %s20 = ssub.s32 %s14, 2
      %s21 = sadd.s32 %s14, 1
      %s22 = ssub.s32 %s14, %s21
      %p23 = scmp.eq.s32.totalorder %s22, 0
      %s25 = sadd.s32 %s24, 1
      %s26 = scalar_select %p23, %s24, %s25
      %p29 = pneg %p23
      %p30 = scmp.eq.s32.totalorder %s14, 1
      %p31 = por %p29, %p30
      %p32 = scmp.ne.s32.totalorder %s24, %s27
      %p33 = scmp.eq.s32.totalorder %s14, 0
      %p34 = por %p32, %p33
      %p35 = scmp.ne.s32.totalorder %s24, %s27
      %p36 = scmp.eq.s32.totalorder %s19, 1
      %p37 = por %p35, %p36
      %p38 = scmp.ne.s32.totalorder %s27, %s28
      %p39 = scmp.eq.s32.totalorder %s19, 0
      %p40 = por %p38, %p39
      %p41 = scmp.ne.s32.totalorder %s27, %s28
      %p42 = scmp.eq.s32.totalorder %s20, 1
      %p43 = por %p41, %p42
      %p45 = scmp.ne.s32.totalorder %s28, %s44
      %p46 = scmp.eq.s32.totalorder %s20, 0
      %p47 = por %p45, %p46
      %s49 = sadd.s32 %s48, 1
      %p52 = scmp.eq.s32.totalorder %s14, 1
      %p53 = scmp.ne.s32.totalorder %s48, %s50
      %p54 = scmp.eq.s32.totalorder %s14, 0
      %p55 = por %p53, %p54
      %p56 = scmp.ne.s32.totalorder %s48, %s50
      %p57 = scmp.eq.s32.totalorder %s19, 1
      %p58 = por %p56, %p57
      %p59 = scmp.ne.s32.totalorder %s50, %s51
      %p60 = scmp.eq.s32.totalorder %s19, 0
      %p61 = por %p59, %p60
      %p62 = scmp.ne.s32.totalorder %s50, %s51
      %p63 = scmp.eq.s32.totalorder %s20, 1
      %p64 = por %p62, %p63
      %p66 = scmp.ne.s32.totalorder %s51, %s65
      %p67 = scmp.eq.s32.totalorder %s20, 0
      %p68 = por %p66, %p67
      %s70 = sadd.s32 %s69, 1
      %p73 = scmp.eq.s32.totalorder %s14, 1
      %p74 = scmp.ne.s32.totalorder %s69, %s71
      %p75 = scmp.eq.s32.totalorder %s14, 0
      %p76 = por %p74, %p75
      %p77 = scmp.ne.s32.totalorder %s69, %s71
      %p78 = scmp.eq.s32.totalorder %s19, 1
      %p79 = por %p77, %p78
      %p80 = scmp.ne.s32.totalorder %s71, %s72
      %p81 = scmp.eq.s32.totalorder %s19, 0
      %p82 = por %p80, %p81
      %p83 = scmp.ne.s32.totalorder %s71, %s72
      %p84 = scmp.eq.s32.totalorder %s20, 1
      %p85 = por %p83, %p84
      %p87 = scmp.ne.s32.totalorder %s72, %s86
      %p88 = scmp.eq.s32.totalorder %s20, 0
      %p89 = por %p87, %p88
      %s91 = sadd.s32 %s90, 1
      %p94 = scmp.eq.s32.totalorder %s14, 1
      %p95 = scmp.ne.s32.totalorder %s90, %s92
      %p96 = scmp.eq.s32.totalorder %s14, 0
      %p97 = por %p95, %p96
      %p98 = scmp.ne.s32.totalorder %s90, %s92
      %p99 = scmp.eq.s32.totalorder %s19, 1
      %p100 = por %p98, %p99
      %p101 = scmp.ne.s32.totalorder %s92, %s93
      %p102 = scmp.eq.s32.totalorder %s19, 0
      %p103 = por %p101, %p102
      %p104 = scmp.ne.s32.totalorder %s92, %s93
      %p105 = scmp.eq.s32.totalorder %s20, 1
      %p106 = por %p104, %p105
      %p108 = scmp.ne.s32.totalorder %s93, %s107
      %p109 = scmp.eq.s32.totalorder %s20, 0
      %p110 = por %p108, %p109
      %s112 = sadd.s32 %s111, 1
      %p115 = scmp.eq.s32.totalorder %s14, 1
      %p116 = scmp.ne.s32.totalorder %s111, %s113
      %p117 = scmp.eq.s32.totalorder %s14, 0
      %p118 = por %p116, %p117
      %p119 = scmp.ne.s32.totalorder %s111, %s113
      %p120 = scmp.eq.s32.totalorder %s19, 1
      %p121 = por %p119, %p120
      %p122 = scmp.ne.s32.totalorder %s113, %s114
      %p123 = scmp.eq.s32.totalorder %s19, 0
      %p124 = por %p122, %p123
      %p125 = scmp.ne.s32.totalorder %s113, %s114
      %p126 = scmp.eq.s32.totalorder %s20, 1
      %p127 = por %p125, %p126
      %p129 = scmp.ne.s32.totalorder %s114, %s128
      %p130 = scmp.eq.s32.totalorder %s20, 0
      %p131 = por %p129, %p130
      %s132 = ssub.s32 %s14, %s21
      %p133 = scmp.eq.s32.totalorder %s132, 0
      %s135 = sadd.s32 %s134, 1
      %s136 = scalar_select %p133, %s134, %s135
      %p139 = pneg %p133
      %p140 = scmp.eq.s32.totalorder %s14, 1
      %p141 = por %p139, %p140
      %p142 = scmp.ne.s32.totalorder %s134, %s137
      %p143 = scmp.eq.s32.totalorder %s14, 0
      %p144 = por %p142, %p143
      %p145 = scmp.ne.s32.totalorder %s134, %s137
      %p146 = scmp.eq.s32.totalorder %s19, 1
      %p147 = por %p145, %p146
      %p148 = scmp.ne.s32.totalorder %s137, %s138
      %p149 = scmp.eq.s32.totalorder %s19, 0
      %p150 = por %p148, %p149
      %p151 = scmp.ne.s32.totalorder %s137, %s138
      %p152 = scmp.eq.s32.totalorder %s20, 1
      %p153 = por %p151, %p152
      %p155 = scmp.ne.s32.totalorder %s138, %s154
      %p156 = scmp.eq.s32.totalorder %s20, 0
      %p157 = por %p155, %p156
      %p158 = scmp.le.s32.totalorder 1, %s14
      %p159 = scmp.lt.s32.totalorder %s14, 3
      %p160 = pnand %p158, %p159
      %p161 = pneg %p160
      // Predicated region
      $region9: #{tpu_custom_call.1} parent=5 // pred_check
        _
      $region10: #{tpu_custom_call.1} parent=5 // pred_check_branch
        %163 = sbr.rel (%p160) target = $region12
      $region11: #{tpu_custom_call.1} parent=5 // pred_region
        %s164 = ssub.s32 %s14, 1
        // Predicated region
        $region13: #{tpu_custom_call.1} parent=11 // pred_check
          %p165 = pneg %p61
        $region14: #{tpu_custom_call.1} parent=11 // pred_check_branch
          %167 = sbr.rel (%p165) target = $region16
        $region15: #{tpu_custom_call.1} parent=11 // pred_region
          _
        $region16: #{tpu_custom_call.1} parent=11 // pred_fallthru
          _
        // Predicated region
        $region17: #{tpu_custom_call.1} parent=11 // pred_check
          %p168 = pneg %p82
        $region18: #{tpu_custom_call.1} parent=11 // pred_check_branch
          %170 = sbr.rel (%p168) target = $region20
        $region19: #{tpu_custom_call.1} parent=11 // pred_region
          _
        $region20: #{tpu_custom_call.1} parent=11 // pred_fallthru
          _
        // Predicated region
        $region21: #{tpu_custom_call.1} parent=11 // pred_check
          %p171 = pneg %p103
        $region22: #{tpu_custom_call.1} parent=11 // pred_check_branch
          %173 = sbr.rel (%p171) target = $region24
        $region23: #{tpu_custom_call.1} parent=11 // pred_region
          _
        $region24: #{tpu_custom_call.1} parent=11 // pred_fallthru
          _
        // Predicated region
        $region25: #{tpu_custom_call.1} parent=11 // pred_check
          %p174 = pneg %p124
        $region26: #{tpu_custom_call.1} parent=11 // pred_check_branch
          %176 = sbr.rel (%p174) target = $region28
        $region27: #{tpu_custom_call.1} parent=11 // pred_region
          _
        $region28: #{tpu_custom_call.1} parent=11 // pred_fallthru
          _
      $region12: #{tpu_custom_call.1} parent=5 // pred_fallthru
        _
      %p177 = scmp.lt.s32.totalorder %s14, 2
      // Predicated region
      $region29: #{tpu_custom_call.1} parent=5 // pred_check
        %p178 = pneg %p177
      $region30: #{tpu_custom_call.1} parent=5 // pred_check_branch
        %180 = sbr.rel (%p178) target = $region32
      $region31: #{tpu_custom_call.1} parent=5 // pred_region
        // Predicated region
        $region33: #{tpu_custom_call.1} parent=31 // pred_check
          %p181 = pneg %p34
        $region34: #{tpu_custom_call.1} parent=31 // pred_check_branch
          %183 = sbr.rel (%p181) target = $region36
        $region35: #{tpu_custom_call.1} parent=31 // pred_region
          %p184 = scmp.lt.s32.totalorder %s14, 1
          %s185 = scalar_select %p184, %s14, 1
          %s186 = smul.addr %s185, 41
          %s187 = smul.addr %s186, 8
          %s188 = scalar_lea.vmem %s0, %s187
        $region36: #{tpu_custom_call.1} parent=31 // pred_fallthru
          _
      $region32: #{tpu_custom_call.1} parent=5 // pred_fallthru
        _
      %p189 = scmp.le.s32.totalorder 1, %s14
      %p190 = scmp.lt.s32.totalorder %s14, 3
      %p191 = pnand %p189, %p190
      %p192 = pneg %p191
      // Predicated region
      $region37: #{tpu_custom_call.1} parent=5 // pred_check
        _
      $region38: #{tpu_custom_call.1} parent=5 // pred_check_branch
        %194 = sbr.rel (%p191) target = $region40
      $region39: #{tpu_custom_call.1} parent=5 // pred_region
        %s195 = ssub.s32 %s14, 1
        %p196 = scmp.lt.s32.totalorder %s19, 1
        %s197 = scalar_select %p196, %s19, 1
        %s198 = smul.addr %s197, 41
        %s199 = smul.addr %s198, 8
        %s200 = scalar_lea.vmem %s0, %s199
        %p201 = pneg %p40
        %p202 = pneg %p37
        %p203 = pneg %p61
        %p204 = pneg %p58
        %p205 = pneg %p82
        %p206 = pneg %p79
        %p207 = pneg %p103
        %p208 = pneg %p100
        %p209 = pneg %p124
        %p210 = pneg %p121
        %p211 = pneg %p150
        %p212 = pneg %p147
        %s213 = sand.u32 %s137, 1
        %s214 = scalar_lea.sflag [#allocation4], %s213
        %s215 = sand.u32 %s137, 1
        %s216 = smul.addr %s215, 288
        %s217 = scalar_lea.vmem [#allocation3], %s216
        %p218 = scmp.lt.s32.totalorder %s19, 1
        %s219 = scalar_select %p218, %s19, 1
        %s220 = smul.addr %s219, 41
        %s221 = smul.addr %s220, 8
        %s222 = scalar_lea.vmem %s0, %s221
        %v223 = vld [vmem:[%s222] sm:$0xff]
        %v224 = vld [vmem:[%s222 + $0x8] sm:$0xff]
        %v225 = vld [vmem:[%s222 + $0x10] sm:$0xff]
        %v226 = vld [vmem:[%s222 + $0x18] sm:$0xff]
        %v227 = vld [vmem:[%s222 + $0x20] sm:$0xff]
        %v228 = vld [vmem:[%s222 + $0x28] sm:$0xff]
        %v229 = vld [vmem:[%s222 + $0x30] sm:$0xff]
        %v230 = vld [vmem:[%s222 + $0x38] sm:$0xff]
        %v231 = vld [vmem:[%s222 + $0x40] sm:$0xff]
        %v232 = vld [vmem:[%s222 + $0x48] sm:$0xff]
        %v233 = vld [vmem:[%s222 + $0x50] sm:$0xff]
        %v234 = vld [vmem:[%s222 + $0x58] sm:$0xff]
        %v235 = vld [vmem:[%s222 + $0x60] sm:$0xff]
        %v236 = vld [vmem:[%s222 + $0x68] sm:$0xff]
        %v237 = vld [vmem:[%s222 + $0x70] sm:$0xff]
        %v238 = vld [vmem:[%s222 + $0x78] sm:$0xff]
        %v239 = vld [vmem:[%s222 + $0x80] sm:$0xff]
        %v240 = vld [vmem:[%s222 + $0x88] sm:$0xff]
        %v241 = vld [vmem:[%s222 + $0x90] sm:$0xff]
        %v242 = vld [vmem:[%s222 + $0x98] sm:$0xff]
        %v243 = vld [vmem:[%s222 + $0xa0] sm:$0xff]
        %v244 = vld [vmem:[%s222 + $0xa8] sm:$0xff]
        %v245 = vld [vmem:[%s222 + $0xb0] sm:$0xff]
        %v246 = vld [vmem:[%s222 + $0xb8] sm:$0xff]
        %v247 = vld [vmem:[%s222 + $0xc0] sm:$0xff]
        %v248 = vld [vmem:[%s222 + $0xc8] sm:$0xff]
        %v249 = vld [vmem:[%s222 + $0xd0] sm:$0xff]
        %v250 = vld [vmem:[%s222 + $0xd8] sm:$0xff]
        %v251 = vld [vmem:[%s222 + $0xe0] sm:$0xff]
        %v252 = vld [vmem:[%s222 + $0xe8] sm:$0xff]
        %v253 = vld [vmem:[%s222 + $0xf0] sm:$0xff]
        %v254 = vld [vmem:[%s222 + $0xf8] sm:$0xff]
        %v255 = vld [vmem:[%s222 + $0x100] sm:$0xff]
        %v256 = vld [vmem:[%s222 + $0x108] sm:$0xff]
        %v257 = vld [vmem:[%s222 + $0x110] sm:$0xff]
        %v258 = vld [vmem:[%s222 + $0x118] sm:$0xff]
        %v259 = vld [vmem:[%s222 + $0x120] sm:$0xff]
        %v260 = vld [vmem:[%s222 + $0x128] sm:$0xff]
        %v261 = vld [vmem:[%s222 + $0x130] sm:$0xff]
        %v262 = vld [vmem:[%s222 + $0x138] sm:$0xff]
        %v263 = vld [vmem:[%s222 + $0x140] sm:$0xf]
        %v264 = vpack.c.bf16 %v223, %v223
        %v265 = vpack.c.bf16 %v224, %v224
        %v266 = vpack.c.bf16 %v225, %v225
        %v267 = vpack.c.bf16 %v226, %v226
        %v268 = vpack.c.bf16 %v227, %v227
        %v269 = vpack.c.bf16 %v228, %v228
        %v270 = vpack.c.bf16 %v229, %v229
        %v271 = vpack.c.bf16 %v230, %v230
        %v272 = vpack.c.bf16 %v231, %v231
        %v273 = vpack.c.bf16 %v232, %v232
        %v274 = vpack.c.bf16 %v233, %v233
        %v275 = vpack.c.bf16 %v234, %v234
        %v276 = vpack.c.bf16 %v235, %v235
        %v277 = vpack.c.bf16 %v236, %v236
        %v278 = vpack.c.bf16 %v237, %v237
        %v279 = vpack.c.bf16 %v238, %v238
        %v280 = vpack.c.bf16 %v239, %v239
        %v281 = vpack.c.bf16 %v240, %v240
        %v282 = vpack.c.bf16 %v241, %v241
        %v283 = vpack.c.bf16 %v242, %v242
        %v284 = vpack.c.bf16 %v243, %v243
        %v285 = vpack.c.bf16 %v244, %v244
        %v286 = vpack.c.bf16 %v245, %v245
        %v287 = vpack.c.bf16 %v246, %v246
        %v288 = vpack.c.bf16 %v247, %v247
        %v289 = vpack.c.bf16 %v248, %v248
        %v290 = vpack.c.bf16 %v249, %v249
        %v291 = vpack.c.bf16 %v250, %v250
        %v292 = vpack.c.bf16 %v251, %v251
        %v293 = vpack.c.bf16 %v252, %v252
        %v294 = vpack.c.bf16 %v253, %v253
        %v295 = vpack.c.bf16 %v254, %v254
        %v296 = vpack.c.bf16 %v255, %v255
        %v297 = vpack.c.bf16 %v256, %v256
        %v298 = vpack.c.bf16 %v257, %v257
        %v299 = vpack.c.bf16 %v258, %v258
        %v300 = vpack.c.bf16 %v259, %v259
        %v301 = vpack.c.bf16 %v260, %v260
        %v302 = vpack.c.bf16 %v261, %v261
        %v303 = vpack.c.bf16 %v262, %v262
        %v304 = vpack.c.bf16 %v263, %v263
        %305 = vst [vmem:[#allocation2] sm:$0xf] %v264
        %306 = vst [vmem:[#allocation2 + $0x4] sm:$0xf] %v265
        %307 = vst [vmem:[#allocation2 + $0x8] sm:$0xf] %v266
        %308 = vst [vmem:[#allocation2 + $0xc] sm:$0xf] %v267
        %309 = vst [vmem:[#allocation2 + $0x10] sm:$0xf] %v268
        %310 = vst [vmem:[#allocation2 + $0x14] sm:$0xf] %v269
        %311 = vst [vmem:[#allocation2 + $0x18] sm:$0xf] %v270
        %312 = vst [vmem:[#allocation2 + $0x1c] sm:$0xf] %v271
        %313 = vst [vmem:[#allocation2 + $0x20] sm:$0xf] %v272
        %314 = vst [vmem:[#allocation2 + $0x24] sm:$0xf] %v273
        %315 = vst [vmem:[#allocation2 + $0x28] sm:$0xf] %v274
        %316 = vst [vmem:[#allocation2 + $0x2c] sm:$0xf] %v275
        %317 = vst [vmem:[#allocation2 + $0x30] sm:$0xf] %v276
        %318 = vst [vmem:[#allocation2 + $0x34] sm:$0xf] %v277
        %319 = vst [vmem:[#allocation2 + $0x38] sm:$0xf] %v278
        %320 = vst [vmem:[#allocation2 + $0x3c] sm:$0xf] %v279
        %321 = vst [vmem:[#allocation2 + $0x40] sm:$0xf] %v280
        %322 = vst [vmem:[#allocation2 + $0x44] sm:$0xf] %v281
        %323 = vst [vmem:[#allocation2 + $0x48] sm:$0xf] %v282
        %324 = vst [vmem:[#allocation2 + $0x4c] sm:$0xf] %v283
        %325 = vst [vmem:[#allocation2 + $0x50] sm:$0xf] %v284
        %326 = vst [vmem:[#allocation2 + $0x54] sm:$0xf] %v285
        %327 = vst [vmem:[#allocation2 + $0x58] sm:$0xf] %v286
        %328 = vst [vmem:[#allocation2 + $0x5c] sm:$0xf] %v287
        %329 = vst [vmem:[#allocation2 + $0x60] sm:$0xf] %v288
        %330 = vst [vmem:[#allocation2 + $0x64] sm:$0xf] %v289
        %331 = vst [vmem:[#allocation2 + $0x68] sm:$0xf] %v290
        %332 = vst [vmem:[#allocation2 + $0x6c] sm:$0xf] %v291
        %333 = vst [vmem:[#allocation2 + $0x70] sm:$0xf] %v292
        %334 = vst [vmem:[#allocation2 + $0x74] sm:$0xf] %v293
        %335 = vst [vmem:[#allocation2 + $0x78] sm:$0xf] %v294
        %336 = vst [vmem:[#allocation2 + $0x7c] sm:$0xf] %v295
        %337 = vst [vmem:[#allocation2 + $0x80] sm:$0xf] %v296
        %338 = vst [vmem:[#allocation2 + $0x84] sm:$0xf] %v297
        %339 = vst [vmem:[#allocation2 + $0x88] sm:$0xf] %v298
        %340 = vst [vmem:[#allocation2 + $0x8c] sm:$0xf] %v299
        %341 = vst [vmem:[#allocation2 + $0x90] sm:$0xf] %v300
        %342 = vst [vmem:[#allocation2 + $0x94] sm:$0xf] %v301
        %343 = vst [vmem:[#allocation2 + $0x98] sm:$0xf] %v302
        %344 = vst [vmem:[#allocation2 + $0x9c] sm:$0xf] %v303
        %345 = vst [vmem:[#allocation2 + $0xa0] sm:$0x3] %v304
        %v346 = vlaneseq
        %v347 = vshrl.u32 %v346, 7
        %v348 = vadd.s32 %v347, 8
        %v349 = vadd.s32 %v347, 16
        %v350 = vadd.s32 %v347, 24
        %v351 = vadd.s32 %v347, 32
        %v352 = vadd.s32 %v347, 40
        %v353 = vadd.s32 %v347, 48
        %v354 = vadd.s32 %v347, 56
        %v355 = vadd.s32 %v347, 64
        %v356 = vadd.s32 %v347, 72
        %v357 = vadd.s32 %v347, 80
        %v358 = vadd.s32 %v347, 88
        %v359 = vadd.s32 %v347, 96
        %v360 = vadd.s32 %v347, 104
        %v361 = vadd.s32 %v347, 112
        %v362 = vadd.s32 %v347, 120
        %v363 = vadd.s32 %v347, 128
        %v364 = vadd.s32 %v347, 136
        %v365 = vadd.s32 %v347, 144
        %v366 = vadd.s32 %v347, 152
        %v367 = vadd.s32 %v347, 160
        %v368 = vadd.s32 %v347, 168
        %v369 = vadd.s32 %v347, 176
        %v370 = vadd.s32 %v347, 184
        %v371 = vadd.s32 %v347, 192
        %v372 = vadd.s32 %v347, 200
        %v373 = vadd.s32 %v347, 208
        %v374 = vadd.s32 %v347, 216
        %v375 = vadd.s32 %v347, 224
        %v376 = vadd.s32 %v347, 232
        %v377 = vadd.s32 %v347, 240
        %v378 = vadd.s32 %v347, 248
        %v379 = vadd.s32 %v347, 256
        %v380 = vadd.s32 %v347, 264
        %v381 = vadd.s32 %v347, 272
        %v382 = vadd.s32 %v347, 280
        %vm383 = vcmp.lt.s32.totalorder %v347, 0
        %v384 = vsub.s32 0, %v347
        %v385 = vsel %vm383, %v384, %v347
        %v386 = vand.u32 %v385, 65535
        %v387 = vshrl.u32 %v385, 16
        %v389 = vmul.u32 %v386, 14564
        %v390 = vmul.u32 %v386, 58254
        %v391 = vmul.u32 %v387, 14564
        %v392 = vmul.u32 %v387, 58254
        %v393 = vshll.u32 %v390, 16
        %v394 = vshrl.u32 %v390, 16
        %v395 = vshll.u32 %v391, 16
        %v396 = vshrl.u32 %v391, 16
        %vm397 = vc.u32 %v389, %v393
        %v398 = vsel %vm397, 1, 0
        %v399 = vadd.s32 %v389, %v393
        %v400 = vadd.s32 %v392, %v398
        %vm401 = vc.u32 %v399, %v395
        %v402 = vsel %vm401, 1, 0
        %v403 = vadd.s32 %v399, %v395
        %v404 = vadd.s32 %v400, %v402
        %v405 = vadd.s32 %v404, %v394
        %v406 = vadd.s32 %v405, %v396
        %v407 = vshrl.u32 %v406, 4
        %v408 = vmul.u32 %v407, 18
        %v409 = vsub.s32 %v385, %v408
        %v410 = vsub.s32 0, %v409
        %v411 = vsel %vm383, %v410, %v409
        %vm412 = vcmp.lt.s32.totalorder %v348, 0
        %v413 = vsub.s32 0, %v348
        %v414 = vsel %vm412, %v413, %v348
        %v415 = vand.u32 %v414, 65535
        %v416 = vshrl.u32 %v414, 16
        %v418 = vmul.u32 %v415, 14564
        %v419 = vmul.u32 %v415, 58254
        %v420 = vmul.u32 %v416, 14564
        %v421 = vmul.u32 %v416, 58254
        %v422 = vshll.u32 %v419, 16
        %v423 = vshrl.u32 %v419, 16
        %v424 = vshll.u32 %v420, 16
        %v425 = vshrl.u32 %v420, 16
        %vm426 = vc.u32 %v418, %v422
        %v427 = vsel %vm426, 1, 0
        %v428 = vadd.s32 %v418, %v422
        %v429 = vadd.s32 %v421, %v427
        %vm430 = vc.u32 %v428, %v424
        %v431 = vsel %vm430, 1, 0
        %v432 = vadd.s32 %v428, %v424
        %v433 = vadd.s32 %v429, %v431
        %v434 = vadd.s32 %v433, %v423
        %v435 = vadd.s32 %v434, %v425
        %v436 = vshrl.u32 %v435, 4
        %v437 = vmul.u32 %v436, 18
        %v438 = vsub.s32 %v414, %v437
        %v439 = vsub.s32 0, %v438
        %v440 = vsel %vm412, %v439, %v438
        %vm441 = vcmp.lt.s32.totalorder %v349, 0
        %v442 = vsub.s32 0, %v349
        %v443 = vsel %vm441, %v442, %v349
        %v444 = vand.u32 %v443, 65535
        %v445 = vshrl.u32 %v443, 16
        %v447 = vmul.u32 %v444, 14564
        %v448 = vmul.u32 %v444, 58254
        %v449 = vmul.u32 %v445, 14564
        %v450 = vmul.u32 %v445, 58254
        %v451 = vshll.u32 %v448, 16
        %v452 = vshrl.u32 %v448, 16
        %v453 = vshll.u32 %v449, 16
        %v454 = vshrl.u32 %v449, 16
        %vm455 = vc.u32 %v447, %v451
        %v456 = vsel %vm455, 1, 0
        %v457 = vadd.s32 %v447, %v451
        %v458 = vadd.s32 %v450, %v456
        %vm459 = vc.u32 %v457, %v453
        %v460 = vsel %vm459, 1, 0
        %v461 = vadd.s32 %v457, %v453
        %v462 = vadd.s32 %v458, %v460
        %v463 = vadd.s32 %v462, %v452
        %v464 = vadd.s32 %v463, %v454
        %v465 = vshrl.u32 %v464, 4
        %v466 = vmul.u32 %v465, 18
        %v467 = vsub.s32 %v443, %v466
        %v468 = vsub.s32 0, %v467
        %v469 = vsel %vm441, %v468, %v467
        %vm470 = vcmp.lt.s32.totalorder %v350, 0
        %v471 = vsub.s32 0, %v350
        %v472 = vsel %vm470, %v471, %v350
        %v473 = vand.u32 %v472, 65535
        %v474 = vshrl.u32 %v472, 16
        %v476 = vmul.u32 %v473, 14564
        %v477 = vmul.u32 %v473, 58254
        %v478 = vmul.u32 %v474, 14564
        %v479 = vmul.u32 %v474, 58254
        %v480 = vshll.u32 %v477, 16
        %v481 = vshrl.u32 %v477, 16
        %v482 = vshll.u32 %v478, 16
        %v483 = vshrl.u32 %v478, 16
        %vm484 = vc.u32 %v476, %v480
        %v485 = vsel %vm484, 1, 0
        %v486 = vadd.s32 %v476, %v480
        %v487 = vadd.s32 %v479, %v485
        %vm488 = vc.u32 %v486, %v482
        %v489 = vsel %vm488, 1, 0
        %v490 = vadd.s32 %v486, %v482
        %v491 = vadd.s32 %v487, %v489
        %v492 = vadd.s32 %v491, %v481
        %v493 = vadd.s32 %v492, %v483
        %v494 = vshrl.u32 %v493, 4
        %v495 = vmul.u32 %v494, 18
        %v496 = vsub.s32 %v472, %v495
        %v497 = vsub.s32 0, %v496
        %v498 = vsel %vm470, %v497, %v496
        %vm499 = vcmp.lt.s32.totalorder %v351, 0
        %v500 = vsub.s32 0, %v351
        %v501 = vsel %vm499, %v500, %v351
        %v502 = vand.u32 %v501, 65535
        %v503 = vshrl.u32 %v501, 16
        %v505 = vmul.u32 %v502, 14564
        %v506 = vmul.u32 %v502, 58254
        %v507 = vmul.u32 %v503, 14564
        %v508 = vmul.u32 %v503, 58254
        %v509 = vshll.u32 %v506, 16
        %v510 = vshrl.u32 %v506, 16
        %v511 = vshll.u32 %v507, 16
        %v512 = vshrl.u32 %v507, 16
        %vm513 = vc.u32 %v505, %v509
        %v514 = vsel %vm513, 1, 0
        %v515 = vadd.s32 %v505, %v509
        %v516 = vadd.s32 %v508, %v514
        %vm517 = vc.u32 %v515, %v511
        %v518 = vsel %vm517, 1, 0
        %v519 = vadd.s32 %v515, %v511
        %v520 = vadd.s32 %v516, %v518
        %v521 = vadd.s32 %v520, %v510
        %v522 = vadd.s32 %v521, %v512
        %v523 = vshrl.u32 %v522, 4
        %v524 = vmul.u32 %v523, 18
        %v525 = vsub.s32 %v501, %v524
        %v526 = vsub.s32 0, %v525
        %v527 = vsel %vm499, %v526, %v525
        %vm528 = vcmp.lt.s32.totalorder %v352, 0
        %v529 = vsub.s32 0, %v352
        %v530 = vsel %vm528, %v529, %v352
        %v531 = vand.u32 %v530, 65535
        %v532 = vshrl.u32 %v530, 16
        %v534 = vmul.u32 %v531, 14564
        %v535 = vmul.u32 %v531, 58254
        %v536 = vmul.u32 %v532, 14564
        %v537 = vmul.u32 %v532, 58254
        %v538 = vshll.u32 %v535, 16
        %v539 = vshrl.u32 %v535, 16
        %v540 = vshll.u32 %v536, 16
        %v541 = vshrl.u32 %v536, 16
        %vm542 = vc.u32 %v534, %v538
        %v543 = vsel %vm542, 1, 0
        %v544 = vadd.s32 %v534, %v538
        %v545 = vadd.s32 %v537, %v543
        %vm546 = vc.u32 %v544, %v540
        %v547 = vsel %vm546, 1, 0
        %v548 = vadd.s32 %v544, %v540
        %v549 = vadd.s32 %v545, %v547
        %v550 = vadd.s32 %v549, %v539
        %v551 = vadd.s32 %v550, %v541
        %v552 = vshrl.u32 %v551, 4
        %v553 = vmul.u32 %v552, 18
        %v554 = vsub.s32 %v530, %v553
        %v555 = vsub.s32 0, %v554
        %v556 = vsel %vm528, %v555, %v554
        %vm557 = vcmp.lt.s32.totalorder %v353, 0
        %v558 = vsub.s32 0, %v353
        %v559 = vsel %vm557, %v558, %v353
        %v560 = vand.u32 %v559, 65535
        %v561 = vshrl.u32 %v559, 16
        %v563 = vmul.u32 %v560, 14564
        %v564 = vmul.u32 %v560, 58254
        %v565 = vmul.u32 %v561, 14564
        %v566 = vmul.u32 %v561, 58254
        %v567 = vshll.u32 %v564, 16
        %v568 = vshrl.u32 %v564, 16
        %v569 = vshll.u32 %v565, 16
        %v570 = vshrl.u32 %v565, 16
        %vm571 = vc.u32 %v563, %v567
        %v572 = vsel %vm571, 1, 0
        %v573 = vadd.s32 %v563, %v567
        %v574 = vadd.s32 %v566, %v572
        %vm575 = vc.u32 %v573, %v569
        %v576 = vsel %vm575, 1, 0
        %v577 = vadd.s32 %v573, %v569
        %v578 = vadd.s32 %v574, %v576
        %v579 = vadd.s32 %v578, %v568
        %v580 = vadd.s32 %v579, %v570
        %v581 = vshrl.u32 %v580, 4
        %v582 = vmul.u32 %v581, 18
        %v583 = vsub.s32 %v559, %v582
        %v584 = vsub.s32 0, %v583
        %v585 = vsel %vm557, %v584, %v583
        %vm586 = vcmp.lt.s32.totalorder %v354, 0
        %v587 = vsub.s32 0, %v354
        %v588 = vsel %vm586, %v587, %v354
        %v589 = vand.u32 %v588, 65535
        %v590 = vshrl.u32 %v588, 16
        %v592 = vmul.u32 %v589, 14564
        %v593 = vmul.u32 %v589, 58254
        %v594 = vmul.u32 %v590, 14564
        %v595 = vmul.u32 %v590, 58254
        %v596 = vshll.u32 %v593, 16
        %v597 = vshrl.u32 %v593, 16
        %v598 = vshll.u32 %v594, 16
        %v599 = vshrl.u32 %v594, 16
        %vm600 = vc.u32 %v592, %v596
        %v601 = vsel %vm600, 1, 0
        %v602 = vadd.s32 %v592, %v596
        %v603 = vadd.s32 %v595, %v601
        %vm604 = vc.u32 %v602, %v598
        %v605 = vsel %vm604, 1, 0
        %v606 = vadd.s32 %v602, %v598
        %v607 = vadd.s32 %v603, %v605
        %v608 = vadd.s32 %v607, %v597
        %v609 = vadd.s32 %v608, %v599
        %v610 = vshrl.u32 %v609, 4
        %v611 = vmul.u32 %v610, 18
        %v612 = vsub.s32 %v588, %v611
        %v613 = vsub.s32 0, %v612
        %v614 = vsel %vm586, %v613, %v612
        %vm615 = vcmp.lt.s32.totalorder %v355, 0
        %v616 = vsub.s32 0, %v355
        %v617 = vsel %vm615, %v616, %v355
        %v618 = vand.u32 %v617, 65535
        %v619 = vshrl.u32 %v617, 16
        %v621 = vmul.u32 %v618, 14564
        %v622 = vmul.u32 %v618, 58254
        %v623 = vmul.u32 %v619, 14564
        %v624 = vmul.u32 %v619, 58254
        %v625 = vshll.u32 %v622, 16
        %v626 = vshrl.u32 %v622, 16
        %v627 = vshll.u32 %v623, 16
        %v628 = vshrl.u32 %v623, 16
        %vm629 = vc.u32 %v621, %v625
        %v630 = vsel %vm629, 1, 0
        %v631 = vadd.s32 %v621, %v625
        %v632 = vadd.s32 %v624, %v630
        %vm633 = vc.u32 %v631, %v627
        %v634 = vsel %vm633, 1, 0
        %v635 = vadd.s32 %v631, %v627
        %v636 = vadd.s32 %v632, %v634
        %v637 = vadd.s32 %v636, %v626
        %v638 = vadd.s32 %v637, %v628
        %v639 = vshrl.u32 %v638, 4
        %v640 = vmul.u32 %v639, 18
        %v641 = vsub.s32 %v617, %v640
        %v642 = vsub.s32 0, %v641
        %v643 = vsel %vm615, %v642, %v641
        %vm644 = vcmp.lt.s32.totalorder %v356, 0
        %v645 = vsub.s32 0, %v356
        %v646 = vsel %vm644, %v645, %v356
        %v647 = vand.u32 %v646, 65535
        %v648 = vshrl.u32 %v646, 16
        %v650 = vmul.u32 %v647, 14564
        %v651 = vmul.u32 %v647, 58254
        %v652 = vmul.u32 %v648, 14564
        %v653 = vmul.u32 %v648, 58254
        %v654 = vshll.u32 %v651, 16
        %v655 = vshrl.u32 %v651, 16
        %v656 = vshll.u32 %v652, 16
        %v657 = vshrl.u32 %v652, 16
        %vm658 = vc.u32 %v650, %v654
        %v659 = vsel %vm658, 1, 0
        %v660 = vadd.s32 %v650, %v654
        %v661 = vadd.s32 %v653, %v659
        %vm662 = vc.u32 %v660, %v656
        %v663 = vsel %vm662, 1, 0
        %v664 = vadd.s32 %v660, %v656
        %v665 = vadd.s32 %v661, %v663
        %v666 = vadd.s32 %v665, %v655
        %v667 = vadd.s32 %v666, %v657
        %v668 = vshrl.u32 %v667, 4
        %v669 = vmul.u32 %v668, 18
        %v670 = vsub.s32 %v646, %v669
        %v671 = vsub.s32 0, %v670
        %v672 = vsel %vm644, %v671, %v670
        %vm673 = vcmp.lt.s32.totalorder %v357, 0
        %v674 = vsub.s32 0, %v357
        %v675 = vsel %vm673, %v674, %v357
        %v676 = vand.u32 %v675, 65535
        %v677 = vshrl.u32 %v675, 16
        %v679 = vmul.u32 %v676, 14564
        %v680 = vmul.u32 %v676, 58254
        %v681 = vmul.u32 %v677, 14564
        %v682 = vmul.u32 %v677, 58254
        %v683 = vshll.u32 %v680, 16
        %v684 = vshrl.u32 %v680, 16
        %v685 = vshll.u32 %v681, 16
        %v686 = vshrl.u32 %v681, 16
        %vm687 = vc.u32 %v679, %v683
        %v688 = vsel %vm687, 1, 0
        %v689 = vadd.s32 %v679, %v683
        %v690 = vadd.s32 %v682, %v688
        %vm691 = vc.u32 %v689, %v685
        %v692 = vsel %vm691, 1, 0
        %v693 = vadd.s32 %v689, %v685
        %v694 = vadd.s32 %v690, %v692
        %v695 = vadd.s32 %v694, %v684
        %v696 = vadd.s32 %v695, %v686
        %v697 = vshrl.u32 %v696, 4
        %v698 = vmul.u32 %v697, 18
        %v699 = vsub.s32 %v675, %v698
        %v700 = vsub.s32 0, %v699
        %v701 = vsel %vm673, %v700, %v699
        %vm702 = vcmp.lt.s32.totalorder %v358, 0
        %v703 = vsub.s32 0, %v358
        %v704 = vsel %vm702, %v703, %v358
        %v705 = vand.u32 %v704, 65535
        %v706 = vshrl.u32 %v704, 16
        %v708 = vmul.u32 %v705, 14564
        %v709 = vmul.u32 %v705, 58254
        %v710 = vmul.u32 %v706, 14564
        %v711 = vmul.u32 %v706, 58254
        %v712 = vshll.u32 %v709, 16
        %v713 = vshrl.u32 %v709, 16
        %v714 = vshll.u32 %v710, 16
        %v715 = vshrl.u32 %v710, 16
        %vm716 = vc.u32 %v708, %v712
        %v717 = vsel %vm716, 1, 0
        %v718 = vadd.s32 %v708, %v712
        %v719 = vadd.s32 %v711, %v717
        %vm720 = vc.u32 %v718, %v714
        %v721 = vsel %vm720, 1, 0
        %v722 = vadd.s32 %v718, %v714
        %v723 = vadd.s32 %v719, %v721
        %v724 = vadd.s32 %v723, %v713
        %v725 = vadd.s32 %v724, %v715
        %v726 = vshrl.u32 %v725, 4
        %v727 = vmul.u32 %v726, 18
        %v728 = vsub.s32 %v704, %v727
        %v729 = vsub.s32 0, %v728
        %v730 = vsel %vm702, %v729, %v728
        %vm731 = vcmp.lt.s32.totalorder %v359, 0
        %v732 = vsub.s32 0, %v359
        %v733 = vsel %vm731, %v732, %v359
        %v734 = vand.u32 %v733, 65535
        %v735 = vshrl.u32 %v733, 16
        %v737 = vmul.u32 %v734, 14564
        %v738 = vmul.u32 %v734, 58254
        %v739 = vmul.u32 %v735, 14564
        %v740 = vmul.u32 %v735, 58254
        %v741 = vshll.u32 %v738, 16
        %v742 = vshrl.u32 %v738, 16
        %v743 = vshll.u32 %v739, 16
        %v744 = vshrl.u32 %v739, 16
        %vm745 = vc.u32 %v737, %v741
        %v746 = vsel %vm745, 1, 0
        %v747 = vadd.s32 %v737, %v741
        %v748 = vadd.s32 %v740, %v746
        %vm749 = vc.u32 %v747, %v743
        %v750 = vsel %vm749, 1, 0
        %v751 = vadd.s32 %v747, %v743
        %v752 = vadd.s32 %v748, %v750
        %v753 = vadd.s32 %v752, %v742
        %v754 = vadd.s32 %v753, %v744
        %v755 = vshrl.u32 %v754, 4
        %v756 = vmul.u32 %v755, 18
        %v757 = vsub.s32 %v733, %v756
        %v758 = vsub.s32 0, %v757
        %v759 = vsel %vm731, %v758, %v757
        %vm760 = vcmp.lt.s32.totalorder %v360, 0
        %v761 = vsub.s32 0, %v360
        %v762 = vsel %vm760, %v761, %v360
        %v763 = vand.u32 %v762, 65535
        %v764 = vshrl.u32 %v762, 16
        %v766 = vmul.u32 %v763, 14564
        %v767 = vmul.u32 %v763, 58254
        %v768 = vmul.u32 %v764, 14564
        %v769 = vmul.u32 %v764, 58254
        %v770 = vshll.u32 %v767, 16
        %v771 = vshrl.u32 %v767, 16
        %v772 = vshll.u32 %v768, 16
        %v773 = vshrl.u32 %v768, 16
        %vm774 = vc.u32 %v766, %v770
        %v775 = vsel %vm774, 1, 0
        %v776 = vadd.s32 %v766, %v770
        %v777 = vadd.s32 %v769, %v775
        %vm778 = vc.u32 %v776, %v772
        %v779 = vsel %vm778, 1, 0
        %v780 = vadd.s32 %v776, %v772
        %v781 = vadd.s32 %v777, %v779
        %v782 = vadd.s32 %v781, %v771
        %v783 = vadd.s32 %v782, %v773
        %v784 = vshrl.u32 %v783, 4
        %v785 = vmul.u32 %v784, 18
        %v786 = vsub.s32 %v762, %v785
        %v787 = vsub.s32 0, %v786
        %v788 = vsel %vm760, %v787, %v786
        %vm789 = vcmp.lt.s32.totalorder %v361, 0
        %v790 = vsub.s32 0, %v361
        %v791 = vsel %vm789, %v790, %v361
        %v792 = vand.u32 %v791, 65535
        %v793 = vshrl.u32 %v791, 16
        %v795 = vmul.u32 %v792, 14564
        %v796 = vmul.u32 %v792, 58254
        %v797 = vmul.u32 %v793, 14564
        %v798 = vmul.u32 %v793, 58254
        %v799 = vshll.u32 %v796, 16
        %v800 = vshrl.u32 %v796, 16
        %v801 = vshll.u32 %v797, 16
        %v802 = vshrl.u32 %v797, 16
        %vm803 = vc.u32 %v795, %v799
        %v804 = vsel %vm803, 1, 0
        %v805 = vadd.s32 %v795, %v799
        %v806 = vadd.s32 %v798, %v804
        %vm807 = vc.u32 %v805, %v801
        %v808 = vsel %vm807, 1, 0
        %v809 = vadd.s32 %v805, %v801
        %v810 = vadd.s32 %v806, %v808
        %v811 = vadd.s32 %v810, %v800
        %v812 = vadd.s32 %v811, %v802
        %v813 = vshrl.u32 %v812, 4
        %v814 = vmul.u32 %v813, 18
        %v815 = vsub.s32 %v791, %v814
        %v816 = vsub.s32 0, %v815
        %v817 = vsel %vm789, %v816, %v815
        %vm818 = vcmp.lt.s32.totalorder %v362, 0
        %v819 = vsub.s32 0, %v362
        %v820 = vsel %vm818, %v819, %v362
        %v821 = vand.u32 %v820, 65535
        %v822 = vshrl.u32 %v820, 16
        %v824 = vmul.u32 %v821, 14564
        %v825 = vmul.u32 %v821, 58254
        %v826 = vmul.u32 %v822, 14564
        %v827 = vmul.u32 %v822, 58254
        %v828 = vshll.u32 %v825, 16
        %v829 = vshrl.u32 %v825, 16
        %v830 = vshll.u32 %v826, 16
        %v831 = vshrl.u32 %v826, 16
        %vm832 = vc.u32 %v824, %v828
        %v833 = vsel %vm832, 1, 0
        %v834 = vadd.s32 %v824, %v828
        %v835 = vadd.s32 %v827, %v833
        %vm836 = vc.u32 %v834, %v830
        %v837 = vsel %vm836, 1, 0
        %v838 = vadd.s32 %v834, %v830
        %v839 = vadd.s32 %v835, %v837
        %v840 = vadd.s32 %v839, %v829
        %v841 = vadd.s32 %v840, %v831
        %v842 = vshrl.u32 %v841, 4
        %v843 = vmul.u32 %v842, 18
        %v844 = vsub.s32 %v820, %v843
        %v845 = vsub.s32 0, %v844
        %v846 = vsel %vm818, %v845, %v844
        %vm847 = vcmp.lt.s32.totalorder %v363, 0
        %v848 = vsub.s32 0, %v363
        %v849 = vsel %vm847, %v848, %v363
        %v850 = vand.u32 %v849, 65535
        %v851 = vshrl.u32 %v849, 16
        %v853 = vmul.u32 %v850, 14564
        %v854 = vmul.u32 %v850, 58254
        %v855 = vmul.u32 %v851, 14564
        %v856 = vmul.u32 %v851, 58254
        %v857 = vshll.u32 %v854, 16
        %v858 = vshrl.u32 %v854, 16
        %v859 = vshll.u32 %v855, 16
        %v860 = vshrl.u32 %v855, 16
        %vm861 = vc.u32 %v853, %v857
        %v862 = vsel %vm861, 1, 0
        %v863 = vadd.s32 %v853, %v857
        %v864 = vadd.s32 %v856, %v862
        %vm865 = vc.u32 %v863, %v859
        %v866 = vsel %vm865, 1, 0
        %v867 = vadd.s32 %v863, %v859
        %v868 = vadd.s32 %v864, %v866
        %v869 = vadd.s32 %v868, %v858
        %v870 = vadd.s32 %v869, %v860
        %v871 = vshrl.u32 %v870, 4
        %v872 = vmul.u32 %v871, 18
        %v873 = vsub.s32 %v849, %v872
        %v874 = vsub.s32 0, %v873
        %v875 = vsel %vm847, %v874, %v873
        %vm876 = vcmp.lt.s32.totalorder %v364, 0
        %v877 = vsub.s32 0, %v364
        %v878 = vsel %vm876, %v877, %v364
        %v879 = vand.u32 %v878, 65535
        %v880 = vshrl.u32 %v878, 16
        %v882 = vmul.u32 %v879, 14564
        %v883 = vmul.u32 %v879, 58254
        %v884 = vmul.u32 %v880, 14564
        %v885 = vmul.u32 %v880, 58254
        %v886 = vshll.u32 %v883, 16
        %v887 = vshrl.u32 %v883, 16
        %v888 = vshll.u32 %v884, 16
        %v889 = vshrl.u32 %v884, 16
        %vm890 = vc.u32 %v882, %v886
        %v891 = vsel %vm890, 1, 0
        %v892 = vadd.s32 %v882, %v886
        %v893 = vadd.s32 %v885, %v891
        %vm894 = vc.u32 %v892, %v888
        %v895 = vsel %vm894, 1, 0
        %v896 = vadd.s32 %v892, %v888
        %v897 = vadd.s32 %v893, %v895
        %v898 = vadd.s32 %v897, %v887
        %v899 = vadd.s32 %v898, %v889
        %v900 = vshrl.u32 %v899, 4
        %v901 = vmul.u32 %v900, 18
        %v902 = vsub.s32 %v878, %v901
        %v903 = vsub.s32 0, %v902
        %v904 = vsel %vm876, %v903, %v902
        %vm905 = vcmp.lt.s32.totalorder %v365, 0
        %v906 = vsub.s32 0, %v365
        %v907 = vsel %vm905, %v906, %v365
        %v908 = vand.u32 %v907, 65535
        %v909 = vshrl.u32 %v907, 16
        %v911 = vmul.u32 %v908, 14564
        %v912 = vmul.u32 %v908, 58254
        %v913 = vmul.u32 %v909, 14564
        %v914 = vmul.u32 %v909, 58254
        %v915 = vshll.u32 %v912, 16
        %v916 = vshrl.u32 %v912, 16
        %v917 = vshll.u32 %v913, 16
        %v918 = vshrl.u32 %v913, 16
        %vm919 = vc.u32 %v911, %v915
        %v920 = vsel %vm919, 1, 0
        %v921 = vadd.s32 %v911, %v915
        %v922 = vadd.s32 %v914, %v920
        %vm923 = vc.u32 %v921, %v917
        %v924 = vsel %vm923, 1, 0
        %v925 = vadd.s32 %v921, %v917
        %v926 = vadd.s32 %v922, %v924
        %v927 = vadd.s32 %v926, %v916
        %v928 = vadd.s32 %v927, %v918
        %v929 = vshrl.u32 %v928, 4
        %v930 = vmul.u32 %v929, 18
        %v931 = vsub.s32 %v907, %v930
        %v932 = vsub.s32 0, %v931
        %v933 = vsel %vm905, %v932, %v931
        %vm934 = vcmp.lt.s32.totalorder %v366, 0
        %v935 = vsub.s32 0, %v366
        %v936 = vsel %vm934, %v935, %v366
        %v937 = vand.u32 %v936, 65535
        %v938 = vshrl.u32 %v936, 16
        %v940 = vmul.u32 %v937, 14564
        %v941 = vmul.u32 %v937, 58254
        %v942 = vmul.u32 %v938, 14564
        %v943 = vmul.u32 %v938, 58254
        %v944 = vshll.u32 %v941, 16
        %v945 = vshrl.u32 %v941, 16
        %v946 = vshll.u32 %v942, 16
        %v947 = vshrl.u32 %v942, 16
        %vm948 = vc.u32 %v940, %v944
        %v949 = vsel %vm948, 1, 0
        %v950 = vadd.s32 %v940, %v944
        %v951 = vadd.s32 %v943, %v949
        %vm952 = vc.u32 %v950, %v946
        %v953 = vsel %vm952, 1, 0
        %v954 = vadd.s32 %v950, %v946
        %v955 = vadd.s32 %v951, %v953
        %v956 = vadd.s32 %v955, %v945
        %v957 = vadd.s32 %v956, %v947
        %v958 = vshrl.u32 %v957, 4
        %v959 = vmul.u32 %v958, 18
        %v960 = vsub.s32 %v936, %v959
        %v961 = vsub.s32 0, %v960
        %v962 = vsel %vm934, %v961, %v960
        %vm963 = vcmp.lt.s32.totalorder %v367, 0
        %v964 = vsub.s32 0, %v367
        %v965 = vsel %vm963, %v964, %v367
        %v966 = vand.u32 %v965, 65535
        %v967 = vshrl.u32 %v965, 16
        %v969 = vmul.u32 %v966, 14564
        %v970 = vmul.u32 %v966, 58254
        %v971 = vmul.u32 %v967, 14564
        %v972 = vmul.u32 %v967, 58254
        %v973 = vshll.u32 %v970, 16
        %v974 = vshrl.u32 %v970, 16
        %v975 = vshll.u32 %v971, 16
        %v976 = vshrl.u32 %v971, 16
        %vm977 = vc.u32 %v969, %v973
        %v978 = vsel %vm977, 1, 0
        %v979 = vadd.s32 %v969, %v973
        %v980 = vadd.s32 %v972, %v978
        %vm981 = vc.u32 %v979, %v975
        %v982 = vsel %vm981, 1, 0
        %v983 = vadd.s32 %v979, %v975
        %v984 = vadd.s32 %v980, %v982
        %v985 = vadd.s32 %v984, %v974
        %v986 = vadd.s32 %v985, %v976
        %v987 = vshrl.u32 %v986, 4
        %v988 = vmul.u32 %v987, 18
        %v989 = vsub.s32 %v965, %v988
        %v990 = vsub.s32 0, %v989
        %v991 = vsel %vm963, %v990, %v989
        %vm992 = vcmp.lt.s32.totalorder %v368, 0
        %v993 = vsub.s32 0, %v368
        %v994 = vsel %vm992, %v993, %v368
        %v995 = vand.u32 %v994, 65535
        %v996 = vshrl.u32 %v994, 16
        %v998 = vmul.u32 %v995, 14564
        %v999 = vmul.u32 %v995, 58254
        %v1000 = vmul.u32 %v996, 14564
        %v1001 = vmul.u32 %v996, 58254
        %v1002 = vshll.u32 %v999, 16
        %v1003 = vshrl.u32 %v999, 16
        %v1004 = vshll.u32 %v1000, 16
        %v1005 = vshrl.u32 %v1000, 16
        %vm1006 = vc.u32 %v998, %v1002
        %v1007 = vsel %vm1006, 1, 0
        %v1008 = vadd.s32 %v998, %v1002
        %v1009 = vadd.s32 %v1001, %v1007
        %vm1010 = vc.u32 %v1008, %v1004
        %v1011 = vsel %vm1010, 1, 0
        %v1012 = vadd.s32 %v1008, %v1004
        %v1013 = vadd.s32 %v1009, %v1011
        %v1014 = vadd.s32 %v1013, %v1003
        %v1015 = vadd.s32 %v1014, %v1005
        %v1016 = vshrl.u32 %v1015, 4
        %v1017 = vmul.u32 %v1016, 18
        %v1018 = vsub.s32 %v994, %v1017
        %v1019 = vsub.s32 0, %v1018
        %v1020 = vsel %vm992, %v1019, %v1018
        %vm1021 = vcmp.lt.s32.totalorder %v369, 0
        %v1022 = vsub.s32 0, %v369
        %v1023 = vsel %vm1021, %v1022, %v369
        %v1024 = vand.u32 %v1023, 65535
        %v1025 = vshrl.u32 %v1023, 16
        %v1027 = vmul.u32 %v1024, 14564
        %v1028 = vmul.u32 %v1024, 58254
        %v1029 = vmul.u32 %v1025, 14564
        %v1030 = vmul.u32 %v1025, 58254
        %v1031 = vshll.u32 %v1028, 16
        %v1032 = vshrl.u32 %v1028, 16
        %v1033 = vshll.u32 %v1029, 16
        %v1034 = vshrl.u32 %v1029, 16
        %vm1035 = vc.u32 %v1027, %v1031
        %v1036 = vsel %vm1035, 1, 0
        %v1037 = vadd.s32 %v1027, %v1031
        %v1038 = vadd.s32 %v1030, %v1036
        %vm1039 = vc.u32 %v1037, %v1033
        %v1040 = vsel %vm1039, 1, 0
        %v1041 = vadd.s32 %v1037, %v1033
        %v1042 = vadd.s32 %v1038, %v1040
        %v1043 = vadd.s32 %v1042, %v1032
        %v1044 = vadd.s32 %v1043, %v1034
        %v1045 = vshrl.u32 %v1044, 4
        %v1046 = vmul.u32 %v1045, 18
        %v1047 = vsub.s32 %v1023, %v1046
        %v1048 = vsub.s32 0, %v1047
        %v1049 = vsel %vm1021, %v1048, %v1047
        %vm1050 = vcmp.lt.s32.totalorder %v370, 0
        %v1051 = vsub.s32 0, %v370
        %v1052 = vsel %vm1050, %v1051, %v370
        %v1053 = vand.u32 %v1052, 65535
        %v1054 = vshrl.u32 %v1052, 16
        %v1056 = vmul.u32 %v1053, 14564
        %v1057 = vmul.u32 %v1053, 58254
        %v1058 = vmul.u32 %v1054, 14564
        %v1059 = vmul.u32 %v1054, 58254
        %v1060 = vshll.u32 %v1057, 16
        %v1061 = vshrl.u32 %v1057, 16
        %v1062 = vshll.u32 %v1058, 16
        %v1063 = vshrl.u32 %v1058, 16
        %vm1064 = vc.u32 %v1056, %v1060
        %v1065 = vsel %vm1064, 1, 0
        %v1066 = vadd.s32 %v1056, %v1060
        %v1067 = vadd.s32 %v1059, %v1065
        %vm1068 = vc.u32 %v1066, %v1062
        %v1069 = vsel %vm1068, 1, 0
        %v1070 = vadd.s32 %v1066, %v1062
        %v1071 = vadd.s32 %v1067, %v1069
        %v1072 = vadd.s32 %v1071, %v1061
        %v1073 = vadd.s32 %v1072, %v1063
        %v1074 = vshrl.u32 %v1073, 4
        %v1075 = vmul.u32 %v1074, 18
        %v1076 = vsub.s32 %v1052, %v1075
        %v1077 = vsub.s32 0, %v1076
        %v1078 = vsel %vm1050, %v1077, %v1076
        %vm1079 = vcmp.lt.s32.totalorder %v371, 0
        %v1080 = vsub.s32 0, %v371
        %v1081 = vsel %vm1079, %v1080, %v371
        %v1082 = vand.u32 %v1081, 65535
        %v1083 = vshrl.u32 %v1081, 16
        %v1085 = vmul.u32 %v1082, 14564
        %v1086 = vmul.u32 %v1082, 58254
        %v1087 = vmul.u32 %v1083, 14564
        %v1088 = vmul.u32 %v1083, 58254
        %v1089 = vshll.u32 %v1086, 16
        %v1090 = vshrl.u32 %v1086, 16
        %v1091 = vshll.u32 %v1087, 16
        %v1092 = vshrl.u32 %v1087, 16
        %vm1093 = vc.u32 %v1085, %v1089
        %v1094 = vsel %vm1093, 1, 0
        %v1095 = vadd.s32 %v1085, %v1089
        %v1096 = vadd.s32 %v1088, %v1094
        %vm1097 = vc.u32 %v1095, %v1091
        %v1098 = vsel %vm1097, 1, 0
        %v1099 = vadd.s32 %v1095, %v1091
        %v1100 = vadd.s32 %v1096, %v1098
        %v1101 = vadd.s32 %v1100, %v1090
        %v1102 = vadd.s32 %v1101, %v1092
        %v1103 = vshrl.u32 %v1102, 4
        %v1104 = vmul.u32 %v1103, 18
        %v1105 = vsub.s32 %v1081, %v1104
        %v1106 = vsub.s32 0, %v1105
        %v1107 = vsel %vm1079, %v1106, %v1105
        %vm1108 = vcmp.lt.s32.totalorder %v372, 0
        %v1109 = vsub.s32 0, %v372
        %v1110 = vsel %vm1108, %v1109, %v372
        %v1111 = vand.u32 %v1110, 65535
        %v1112 = vshrl.u32 %v1110, 16
        %v1114 = vmul.u32 %v1111, 14564
        %v1115 = vmul.u32 %v1111, 58254
        %v1116 = vmul.u32 %v1112, 14564
        %v1117 = vmul.u32 %v1112, 58254
        %v1118 = vshll.u32 %v1115, 16
        %v1119 = vshrl.u32 %v1115, 16
        %v1120 = vshll.u32 %v1116, 16
        %v1121 = vshrl.u32 %v1116, 16
        %vm1122 = vc.u32 %v1114, %v1118
        %v1123 = vsel %vm1122, 1, 0
        %v1124 = vadd.s32 %v1114, %v1118
        %v1125 = vadd.s32 %v1117, %v1123
        %vm1126 = vc.u32 %v1124, %v1120
        %v1127 = vsel %vm1126, 1, 0
        %v1128 = vadd.s32 %v1124, %v1120
        %v1129 = vadd.s32 %v1125, %v1127
        %v1130 = vadd.s32 %v1129, %v1119
        %v1131 = vadd.s32 %v1130, %v1121
        %v1132 = vshrl.u32 %v1131, 4
        %v1133 = vmul.u32 %v1132, 18
        %v1134 = vsub.s32 %v1110, %v1133
        %v1135 = vsub.s32 0, %v1134
        %v1136 = vsel %vm1108, %v1135, %v1134
        %vm1137 = vcmp.lt.s32.totalorder %v373, 0
        %v1138 = vsub.s32 0, %v373
        %v1139 = vsel %vm1137, %v1138, %v373
        %v1140 = vand.u32 %v1139, 65535
        %v1141 = vshrl.u32 %v1139, 16
        %v1143 = vmul.u32 %v1140, 14564
        %v1144 = vmul.u32 %v1140, 58254
        %v1145 = vmul.u32 %v1141, 14564
        %v1146 = vmul.u32 %v1141, 58254
        %v1147 = vshll.u32 %v1144, 16
        %v1148 = vshrl.u32 %v1144, 16
        %v1149 = vshll.u32 %v1145, 16
        %v1150 = vshrl.u32 %v1145, 16
        %vm1151 = vc.u32 %v1143, %v1147
        %v1152 = vsel %vm1151, 1, 0
        %v1153 = vadd.s32 %v1143, %v1147
        %v1154 = vadd.s32 %v1146, %v1152
        %vm1155 = vc.u32 %v1153, %v1149
        %v1156 = vsel %vm1155, 1, 0
        %v1157 = vadd.s32 %v1153, %v1149
        %v1158 = vadd.s32 %v1154, %v1156
        %v1159 = vadd.s32 %v1158, %v1148
        %v1160 = vadd.s32 %v1159, %v1150
        %v1161 = vshrl.u32 %v1160, 4
        %v1162 = vmul.u32 %v1161, 18
        %v1163 = vsub.s32 %v1139, %v1162
        %v1164 = vsub.s32 0, %v1163
        %v1165 = vsel %vm1137, %v1164, %v1163
        %vm1166 = vcmp.lt.s32.totalorder %v374, 0
        %v1167 = vsub.s32 0, %v374
        %v1168 = vsel %vm1166, %v1167, %v374
        %v1169 = vand.u32 %v1168, 65535
        %v1170 = vshrl.u32 %v1168, 16
        %v1172 = vmul.u32 %v1169, 14564
        %v1173 = vmul.u32 %v1169, 58254
        %v1174 = vmul.u32 %v1170, 14564
        %v1175 = vmul.u32 %v1170, 58254
        %v1176 = vshll.u32 %v1173, 16
        %v1177 = vshrl.u32 %v1173, 16
        %v1178 = vshll.u32 %v1174, 16
        %v1179 = vshrl.u32 %v1174, 16
        %vm1180 = vc.u32 %v1172, %v1176
        %v1181 = vsel %vm1180, 1, 0
        %v1182 = vadd.s32 %v1172, %v1176
        %v1183 = vadd.s32 %v1175, %v1181
        %vm1184 = vc.u32 %v1182, %v1178
        %v1185 = vsel %vm1184, 1, 0
        %v1186 = vadd.s32 %v1182, %v1178
        %v1187 = vadd.s32 %v1183, %v1185
        %v1188 = vadd.s32 %v1187, %v1177
        %v1189 = vadd.s32 %v1188, %v1179
        %v1190 = vshrl.u32 %v1189, 4
        %v1191 = vmul.u32 %v1190, 18
        %v1192 = vsub.s32 %v1168, %v1191
        %v1193 = vsub.s32 0, %v1192
        %v1194 = vsel %vm1166, %v1193, %v1192
        %vm1195 = vcmp.lt.s32.totalorder %v375, 0
        %v1196 = vsub.s32 0, %v375
        %v1197 = vsel %vm1195, %v1196, %v375
        %v1198 = vand.u32 %v1197, 65535
        %v1199 = vshrl.u32 %v1197, 16
        %v1201 = vmul.u32 %v1198, 14564
        %v1202 = vmul.u32 %v1198, 58254
        %v1203 = vmul.u32 %v1199, 14564
        %v1204 = vmul.u32 %v1199, 58254
        %v1205 = vshll.u32 %v1202, 16
        %v1206 = vshrl.u32 %v1202, 16
        %v1207 = vshll.u32 %v1203, 16
        %v1208 = vshrl.u32 %v1203, 16
        %vm1209 = vc.u32 %v1201, %v1205
        %v1210 = vsel %vm1209, 1, 0
        %v1211 = vadd.s32 %v1201, %v1205
        %v1212 = vadd.s32 %v1204, %v1210
        %vm1213 = vc.u32 %v1211, %v1207
        %v1214 = vsel %vm1213, 1, 0
        %v1215 = vadd.s32 %v1211, %v1207
        %v1216 = vadd.s32 %v1212, %v1214
        %v1217 = vadd.s32 %v1216, %v1206
        %v1218 = vadd.s32 %v1217, %v1208
        %v1219 = vshrl.u32 %v1218, 4
        %v1220 = vmul.u32 %v1219, 18
        %v1221 = vsub.s32 %v1197, %v1220
        %v1222 = vsub.s32 0, %v1221
        %v1223 = vsel %vm1195, %v1222, %v1221
        %vm1224 = vcmp.lt.s32.totalorder %v376, 0
        %v1225 = vsub.s32 0, %v376
        %v1226 = vsel %vm1224, %v1225, %v376
        %v1227 = vand.u32 %v1226, 65535
        %v1228 = vshrl.u32 %v1226, 16
        %v1230 = vmul.u32 %v1227, 14564
        %v1231 = vmul.u32 %v1227, 58254
        %v1232 = vmul.u32 %v1228, 14564
        %v1233 = vmul.u32 %v1228, 58254
        %v1234 = vshll.u32 %v1231, 16
        %v1235 = vshrl.u32 %v1231, 16
        %v1236 = vshll.u32 %v1232, 16
        %v1237 = vshrl.u32 %v1232, 16
        %vm1238 = vc.u32 %v1230, %v1234
        %v1239 = vsel %vm1238, 1, 0
        %v1240 = vadd.s32 %v1230, %v1234
        %v1241 = vadd.s32 %v1233, %v1239
        %vm1242 = vc.u32 %v1240, %v1236
        %v1243 = vsel %vm1242, 1, 0
        %v1244 = vadd.s32 %v1240, %v1236
        %v1245 = vadd.s32 %v1241, %v1243
        %v1246 = vadd.s32 %v1245, %v1235
        %v1247 = vadd.s32 %v1246, %v1237
        %v1248 = vshrl.u32 %v1247, 4
        %v1249 = vmul.u32 %v1248, 18
        %v1250 = vsub.s32 %v1226, %v1249
        %v1251 = vsub.s32 0, %v1250
        %v1252 = vsel %vm1224, %v1251, %v1250
        %vm1253 = vcmp.lt.s32.totalorder %v377, 0
        %v1254 = vsub.s32 0, %v377
        %v1255 = vsel %vm1253, %v1254, %v377
        %v1256 = vand.u32 %v1255, 65535
        %v1257 = vshrl.u32 %v1255, 16
        %v1259 = vmul.u32 %v1256, 14564
        %v1260 = vmul.u32 %v1256, 58254
        %v1261 = vmul.u32 %v1257, 14564
        %v1262 = vmul.u32 %v1257, 58254
        %v1263 = vshll.u32 %v1260, 16
        %v1264 = vshrl.u32 %v1260, 16
        %v1265 = vshll.u32 %v1261, 16
        %v1266 = vshrl.u32 %v1261, 16
        %vm1267 = vc.u32 %v1259, %v1263
        %v1268 = vsel %vm1267, 1, 0
        %v1269 = vadd.s32 %v1259, %v1263
        %v1270 = vadd.s32 %v1262, %v1268
        %vm1271 = vc.u32 %v1269, %v1265
        %v1272 = vsel %vm1271, 1, 0
        %v1273 = vadd.s32 %v1269, %v1265
        %v1274 = vadd.s32 %v1270, %v1272
        %v1275 = vadd.s32 %v1274, %v1264
        %v1276 = vadd.s32 %v1275, %v1266
        %v1277 = vshrl.u32 %v1276, 4
        %v1278 = vmul.u32 %v1277, 18
        %v1279 = vsub.s32 %v1255, %v1278
        %v1280 = vsub.s32 0, %v1279
        %v1281 = vsel %vm1253, %v1280, %v1279
        %vm1282 = vcmp.lt.s32.totalorder %v378, 0
        %v1283 = vsub.s32 0, %v378
        %v1284 = vsel %vm1282, %v1283, %v378
        %v1285 = vand.u32 %v1284, 65535
        %v1286 = vshrl.u32 %v1284, 16
        %v1288 = vmul.u32 %v1285, 14564
        %v1289 = vmul.u32 %v1285, 58254
        %v1290 = vmul.u32 %v1286, 14564
        %v1291 = vmul.u32 %v1286, 58254
        %v1292 = vshll.u32 %v1289, 16
        %v1293 = vshrl.u32 %v1289, 16
        %v1294 = vshll.u32 %v1290, 16
        %v1295 = vshrl.u32 %v1290, 16
        %vm1296 = vc.u32 %v1288, %v1292
        %v1297 = vsel %vm1296, 1, 0
        %v1298 = vadd.s32 %v1288, %v1292
        %v1299 = vadd.s32 %v1291, %v1297
        %vm1300 = vc.u32 %v1298, %v1294
        %v1301 = vsel %vm1300, 1, 0
        %v1302 = vadd.s32 %v1298, %v1294
        %v1303 = vadd.s32 %v1299, %v1301
        %v1304 = vadd.s32 %v1303, %v1293
        %v1305 = vadd.s32 %v1304, %v1295
        %v1306 = vshrl.u32 %v1305, 4
        %v1307 = vmul.u32 %v1306, 18
        %v1308 = vsub.s32 %v1284, %v1307
        %v1309 = vsub.s32 0, %v1308
        %v1310 = vsel %vm1282, %v1309, %v1308
        %vm1311 = vcmp.lt.s32.totalorder %v379, 0
        %v1312 = vsub.s32 0, %v379
        %v1313 = vsel %vm1311, %v1312, %v379
        %v1314 = vand.u32 %v1313, 65535
        %v1315 = vshrl.u32 %v1313, 16
        %v1317 = vmul.u32 %v1314, 14564
        %v1318 = vmul.u32 %v1314, 58254
        %v1319 = vmul.u32 %v1315, 14564
        %v1320 = vmul.u32 %v1315, 58254
        %v1321 = vshll.u32 %v1318, 16
        %v1322 = vshrl.u32 %v1318, 16
        %v1323 = vshll.u32 %v1319, 16
        %v1324 = vshrl.u32 %v1319, 16
        %vm1325 = vc.u32 %v1317, %v1321
        %v1326 = vsel %vm1325, 1, 0
        %v1327 = vadd.s32 %v1317, %v1321
        %v1328 = vadd.s32 %v1320, %v1326
        %vm1329 = vc.u32 %v1327, %v1323
        %v1330 = vsel %vm1329, 1, 0
        %v1331 = vadd.s32 %v1327, %v1323
        %v1332 = vadd.s32 %v1328, %v1330
        %v1333 = vadd.s32 %v1332, %v1322
        %v1334 = vadd.s32 %v1333, %v1324
        %v1335 = vshrl.u32 %v1334, 4
        %v1336 = vmul.u32 %v1335, 18
        %v1337 = vsub.s32 %v1313, %v1336
        %v1338 = vsub.s32 0, %v1337
        %v1339 = vsel %vm1311, %v1338, %v1337
        %vm1340 = vcmp.lt.s32.totalorder %v380, 0
        %v1341 = vsub.s32 0, %v380
        %v1342 = vsel %vm1340, %v1341, %v380
        %v1343 = vand.u32 %v1342, 65535
        %v1344 = vshrl.u32 %v1342, 16
        %v1346 = vmul.u32 %v1343, 14564
        %v1347 = vmul.u32 %v1343, 58254
        %v1348 = vmul.u32 %v1344, 14564
        %v1349 = vmul.u32 %v1344, 58254
        %v1350 = vshll.u32 %v1347, 16
        %v1351 = vshrl.u32 %v1347, 16
        %v1352 = vshll.u32 %v1348, 16
        %v1353 = vshrl.u32 %v1348, 16
        %vm1354 = vc.u32 %v1346, %v1350
        %v1355 = vsel %vm1354, 1, 0
        %v1356 = vadd.s32 %v1346, %v1350
        %v1357 = vadd.s32 %v1349, %v1355
        %vm1358 = vc.u32 %v1356, %v1352
        %v1359 = vsel %vm1358, 1, 0
        %v1360 = vadd.s32 %v1356, %v1352
        %v1361 = vadd.s32 %v1357, %v1359
        %v1362 = vadd.s32 %v1361, %v1351
        %v1363 = vadd.s32 %v1362, %v1353
        %v1364 = vshrl.u32 %v1363, 4
        %v1365 = vmul.u32 %v1364, 18
        %v1366 = vsub.s32 %v1342, %v1365
        %v1367 = vsub.s32 0, %v1366
        %v1368 = vsel %vm1340, %v1367, %v1366
        %vm1369 = vcmp.lt.s32.totalorder %v381, 0
        %v1370 = vsub.s32 0, %v381
        %v1371 = vsel %vm1369, %v1370, %v381
        %v1372 = vand.u32 %v1371, 65535
        %v1373 = vshrl.u32 %v1371, 16
        %v1375 = vmul.u32 %v1372, 14564
        %v1376 = vmul.u32 %v1372, 58254
        %v1377 = vmul.u32 %v1373, 14564
        %v1378 = vmul.u32 %v1373, 58254
        %v1379 = vshll.u32 %v1376, 16
        %v1380 = vshrl.u32 %v1376, 16
        %v1381 = vshll.u32 %v1377, 16
        %v1382 = vshrl.u32 %v1377, 16
        %vm1383 = vc.u32 %v1375, %v1379
        %v1384 = vsel %vm1383, 1, 0
        %v1385 = vadd.s32 %v1375, %v1379
        %v1386 = vadd.s32 %v1378, %v1384
        %vm1387 = vc.u32 %v1385, %v1381
        %v1388 = vsel %vm1387, 1, 0
        %v1389 = vadd.s32 %v1385, %v1381
        %v1390 = vadd.s32 %v1386, %v1388
        %v1391 = vadd.s32 %v1390, %v1380
        %v1392 = vadd.s32 %v1391, %v1382
        %v1393 = vshrl.u32 %v1392, 4
        %v1394 = vmul.u32 %v1393, 18
        %v1395 = vsub.s32 %v1371, %v1394
        %v1396 = vsub.s32 0, %v1395
        %v1397 = vsel %vm1369, %v1396, %v1395
        %vm1398 = vcmp.lt.s32.totalorder %v382, 0
        %v1399 = vsub.s32 0, %v382
        %v1400 = vsel %vm1398, %v1399, %v382
        %v1401 = vand.u32 %v1400, 65535
        %v1402 = vshrl.u32 %v1400, 16
        %v1404 = vmul.u32 %v1401, 14564
        %v1405 = vmul.u32 %v1401, 58254
        %v1406 = vmul.u32 %v1402, 14564
        %v1407 = vmul.u32 %v1402, 58254
        %v1408 = vshll.u32 %v1405, 16
        %v1409 = vshrl.u32 %v1405, 16
        %v1410 = vshll.u32 %v1406, 16
        %v1411 = vshrl.u32 %v1406, 16
        %vm1412 = vc.u32 %v1404, %v1408
        %v1413 = vsel %vm1412, 1, 0
        %v1414 = vadd.s32 %v1404, %v1408
        %v1415 = vadd.s32 %v1407, %v1413
        %vm1416 = vc.u32 %v1414, %v1410
        %v1417 = vsel %vm1416, 1, 0
        %v1418 = vadd.s32 %v1414, %v1410
        %v1419 = vadd.s32 %v1415, %v1417
        %v1420 = vadd.s32 %v1419, %v1409
        %v1421 = vadd.s32 %v1420, %v1411
        %v1422 = vshrl.u32 %v1421, 4
        %v1423 = vmul.u32 %v1422, 18
        %v1424 = vsub.s32 %v1400, %v1423
        %v1425 = vsub.s32 0, %v1424
        %v1426 = vsel %vm1398, %v1425, %v1424
        %vm1427 = vcmp.ne.s32.totalorder %v411, 0
        %vm1428 = vcmp.ne.s32.totalorder %v440, 0
        %vm1429 = vcmp.ne.s32.totalorder %v469, 0
        %vm1430 = vcmp.ne.s32.totalorder %v498, 0
        %vm1431 = vcmp.ne.s32.totalorder %v527, 0
        %vm1432 = vcmp.ne.s32.totalorder %v556, 0
        %vm1433 = vcmp.ne.s32.totalorder %v585, 0
        %vm1434 = vcmp.ne.s32.totalorder %v614, 0
        %vm1435 = vcmp.ne.s32.totalorder %v643, 0
        %vm1436 = vcmp.ne.s32.totalorder %v672, 0
        %vm1437 = vcmp.ne.s32.totalorder %v701, 0
        %vm1438 = vcmp.ne.s32.totalorder %v730, 0
        %vm1439 = vcmp.ne.s32.totalorder %v759, 0
        %vm1440 = vcmp.ne.s32.totalorder %v788, 0
        %vm1441 = vcmp.ne.s32.totalorder %v817, 0
        %vm1442 = vcmp.ne.s32.totalorder %v846, 0
        %vm1443 = vcmp.ne.s32.totalorder %v875, 0
        %vm1444 = vcmp.ne.s32.totalorder %v904, 0
        %vm1445 = vcmp.ne.s32.totalorder %v933, 0
        %vm1446 = vcmp.ne.s32.totalorder %v962, 0
        %vm1447 = vcmp.ne.s32.totalorder %v991, 0
        %vm1448 = vcmp.ne.s32.totalorder %v1020, 0
        %vm1449 = vcmp.ne.s32.totalorder %v1049, 0
        %vm1450 = vcmp.ne.s32.totalorder %v1078, 0
        %vm1451 = vcmp.ne.s32.totalorder %v1107, 0
        %vm1452 = vcmp.ne.s32.totalorder %v1136, 0
        %vm1453 = vcmp.ne.s32.totalorder %v1165, 0
        %vm1454 = vcmp.ne.s32.totalorder %v1194, 0
        %vm1455 = vcmp.ne.s32.totalorder %v1223, 0
        %vm1456 = vcmp.ne.s32.totalorder %v1252, 0
        %vm1457 = vcmp.ne.s32.totalorder %v1281, 0
        %vm1458 = vcmp.ne.s32.totalorder %v1310, 0
        %vm1459 = vcmp.ne.s32.totalorder %v1339, 0
        %vm1460 = vcmp.ne.s32.totalorder %v1368, 0
        %vm1461 = vcmp.ne.s32.totalorder %v1397, 0
        %vm1462 = vcmp.ne.s32.totalorder %v1426, 0
        %vm1463 = vcmp.lt.s32.totalorder %v411, 0
        %vm1464 = vcmp.lt.s32.totalorder %v440, 0
        %vm1465 = vcmp.lt.s32.totalorder %v469, 0
        %vm1466 = vcmp.lt.s32.totalorder %v498, 0
        %vm1467 = vcmp.lt.s32.totalorder %v527, 0
        %vm1468 = vcmp.lt.s32.totalorder %v556, 0
        %vm1469 = vcmp.lt.s32.totalorder %v585, 0
        %vm1470 = vcmp.lt.s32.totalorder %v614, 0
        %vm1471 = vcmp.lt.s32.totalorder %v643, 0
        %vm1472 = vcmp.lt.s32.totalorder %v672, 0
        %vm1473 = vcmp.lt.s32.totalorder %v701, 0
        %vm1474 = vcmp.lt.s32.totalorder %v730, 0
        %vm1475 = vcmp.lt.s32.totalorder %v759, 0
        %vm1476 = vcmp.lt.s32.totalorder %v788, 0
        %vm1477 = vcmp.lt.s32.totalorder %v817, 0
        %vm1478 = vcmp.lt.s32.totalorder %v846, 0
        %vm1479 = vcmp.lt.s32.totalorder %v875, 0
        %vm1480 = vcmp.lt.s32.totalorder %v904, 0
        %vm1481 = vcmp.lt.s32.totalorder %v933, 0
        %vm1482 = vcmp.lt.s32.totalorder %v962, 0
        %vm1483 = vcmp.lt.s32.totalorder %v991, 0
        %vm1484 = vcmp.lt.s32.totalorder %v1020, 0
        %vm1485 = vcmp.lt.s32.totalorder %v1049, 0
        %vm1486 = vcmp.lt.s32.totalorder %v1078, 0
        %vm1487 = vcmp.lt.s32.totalorder %v1107, 0
        %vm1488 = vcmp.lt.s32.totalorder %v1136, 0
        %vm1489 = vcmp.lt.s32.totalorder %v1165, 0
        %vm1490 = vcmp.lt.s32.totalorder %v1194, 0
        %vm1491 = vcmp.lt.s32.totalorder %v1223, 0
        %vm1492 = vcmp.lt.s32.totalorder %v1252, 0
        %vm1493 = vcmp.lt.s32.totalorder %v1281, 0
        %vm1494 = vcmp.lt.s32.totalorder %v1310, 0
        %vm1495 = vcmp.lt.s32.totalorder %v1339, 0
        %vm1496 = vcmp.lt.s32.totalorder %v1368, 0
        %vm1497 = vcmp.lt.s32.totalorder %v1397, 0
        %vm1498 = vcmp.lt.s32.totalorder %v1426, 0
        %vm1499 = vmand %vm1463, %vm1427
        %vm1500 = vmand %vm1464, %vm1428
        %vm1501 = vmand %vm1465, %vm1429
        %vm1502 = vmand %vm1466, %vm1430
        %vm1503 = vmand %vm1467, %vm1431
        %vm1504 = vmand %vm1468, %vm1432
        %vm1505 = vmand %vm1469, %vm1433
        %vm1506 = vmand %vm1470, %vm1434
        %vm1507 = vmand %vm1471, %vm1435
        %vm1508 = vmand %vm1472, %vm1436
        %vm1509 = vmand %vm1473, %vm1437
        %vm1510 = vmand %vm1474, %vm1438
        %vm1511 = vmand %vm1475, %vm1439
        %vm1512 = vmand %vm1476, %vm1440
        %vm1513 = vmand %vm1477, %vm1441
        %vm1514 = vmand %vm1478, %vm1442
        %vm1515 = vmand %vm1479, %vm1443
        %vm1516 = vmand %vm1480, %vm1444
        %vm1517 = vmand %vm1481, %vm1445
        %vm1518 = vmand %vm1482, %vm1446
        %vm1519 = vmand %vm1483, %vm1447
        %vm1520 = vmand %vm1484, %vm1448
        %vm1521 = vmand %vm1485, %vm1449
        %vm1522 = vmand %vm1486, %vm1450
        %vm1523 = vmand %vm1487, %vm1451
        %vm1524 = vmand %vm1488, %vm1452
        %vm1525 = vmand %vm1489, %vm1453
        %vm1526 = vmand %vm1490, %vm1454
        %vm1527 = vmand %vm1491, %vm1455
        %vm1528 = vmand %vm1492, %vm1456
        %vm1529 = vmand %vm1493, %vm1457
        %vm1530 = vmand %vm1494, %vm1458
        %vm1531 = vmand %vm1495, %vm1459
        %vm1532 = vmand %vm1496, %vm1460
        %vm1533 = vmand %vm1497, %vm1461
        %vm1534 = vmand %vm1498, %vm1462
        %v1535 = vadd.s32 %v411, 18
        %v1536 = vadd.s32 %v440, 18
        %v1537 = vadd.s32 %v469, 18
        %v1538 = vadd.s32 %v498, 18
        %v1539 = vadd.s32 %v527, 18
        %v1540 = vadd.s32 %v556, 18
        %v1541 = vadd.s32 %v585, 18
        %v1542 = vadd.s32 %v614, 18
        %v1543 = vadd.s32 %v643, 18
        %v1544 = vadd.s32 %v672, 18
        %v1545 = vadd.s32 %v701, 18
        %v1546 = vadd.s32 %v730, 18
        %v1547 = vadd.s32 %v759, 18
        %v1548 = vadd.s32 %v788, 18
        %v1549 = vadd.s32 %v817, 18
        %v1550 = vadd.s32 %v846, 18
        %v1551 = vadd.s32 %v875, 18
        %v1552 = vadd.s32 %v904, 18
        %v1553 = vadd.s32 %v933, 18
        %v1554 = vadd.s32 %v962, 18
        %v1555 = vadd.s32 %v991, 18
        %v1556 = vadd.s32 %v1020, 18
        %v1557 = vadd.s32 %v1049, 18
        %v1558 = vadd.s32 %v1078, 18
        %v1559 = vadd.s32 %v1107, 18
        %v1560 = vadd.s32 %v1136, 18
        %v1561 = vadd.s32 %v1165, 18
        %v1562 = vadd.s32 %v1194, 18
        %v1563 = vadd.s32 %v1223, 18
        %v1564 = vadd.s32 %v1252, 18
        %v1565 = vadd.s32 %v1281, 18
        %v1566 = vadd.s32 %v1310, 18
        %v1567 = vadd.s32 %v1339, 18
        %v1568 = vadd.s32 %v1368, 18
        %v1569 = vadd.s32 %v1397, 18
        %v1570 = vadd.s32 %v1426, 18
        %v1571 = vsel %vm1499, %v1535, %v411
        %v1572 = vsel %vm1500, %v1536, %v440
        %v1573 = vsel %vm1501, %v1537, %v469
        %v1574 = vsel %vm1502, %v1538, %v498
        %v1575 = vsel %vm1503, %v1539, %v527
        %v1576 = vsel %vm1504, %v1540, %v556
        %v1577 = vsel %vm1505, %v1541, %v585
        %v1578 = vsel %vm1506, %v1542, %v614
        %v1579 = vsel %vm1507, %v1543, %v643
        %v1580 = vsel %vm1508, %v1544, %v672
        %v1581 = vsel %vm1509, %v1545, %v701
        %v1582 = vsel %vm1510, %v1546, %v730
        %v1583 = vsel %vm1511, %v1547, %v759
        %v1584 = vsel %vm1512, %v1548, %v788
        %v1585 = vsel %vm1513, %v1549, %v817
        %v1586 = vsel %vm1514, %v1550, %v846
        %v1587 = vsel %vm1515, %v1551, %v875
        %v1588 = vsel %vm1516, %v1552, %v904
        %v1589 = vsel %vm1517, %v1553, %v933
        %v1590 = vsel %vm1518, %v1554, %v962
        %v1591 = vsel %vm1519, %v1555, %v991
        %v1592 = vsel %vm1520, %v1556, %v1020
        %v1593 = vsel %vm1521, %v1557, %v1049
        %v1594 = vsel %vm1522, %v1558, %v1078
        %v1595 = vsel %vm1523, %v1559, %v1107
        %v1596 = vsel %vm1524, %v1560, %v1136
        %v1597 = vsel %vm1525, %v1561, %v1165
        %v1598 = vsel %vm1526, %v1562, %v1194
        %v1599 = vsel %vm1527, %v1563, %v1223
        %v1600 = vsel %vm1528, %v1564, %v1252
        %v1601 = vsel %vm1529, %v1565, %v1281
        %v1602 = vsel %vm1530, %v1566, %v1310
        %v1603 = vsel %vm1531, %v1567, %v1339
        %v1604 = vsel %vm1532, %v1568, %v1368
        %v1605 = vsel %vm1533, %v1569, %v1397
        %v1606 = vsel %vm1534, %v1570, %v1426
        %vm1607 = vcmp.lt.s32.totalorder %v1571, 16
        %vm1608 = vcmp.lt.s32.totalorder %v1572, 16
        %vm1609 = vcmp.lt.s32.totalorder %v1573, 16
        %vm1610 = vcmp.lt.s32.totalorder %v1574, 16
        %vm1611 = vcmp.lt.s32.totalorder %v1575, 16
        %vm1612 = vcmp.lt.s32.totalorder %v1576, 16
        %vm1613 = vcmp.lt.s32.totalorder %v1577, 16
        %vm1614 = vcmp.lt.s32.totalorder %v1578, 16
        %vm1615 = vcmp.lt.s32.totalorder %v1579, 16
        %vm1616 = vcmp.lt.s32.totalorder %v1580, 16
        %vm1617 = vcmp.lt.s32.totalorder %v1581, 16
        %vm1618 = vcmp.lt.s32.totalorder %v1582, 16
        %vm1619 = vcmp.lt.s32.totalorder %v1583, 16
        %vm1620 = vcmp.lt.s32.totalorder %v1584, 16
        %vm1621 = vcmp.lt.s32.totalorder %v1585, 16
        %vm1622 = vcmp.lt.s32.totalorder %v1586, 16
        %vm1623 = vcmp.lt.s32.totalorder %v1587, 16
        %vm1624 = vcmp.lt.s32.totalorder %v1588, 16
        %vm1625 = vcmp.lt.s32.totalorder %v1589, 16
        %vm1626 = vcmp.lt.s32.totalorder %v1590, 16
        %vm1627 = vcmp.lt.s32.totalorder %v1591, 16
        %vm1628 = vcmp.lt.s32.totalorder %v1592, 16
        %vm1629 = vcmp.lt.s32.totalorder %v1593, 16
        %vm1630 = vcmp.lt.s32.totalorder %v1594, 16
        %vm1631 = vcmp.lt.s32.totalorder %v1595, 16
        %vm1632 = vcmp.lt.s32.totalorder %v1596, 16
        %vm1633 = vcmp.lt.s32.totalorder %v1597, 16
        %vm1634 = vcmp.lt.s32.totalorder %v1598, 16
        %vm1635 = vcmp.lt.s32.totalorder %v1599, 16
        %vm1636 = vcmp.lt.s32.totalorder %v1600, 16
        %vm1637 = vcmp.lt.s32.totalorder %v1601, 16
        %vm1638 = vcmp.lt.s32.totalorder %v1602, 16
        %vm1639 = vcmp.lt.s32.totalorder %v1603, 16
        %vm1640 = vcmp.lt.s32.totalorder %v1604, 16
        %vm1641 = vcmp.lt.s32.totalorder %v1605, 16
        %vm1642 = vcmp.lt.s32.totalorder %v1606, 16
        %v1643 = vld [vmem:[#allocation2] sm:$0xf]
        %v1644 = vld [vmem:[#allocation2 + $0x4] sm:$0xf]
        %v1645 = vld [vmem:[#allocation2 + $0x8] sm:$0xf]
        %v1646 = vld [vmem:[#allocation2 + $0xc] sm:$0xf]
        %v1647 = vld [vmem:[#allocation2 + $0x10] sm:$0xf]
        %v1648 = vld [vmem:[#allocation2 + $0x14] sm:$0xf]
        %v1649 = vld [vmem:[#allocation2 + $0x18] sm:$0xf]
        %v1650 = vld [vmem:[#allocation2 + $0x1c] sm:$0xf]
        %v1651 = vld [vmem:[#allocation2 + $0x20] sm:$0xf]
        %v1652 = vld [vmem:[#allocation2 + $0x24] sm:$0xf]
        %v1653 = vld [vmem:[#allocation2 + $0x28] sm:$0xf]
        %v1654 = vld [vmem:[#allocation2 + $0x2c] sm:$0xf]
        %v1655 = vld [vmem:[#allocation2 + $0x30] sm:$0xf]
        %v1656 = vld [vmem:[#allocation2 + $0x34] sm:$0xf]
        %v1657 = vld [vmem:[#allocation2 + $0x38] sm:$0xf]
        %v1658 = vld [vmem:[#allocation2 + $0x3c] sm:$0xf]
        %v1659 = vld [vmem:[#allocation2 + $0x40] sm:$0xf]
        %v1660 = vld [vmem:[#allocation2 + $0x44] sm:$0xf]
        %v1661 = vld [vmem:[#allocation2 + $0x48] sm:$0xf]
        %v1662 = vld [vmem:[#allocation2 + $0x4c] sm:$0xf]
        %v1663 = vld [vmem:[#allocation2 + $0x50] sm:$0xf]
        %v1664 = vld [vmem:[#allocation2 + $0x54] sm:$0xf]
        %v1665 = vld [vmem:[#allocation2 + $0x58] sm:$0xf]
        %v1666 = vld [vmem:[#allocation2 + $0x5c] sm:$0xf]
        %v1667 = vld [vmem:[#allocation2 + $0x60] sm:$0xf]
        %v1668 = vld [vmem:[#allocation2 + $0x64] sm:$0xf]
        %v1669 = vld [vmem:[#allocation2 + $0x68] sm:$0xf]
        %v1670 = vld [vmem:[#allocation2 + $0x6c] sm:$0xf]
        %v1671 = vld [vmem:[#allocation2 + $0x70] sm:$0xf]
        %v1672 = vld [vmem:[#allocation2 + $0x74] sm:$0xf]
        %v1673 = vld [vmem:[#allocation2 + $0x78] sm:$0xf]
        %v1674 = vld [vmem:[#allocation2 + $0x7c] sm:$0xf]
        %v1675 = vld [vmem:[#allocation2 + $0x80] sm:$0xf]
        %v1676 = vld [vmem:[#allocation2 + $0x84] sm:$0xf]
        %v1677 = vld [vmem:[#allocation2 + $0x88] sm:$0xf]
        %v1678 = vld [vmem:[#allocation2 + $0x8c] sm:$0xf]
        %v1679 = vld [vmem:[%s1] sm:$0xf]
        %v1680 = vld [vmem:[%s1 + $0x4] sm:$0xf]
        %v1681 = vld [vmem:[%s1 + $0x8] sm:$0xf]
        %v1682 = vld [vmem:[%s1 + $0xc] sm:$0xf]
        %v1683 = vld [vmem:[%s1 + $0x10] sm:$0xf]
        %v1684 = vld [vmem:[%s1 + $0x14] sm:$0xf]
        %v1685 = vld [vmem:[%s1 + $0x18] sm:$0xf]
        %v1686 = vld [vmem:[%s1 + $0x1c] sm:$0xf]
        %v1687 = vld [vmem:[%s1 + $0x20] sm:$0xf]
        %v1688 = vld [vmem:[%s1 + $0x24] sm:$0xf]
        %v1689 = vld [vmem:[%s1 + $0x28] sm:$0xf]
        %v1690 = vld [vmem:[%s1 + $0x2c] sm:$0xf]
        %v1691 = vld [vmem:[%s1 + $0x30] sm:$0xf]
        %v1692 = vld [vmem:[%s1 + $0x34] sm:$0xf]
        %v1693 = vld [vmem:[%s1 + $0x38] sm:$0xf]
        %v1694 = vld [vmem:[%s1 + $0x3c] sm:$0xf]
        %v1695 = vld [vmem:[#allocation2 + $0x90] sm:$0x1]
        %s1696 = scalar_lea.vmem %s1, 64
        %v1697 = vld [vmem:[%s1696] sm:$0xf]
        %v1698 = vld [vmem:[%s1696 + $0x4] sm:$0xf]
        %v1699 = vld [vmem:[%s1696 + $0x8] sm:$0xf]
        %v1700 = vld [vmem:[%s1696 + $0xc] sm:$0xf]
        %v1701 = vld [vmem:[%s1696 + $0x10] sm:$0xf]
        %v1702 = vld [vmem:[%s1696 + $0x14] sm:$0xf]
        %v1703 = vld [vmem:[%s1696 + $0x18] sm:$0xf]
        %v1704 = vld [vmem:[%s1696 + $0x1c] sm:$0xf]
        %v1705 = vld [vmem:[%s1696 + $0x20] sm:$0xf]
        %v1706 = vld [vmem:[%s1696 + $0x24] sm:$0xf]
        %v1707 = vld [vmem:[%s1696 + $0x28] sm:$0xf]
        %v1708 = vld [vmem:[%s1696 + $0x2c] sm:$0xf]
        %v1709 = vld [vmem:[%s1696 + $0x30] sm:$0xf]
        %v1710 = vld [vmem:[%s1696 + $0x34] sm:$0xf]
        %v1711 = vld [vmem:[%s1696 + $0x38] sm:$0xf]
        %v1712 = vld [vmem:[%s1696 + $0x3c] sm:$0xf]
        %v1750 = vunpack.c.l.b16 %v1643
        %v1751 = vunpack.c.l.b16 %v1644
        %v1752 = vunpack.c.l.b16 %v1645
        %v1753 = vunpack.c.l.b16 %v1646
        %v1754 = vunpack.c.l.b16 %v1647
        %v1755 = vunpack.c.l.b16 %v1648
        %v1756 = vunpack.c.l.b16 %v1649
        %v1757 = vunpack.c.l.b16 %v1650
        %v1758 = vunpack.c.l.b16 %v1651
        %v1759 = vunpack.c.l.b16 %v1652
        %v1760 = vunpack.c.l.b16 %v1653
        %v1761 = vunpack.c.l.b16 %v1654
        %v1762 = vunpack.c.l.b16 %v1655
        %v1763 = vunpack.c.l.b16 %v1656
        %v1764 = vunpack.c.l.b16 %v1657
        %v1765 = vunpack.c.l.b16 %v1658
        %v1766 = vunpack.c.l.b16 %v1659
        %v1767 = vunpack.c.l.b16 %v1660
        %v1768 = vunpack.c.l.b16 %v1661
        %v1769 = vunpack.c.l.b16 %v1662
        %v1770 = vunpack.c.l.b16 %v1663
        %v1771 = vunpack.c.l.b16 %v1664
        %v1772 = vunpack.c.l.b16 %v1665
        %v1773 = vunpack.c.l.b16 %v1666
        %v1774 = vunpack.c.l.b16 %v1667
        %v1775 = vunpack.c.l.b16 %v1668
        %v1776 = vunpack.c.l.b16 %v1669
        %v1777 = vunpack.c.l.b16 %v1670
        %v1778 = vunpack.c.l.b16 %v1671
        %v1779 = vunpack.c.l.b16 %v1672
        %v1780 = vunpack.c.l.b16 %v1673
        %v1781 = vunpack.c.l.b16 %v1674
        %v1782 = vunpack.c.l.b16 %v1675
        %v1783 = vunpack.c.l.b16 %v1676
        %v1784 = vunpack.c.l.b16 %v1677
        %v1785 = vunpack.c.l.b16 %v1678
        %v1786 = vunpack.c.l.b16 %v1695
        %v1787 = vpack.c.b16 %v1751, %v1750
        %v1788 = vpack.c.b16 %v1753, %v1752
        %v1789 = vpack.c.b16 %v1755, %v1754
        %v1790 = vpack.c.b16 %v1757, %v1756
        %v1791 = vpack.c.b16 %v1759, %v1758
        %v1792 = vpack.c.b16 %v1761, %v1760
        %v1793 = vpack.c.b16 %v1763, %v1762
        %v1794 = vpack.c.b16 %v1765, %v1764
        %v1795 = vpack.c.b16 %v1767, %v1766
        %v1796 = vpack.c.b16 %v1769, %v1768
        %v1797 = vpack.c.b16 %v1771, %v1770
        %v1798 = vpack.c.b16 %v1773, %v1772
        %v1799 = vpack.c.b16 %v1775, %v1774
        %v1800 = vpack.c.b16 %v1777, %v1776
        %v1801 = vpack.c.b16 %v1779, %v1778
        %v1802 = vpack.c.b16 %v1781, %v1780
        %v1803 = vpack.c.b16 %v1783, %v1782
        %v1804 = vpack.c.b16 %v1785, %v1784
        %v1805 = vpack.c.b16 %v1786, %v1786
        %vm1806 = vsmask.f32 7424
        %v1808 = vshrl.u32 %v1787, 16
        %v1810 = vshll.u32 %v1787, 16
        %v1812 = vrot.slane %v1810, 1
        %v1813 = vor.u32 %v1808, %v1812
        %v1815 = vshll.u32 %v1788, 16
        %v1817 = vrot.slane %v1815, 1
        %v1818 = vsel %vm1806, %v1813, %v1817
        %v1819 = vshrl.u32 %v1788, 16
        %v1821 = vor.u32 %v1819, %v1817
        %v1823 = vshll.u32 %v1789, 16
        %v1825 = vrot.slane %v1823, 1
        %v1826 = vsel %vm1806, %v1821, %v1825
        %v1827 = vshrl.u32 %v1789, 16
        %v1829 = vor.u32 %v1827, %v1825
        %v1831 = vshll.u32 %v1790, 16
        %v1833 = vrot.slane %v1831, 1
        %v1834 = vsel %vm1806, %v1829, %v1833
        %v1835 = vshrl.u32 %v1790, 16
        %v1837 = vor.u32 %v1835, %v1833
        %v1839 = vshll.u32 %v1791, 16
        %v1841 = vrot.slane %v1839, 1
        %v1842 = vsel %vm1806, %v1837, %v1841
        %v1843 = vshrl.u32 %v1791, 16
        %v1845 = vor.u32 %v1843, %v1841
        %v1847 = vshll.u32 %v1792, 16
        %v1849 = vrot.slane %v1847, 1
        %v1850 = vsel %vm1806, %v1845, %v1849
        %v1851 = vshrl.u32 %v1792, 16
        %v1853 = vor.u32 %v1851, %v1849
        %v1855 = vshll.u32 %v1793, 16
        %v1857 = vrot.slane %v1855, 1
        %v1858 = vsel %vm1806, %v1853, %v1857
        %v1859 = vshrl.u32 %v1793, 16
        %v1861 = vor.u32 %v1859, %v1857
        %v1863 = vshll.u32 %v1794, 16
        %v1865 = vrot.slane %v1863, 1
        %v1866 = vsel %vm1806, %v1861, %v1865
        %v1867 = vshrl.u32 %v1794, 16
        %v1869 = vor.u32 %v1867, %v1865
        %v1871 = vshll.u32 %v1795, 16
        %v1873 = vrot.slane %v1871, 1
        %v1874 = vsel %vm1806, %v1869, %v1873
        %v1875 = vshrl.u32 %v1795, 16
        %v1877 = vor.u32 %v1875, %v1873
        %v1879 = vshll.u32 %v1796, 16
        %v1881 = vrot.slane %v1879, 1
        %v1882 = vsel %vm1806, %v1877, %v1881
        %v1883 = vshrl.u32 %v1796, 16
        %v1885 = vor.u32 %v1883, %v1881
        %v1887 = vshll.u32 %v1797, 16
        %v1889 = vrot.slane %v1887, 1
        %v1890 = vsel %vm1806, %v1885, %v1889
        %v1891 = vshrl.u32 %v1797, 16
        %v1893 = vor.u32 %v1891, %v1889
        %v1895 = vshll.u32 %v1798, 16
        %v1897 = vrot.slane %v1895, 1
        %v1898 = vsel %vm1806, %v1893, %v1897
        %v1899 = vshrl.u32 %v1798, 16
        %v1901 = vor.u32 %v1899, %v1897
        %v1903 = vshll.u32 %v1799, 16
        %v1905 = vrot.slane %v1903, 1
        %v1906 = vsel %vm1806, %v1901, %v1905
        %v1907 = vshrl.u32 %v1799, 16
        %v1909 = vor.u32 %v1907, %v1905
        %v1911 = vshll.u32 %v1800, 16
        %v1913 = vrot.slane %v1911, 1
        %v1914 = vsel %vm1806, %v1909, %v1913
        %v1915 = vshrl.u32 %v1800, 16
        %v1917 = vor.u32 %v1915, %v1913
        %v1919 = vshll.u32 %v1801, 16
        %v1921 = vrot.slane %v1919, 1
        %v1922 = vsel %vm1806, %v1917, %v1921
        %v1923 = vshrl.u32 %v1801, 16
        %v1925 = vor.u32 %v1923, %v1921
        %v1927 = vshll.u32 %v1802, 16
        %v1929 = vrot.slane %v1927, 1
        %v1930 = vsel %vm1806, %v1925, %v1929
        %v1931 = vshrl.u32 %v1802, 16
        %v1933 = vor.u32 %v1931, %v1929
        %v1935 = vshll.u32 %v1803, 16
        %v1937 = vrot.slane %v1935, 1
        %v1938 = vsel %vm1806, %v1933, %v1937
        %v1939 = vshrl.u32 %v1803, 16
        %v1941 = vor.u32 %v1939, %v1937
        %v1943 = vshll.u32 %v1804, 16
        %v1945 = vrot.slane %v1943, 1
        %v1946 = vsel %vm1806, %v1941, %v1945
        %v1947 = vshrl.u32 %v1804, 16
        %v1949 = vor.u32 %v1947, %v1945
        %v1951 = vshll.u32 %v1805, 16
        %v1953 = vrot.slane %v1951, 1
        %v1954 = vsel %vm1806, %v1949, %v1953
        %v1989 = vunpack.c.l.b16 %v1697
        %v1990 = vunpack.c.l.b16 %v1698
        %v1991 = vunpack.c.l.b16 %v1699
        %v1992 = vunpack.c.l.b16 %v1700
        %v1993 = vunpack.c.l.b16 %v1701
        %v1994 = vunpack.c.l.b16 %v1702
        %v1995 = vunpack.c.l.b16 %v1703
        %v1996 = vunpack.c.l.b16 %v1704
        %v1997 = vunpack.c.l.b16 %v1705
        %v1998 = vunpack.c.l.b16 %v1706
        %v1999 = vunpack.c.l.b16 %v1707
        %v2000 = vunpack.c.l.b16 %v1708
        %v2001 = vunpack.c.l.b16 %v1709
        %v2002 = vunpack.c.l.b16 %v1710
        %v2003 = vunpack.c.l.b16 %v1711
        %v2004 = vunpack.c.l.b16 %v1712
        %v2005 = vpack.c.b16 %v1990, %v1989
        %v2006 = vpack.c.b16 %v1992, %v1991
        %v2007 = vpack.c.b16 %v1994, %v1993
        %v2008 = vpack.c.b16 %v1996, %v1995
        %v2009 = vpack.c.b16 %v1998, %v1997
        %v2010 = vpack.c.b16 %v2000, %v1999
        %v2011 = vpack.c.b16 %v2002, %v2001
        %v2012 = vpack.c.b16 %v2004, %v2003
        %2021 = vmatpush.bf16.msra.mxu0 %v2012
        %2022 = vmatpush.bf16.msra.mxu0 %v2011
        %2023 = vmatpush.bf16.msra.mxu0 %v2010
        %2024 = vmatpush.bf16.msra.mxu0 %v2009
        %2025 = vmatpush.bf16.msra.mxu0 %v2008
        %2026 = vmatpush.bf16.msra.mxu0 %v2007
        %2027 = vmatpush.bf16.msra.mxu0 %v2006
        %2028 = vmatpush.bf16.msra.mxu0 %v2005
        %2029 = vmatmul.bf16.gmra.mxu0 %v1818
        %v2030 = vpop.f32.mrf.mxu0
        %v2031 = vadd.f32 0.0, %v2030
        %v2032 = vpop.f32.mrf.mxu0
        %v2033 = vadd.f32 0.0, %v2032
        %2034 = vmatmul.bf16.gmra.mxu0 %v1826
        %v2035 = vpop.f32.mrf.mxu0
        %v2036 = vadd.f32 0.0, %v2035
        %v2037 = vpop.f32.mrf.mxu0
        %v2038 = vadd.f32 0.0, %v2037
        %2039 = vmatmul.bf16.gmra.mxu0 %v1834
        %v2040 = vpop.f32.mrf.mxu0
        %v2041 = vadd.f32 0.0, %v2040
        %v2042 = vpop.f32.mrf.mxu0
        %v2043 = vadd.f32 0.0, %v2042
        %2044 = vmatmul.bf16.gmra.mxu0 %v1842
        %v2045 = vpop.f32.mrf.mxu0
        %v2046 = vadd.f32 0.0, %v2045
        %v2047 = vpop.f32.mrf.mxu0
        %v2048 = vadd.f32 0.0, %v2047
        %2049 = vmatmul.bf16.gmra.mxu0 %v1850
        %v2050 = vpop.f32.mrf.mxu0
        %v2051 = vadd.f32 0.0, %v2050
        %v2052 = vpop.f32.mrf.mxu0
        %v2053 = vadd.f32 0.0, %v2052
        %2054 = vmatmul.bf16.gmra.mxu0 %v1858
        %v2055 = vpop.f32.mrf.mxu0
        %v2056 = vadd.f32 0.0, %v2055
        %v2057 = vpop.f32.mrf.mxu0
        %v2058 = vadd.f32 0.0, %v2057
        %2059 = vmatmul.bf16.gmra.mxu0 %v1866
        %v2060 = vpop.f32.mrf.mxu0
        %v2061 = vadd.f32 0.0, %v2060
        %v2062 = vpop.f32.mrf.mxu0
        %v2063 = vadd.f32 0.0, %v2062
        %2064 = vmatmul.bf16.gmra.mxu0 %v1874
        %v2065 = vpop.f32.mrf.mxu0
        %v2066 = vadd.f32 0.0, %v2065
        %v2067 = vpop.f32.mrf.mxu0
        %v2068 = vadd.f32 0.0, %v2067
        %2069 = vmatmul.bf16.gmra.mxu0 %v1882
        %v2070 = vpop.f32.mrf.mxu0
        %v2071 = vadd.f32 0.0, %v2070
        %v2072 = vpop.f32.mrf.mxu0
        %v2073 = vadd.f32 0.0, %v2072
        %2074 = vmatmul.bf16.gmra.mxu0 %v1890
        %v2075 = vpop.f32.mrf.mxu0
        %v2076 = vadd.f32 0.0, %v2075
        %v2077 = vpop.f32.mrf.mxu0
        %v2078 = vadd.f32 0.0, %v2077
        %2079 = vmatmul.bf16.gmra.mxu0 %v1898
        %v2080 = vpop.f32.mrf.mxu0
        %v2081 = vadd.f32 0.0, %v2080
        %v2082 = vpop.f32.mrf.mxu0
        %v2083 = vadd.f32 0.0, %v2082
        %2084 = vmatmul.bf16.gmra.mxu0 %v1906
        %v2085 = vpop.f32.mrf.mxu0
        %v2086 = vadd.f32 0.0, %v2085
        %v2087 = vpop.f32.mrf.mxu0
        %v2088 = vadd.f32 0.0, %v2087
        %2089 = vmatmul.bf16.gmra.mxu0 %v1914
        %v2090 = vpop.f32.mrf.mxu0
        %v2091 = vadd.f32 0.0, %v2090
        %v2092 = vpop.f32.mrf.mxu0
        %v2093 = vadd.f32 0.0, %v2092
        %2094 = vmatmul.bf16.gmra.mxu0 %v1922
        %v2095 = vpop.f32.mrf.mxu0
        %v2096 = vadd.f32 0.0, %v2095
        %v2097 = vpop.f32.mrf.mxu0
        %v2098 = vadd.f32 0.0, %v2097
        %2099 = vmatmul.bf16.gmra.mxu0 %v1930
        %v2100 = vpop.f32.mrf.mxu0
        %v2101 = vadd.f32 0.0, %v2100
        %v2102 = vpop.f32.mrf.mxu0
        %v2103 = vadd.f32 0.0, %v2102
        %2104 = vmatmul.bf16.gmra.mxu0 %v1938
        %v2105 = vpop.f32.mrf.mxu0
        %v2106 = vadd.f32 0.0, %v2105
        %v2107 = vpop.f32.mrf.mxu0
        %v2108 = vadd.f32 0.0, %v2107
        %2109 = vmatmul.bf16.gmra.mxu0 %v1946
        %v2110 = vpop.f32.mrf.mxu0
        %v2111 = vadd.f32 0.0, %v2110
        %v2112 = vpop.f32.mrf.mxu0
        %v2113 = vadd.f32 0.0, %v2112
        %2114 = vmatmul.bf16.gmra.mxu0 %v1954
        %v2115 = vpop.f32.mrf.mxu0
        %v2116 = vadd.f32 0.0, %v2115
        %v2117 = vpop.f32.mrf.mxu0
        %v2118 = vadd.f32 0.0, %v2117
        %2119 = vdwg.mxu0
        %v2154 = vunpack.c.l.b16 %v1679
        %v2155 = vunpack.c.l.b16 %v1680
        %v2156 = vunpack.c.l.b16 %v1681
        %v2157 = vunpack.c.l.b16 %v1682
        %v2158 = vunpack.c.l.b16 %v1683
        %v2159 = vunpack.c.l.b16 %v1684
        %v2160 = vunpack.c.l.b16 %v1685
        %v2161 = vunpack.c.l.b16 %v1686
        %v2162 = vunpack.c.l.b16 %v1687
        %v2163 = vunpack.c.l.b16 %v1688
        %v2164 = vunpack.c.l.b16 %v1689
        %v2165 = vunpack.c.l.b16 %v1690
        %v2166 = vunpack.c.l.b16 %v1691
        %v2167 = vunpack.c.l.b16 %v1692
        %v2168 = vunpack.c.l.b16 %v1693
        %v2169 = vunpack.c.l.b16 %v1694
        %v2170 = vpack.c.b16 %v2155, %v2154
        %v2171 = vpack.c.b16 %v2157, %v2156
        %v2172 = vpack.c.b16 %v2159, %v2158
        %v2173 = vpack.c.b16 %v2161, %v2160
        %v2174 = vpack.c.b16 %v2163, %v2162
        %v2175 = vpack.c.b16 %v2165, %v2164
        %v2176 = vpack.c.b16 %v2167, %v2166
        %v2177 = vpack.c.b16 %v2169, %v2168
        %2186 = vmatpush.bf16.msra.mxu0 %v2177
        %2187 = vmatpush.bf16.msra.mxu0 %v2176
        %2188 = vmatpush.bf16.msra.mxu0 %v2175
        %2189 = vmatpush.bf16.msra.mxu0 %v2174
        %2190 = vmatpush.bf16.msra.mxu0 %v2173
        %2191 = vmatpush.bf16.msra.mxu0 %v2172
        %2192 = vmatpush.bf16.msra.mxu0 %v2171
        %2193 = vmatpush.bf16.msra.mxu0 %v2170
        %2194 = vmatmul.bf16.gmra.mxu0 %v1787
        %v2195 = vpop.f32.mrf.mxu0
        %v2196 = vadd.f32 %v2031, %v2195
        %v2197 = vpop.f32.mrf.mxu0
        %v2198 = vadd.f32 %v2033, %v2197
        %2199 = vmatmul.bf16.gmra.mxu0 %v1788
        %v2200 = vpop.f32.mrf.mxu0
        %v2201 = vadd.f32 %v2036, %v2200
        %v2202 = vpop.f32.mrf.mxu0
        %v2203 = vadd.f32 %v2038, %v2202
        %2204 = vmatmul.bf16.gmra.mxu0 %v1789
        %v2205 = vpop.f32.mrf.mxu0
        %v2206 = vadd.f32 %v2041, %v2205
        %v2207 = vpop.f32.mrf.mxu0
        %v2208 = vadd.f32 %v2043, %v2207
        %2209 = vmatmul.bf16.gmra.mxu0 %v1790
        %v2210 = vpop.f32.mrf.mxu0
        %v2211 = vadd.f32 %v2046, %v2210
        %v2212 = vpop.f32.mrf.mxu0
        %v2213 = vadd.f32 %v2048, %v2212
        %2214 = vmatmul.bf16.gmra.mxu0 %v1791
        %v2215 = vpop.f32.mrf.mxu0
        %v2216 = vadd.f32 %v2051, %v2215
        %v2217 = vpop.f32.mrf.mxu0
        %v2218 = vadd.f32 %v2053, %v2217
        %2219 = vmatmul.bf16.gmra.mxu0 %v1792
        %v2220 = vpop.f32.mrf.mxu0
        %v2221 = vadd.f32 %v2056, %v2220
        %v2222 = vpop.f32.mrf.mxu0
        %v2223 = vadd.f32 %v2058, %v2222
        %2224 = vmatmul.bf16.gmra.mxu0 %v1793
        %v2225 = vpop.f32.mrf.mxu0
        %v2226 = vadd.f32 %v2061, %v2225
        %v2227 = vpop.f32.mrf.mxu0
        %v2228 = vadd.f32 %v2063, %v2227
        %2229 = vmatmul.bf16.gmra.mxu0 %v1794
        %v2230 = vpop.f32.mrf.mxu0
        %v2231 = vadd.f32 %v2066, %v2230
        %v2232 = vpop.f32.mrf.mxu0
        %v2233 = vadd.f32 %v2068, %v2232
        %2234 = vmatmul.bf16.gmra.mxu0 %v1795
        %v2235 = vpop.f32.mrf.mxu0
        %v2236 = vadd.f32 %v2071, %v2235
        %v2237 = vpop.f32.mrf.mxu0
        %v2238 = vadd.f32 %v2073, %v2237
        %2239 = vmatmul.bf16.gmra.mxu0 %v1796
        %v2240 = vpop.f32.mrf.mxu0
        %v2241 = vadd.f32 %v2076, %v2240
        %v2242 = vpop.f32.mrf.mxu0
        %v2243 = vadd.f32 %v2078, %v2242
        %2244 = vmatmul.bf16.gmra.mxu0 %v1797
        %v2245 = vpop.f32.mrf.mxu0
        %v2246 = vadd.f32 %v2081, %v2245
        %v2247 = vpop.f32.mrf.mxu0
        %v2248 = vadd.f32 %v2083, %v2247
        %2249 = vmatmul.bf16.gmra.mxu0 %v1798
        %v2250 = vpop.f32.mrf.mxu0
        %v2251 = vadd.f32 %v2086, %v2250
        %v2252 = vpop.f32.mrf.mxu0
        %v2253 = vadd.f32 %v2088, %v2252
        %2254 = vmatmul.bf16.gmra.mxu0 %v1799
        %v2255 = vpop.f32.mrf.mxu0
        %v2256 = vadd.f32 %v2091, %v2255
        %v2257 = vpop.f32.mrf.mxu0
        %v2258 = vadd.f32 %v2093, %v2257
        %2259 = vmatmul.bf16.gmra.mxu0 %v1800
        %v2260 = vpop.f32.mrf.mxu0
        %v2261 = vadd.f32 %v2096, %v2260
        %v2262 = vpop.f32.mrf.mxu0
        %v2263 = vadd.f32 %v2098, %v2262
        %2264 = vmatmul.bf16.gmra.mxu0 %v1801
        %v2265 = vpop.f32.mrf.mxu0
        %v2266 = vadd.f32 %v2101, %v2265
        %v2267 = vpop.f32.mrf.mxu0
        %v2268 = vadd.f32 %v2103, %v2267
        %2269 = vmatmul.bf16.gmra.mxu0 %v1802
        %v2270 = vpop.f32.mrf.mxu0
        %v2271 = vadd.f32 %v2106, %v2270
        %v2272 = vpop.f32.mrf.mxu0
        %v2273 = vadd.f32 %v2108, %v2272
        %2274 = vmatmul.bf16.gmra.mxu0 %v1803
        %v2275 = vpop.f32.mrf.mxu0
        %v2276 = vadd.f32 %v2111, %v2275
        %v2277 = vpop.f32.mrf.mxu0
        %v2278 = vadd.f32 %v2113, %v2277
        %2279 = vmatmul.bf16.gmra.mxu0 %v1804
        %v2280 = vpop.f32.mrf.mxu0
        %v2281 = vadd.f32 %v2116, %v2280
        %v2282 = vpop.f32.mrf.mxu0
        %v2283 = vadd.f32 %v2118, %v2282
        %2284 = vdwg.mxu0
        %v2285 = vld [vmem:[#allocation2] sm:$0xe]
        %s2286 = scalar_lea.vmem %s1, 128
        %v2287 = vld [vmem:[%s2286] sm:$0xf]
        %v2288 = vld [vmem:[%s2286 + $0x4] sm:$0xf]
        %v2289 = vld [vmem:[%s2286 + $0x8] sm:$0xf]
        %v2290 = vld [vmem:[%s2286 + $0xc] sm:$0xf]
        %v2291 = vld [vmem:[%s2286 + $0x10] sm:$0xf]
        %v2292 = vld [vmem:[%s2286 + $0x14] sm:$0xf]
        %v2293 = vld [vmem:[%s2286 + $0x18] sm:$0xf]
        %v2294 = vld [vmem:[%s2286 + $0x1c] sm:$0xf]
        %v2295 = vld [vmem:[%s2286 + $0x20] sm:$0xf]
        %v2296 = vld [vmem:[%s2286 + $0x24] sm:$0xf]
        %v2297 = vld [vmem:[%s2286 + $0x28] sm:$0xf]
        %v2298 = vld [vmem:[%s2286 + $0x2c] sm:$0xf]
        %v2299 = vld [vmem:[%s2286 + $0x30] sm:$0xf]
        %v2300 = vld [vmem:[%s2286 + $0x34] sm:$0xf]
        %v2301 = vld [vmem:[%s2286 + $0x38] sm:$0xf]
        %v2302 = vld [vmem:[%s2286 + $0x3c] sm:$0xf]
        %v2304 = vunpack.c.l.b16 %v2285
        %v2305 = vpack.c.b16 %v1751, %v2304
        %vm2306 = vcmask 1046528
        %v2307 = vrot.slane %v2305, 1
        %v2308 = vrot.slane %v1788, 1
        %v2309 = vsel %vm2306, %v2307, %v2308
        %v2310 = vrot.slane %v1789, 1
        %v2311 = vsel %vm2306, %v2308, %v2310
        %v2312 = vrot.slane %v1790, 1
        %v2313 = vsel %vm2306, %v2310, %v2312
        %v2314 = vrot.slane %v1791, 1
        %v2315 = vsel %vm2306, %v2312, %v2314
        %v2316 = vrot.slane %v1792, 1
        %v2317 = vsel %vm2306, %v2314, %v2316
        %v2318 = vrot.slane %v1793, 1
        %v2319 = vsel %vm2306, %v2316, %v2318
        %v2320 = vrot.slane %v1794, 1
        %v2321 = vsel %vm2306, %v2318, %v2320
        %v2322 = vrot.slane %v1795, 1
        %v2323 = vsel %vm2306, %v2320, %v2322
        %v2324 = vrot.slane %v1796, 1
        %v2325 = vsel %vm2306, %v2322, %v2324
        %v2326 = vrot.slane %v1797, 1
        %v2327 = vsel %vm2306, %v2324, %v2326
        %v2328 = vrot.slane %v1798, 1
        %v2329 = vsel %vm2306, %v2326, %v2328
        %v2330 = vrot.slane %v1799, 1
        %v2331 = vsel %vm2306, %v2328, %v2330
        %v2332 = vrot.slane %v1800, 1
        %v2333 = vsel %vm2306, %v2330, %v2332
        %v2334 = vrot.slane %v1801, 1
        %v2335 = vsel %vm2306, %v2332, %v2334
        %v2336 = vrot.slane %v1802, 1
        %v2337 = vsel %vm2306, %v2334, %v2336
        %v2338 = vrot.slane %v1803, 1
        %v2339 = vsel %vm2306, %v2336, %v2338
        %v2340 = vrot.slane %v1804, 1
        %v2341 = vsel %vm2306, %v2338, %v2340
        %v2342 = vrot.slane %v1805, 1
        %v2343 = vsel %vm2306, %v2340, %v2342
        %v2378 = vunpack.c.l.b16 %v2287
        %v2379 = vunpack.c.l.b16 %v2288
        %v2380 = vunpack.c.l.b16 %v2289
        %v2381 = vunpack.c.l.b16 %v2290
        %v2382 = vunpack.c.l.b16 %v2291
        %v2383 = vunpack.c.l.b16 %v2292
        %v2384 = vunpack.c.l.b16 %v2293
        %v2385 = vunpack.c.l.b16 %v2294
        %v2386 = vunpack.c.l.b16 %v2295
        %v2387 = vunpack.c.l.b16 %v2296
        %v2388 = vunpack.c.l.b16 %v2297
        %v2389 = vunpack.c.l.b16 %v2298
        %v2390 = vunpack.c.l.b16 %v2299
        %v2391 = vunpack.c.l.b16 %v2300
        %v2392 = vunpack.c.l.b16 %v2301
        %v2393 = vunpack.c.l.b16 %v2302
        %v2394 = vpack.c.b16 %v2379, %v2378
        %v2395 = vpack.c.b16 %v2381, %v2380
        %v2396 = vpack.c.b16 %v2383, %v2382
        %v2397 = vpack.c.b16 %v2385, %v2384
        %v2398 = vpack.c.b16 %v2387, %v2386
        %v2399 = vpack.c.b16 %v2389, %v2388
        %v2400 = vpack.c.b16 %v2391, %v2390
        %v2401 = vpack.c.b16 %v2393, %v2392
        %2410 = vmatpush.bf16.msra.mxu0 %v2401
        %2411 = vmatpush.bf16.msra.mxu0 %v2400
        %2412 = vmatpush.bf16.msra.mxu0 %v2399
        %2413 = vmatpush.bf16.msra.mxu0 %v2398
        %2414 = vmatpush.bf16.msra.mxu0 %v2397
        %2415 = vmatpush.bf16.msra.mxu0 %v2396
        %2416 = vmatpush.bf16.msra.mxu0 %v2395
        %2417 = vmatpush.bf16.msra.mxu0 %v2394
        %2418 = vmatmul.bf16.gmra.mxu0 %v2309
        %v2419 = vpop.f32.mrf.mxu0
        %v2420 = vadd.f32 0.0, %v2419
        %v2421 = vpop.f32.mrf.mxu0
        %v2422 = vadd.f32 0.0, %v2421
        %2423 = vmatmul.bf16.gmra.mxu0 %v2311
        %v2424 = vpop.f32.mrf.mxu0
        %v2425 = vadd.f32 0.0, %v2424
        %v2426 = vpop.f32.mrf.mxu0
        %v2427 = vadd.f32 0.0, %v2426
        %2428 = vmatmul.bf16.gmra.mxu0 %v2313
        %v2429 = vpop.f32.mrf.mxu0
        %v2430 = vadd.f32 0.0, %v2429
        %v2431 = vpop.f32.mrf.mxu0
        %v2432 = vadd.f32 0.0, %v2431
        %2433 = vmatmul.bf16.gmra.mxu0 %v2315
        %v2434 = vpop.f32.mrf.mxu0
        %v2435 = vadd.f32 0.0, %v2434
        %v2436 = vpop.f32.mrf.mxu0
        %v2437 = vadd.f32 0.0, %v2436
        %2438 = vmatmul.bf16.gmra.mxu0 %v2317
        %v2439 = vpop.f32.mrf.mxu0
        %v2440 = vadd.f32 0.0, %v2439
        %v2441 = vpop.f32.mrf.mxu0
        %v2442 = vadd.f32 0.0, %v2441
        %2443 = vmatmul.bf16.gmra.mxu0 %v2319
        %v2444 = vpop.f32.mrf.mxu0
        %v2445 = vadd.f32 0.0, %v2444
        %v2446 = vpop.f32.mrf.mxu0
        %v2447 = vadd.f32 0.0, %v2446
        %2448 = vmatmul.bf16.gmra.mxu0 %v2321
        %v2449 = vpop.f32.mrf.mxu0
        %v2450 = vadd.f32 0.0, %v2449
        %v2451 = vpop.f32.mrf.mxu0
        %v2452 = vadd.f32 0.0, %v2451
        %2453 = vmatmul.bf16.gmra.mxu0 %v2323
        %v2454 = vpop.f32.mrf.mxu0
        %v2455 = vadd.f32 0.0, %v2454
        %v2456 = vpop.f32.mrf.mxu0
        %v2457 = vadd.f32 0.0, %v2456
        %2458 = vmatmul.bf16.gmra.mxu0 %v2325
        %v2459 = vpop.f32.mrf.mxu0
        %v2460 = vadd.f32 0.0, %v2459
        %v2461 = vpop.f32.mrf.mxu0
        %v2462 = vadd.f32 0.0, %v2461
        %2463 = vmatmul.bf16.gmra.mxu0 %v2327
        %v2464 = vpop.f32.mrf.mxu0
        %v2465 = vadd.f32 0.0, %v2464
        %v2466 = vpop.f32.mrf.mxu0
        %v2467 = vadd.f32 0.0, %v2466
        %2468 = vmatmul.bf16.gmra.mxu0 %v2329
        %v2469 = vpop.f32.mrf.mxu0
        %v2470 = vadd.f32 0.0, %v2469
        %v2471 = vpop.f32.mrf.mxu0
        %v2472 = vadd.f32 0.0, %v2471
        %2473 = vmatmul.bf16.gmra.mxu0 %v2331
        %v2474 = vpop.f32.mrf.mxu0
        %v2475 = vadd.f32 0.0, %v2474
        %v2476 = vpop.f32.mrf.mxu0
        %v2477 = vadd.f32 0.0, %v2476
        %2478 = vmatmul.bf16.gmra.mxu0 %v2333
        %v2479 = vpop.f32.mrf.mxu0
        %v2480 = vadd.f32 0.0, %v2479
        %v2481 = vpop.f32.mrf.mxu0
        %v2482 = vadd.f32 0.0, %v2481
        %2483 = vmatmul.bf16.gmra.mxu0 %v2335
        %v2484 = vpop.f32.mrf.mxu0
        %v2485 = vadd.f32 0.0, %v2484
        %v2486 = vpop.f32.mrf.mxu0
        %v2487 = vadd.f32 0.0, %v2486
        %2488 = vmatmul.bf16.gmra.mxu0 %v2337
        %v2489 = vpop.f32.mrf.mxu0
        %v2490 = vadd.f32 0.0, %v2489
        %v2491 = vpop.f32.mrf.mxu0
        %v2492 = vadd.f32 0.0, %v2491
        %2493 = vmatmul.bf16.gmra.mxu0 %v2339
        %v2494 = vpop.f32.mrf.mxu0
        %v2495 = vadd.f32 0.0, %v2494
        %v2496 = vpop.f32.mrf.mxu0
        %v2497 = vadd.f32 0.0, %v2496
        %2498 = vmatmul.bf16.gmra.mxu0 %v2341
        %v2499 = vpop.f32.mrf.mxu0
        %v2500 = vadd.f32 0.0, %v2499
        %v2501 = vpop.f32.mrf.mxu0
        %v2502 = vadd.f32 0.0, %v2501
        %2503 = vmatmul.bf16.gmra.mxu0 %v2343
        %v2504 = vpop.f32.mrf.mxu0
        %v2505 = vadd.f32 0.0, %v2504
        %v2506 = vpop.f32.mrf.mxu0
        %v2507 = vadd.f32 0.0, %v2506
        %2508 = vdwg.mxu0
        %v2509 = vadd.f32 %v2196, %v2420
        %v2510 = vadd.f32 %v2198, %v2422
        %v2511 = vadd.f32 %v2201, %v2425
        %v2512 = vadd.f32 %v2203, %v2427
        %v2513 = vadd.f32 %v2206, %v2430
        %v2514 = vadd.f32 %v2208, %v2432
        %v2515 = vadd.f32 %v2211, %v2435
        %v2516 = vadd.f32 %v2213, %v2437
        %v2517 = vadd.f32 %v2216, %v2440
        %v2518 = vadd.f32 %v2218, %v2442
        %v2519 = vadd.f32 %v2221, %v2445
        %v2520 = vadd.f32 %v2223, %v2447
        %v2521 = vadd.f32 %v2226, %v2450
        %v2522 = vadd.f32 %v2228, %v2452
        %v2523 = vadd.f32 %v2231, %v2455
        %v2524 = vadd.f32 %v2233, %v2457
        %v2525 = vadd.f32 %v2236, %v2460
        %v2526 = vadd.f32 %v2238, %v2462
        %v2527 = vadd.f32 %v2241, %v2465
        %v2528 = vadd.f32 %v2243, %v2467
        %v2529 = vadd.f32 %v2246, %v2470
        %v2530 = vadd.f32 %v2248, %v2472
        %v2531 = vadd.f32 %v2251, %v2475
        %v2532 = vadd.f32 %v2253, %v2477
        %v2533 = vadd.f32 %v2256, %v2480
        %v2534 = vadd.f32 %v2258, %v2482
        %v2535 = vadd.f32 %v2261, %v2485
        %v2536 = vadd.f32 %v2263, %v2487
        %v2537 = vadd.f32 %v2266, %v2490
        %v2538 = vadd.f32 %v2268, %v2492
        %v2539 = vadd.f32 %v2271, %v2495
        %v2540 = vadd.f32 %v2273, %v2497
        %v2541 = vadd.f32 %v2276, %v2500
        %v2542 = vadd.f32 %v2278, %v2502
        %v2543 = vadd.f32 %v2281, %v2505
        %v2544 = vadd.f32 %v2283, %v2507
        %v2545 = vld [vmem:[#allocation2 + $0x8] sm:$0xe]
        %v2546 = vld [vmem:[#allocation2 + $0xc] sm:$0xf]
        %v2547 = vld [vmem:[#allocation2 + $0x10] sm:$0xf]
        %v2548 = vld [vmem:[#allocation2 + $0x14] sm:$0xf]
        %v2549 = vld [vmem:[#allocation2 + $0x18] sm:$0xf]
        %v2550 = vld [vmem:[#allocation2 + $0x1c] sm:$0xf]
        %v2551 = vld [vmem:[#allocation2 + $0x20] sm:$0xf]
        %v2552 = vld [vmem:[#allocation2 + $0x24] sm:$0xf]
        %v2553 = vld [vmem:[#allocation2 + $0x28] sm:$0xf]
        %v2554 = vld [vmem:[#allocation2 + $0x2c] sm:$0xf]
        %v2555 = vld [vmem:[#allocation2 + $0x30] sm:$0xf]
        %v2556 = vld [vmem:[#allocation2 + $0x34] sm:$0xf]
        %v2557 = vld [vmem:[#allocation2 + $0x38] sm:$0xf]
        %v2558 = vld [vmem:[#allocation2 + $0x3c] sm:$0xf]
        %v2559 = vld [vmem:[#allocation2 + $0x40] sm:$0xf]
        %v2560 = vld [vmem:[#allocation2 + $0x44] sm:$0xf]
        %v2561 = vld [vmem:[#allocation2 + $0x48] sm:$0xf]
        %v2562 = vld [vmem:[#allocation2 + $0x4c] sm:$0xf]
        %v2563 = vld [vmem:[#allocation2 + $0x50] sm:$0xf]
        %v2564 = vld [vmem:[#allocation2 + $0x54] sm:$0xf]
        %v2565 = vld [vmem:[#allocation2 + $0x58] sm:$0xf]
        %v2566 = vld [vmem:[#allocation2 + $0x5c] sm:$0xf]
        %v2567 = vld [vmem:[#allocation2 + $0x60] sm:$0xf]
        %v2568 = vld [vmem:[#allocation2 + $0x64] sm:$0xf]
        %v2569 = vld [vmem:[#allocation2 + $0x68] sm:$0xf]
        %v2570 = vld [vmem:[#allocation2 + $0x6c] sm:$0xf]
        %v2571 = vld [vmem:[#allocation2 + $0x70] sm:$0xf]
        %v2572 = vld [vmem:[#allocation2 + $0x74] sm:$0xf]
        %v2573 = vld [vmem:[#allocation2 + $0x78] sm:$0xf]
        %v2574 = vld [vmem:[#allocation2 + $0x7c] sm:$0xf]
        %v2575 = vld [vmem:[#allocation2 + $0x80] sm:$0xf]
        %v2576 = vld [vmem:[#allocation2 + $0x84] sm:$0xf]
        %v2577 = vld [vmem:[#allocation2 + $0x88] sm:$0xf]
        %v2578 = vld [vmem:[#allocation2 + $0x8c] sm:$0xf]
        %v2579 = vld [vmem:[#allocation2 + $0x90] sm:$0xf]
        %v2580 = vld [vmem:[#allocation2 + $0x94] sm:$0xf]
        %v2581 = vld [vmem:[#allocation2 + $0x98] sm:$0x1]
        %s2582 = scalar_lea.vmem %s1, 192
        %v2583 = vld [vmem:[%s2582] sm:$0xf]
        %v2584 = vld [vmem:[%s2582 + $0x4] sm:$0xf]
        %v2585 = vld [vmem:[%s2582 + $0x8] sm:$0xf]
        %v2586 = vld [vmem:[%s2582 + $0xc] sm:$0xf]
        %v2587 = vld [vmem:[%s2582 + $0x10] sm:$0xf]
        %v2588 = vld [vmem:[%s2582 + $0x14] sm:$0xf]
        %v2589 = vld [vmem:[%s2582 + $0x18] sm:$0xf]
        %v2590 = vld [vmem:[%s2582 + $0x1c] sm:$0xf]
        %v2591 = vld [vmem:[%s2582 + $0x20] sm:$0xf]
        %v2592 = vld [vmem:[%s2582 + $0x24] sm:$0xf]
        %v2593 = vld [vmem:[%s2582 + $0x28] sm:$0xf]
        %v2594 = vld [vmem:[%s2582 + $0x2c] sm:$0xf]
        %v2595 = vld [vmem:[%s2582 + $0x30] sm:$0xf]
        %v2596 = vld [vmem:[%s2582 + $0x34] sm:$0xf]
        %v2597 = vld [vmem:[%s2582 + $0x38] sm:$0xf]
        %v2598 = vld [vmem:[%s2582 + $0x3c] sm:$0xf]
        %v2636 = vunpack.c.l.b16 %v2545
        %v2637 = vunpack.c.l.b16 %v2546
        %v2638 = vunpack.c.l.b16 %v2547
        %v2639 = vunpack.c.l.b16 %v2548
        %v2640 = vunpack.c.l.b16 %v2549
        %v2641 = vunpack.c.l.b16 %v2550
        %v2642 = vunpack.c.l.b16 %v2551
        %v2643 = vunpack.c.l.b16 %v2552
        %v2644 = vunpack.c.l.b16 %v2553
        %v2645 = vunpack.c.l.b16 %v2554
        %v2646 = vunpack.c.l.b16 %v2555
        %v2647 = vunpack.c.l.b16 %v2556
        %v2648 = vunpack.c.l.b16 %v2557
        %v2649 = vunpack.c.l.b16 %v2558
        %v2650 = vunpack.c.l.b16 %v2559
        %v2651 = vunpack.c.l.b16 %v2560
        %v2652 = vunpack.c.l.b16 %v2561
        %v2653 = vunpack.c.l.b16 %v2562
        %v2654 = vunpack.c.l.b16 %v2563
        %v2655 = vunpack.c.l.b16 %v2564
        %v2656 = vunpack.c.l.b16 %v2565
        %v2657 = vunpack.c.l.b16 %v2566
        %v2658 = vunpack.c.l.b16 %v2567
        %v2659 = vunpack.c.l.b16 %v2568
        %v2660 = vunpack.c.l.b16 %v2569
        %v2661 = vunpack.c.l.b16 %v2570
        %v2662 = vunpack.c.l.b16 %v2571
        %v2663 = vunpack.c.l.b16 %v2572
        %v2664 = vunpack.c.l.b16 %v2573
        %v2665 = vunpack.c.l.b16 %v2574
        %v2666 = vunpack.c.l.b16 %v2575
        %v2667 = vunpack.c.l.b16 %v2576
        %v2668 = vunpack.c.l.b16 %v2577
        %v2669 = vunpack.c.l.b16 %v2578
        %v2670 = vunpack.c.l.b16 %v2579
        %v2671 = vunpack.c.l.b16 %v2580
        %v2672 = vunpack.c.l.b16 %v2581
        %v2673 = vpack.c.b16 %v2637, %v2636
        %v2674 = vpack.c.b16 %v2639, %v2638
        %v2675 = vpack.c.b16 %v2641, %v2640
        %v2676 = vpack.c.b16 %v2643, %v2642
        %v2677 = vpack.c.b16 %v2645, %v2644
        %v2678 = vpack.c.b16 %v2647, %v2646
        %v2679 = vpack.c.b16 %v2649, %v2648
        %v2680 = vpack.c.b16 %v2651, %v2650
        %v2681 = vpack.c.b16 %v2653, %v2652
        %v2682 = vpack.c.b16 %v2655, %v2654
        %v2683 = vpack.c.b16 %v2657, %v2656
        %v2684 = vpack.c.b16 %v2659, %v2658
        %v2685 = vpack.c.b16 %v2661, %v2660
        %v2686 = vpack.c.b16 %v2663, %v2662
        %v2687 = vpack.c.b16 %v2665, %v2664
        %v2688 = vpack.c.b16 %v2667, %v2666
        %v2689 = vpack.c.b16 %v2669, %v2668
        %v2690 = vpack.c.b16 %v2671, %v2670
        %v2691 = vpack.c.b16 %v2672, %v2672
        %v2692 = vrot.slane %v2673, 1
        %v2693 = vrot.slane %v2674, 1
        %v2694 = vsel %vm2306, %v2692, %v2693
        %v2695 = vrot.slane %v2675, 1
        %v2696 = vsel %vm2306, %v2693, %v2695
        %v2697 = vrot.slane %v2676, 1
        %v2698 = vsel %vm2306, %v2695, %v2697
        %v2699 = vrot.slane %v2677, 1
        %v2700 = vsel %vm2306, %v2697, %v2699
        %v2701 = vrot.slane %v2678, 1
        %v2702 = vsel %vm2306, %v2699, %v2701
        %v2703 = vrot.slane %v2679, 1
        %v2704 = vsel %vm2306, %v2701, %v2703
        %v2705 = vrot.slane %v2680, 1
        %v2706 = vsel %vm2306, %v2703, %v2705
        %v2707 = vrot.slane %v2681, 1
        %v2708 = vsel %vm2306, %v2705, %v2707
        %v2709 = vrot.slane %v2682, 1
        %v2710 = vsel %vm2306, %v2707, %v2709
        %v2711 = vrot.slane %v2683, 1
        %v2712 = vsel %vm2306, %v2709, %v2711
        %v2713 = vrot.slane %v2684, 1
        %v2714 = vsel %vm2306, %v2711, %v2713
        %v2715 = vrot.slane %v2685, 1
        %v2716 = vsel %vm2306, %v2713, %v2715
        %v2717 = vrot.slane %v2686, 1
        %v2718 = vsel %vm2306, %v2715, %v2717
        %v2719 = vrot.slane %v2687, 1
        %v2720 = vsel %vm2306, %v2717, %v2719
        %v2721 = vrot.slane %v2688, 1
        %v2722 = vsel %vm2306, %v2719, %v2721
        %v2723 = vrot.slane %v2689, 1
        %v2724 = vsel %vm2306, %v2721, %v2723
        %v2725 = vrot.slane %v2690, 1
        %v2726 = vsel %vm2306, %v2723, %v2725
        %v2727 = vrot.slane %v2691, 1
        %v2728 = vsel %vm2306, %v2725, %v2727
        %v2763 = vunpack.c.l.b16 %v2583
        %v2764 = vunpack.c.l.b16 %v2584
        %v2765 = vunpack.c.l.b16 %v2585
        %v2766 = vunpack.c.l.b16 %v2586
        %v2767 = vunpack.c.l.b16 %v2587
        %v2768 = vunpack.c.l.b16 %v2588
        %v2769 = vunpack.c.l.b16 %v2589
        %v2770 = vunpack.c.l.b16 %v2590
        %v2771 = vunpack.c.l.b16 %v2591
        %v2772 = vunpack.c.l.b16 %v2592
        %v2773 = vunpack.c.l.b16 %v2593
        %v2774 = vunpack.c.l.b16 %v2594
        %v2775 = vunpack.c.l.b16 %v2595
        %v2776 = vunpack.c.l.b16 %v2596
        %v2777 = vunpack.c.l.b16 %v2597
        %v2778 = vunpack.c.l.b16 %v2598
        %v2779 = vpack.c.b16 %v2764, %v2763
        %v2780 = vpack.c.b16 %v2766, %v2765
        %v2781 = vpack.c.b16 %v2768, %v2767
        %v2782 = vpack.c.b16 %v2770, %v2769
        %v2783 = vpack.c.b16 %v2772, %v2771
        %v2784 = vpack.c.b16 %v2774, %v2773
        %v2785 = vpack.c.b16 %v2776, %v2775
        %v2786 = vpack.c.b16 %v2778, %v2777
        %2795 = vmatpush.bf16.msra.mxu0 %v2786
        %2796 = vmatpush.bf16.msra.mxu0 %v2785
        %2797 = vmatpush.bf16.msra.mxu0 %v2784
        %2798 = vmatpush.bf16.msra.mxu0 %v2783
        %2799 = vmatpush.bf16.msra.mxu0 %v2782
        %2800 = vmatpush.bf16.msra.mxu0 %v2781
        %2801 = vmatpush.bf16.msra.mxu0 %v2780
        %2802 = vmatpush.bf16.msra.mxu0 %v2779
        %2803 = vmatmul.bf16.gmra.mxu0 %v2694
        %v2804 = vpop.f32.mrf.mxu0
        %v2805 = vadd.f32 0.0, %v2804
        %v2806 = vpop.f32.mrf.mxu0
        %v2807 = vadd.f32 0.0, %v2806
        %2808 = vmatmul.bf16.gmra.mxu0 %v2696
        %v2809 = vpop.f32.mrf.mxu0
        %v2810 = vadd.f32 0.0, %v2809
        %v2811 = vpop.f32.mrf.mxu0
        %v2812 = vadd.f32 0.0, %v2811
        %2813 = vmatmul.bf16.gmra.mxu0 %v2698
        %v2814 = vpop.f32.mrf.mxu0
        %v2815 = vadd.f32 0.0, %v2814
        %v2816 = vpop.f32.mrf.mxu0
        %v2817 = vadd.f32 0.0, %v2816
        %2818 = vmatmul.bf16.gmra.mxu0 %v2700
        %v2819 = vpop.f32.mrf.mxu0
        %v2820 = vadd.f32 0.0, %v2819
        %v2821 = vpop.f32.mrf.mxu0
        %v2822 = vadd.f32 0.0, %v2821
        %2823 = vmatmul.bf16.gmra.mxu0 %v2702
        %v2824 = vpop.f32.mrf.mxu0
        %v2825 = vadd.f32 0.0, %v2824
        %v2826 = vpop.f32.mrf.mxu0
        %v2827 = vadd.f32 0.0, %v2826
        %2828 = vmatmul.bf16.gmra.mxu0 %v2704
        %v2829 = vpop.f32.mrf.mxu0
        %v2830 = vadd.f32 0.0, %v2829
        %v2831 = vpop.f32.mrf.mxu0
        %v2832 = vadd.f32 0.0, %v2831
        %2833 = vmatmul.bf16.gmra.mxu0 %v2706
        %v2834 = vpop.f32.mrf.mxu0
        %v2835 = vadd.f32 0.0, %v2834
        %v2836 = vpop.f32.mrf.mxu0
        %v2837 = vadd.f32 0.0, %v2836
        %2838 = vmatmul.bf16.gmra.mxu0 %v2708
        %v2839 = vpop.f32.mrf.mxu0
        %v2840 = vadd.f32 0.0, %v2839
        %v2841 = vpop.f32.mrf.mxu0
        %v2842 = vadd.f32 0.0, %v2841
        %2843 = vmatmul.bf16.gmra.mxu0 %v2710
        %v2844 = vpop.f32.mrf.mxu0
        %v2845 = vadd.f32 0.0, %v2844
        %v2846 = vpop.f32.mrf.mxu0
        %v2847 = vadd.f32 0.0, %v2846
        %2848 = vmatmul.bf16.gmra.mxu0 %v2712
        %v2849 = vpop.f32.mrf.mxu0
        %v2850 = vadd.f32 0.0, %v2849
        %v2851 = vpop.f32.mrf.mxu0
        %v2852 = vadd.f32 0.0, %v2851
        %2853 = vmatmul.bf16.gmra.mxu0 %v2714
        %v2854 = vpop.f32.mrf.mxu0
        %v2855 = vadd.f32 0.0, %v2854
        %v2856 = vpop.f32.mrf.mxu0
        %v2857 = vadd.f32 0.0, %v2856
        %2858 = vmatmul.bf16.gmra.mxu0 %v2716
        %v2859 = vpop.f32.mrf.mxu0
        %v2860 = vadd.f32 0.0, %v2859
        %v2861 = vpop.f32.mrf.mxu0
        %v2862 = vadd.f32 0.0, %v2861
        %2863 = vmatmul.bf16.gmra.mxu0 %v2718
        %v2864 = vpop.f32.mrf.mxu0
        %v2865 = vadd.f32 0.0, %v2864
        %v2866 = vpop.f32.mrf.mxu0
        %v2867 = vadd.f32 0.0, %v2866
        %2868 = vmatmul.bf16.gmra.mxu0 %v2720
        %v2869 = vpop.f32.mrf.mxu0
        %v2870 = vadd.f32 0.0, %v2869
        %v2871 = vpop.f32.mrf.mxu0
        %v2872 = vadd.f32 0.0, %v2871
        %2873 = vmatmul.bf16.gmra.mxu0 %v2722
        %v2874 = vpop.f32.mrf.mxu0
        %v2875 = vadd.f32 0.0, %v2874
        %v2876 = vpop.f32.mrf.mxu0
        %v2877 = vadd.f32 0.0, %v2876
        %2878 = vmatmul.bf16.gmra.mxu0 %v2724
        %v2879 = vpop.f32.mrf.mxu0
        %v2880 = vadd.f32 0.0, %v2879
        %v2881 = vpop.f32.mrf.mxu0
        %v2882 = vadd.f32 0.0, %v2881
        %2883 = vmatmul.bf16.gmra.mxu0 %v2726
        %v2884 = vpop.f32.mrf.mxu0
        %v2885 = vadd.f32 0.0, %v2884
        %v2886 = vpop.f32.mrf.mxu0
        %v2887 = vadd.f32 0.0, %v2886
        %2888 = vmatmul.bf16.gmra.mxu0 %v2728
        %v2889 = vpop.f32.mrf.mxu0
        %v2890 = vadd.f32 0.0, %v2889
        %v2891 = vpop.f32.mrf.mxu0
        %v2892 = vadd.f32 0.0, %v2891
        %2893 = vdwg.mxu0
        %v2894 = vadd.f32 %v2509, %v2805
        %v2895 = vadd.f32 %v2510, %v2807
        %v2896 = vadd.f32 %v2511, %v2810
        %v2897 = vadd.f32 %v2512, %v2812
        %v2898 = vadd.f32 %v2513, %v2815
        %v2899 = vadd.f32 %v2514, %v2817
        %v2900 = vadd.f32 %v2515, %v2820
        %v2901 = vadd.f32 %v2516, %v2822
        %v2902 = vadd.f32 %v2517, %v2825
        %v2903 = vadd.f32 %v2518, %v2827
        %v2904 = vadd.f32 %v2519, %v2830
        %v2905 = vadd.f32 %v2520, %v2832
        %v2906 = vadd.f32 %v2521, %v2835
        %v2907 = vadd.f32 %v2522, %v2837
        %v2908 = vadd.f32 %v2523, %v2840
        %v2909 = vadd.f32 %v2524, %v2842
        %v2910 = vadd.f32 %v2525, %v2845
        %v2911 = vadd.f32 %v2526, %v2847
        %v2912 = vadd.f32 %v2527, %v2850
        %v2913 = vadd.f32 %v2528, %v2852
        %v2914 = vadd.f32 %v2529, %v2855
        %v2915 = vadd.f32 %v2530, %v2857
        %v2916 = vadd.f32 %v2531, %v2860
        %v2917 = vadd.f32 %v2532, %v2862
        %v2918 = vadd.f32 %v2533, %v2865
        %v2919 = vadd.f32 %v2534, %v2867
        %v2920 = vadd.f32 %v2535, %v2870
        %v2921 = vadd.f32 %v2536, %v2872
        %v2922 = vadd.f32 %v2537, %v2875
        %v2923 = vadd.f32 %v2538, %v2877
        %v2924 = vadd.f32 %v2539, %v2880
        %v2925 = vadd.f32 %v2540, %v2882
        %v2926 = vadd.f32 %v2541, %v2885
        %v2927 = vadd.f32 %v2542, %v2887
        %v2928 = vadd.f32 %v2543, %v2890
        %v2929 = vadd.f32 %v2544, %v2892
        %v2930 = vld [vmem:[#allocation2 + $0x98] sm:$0x3]
        %s2931 = scalar_lea.vmem %s1, 256
        %v2932 = vld [vmem:[%s2931] sm:$0xf]
        %v2933 = vld [vmem:[%s2931 + $0x4] sm:$0xf]
        %v2934 = vld [vmem:[%s2931 + $0x8] sm:$0xf]
        %v2935 = vld [vmem:[%s2931 + $0xc] sm:$0xf]
        %v2936 = vld [vmem:[%s2931 + $0x10] sm:$0xf]
        %v2937 = vld [vmem:[%s2931 + $0x14] sm:$0xf]
        %v2938 = vld [vmem:[%s2931 + $0x18] sm:$0xf]
        %v2939 = vld [vmem:[%s2931 + $0x1c] sm:$0xf]
        %v2940 = vld [vmem:[%s2931 + $0x20] sm:$0xf]
        %v2941 = vld [vmem:[%s2931 + $0x24] sm:$0xf]
        %v2942 = vld [vmem:[%s2931 + $0x28] sm:$0xf]
        %v2943 = vld [vmem:[%s2931 + $0x2c] sm:$0xf]
        %v2944 = vld [vmem:[%s2931 + $0x30] sm:$0xf]
        %v2945 = vld [vmem:[%s2931 + $0x34] sm:$0xf]
        %v2946 = vld [vmem:[%s2931 + $0x38] sm:$0xf]
        %v2947 = vld [vmem:[%s2931 + $0x3c] sm:$0xf]
        %v2949 = vunpack.c.l.b16 %v2930
        %v2950 = vpack.c.b16 %v2949, %v2949
        %vm2951 = vsmask.f32 6400
        %v2953 = vshrl.u32 %v2673, 16
        %v2955 = vrot.slane %v2953, 1
        %v2956 = vshll.u32 %v2673, 16
        %v2958 = vrot.slane %v2956, 2
        %v2959 = vor.u32 %v2955, %v2958
        %v2961 = vshrl.u32 %v2674, 16
        %v2963 = vrot.slane %v2961, 1
        %v2964 = vshll.u32 %v2674, 16
        %v2966 = vrot.slane %v2964, 2
        %v2967 = vor.u32 %v2963, %v2966
        %v2968 = vsel %vm2951, %v2959, %v2967
        %v2970 = vshrl.u32 %v2675, 16
        %v2972 = vrot.slane %v2970, 1
        %v2973 = vshll.u32 %v2675, 16
        %v2975 = vrot.slane %v2973, 2
        %v2976 = vor.u32 %v2972, %v2975
        %v2977 = vsel %vm2951, %v2967, %v2976
        %v2979 = vshrl.u32 %v2676, 16
        %v2981 = vrot.slane %v2979, 1
        %v2982 = vshll.u32 %v2676, 16
        %v2984 = vrot.slane %v2982, 2
        %v2985 = vor.u32 %v2981, %v2984
        %v2986 = vsel %vm2951, %v2976, %v2985
        %v2988 = vshrl.u32 %v2677, 16
        %v2990 = vrot.slane %v2988, 1
        %v2991 = vshll.u32 %v2677, 16
        %v2993 = vrot.slane %v2991, 2
        %v2994 = vor.u32 %v2990, %v2993
        %v2995 = vsel %vm2951, %v2985, %v2994
        %v2997 = vshrl.u32 %v2678, 16
        %v2999 = vrot.slane %v2997, 1
        %v3000 = vshll.u32 %v2678, 16
        %v3002 = vrot.slane %v3000, 2
        %v3003 = vor.u32 %v2999, %v3002
        %v3004 = vsel %vm2951, %v2994, %v3003
        %v3006 = vshrl.u32 %v2679, 16
        %v3008 = vrot.slane %v3006, 1
        %v3009 = vshll.u32 %v2679, 16
        %v3011 = vrot.slane %v3009, 2
        %v3012 = vor.u32 %v3008, %v3011
        %v3013 = vsel %vm2951, %v3003, %v3012
        %v3015 = vshrl.u32 %v2680, 16
        %v3017 = vrot.slane %v3015, 1
        %v3018 = vshll.u32 %v2680, 16
        %v3020 = vrot.slane %v3018, 2
        %v3021 = vor.u32 %v3017, %v3020
        %v3022 = vsel %vm2951, %v3012, %v3021
        %v3024 = vshrl.u32 %v2681, 16
        %v3026 = vrot.slane %v3024, 1
        %v3027 = vshll.u32 %v2681, 16
        %v3029 = vrot.slane %v3027, 2
        %v3030 = vor.u32 %v3026, %v3029
        %v3031 = vsel %vm2951, %v3021, %v3030
        %v3033 = vshrl.u32 %v2682, 16
        %v3035 = vrot.slane %v3033, 1
        %v3036 = vshll.u32 %v2682, 16
        %v3038 = vrot.slane %v3036, 2
        %v3039 = vor.u32 %v3035, %v3038
        %v3040 = vsel %vm2951, %v3030, %v3039
        %v3042 = vshrl.u32 %v2683, 16
        %v3044 = vrot.slane %v3042, 1
        %v3045 = vshll.u32 %v2683, 16
        %v3047 = vrot.slane %v3045, 2
        %v3048 = vor.u32 %v3044, %v3047
        %v3049 = vsel %vm2951, %v3039, %v3048
        %v3051 = vshrl.u32 %v2684, 16
        %v3053 = vrot.slane %v3051, 1
        %v3054 = vshll.u32 %v2684, 16
        %v3056 = vrot.slane %v3054, 2
        %v3057 = vor.u32 %v3053, %v3056
        %v3058 = vsel %vm2951, %v3048, %v3057
        %v3060 = vshrl.u32 %v2685, 16
        %v3062 = vrot.slane %v3060, 1
        %v3063 = vshll.u32 %v2685, 16
        %v3065 = vrot.slane %v3063, 2
        %v3066 = vor.u32 %v3062, %v3065
        %v3067 = vsel %vm2951, %v3057, %v3066
        %v3069 = vshrl.u32 %v2686, 16
        %v3071 = vrot.slane %v3069, 1
        %v3072 = vshll.u32 %v2686, 16
        %v3074 = vrot.slane %v3072, 2
        %v3075 = vor.u32 %v3071, %v3074
        %v3076 = vsel %vm2951, %v3066, %v3075
        %v3078 = vshrl.u32 %v2687, 16
        %v3080 = vrot.slane %v3078, 1
        %v3081 = vshll.u32 %v2687, 16
        %v3083 = vrot.slane %v3081, 2
        %v3084 = vor.u32 %v3080, %v3083
        %v3085 = vsel %vm2951, %v3075, %v3084
        %v3087 = vshrl.u32 %v2688, 16
        %v3089 = vrot.slane %v3087, 1
        %v3090 = vshll.u32 %v2688, 16
        %v3092 = vrot.slane %v3090, 2
        %v3093 = vor.u32 %v3089, %v3092
        %v3094 = vsel %vm2951, %v3084, %v3093
        %v3096 = vshrl.u32 %v2689, 16
        %v3098 = vrot.slane %v3096, 1
        %v3099 = vshll.u32 %v2689, 16
        %v3101 = vrot.slane %v3099, 2
        %v3102 = vor.u32 %v3098, %v3101
        %v3103 = vsel %vm2951, %v3093, %v3102
        %v3105 = vshrl.u32 %v2690, 16
        %v3107 = vrot.slane %v3105, 1
        %v3108 = vshll.u32 %v2690, 16
        %v3110 = vrot.slane %v3108, 2
        %v3111 = vor.u32 %v3107, %v3110
        %v3112 = vsel %vm2951, %v3102, %v3111
        %v3114 = vshrl.u32 %v2950, 16
        %v3116 = vrot.slane %v3114, 1
        %v3117 = vshll.u32 %v2950, 16
        %v3119 = vrot.slane %v3117, 2
        %v3120 = vor.u32 %v3116, %v3119
        %v3121 = vsel %vm2951, %v3111, %v3120
        %v3156 = vunpack.c.l.b16 %v2932
        %v3157 = vunpack.c.l.b16 %v2933
        %v3158 = vunpack.c.l.b16 %v2934
        %v3159 = vunpack.c.l.b16 %v2935
        %v3160 = vunpack.c.l.b16 %v2936
        %v3161 = vunpack.c.l.b16 %v2937
        %v3162 = vunpack.c.l.b16 %v2938
        %v3163 = vunpack.c.l.b16 %v2939
        %v3164 = vunpack.c.l.b16 %v2940
        %v3165 = vunpack.c.l.b16 %v2941
        %v3166 = vunpack.c.l.b16 %v2942
        %v3167 = vunpack.c.l.b16 %v2943
        %v3168 = vunpack.c.l.b16 %v2944
        %v3169 = vunpack.c.l.b16 %v2945
        %v3170 = vunpack.c.l.b16 %v2946
        %v3171 = vunpack.c.l.b16 %v2947
        %v3172 = vpack.c.b16 %v3157, %v3156
        %v3173 = vpack.c.b16 %v3159, %v3158
        %v3174 = vpack.c.b16 %v3161, %v3160
        %v3175 = vpack.c.b16 %v3163, %v3162
        %v3176 = vpack.c.b16 %v3165, %v3164
        %v3177 = vpack.c.b16 %v3167, %v3166
        %v3178 = vpack.c.b16 %v3169, %v3168
        %v3179 = vpack.c.b16 %v3171, %v3170
        %3188 = vmatpush.bf16.msra.mxu0 %v3179
        %3189 = vmatpush.bf16.msra.mxu0 %v3178
        %3190 = vmatpush.bf16.msra.mxu0 %v3177
        %3191 = vmatpush.bf16.msra.mxu0 %v3176
        %3192 = vmatpush.bf16.msra.mxu0 %v3175
        %3193 = vmatpush.bf16.msra.mxu0 %v3174
        %3194 = vmatpush.bf16.msra.mxu0 %v3173
        %3195 = vmatpush.bf16.msra.mxu0 %v3172
        %3196 = vmatmul.bf16.gmra.mxu0 %v2968
        %v3197 = vpop.f32.mrf.mxu0
        %v3198 = vadd.f32 0.0, %v3197
        %v3199 = vpop.f32.mrf.mxu0
        %v3200 = vadd.f32 0.0, %v3199
        %3201 = vmatmul.bf16.gmra.mxu0 %v2977
        %v3202 = vpop.f32.mrf.mxu0
        %v3203 = vadd.f32 0.0, %v3202
        %v3204 = vpop.f32.mrf.mxu0
        %v3205 = vadd.f32 0.0, %v3204
        %3206 = vmatmul.bf16.gmra.mxu0 %v2986
        %v3207 = vpop.f32.mrf.mxu0
        %v3208 = vadd.f32 0.0, %v3207
        %v3209 = vpop.f32.mrf.mxu0
        %v3210 = vadd.f32 0.0, %v3209
        %3211 = vmatmul.bf16.gmra.mxu0 %v2995
        %v3212 = vpop.f32.mrf.mxu0
        %v3213 = vadd.f32 0.0, %v3212
        %v3214 = vpop.f32.mrf.mxu0
        %v3215 = vadd.f32 0.0, %v3214
        %3216 = vmatmul.bf16.gmra.mxu0 %v3004
        %v3217 = vpop.f32.mrf.mxu0
        %v3218 = vadd.f32 0.0, %v3217
        %v3219 = vpop.f32.mrf.mxu0
        %v3220 = vadd.f32 0.0, %v3219
        %3221 = vmatmul.bf16.gmra.mxu0 %v3013
        %v3222 = vpop.f32.mrf.mxu0
        %v3223 = vadd.f32 0.0, %v3222
        %v3224 = vpop.f32.mrf.mxu0
        %v3225 = vadd.f32 0.0, %v3224
        %3226 = vmatmul.bf16.gmra.mxu0 %v3022
        %v3227 = vpop.f32.mrf.mxu0
        %v3228 = vadd.f32 0.0, %v3227
        %v3229 = vpop.f32.mrf.mxu0
        %v3230 = vadd.f32 0.0, %v3229
        %3231 = vmatmul.bf16.gmra.mxu0 %v3031
        %v3232 = vpop.f32.mrf.mxu0
        %v3233 = vadd.f32 0.0, %v3232
        %v3234 = vpop.f32.mrf.mxu0
        %v3235 = vadd.f32 0.0, %v3234
        %3236 = vmatmul.bf16.gmra.mxu0 %v3040
        %v3237 = vpop.f32.mrf.mxu0
        %v3238 = vadd.f32 0.0, %v3237
        %v3239 = vpop.f32.mrf.mxu0
        %v3240 = vadd.f32 0.0, %v3239
        %3241 = vmatmul.bf16.gmra.mxu0 %v3049
        %v3242 = vpop.f32.mrf.mxu0
        %v3243 = vadd.f32 0.0, %v3242
        %v3244 = vpop.f32.mrf.mxu0
        %v3245 = vadd.f32 0.0, %v3244
        %3246 = vmatmul.bf16.gmra.mxu0 %v3058
        %v3247 = vpop.f32.mrf.mxu0
        %v3248 = vadd.f32 0.0, %v3247
        %v3249 = vpop.f32.mrf.mxu0
        %v3250 = vadd.f32 0.0, %v3249
        %3251 = vmatmul.bf16.gmra.mxu0 %v3067
        %v3252 = vpop.f32.mrf.mxu0
        %v3253 = vadd.f32 0.0, %v3252
        %v3254 = vpop.f32.mrf.mxu0
        %v3255 = vadd.f32 0.0, %v3254
        %3256 = vmatmul.bf16.gmra.mxu0 %v3076
        %v3257 = vpop.f32.mrf.mxu0
        %v3258 = vadd.f32 0.0, %v3257
        %v3259 = vpop.f32.mrf.mxu0
        %v3260 = vadd.f32 0.0, %v3259
        %3261 = vmatmul.bf16.gmra.mxu0 %v3085
        %v3262 = vpop.f32.mrf.mxu0
        %v3263 = vadd.f32 0.0, %v3262
        %v3264 = vpop.f32.mrf.mxu0
        %v3265 = vadd.f32 0.0, %v3264
        %3266 = vmatmul.bf16.gmra.mxu0 %v3094
        %v3267 = vpop.f32.mrf.mxu0
        %v3268 = vadd.f32 0.0, %v3267
        %v3269 = vpop.f32.mrf.mxu0
        %v3270 = vadd.f32 0.0, %v3269
        %3271 = vmatmul.bf16.gmra.mxu0 %v3103
        %v3272 = vpop.f32.mrf.mxu0
        %v3273 = vadd.f32 0.0, %v3272
        %v3274 = vpop.f32.mrf.mxu0
        %v3275 = vadd.f32 0.0, %v3274
        %3276 = vmatmul.bf16.gmra.mxu0 %v3112
        %v3277 = vpop.f32.mrf.mxu0
        %v3278 = vadd.f32 0.0, %v3277
        %v3279 = vpop.f32.mrf.mxu0
        %v3280 = vadd.f32 0.0, %v3279
        %3281 = vmatmul.bf16.gmra.mxu0 %v3121
        %v3282 = vpop.f32.mrf.mxu0
        %v3283 = vadd.f32 0.0, %v3282
        %v3284 = vpop.f32.mrf.mxu0
        %v3285 = vadd.f32 0.0, %v3284
        %3286 = vdwg.mxu0
        %v3287 = vadd.f32 %v2894, %v3198
        %v3288 = vadd.f32 %v2895, %v3200
        %v3289 = vadd.f32 %v2896, %v3203
        %v3290 = vadd.f32 %v2897, %v3205
        %v3291 = vadd.f32 %v2898, %v3208
        %v3292 = vadd.f32 %v2899, %v3210
        %v3293 = vadd.f32 %v2900, %v3213
        %v3294 = vadd.f32 %v2901, %v3215
        %v3295 = vadd.f32 %v2902, %v3218
        %v3296 = vadd.f32 %v2903, %v3220
        %v3297 = vadd.f32 %v2904, %v3223
        %v3298 = vadd.f32 %v2905, %v3225
        %v3299 = vadd.f32 %v2906, %v3228
        %v3300 = vadd.f32 %v2907, %v3230
        %v3301 = vadd.f32 %v2908, %v3233
        %v3302 = vadd.f32 %v2909, %v3235
        %v3303 = vadd.f32 %v2910, %v3238
        %v3304 = vadd.f32 %v2911, %v3240
        %v3305 = vadd.f32 %v2912, %v3243
        %v3306 = vadd.f32 %v2913, %v3245
        %v3307 = vadd.f32 %v2914, %v3248
        %v3308 = vadd.f32 %v2915, %v3250
        %v3309 = vadd.f32 %v2916, %v3253
        %v3310 = vadd.f32 %v2917, %v3255
        %v3311 = vadd.f32 %v2918, %v3258
        %v3312 = vadd.f32 %v2919, %v3260
        %v3313 = vadd.f32 %v2920, %v3263
        %v3314 = vadd.f32 %v2921, %v3265
        %v3315 = vadd.f32 %v2922, %v3268
        %v3316 = vadd.f32 %v2923, %v3270
        %v3317 = vadd.f32 %v2924, %v3273
        %v3318 = vadd.f32 %v2925, %v3275
        %v3319 = vadd.f32 %v2926, %v3278
        %v3320 = vadd.f32 %v2927, %v3280
        %v3321 = vadd.f32 %v2928, %v3283
        %v3322 = vadd.f32 %v2929, %v3285
        %v3323 = vld [vmem:[#allocation2 + $0x8] sm:$0xc]
        %s3324 = scalar_lea.vmem %s1, 320
        %v3325 = vld [vmem:[%s3324] sm:$0xf]
        %v3326 = vld [vmem:[%s3324 + $0x4] sm:$0xf]
        %v3327 = vld [vmem:[%s3324 + $0x8] sm:$0xf]
        %v3328 = vld [vmem:[%s3324 + $0xc] sm:$0xf]
        %v3329 = vld [vmem:[%s3324 + $0x10] sm:$0xf]
        %v3330 = vld [vmem:[%s3324 + $0x14] sm:$0xf]
        %v3331 = vld [vmem:[%s3324 + $0x18] sm:$0xf]
        %v3332 = vld [vmem:[%s3324 + $0x1c] sm:$0xf]
        %v3333 = vld [vmem:[%s3324 + $0x20] sm:$0xf]
        %v3334 = vld [vmem:[%s3324 + $0x24] sm:$0xf]
        %v3335 = vld [vmem:[%s3324 + $0x28] sm:$0xf]
        %v3336 = vld [vmem:[%s3324 + $0x2c] sm:$0xf]
        %v3337 = vld [vmem:[%s3324 + $0x30] sm:$0xf]
        %v3338 = vld [vmem:[%s3324 + $0x34] sm:$0xf]
        %v3339 = vld [vmem:[%s3324 + $0x38] sm:$0xf]
        %v3340 = vld [vmem:[%s3324 + $0x3c] sm:$0xf]
        %v3342 = vunpack.c.l.b16 %v3323
        %v3343 = vpack.c.b16 %v2637, %v3342
        %vm3344 = vcmask 1045504
        %v3345 = vrot.slane %v3343, 2
        %v3346 = vrot.slane %v2674, 2
        %v3347 = vsel %vm3344, %v3345, %v3346
        %v3348 = vrot.slane %v2675, 2
        %v3349 = vsel %vm3344, %v3346, %v3348
        %v3350 = vrot.slane %v2676, 2
        %v3351 = vsel %vm3344, %v3348, %v3350
        %v3352 = vrot.slane %v2677, 2
        %v3353 = vsel %vm3344, %v3350, %v3352
        %v3354 = vrot.slane %v2678, 2
        %v3355 = vsel %vm3344, %v3352, %v3354
        %v3356 = vrot.slane %v2679, 2
        %v3357 = vsel %vm3344, %v3354, %v3356
        %v3358 = vrot.slane %v2680, 2
        %v3359 = vsel %vm3344, %v3356, %v3358
        %v3360 = vrot.slane %v2681, 2
        %v3361 = vsel %vm3344, %v3358, %v3360
        %v3362 = vrot.slane %v2682, 2
        %v3363 = vsel %vm3344, %v3360, %v3362
        %v3364 = vrot.slane %v2683, 2
        %v3365 = vsel %vm3344, %v3362, %v3364
        %v3366 = vrot.slane %v2684, 2
        %v3367 = vsel %vm3344, %v3364, %v3366
        %v3368 = vrot.slane %v2685, 2
        %v3369 = vsel %vm3344, %v3366, %v3368
        %v3370 = vrot.slane %v2686, 2
        %v3371 = vsel %vm3344, %v3368, %v3370
        %v3372 = vrot.slane %v2687, 2
        %v3373 = vsel %vm3344, %v3370, %v3372
        %v3374 = vrot.slane %v2688, 2
        %v3375 = vsel %vm3344, %v3372, %v3374
        %v3376 = vrot.slane %v2689, 2
        %v3377 = vsel %vm3344, %v3374, %v3376
        %v3378 = vrot.slane %v2690, 2
        %v3379 = vsel %vm3344, %v3376, %v3378
        %v3380 = vrot.slane %v2950, 2
        %v3381 = vsel %vm3344, %v3378, %v3380
        %v3416 = vunpack.c.l.b16 %v3325
        %v3417 = vunpack.c.l.b16 %v3326
        %v3418 = vunpack.c.l.b16 %v3327
        %v3419 = vunpack.c.l.b16 %v3328
        %v3420 = vunpack.c.l.b16 %v3329
        %v3421 = vunpack.c.l.b16 %v3330
        %v3422 = vunpack.c.l.b16 %v3331
        %v3423 = vunpack.c.l.b16 %v3332
        %v3424 = vunpack.c.l.b16 %v3333
        %v3425 = vunpack.c.l.b16 %v3334
        %v3426 = vunpack.c.l.b16 %v3335
        %v3427 = vunpack.c.l.b16 %v3336
        %v3428 = vunpack.c.l.b16 %v3337
        %v3429 = vunpack.c.l.b16 %v3338
        %v3430 = vunpack.c.l.b16 %v3339
        %v3431 = vunpack.c.l.b16 %v3340
        %v3432 = vpack.c.b16 %v3417, %v3416
        %v3433 = vpack.c.b16 %v3419, %v3418
        %v3434 = vpack.c.b16 %v3421, %v3420
        %v3435 = vpack.c.b16 %v3423, %v3422
        %v3436 = vpack.c.b16 %v3425, %v3424
        %v3437 = vpack.c.b16 %v3427, %v3426
        %v3438 = vpack.c.b16 %v3429, %v3428
        %v3439 = vpack.c.b16 %v3431, %v3430
        %3448 = vmatpush.bf16.msra.mxu0 %v3439
        %3449 = vmatpush.bf16.msra.mxu0 %v3438
        %3450 = vmatpush.bf16.msra.mxu0 %v3437
        %3451 = vmatpush.bf16.msra.mxu0 %v3436
        %3452 = vmatpush.bf16.msra.mxu0 %v3435
        %3453 = vmatpush.bf16.msra.mxu0 %v3434
        %3454 = vmatpush.bf16.msra.mxu0 %v3433
        %3455 = vmatpush.bf16.msra.mxu0 %v3432
        %3456 = vmatmul.bf16.gmra.mxu0 %v3347
        %v3457 = vpop.f32.mrf.mxu0
        %v3458 = vadd.f32 0.0, %v3457
        %v3459 = vpop.f32.mrf.mxu0
        %v3460 = vadd.f32 0.0, %v3459
        %3461 = vmatmul.bf16.gmra.mxu0 %v3349
        %v3462 = vpop.f32.mrf.mxu0
        %v3463 = vadd.f32 0.0, %v3462
        %v3464 = vpop.f32.mrf.mxu0
        %v3465 = vadd.f32 0.0, %v3464
        %3466 = vmatmul.bf16.gmra.mxu0 %v3351
        %v3467 = vpop.f32.mrf.mxu0
        %v3468 = vadd.f32 0.0, %v3467
        %v3469 = vpop.f32.mrf.mxu0
        %v3470 = vadd.f32 0.0, %v3469
        %3471 = vmatmul.bf16.gmra.mxu0 %v3353
        %v3472 = vpop.f32.mrf.mxu0
        %v3473 = vadd.f32 0.0, %v3472
        %v3474 = vpop.f32.mrf.mxu0
        %v3475 = vadd.f32 0.0, %v3474
        %3476 = vmatmul.bf16.gmra.mxu0 %v3355
        %v3477 = vpop.f32.mrf.mxu0
        %v3478 = vadd.f32 0.0, %v3477
        %v3479 = vpop.f32.mrf.mxu0
        %v3480 = vadd.f32 0.0, %v3479
        %3481 = vmatmul.bf16.gmra.mxu0 %v3357
        %v3482 = vpop.f32.mrf.mxu0
        %v3483 = vadd.f32 0.0, %v3482
        %v3484 = vpop.f32.mrf.mxu0
        %v3485 = vadd.f32 0.0, %v3484
        %3486 = vmatmul.bf16.gmra.mxu0 %v3359
        %v3487 = vpop.f32.mrf.mxu0
        %v3488 = vadd.f32 0.0, %v3487
        %v3489 = vpop.f32.mrf.mxu0
        %v3490 = vadd.f32 0.0, %v3489
        %3491 = vmatmul.bf16.gmra.mxu0 %v3361
        %v3492 = vpop.f32.mrf.mxu0
        %v3493 = vadd.f32 0.0, %v3492
        %v3494 = vpop.f32.mrf.mxu0
        %v3495 = vadd.f32 0.0, %v3494
        %3496 = vmatmul.bf16.gmra.mxu0 %v3363
        %v3497 = vpop.f32.mrf.mxu0
        %v3498 = vadd.f32 0.0, %v3497
        %v3499 = vpop.f32.mrf.mxu0
        %v3500 = vadd.f32 0.0, %v3499
        %3501 = vmatmul.bf16.gmra.mxu0 %v3365
        %v3502 = vpop.f32.mrf.mxu0
        %v3503 = vadd.f32 0.0, %v3502
        %v3504 = vpop.f32.mrf.mxu0
        %v3505 = vadd.f32 0.0, %v3504
        %3506 = vmatmul.bf16.gmra.mxu0 %v3367
        %v3507 = vpop.f32.mrf.mxu0
        %v3508 = vadd.f32 0.0, %v3507
        %v3509 = vpop.f32.mrf.mxu0
        %v3510 = vadd.f32 0.0, %v3509
        %3511 = vmatmul.bf16.gmra.mxu0 %v3369
        %v3512 = vpop.f32.mrf.mxu0
        %v3513 = vadd.f32 0.0, %v3512
        %v3514 = vpop.f32.mrf.mxu0
        %v3515 = vadd.f32 0.0, %v3514
        %3516 = vmatmul.bf16.gmra.mxu0 %v3371
        %v3517 = vpop.f32.mrf.mxu0
        %v3518 = vadd.f32 0.0, %v3517
        %v3519 = vpop.f32.mrf.mxu0
        %v3520 = vadd.f32 0.0, %v3519
        %3521 = vmatmul.bf16.gmra.mxu0 %v3373
        %v3522 = vpop.f32.mrf.mxu0
        %v3523 = vadd.f32 0.0, %v3522
        %v3524 = vpop.f32.mrf.mxu0
        %v3525 = vadd.f32 0.0, %v3524
        %3526 = vmatmul.bf16.gmra.mxu0 %v3375
        %v3527 = vpop.f32.mrf.mxu0
        %v3528 = vadd.f32 0.0, %v3527
        %v3529 = vpop.f32.mrf.mxu0
        %v3530 = vadd.f32 0.0, %v3529
        %3531 = vmatmul.bf16.gmra.mxu0 %v3377
        %v3532 = vpop.f32.mrf.mxu0
        %v3533 = vadd.f32 0.0, %v3532
        %v3534 = vpop.f32.mrf.mxu0
        %v3535 = vadd.f32 0.0, %v3534
        %3536 = vmatmul.bf16.gmra.mxu0 %v3379
        %v3537 = vpop.f32.mrf.mxu0
        %v3538 = vadd.f32 0.0, %v3537
        %v3539 = vpop.f32.mrf.mxu0
        %v3540 = vadd.f32 0.0, %v3539
        %3541 = vmatmul.bf16.gmra.mxu0 %v3381
        %v3542 = vpop.f32.mrf.mxu0
        %v3543 = vadd.f32 0.0, %v3542
        %v3544 = vpop.f32.mrf.mxu0
        %v3545 = vadd.f32 0.0, %v3544
        %3546 = vdwg.mxu0
        %v3547 = vadd.f32 %v3287, %v3458
        %v3548 = vadd.f32 %v3288, %v3460
        %v3549 = vadd.f32 %v3289, %v3463
        %v3550 = vadd.f32 %v3290, %v3465
        %v3551 = vadd.f32 %v3291, %v3468
        %v3552 = vadd.f32 %v3292, %v3470
        %v3553 = vadd.f32 %v3293, %v3473
        %v3554 = vadd.f32 %v3294, %v3475
        %v3555 = vadd.f32 %v3295, %v3478
        %v3556 = vadd.f32 %v3296, %v3480
        %v3557 = vadd.f32 %v3297, %v3483
        %v3558 = vadd.f32 %v3298, %v3485
        %v3559 = vadd.f32 %v3299, %v3488
        %v3560 = vadd.f32 %v3300, %v3490
        %v3561 = vadd.f32 %v3301, %v3493
        %v3562 = vadd.f32 %v3302, %v3495
        %v3563 = vadd.f32 %v3303, %v3498
        %v3564 = vadd.f32 %v3304, %v3500
        %v3565 = vadd.f32 %v3305, %v3503
        %v3566 = vadd.f32 %v3306, %v3505
        %v3567 = vadd.f32 %v3307, %v3508
        %v3568 = vadd.f32 %v3308, %v3510
        %v3569 = vadd.f32 %v3309, %v3513
        %v3570 = vadd.f32 %v3310, %v3515
        %v3571 = vadd.f32 %v3311, %v3518
        %v3572 = vadd.f32 %v3312, %v3520
        %v3573 = vadd.f32 %v3313, %v3523
        %v3574 = vadd.f32 %v3314, %v3525
        %v3575 = vadd.f32 %v3315, %v3528
        %v3576 = vadd.f32 %v3316, %v3530
        %v3577 = vadd.f32 %v3317, %v3533
        %v3578 = vadd.f32 %v3318, %v3535
        %v3579 = vadd.f32 %v3319, %v3538
        %v3580 = vadd.f32 %v3320, %v3540
        %v3581 = vadd.f32 %v3321, %v3543
        %v3582 = vadd.f32 %v3322, %v3545
        %v3583 = vld [vmem:[#allocation2 + $0x10] sm:$0xc]
        %v3584 = vld [vmem:[#allocation2 + $0x14] sm:$0xf]
        %v3585 = vld [vmem:[#allocation2 + $0x18] sm:$0xf]
        %v3586 = vld [vmem:[#allocation2 + $0x1c] sm:$0xf]
        %v3587 = vld [vmem:[#allocation2 + $0x20] sm:$0xf]
        %v3588 = vld [vmem:[#allocation2 + $0x24] sm:$0xf]
        %v3589 = vld [vmem:[#allocation2 + $0x28] sm:$0xf]
        %v3590 = vld [vmem:[#allocation2 + $0x2c] sm:$0xf]
        %v3591 = vld [vmem:[#allocation2 + $0x30] sm:$0xf]
        %v3592 = vld [vmem:[#allocation2 + $0x34] sm:$0xf]
        %v3593 = vld [vmem:[#allocation2 + $0x38] sm:$0xf]
        %v3594 = vld [vmem:[#allocation2 + $0x3c] sm:$0xf]
        %v3595 = vld [vmem:[#allocation2 + $0x40] sm:$0xf]
        %v3596 = vld [vmem:[#allocation2 + $0x44] sm:$0xf]
        %v3597 = vld [vmem:[#allocation2 + $0x48] sm:$0xf]
        %v3598 = vld [vmem:[#allocation2 + $0x4c] sm:$0xf]
        %v3599 = vld [vmem:[#allocation2 + $0x50] sm:$0xf]
        %v3600 = vld [vmem:[#allocation2 + $0x54] sm:$0xf]
        %v3601 = vld [vmem:[#allocation2 + $0x58] sm:$0xf]
        %v3602 = vld [vmem:[#allocation2 + $0x5c] sm:$0xf]
        %v3603 = vld [vmem:[#allocation2 + $0x60] sm:$0xf]
        %v3604 = vld [vmem:[#allocation2 + $0x64] sm:$0xf]
        %v3605 = vld [vmem:[#allocation2 + $0x68] sm:$0xf]
        %v3606 = vld [vmem:[#allocation2 + $0x6c] sm:$0xf]
        %v3607 = vld [vmem:[#allocation2 + $0x70] sm:$0xf]
        %v3608 = vld [vmem:[#allocation2 + $0x74] sm:$0xf]
        %v3609 = vld [vmem:[#allocation2 + $0x78] sm:$0xf]
        %v3610 = vld [vmem:[#allocation2 + $0x7c] sm:$0xf]
        %v3611 = vld [vmem:[#allocation2 + $0x80] sm:$0xf]
        %v3612 = vld [vmem:[#allocation2 + $0x84] sm:$0xf]
        %v3613 = vld [vmem:[#allocation2 + $0x88] sm:$0xf]
        %v3614 = vld [vmem:[#allocation2 + $0x8c] sm:$0xf]
        %v3615 = vld [vmem:[#allocation2 + $0x90] sm:$0xf]
        %v3616 = vld [vmem:[#allocation2 + $0x94] sm:$0xf]
        %v3617 = vld [vmem:[#allocation2 + $0x98] sm:$0xf]
        %v3618 = vld [vmem:[#allocation2 + $0x9c] sm:$0xf]
        %v3619 = vld [vmem:[#allocation2 + $0xa0] sm:$0x3]
        %s3620 = scalar_lea.vmem %s1, 384
        %v3621 = vld [vmem:[%s3620] sm:$0xf]
        %v3622 = vld [vmem:[%s3620 + $0x4] sm:$0xf]
        %v3623 = vld [vmem:[%s3620 + $0x8] sm:$0xf]
        %v3624 = vld [vmem:[%s3620 + $0xc] sm:$0xf]
        %v3625 = vld [vmem:[%s3620 + $0x10] sm:$0xf]
        %v3626 = vld [vmem:[%s3620 + $0x14] sm:$0xf]
        %v3627 = vld [vmem:[%s3620 + $0x18] sm:$0xf]
        %v3628 = vld [vmem:[%s3620 + $0x1c] sm:$0xf]
        %v3629 = vld [vmem:[%s3620 + $0x20] sm:$0xf]
        %v3630 = vld [vmem:[%s3620 + $0x24] sm:$0xf]
        %v3631 = vld [vmem:[%s3620 + $0x28] sm:$0xf]
        %v3632 = vld [vmem:[%s3620 + $0x2c] sm:$0xf]
        %v3633 = vld [vmem:[%s3620 + $0x30] sm:$0xf]
        %v3634 = vld [vmem:[%s3620 + $0x34] sm:$0xf]
        %v3635 = vld [vmem:[%s3620 + $0x38] sm:$0xf]
        %v3636 = vld [vmem:[%s3620 + $0x3c] sm:$0xf]
        %v3674 = vunpack.c.l.b16 %v3583
        %v3675 = vunpack.c.l.b16 %v3584
        %v3676 = vunpack.c.l.b16 %v3585
        %v3677 = vunpack.c.l.b16 %v3586
        %v3678 = vunpack.c.l.b16 %v3587
        %v3679 = vunpack.c.l.b16 %v3588
        %v3680 = vunpack.c.l.b16 %v3589
        %v3681 = vunpack.c.l.b16 %v3590
        %v3682 = vunpack.c.l.b16 %v3591
        %v3683 = vunpack.c.l.b16 %v3592
        %v3684 = vunpack.c.l.b16 %v3593
        %v3685 = vunpack.c.l.b16 %v3594
        %v3686 = vunpack.c.l.b16 %v3595
        %v3687 = vunpack.c.l.b16 %v3596
        %v3688 = vunpack.c.l.b16 %v3597
        %v3689 = vunpack.c.l.b16 %v3598
        %v3690 = vunpack.c.l.b16 %v3599
        %v3691 = vunpack.c.l.b16 %v3600
        %v3692 = vunpack.c.l.b16 %v3601
        %v3693 = vunpack.c.l.b16 %v3602
        %v3694 = vunpack.c.l.b16 %v3603
        %v3695 = vunpack.c.l.b16 %v3604
        %v3696 = vunpack.c.l.b16 %v3605
        %v3697 = vunpack.c.l.b16 %v3606
        %v3698 = vunpack.c.l.b16 %v3607
        %v3699 = vunpack.c.l.b16 %v3608
        %v3700 = vunpack.c.l.b16 %v3609
        %v3701 = vunpack.c.l.b16 %v3610
        %v3702 = vunpack.c.l.b16 %v3611
        %v3703 = vunpack.c.l.b16 %v3612
        %v3704 = vunpack.c.l.b16 %v3613
        %v3705 = vunpack.c.l.b16 %v3614
        %v3706 = vunpack.c.l.b16 %v3615
        %v3707 = vunpack.c.l.b16 %v3616
        %v3708 = vunpack.c.l.b16 %v3617
        %v3709 = vunpack.c.l.b16 %v3618
        %v3710 = vunpack.c.l.b16 %v3619
        %v3711 = vpack.c.b16 %v3675, %v3674
        %v3712 = vpack.c.b16 %v3677, %v3676
        %v3713 = vpack.c.b16 %v3679, %v3678
        %v3714 = vpack.c.b16 %v3681, %v3680
        %v3715 = vpack.c.b16 %v3683, %v3682
        %v3716 = vpack.c.b16 %v3685, %v3684
        %v3717 = vpack.c.b16 %v3687, %v3686
        %v3718 = vpack.c.b16 %v3689, %v3688
        %v3719 = vpack.c.b16 %v3691, %v3690
        %v3720 = vpack.c.b16 %v3693, %v3692
        %v3721 = vpack.c.b16 %v3695, %v3694
        %v3722 = vpack.c.b16 %v3697, %v3696
        %v3723 = vpack.c.b16 %v3699, %v3698
        %v3724 = vpack.c.b16 %v3701, %v3700
        %v3725 = vpack.c.b16 %v3703, %v3702
        %v3726 = vpack.c.b16 %v3705, %v3704
        %v3727 = vpack.c.b16 %v3707, %v3706
        %v3728 = vpack.c.b16 %v3709, %v3708
        %v3729 = vpack.c.b16 %v3710, %v3710
        %v3730 = vrot.slane %v3711, 2
        %v3731 = vrot.slane %v3712, 2
        %v3732 = vsel %vm3344, %v3730, %v3731
        %v3733 = vrot.slane %v3713, 2
        %v3734 = vsel %vm3344, %v3731, %v3733
        %v3735 = vrot.slane %v3714, 2
        %v3736 = vsel %vm3344, %v3733, %v3735
        %v3737 = vrot.slane %v3715, 2
        %v3738 = vsel %vm3344, %v3735, %v3737
        %v3739 = vrot.slane %v3716, 2
        %v3740 = vsel %vm3344, %v3737, %v3739
        %v3741 = vrot.slane %v3717, 2
        %v3742 = vsel %vm3344, %v3739, %v3741
        %v3743 = vrot.slane %v3718, 2
        %v3744 = vsel %vm3344, %v3741, %v3743
        %v3745 = vrot.slane %v3719, 2
        %v3746 = vsel %vm3344, %v3743, %v3745
        %v3747 = vrot.slane %v3720, 2
        %v3748 = vsel %vm3344, %v3745, %v3747
        %v3749 = vrot.slane %v3721, 2
        %v3750 = vsel %vm3344, %v3747, %v3749
        %v3751 = vrot.slane %v3722, 2
        %v3752 = vsel %vm3344, %v3749, %v3751
        %v3753 = vrot.slane %v3723, 2
        %v3754 = vsel %vm3344, %v3751, %v3753
        %v3755 = vrot.slane %v3724, 2
        %v3756 = vsel %vm3344, %v3753, %v3755
        %v3757 = vrot.slane %v3725, 2
        %v3758 = vsel %vm3344, %v3755, %v3757
        %v3759 = vrot.slane %v3726, 2
        %v3760 = vsel %vm3344, %v3757, %v3759
        %v3761 = vrot.slane %v3727, 2
        %v3762 = vsel %vm3344, %v3759, %v3761
        %v3763 = vrot.slane %v3728, 2
        %v3764 = vsel %vm3344, %v3761, %v3763
        %v3765 = vrot.slane %v3729, 2
        %v3766 = vsel %vm3344, %v3763, %v3765
        %v3801 = vunpack.c.l.b16 %v3621
        %v3802 = vunpack.c.l.b16 %v3622
        %v3803 = vunpack.c.l.b16 %v3623
        %v3804 = vunpack.c.l.b16 %v3624
        %v3805 = vunpack.c.l.b16 %v3625
        %v3806 = vunpack.c.l.b16 %v3626
        %v3807 = vunpack.c.l.b16 %v3627
        %v3808 = vunpack.c.l.b16 %v3628
        %v3809 = vunpack.c.l.b16 %v3629
        %v3810 = vunpack.c.l.b16 %v3630
        %v3811 = vunpack.c.l.b16 %v3631
        %v3812 = vunpack.c.l.b16 %v3632
        %v3813 = vunpack.c.l.b16 %v3633
        %v3814 = vunpack.c.l.b16 %v3634
        %v3815 = vunpack.c.l.b16 %v3635
        %v3816 = vunpack.c.l.b16 %v3636
        %v3817 = vpack.c.b16 %v3802, %v3801
        %v3818 = vpack.c.b16 %v3804, %v3803
        %v3819 = vpack.c.b16 %v3806, %v3805
        %v3820 = vpack.c.b16 %v3808, %v3807
        %v3821 = vpack.c.b16 %v3810, %v3809
        %v3822 = vpack.c.b16 %v3812, %v3811
        %v3823 = vpack.c.b16 %v3814, %v3813
        %v3824 = vpack.c.b16 %v3816, %v3815
        %3833 = vmatpush.bf16.msra.mxu0 %v3824
        %3834 = vmatpush.bf16.msra.mxu0 %v3823
        %3835 = vmatpush.bf16.msra.mxu0 %v3822
        %3836 = vmatpush.bf16.msra.mxu0 %v3821
        %3837 = vmatpush.bf16.msra.mxu0 %v3820
        %3838 = vmatpush.bf16.msra.mxu0 %v3819
        %3839 = vmatpush.bf16.msra.mxu0 %v3818
        %3840 = vmatpush.bf16.msra.mxu0 %v3817
        %3841 = vmatmul.bf16.gmra.mxu0 %v3732
        %v3842 = vpop.f32.mrf.mxu0
        %v3843 = vadd.f32 0.0, %v3842
        %v3844 = vpop.f32.mrf.mxu0
        %v3845 = vadd.f32 0.0, %v3844
        %3846 = vmatmul.bf16.gmra.mxu0 %v3734
        %v3847 = vpop.f32.mrf.mxu0
        %v3848 = vadd.f32 0.0, %v3847
        %v3849 = vpop.f32.mrf.mxu0
        %v3850 = vadd.f32 0.0, %v3849
        %3851 = vmatmul.bf16.gmra.mxu0 %v3736
        %v3852 = vpop.f32.mrf.mxu0
        %v3853 = vadd.f32 0.0, %v3852
        %v3854 = vpop.f32.mrf.mxu0
        %v3855 = vadd.f32 0.0, %v3854
        %3856 = vmatmul.bf16.gmra.mxu0 %v3738
        %v3857 = vpop.f32.mrf.mxu0
        %v3858 = vadd.f32 0.0, %v3857
        %v3859 = vpop.f32.mrf.mxu0
        %v3860 = vadd.f32 0.0, %v3859
        %3861 = vmatmul.bf16.gmra.mxu0 %v3740
        %v3862 = vpop.f32.mrf.mxu0
        %v3863 = vadd.f32 0.0, %v3862
        %v3864 = vpop.f32.mrf.mxu0
        %v3865 = vadd.f32 0.0, %v3864
        %3866 = vmatmul.bf16.gmra.mxu0 %v3742
        %v3867 = vpop.f32.mrf.mxu0
        %v3868 = vadd.f32 0.0, %v3867
        %v3869 = vpop.f32.mrf.mxu0
        %v3870 = vadd.f32 0.0, %v3869
        %3871 = vmatmul.bf16.gmra.mxu0 %v3744
        %v3872 = vpop.f32.mrf.mxu0
        %v3873 = vadd.f32 0.0, %v3872
        %v3874 = vpop.f32.mrf.mxu0
        %v3875 = vadd.f32 0.0, %v3874
        %3876 = vmatmul.bf16.gmra.mxu0 %v3746
        %v3877 = vpop.f32.mrf.mxu0
        %v3878 = vadd.f32 0.0, %v3877
        %v3879 = vpop.f32.mrf.mxu0
        %v3880 = vadd.f32 0.0, %v3879
        %3881 = vmatmul.bf16.gmra.mxu0 %v3748
        %v3882 = vpop.f32.mrf.mxu0
        %v3883 = vadd.f32 0.0, %v3882
        %v3884 = vpop.f32.mrf.mxu0
        %v3885 = vadd.f32 0.0, %v3884
        %3886 = vmatmul.bf16.gmra.mxu0 %v3750
        %v3887 = vpop.f32.mrf.mxu0
        %v3888 = vadd.f32 0.0, %v3887
        %v3889 = vpop.f32.mrf.mxu0
        %v3890 = vadd.f32 0.0, %v3889
        %3891 = vmatmul.bf16.gmra.mxu0 %v3752
        %v3892 = vpop.f32.mrf.mxu0
        %v3893 = vadd.f32 0.0, %v3892
        %v3894 = vpop.f32.mrf.mxu0
        %v3895 = vadd.f32 0.0, %v3894
        %3896 = vmatmul.bf16.gmra.mxu0 %v3754
        %v3897 = vpop.f32.mrf.mxu0
        %v3898 = vadd.f32 0.0, %v3897
        %v3899 = vpop.f32.mrf.mxu0
        %v3900 = vadd.f32 0.0, %v3899
        %3901 = vmatmul.bf16.gmra.mxu0 %v3756
        %v3902 = vpop.f32.mrf.mxu0
        %v3903 = vadd.f32 0.0, %v3902
        %v3904 = vpop.f32.mrf.mxu0
        %v3905 = vadd.f32 0.0, %v3904
        %3906 = vmatmul.bf16.gmra.mxu0 %v3758
        %v3907 = vpop.f32.mrf.mxu0
        %v3908 = vadd.f32 0.0, %v3907
        %v3909 = vpop.f32.mrf.mxu0
        %v3910 = vadd.f32 0.0, %v3909
        %3911 = vmatmul.bf16.gmra.mxu0 %v3760
        %v3912 = vpop.f32.mrf.mxu0
        %v3913 = vadd.f32 0.0, %v3912
        %v3914 = vpop.f32.mrf.mxu0
        %v3915 = vadd.f32 0.0, %v3914
        %3916 = vmatmul.bf16.gmra.mxu0 %v3762
        %v3917 = vpop.f32.mrf.mxu0
        %v3918 = vadd.f32 0.0, %v3917
        %v3919 = vpop.f32.mrf.mxu0
        %v3920 = vadd.f32 0.0, %v3919
        %3921 = vmatmul.bf16.gmra.mxu0 %v3764
        %v3922 = vpop.f32.mrf.mxu0
        %v3923 = vadd.f32 0.0, %v3922
        %v3924 = vpop.f32.mrf.mxu0
        %v3925 = vadd.f32 0.0, %v3924
        %3926 = vmatmul.bf16.gmra.mxu0 %v3766
        %v3927 = vpop.f32.mrf.mxu0
        %v3928 = vadd.f32 0.0, %v3927
        %v3929 = vpop.f32.mrf.mxu0
        %v3930 = vadd.f32 0.0, %v3929
        %3931 = vdwg.mxu0
        %v3932 = vadd.f32 %v3547, %v3843
        %v3933 = vadd.f32 %v3548, %v3845
        %v3934 = vadd.f32 %v3549, %v3848
        %v3935 = vadd.f32 %v3550, %v3850
        %v3936 = vadd.f32 %v3551, %v3853
        %v3937 = vadd.f32 %v3552, %v3855
        %v3938 = vadd.f32 %v3553, %v3858
        %v3939 = vadd.f32 %v3554, %v3860
        %v3940 = vadd.f32 %v3555, %v3863
        %v3941 = vadd.f32 %v3556, %v3865
        %v3942 = vadd.f32 %v3557, %v3868
        %v3943 = vadd.f32 %v3558, %v3870
        %v3944 = vadd.f32 %v3559, %v3873
        %v3945 = vadd.f32 %v3560, %v3875
        %v3946 = vadd.f32 %v3561, %v3878
        %v3947 = vadd.f32 %v3562, %v3880
        %v3948 = vadd.f32 %v3563, %v3883
        %v3949 = vadd.f32 %v3564, %v3885
        %v3950 = vadd.f32 %v3565, %v3888
        %v3951 = vadd.f32 %v3566, %v3890
        %v3952 = vadd.f32 %v3567, %v3893
        %v3953 = vadd.f32 %v3568, %v3895
        %v3954 = vadd.f32 %v3569, %v3898
        %v3955 = vadd.f32 %v3570, %v3900
        %v3956 = vadd.f32 %v3571, %v3903
        %v3957 = vadd.f32 %v3572, %v3905
        %v3958 = vadd.f32 %v3573, %v3908
        %v3959 = vadd.f32 %v3574, %v3910
        %v3960 = vadd.f32 %v3575, %v3913
        %v3961 = vadd.f32 %v3576, %v3915
        %v3962 = vadd.f32 %v3577, %v3918
        %v3963 = vadd.f32 %v3578, %v3920
        %v3964 = vadd.f32 %v3579, %v3923
        %v3965 = vadd.f32 %v3580, %v3925
        %v3966 = vadd.f32 %v3581, %v3928
        %v3967 = vadd.f32 %v3582, %v3930
        %v3968 = vld [vmem:[#allocation2 + $0xa0] sm:$0x7]
        %s3969 = scalar_lea.vmem %s1, 448
        %v3970 = vld [vmem:[%s3969] sm:$0xf]
        %v3971 = vld [vmem:[%s3969 + $0x4] sm:$0xf]
        %v3972 = vld [vmem:[%s3969 + $0x8] sm:$0xf]
        %v3973 = vld [vmem:[%s3969 + $0xc] sm:$0xf]
        %v3974 = vld [vmem:[%s3969 + $0x10] sm:$0xf]
        %v3975 = vld [vmem:[%s3969 + $0x14] sm:$0xf]
        %v3976 = vld [vmem:[%s3969 + $0x18] sm:$0xf]
        %v3977 = vld [vmem:[%s3969 + $0x1c] sm:$0xf]
        %v3978 = vld [vmem:[%s3969 + $0x20] sm:$0xf]
        %v3979 = vld [vmem:[%s3969 + $0x24] sm:$0xf]
        %v3980 = vld [vmem:[%s3969 + $0x28] sm:$0xf]
        %v3981 = vld [vmem:[%s3969 + $0x2c] sm:$0xf]
        %v3982 = vld [vmem:[%s3969 + $0x30] sm:$0xf]
        %v3983 = vld [vmem:[%s3969 + $0x34] sm:$0xf]
        %v3984 = vld [vmem:[%s3969 + $0x38] sm:$0xf]
        %v3985 = vld [vmem:[%s3969 + $0x3c] sm:$0xf]
        %v3987 = vunpack.c.l.b16 %v3968
        %v3988 = vpack.c.b16 %v3987, %v3987
        %vm3989 = vsmask.f32 5376
        %v3991 = vshrl.u32 %v3711, 16
        %v3993 = vrot.slane %v3991, 2
        %v3994 = vshll.u32 %v3711, 16
        %v3996 = vrot.slane %v3994, 3
        %v3997 = vor.u32 %v3993, %v3996
        %v3999 = vshrl.u32 %v3712, 16
        %v4001 = vrot.slane %v3999, 2
        %v4002 = vshll.u32 %v3712, 16
        %v4004 = vrot.slane %v4002, 3
        %v4005 = vor.u32 %v4001, %v4004
        %v4006 = vsel %vm3989, %v3997, %v4005
        %v4008 = vshrl.u32 %v3713, 16
        %v4010 = vrot.slane %v4008, 2
        %v4011 = vshll.u32 %v3713, 16
        %v4013 = vrot.slane %v4011, 3
        %v4014 = vor.u32 %v4010, %v4013
        %v4015 = vsel %vm3989, %v4005, %v4014
        %v4017 = vshrl.u32 %v3714, 16
        %v4019 = vrot.slane %v4017, 2
        %v4020 = vshll.u32 %v3714, 16
        %v4022 = vrot.slane %v4020, 3
        %v4023 = vor.u32 %v4019, %v4022
        %v4024 = vsel %vm3989, %v4014, %v4023
        %v4026 = vshrl.u32 %v3715, 16
        %v4028 = vrot.slane %v4026, 2
        %v4029 = vshll.u32 %v3715, 16
        %v4031 = vrot.slane %v4029, 3
        %v4032 = vor.u32 %v4028, %v4031
        %v4033 = vsel %vm3989, %v4023, %v4032
        %v4035 = vshrl.u32 %v3716, 16
        %v4037 = vrot.slane %v4035, 2
        %v4038 = vshll.u32 %v3716, 16
        %v4040 = vrot.slane %v4038, 3
        %v4041 = vor.u32 %v4037, %v4040
        %v4042 = vsel %vm3989, %v4032, %v4041
        %v4044 = vshrl.u32 %v3717, 16
        %v4046 = vrot.slane %v4044, 2
        %v4047 = vshll.u32 %v3717, 16
        %v4049 = vrot.slane %v4047, 3
        %v4050 = vor.u32 %v4046, %v4049
        %v4051 = vsel %vm3989, %v4041, %v4050
        %v4053 = vshrl.u32 %v3718, 16
        %v4055 = vrot.slane %v4053, 2
        %v4056 = vshll.u32 %v3718, 16
        %v4058 = vrot.slane %v4056, 3
        %v4059 = vor.u32 %v4055, %v4058
        %v4060 = vsel %vm3989, %v4050, %v4059
        %v4062 = vshrl.u32 %v3719, 16
        %v4064 = vrot.slane %v4062, 2
        %v4065 = vshll.u32 %v3719, 16
        %v4067 = vrot.slane %v4065, 3
        %v4068 = vor.u32 %v4064, %v4067
        %v4069 = vsel %vm3989, %v4059, %v4068
        %v4071 = vshrl.u32 %v3720, 16
        %v4073 = vrot.slane %v4071, 2
        %v4074 = vshll.u32 %v3720, 16
        %v4076 = vrot.slane %v4074, 3
        %v4077 = vor.u32 %v4073, %v4076
        %v4078 = vsel %vm3989, %v4068, %v4077
        %v4080 = vshrl.u32 %v3721, 16
        %v4082 = vrot.slane %v4080, 2
        %v4083 = vshll.u32 %v3721, 16
        %v4085 = vrot.slane %v4083, 3
        %v4086 = vor.u32 %v4082, %v4085
        %v4087 = vsel %vm3989, %v4077, %v4086
        %v4089 = vshrl.u32 %v3722, 16
        %v4091 = vrot.slane %v4089, 2
        %v4092 = vshll.u32 %v3722, 16
        %v4094 = vrot.slane %v4092, 3
        %v4095 = vor.u32 %v4091, %v4094
        %v4096 = vsel %vm3989, %v4086, %v4095
        %v4098 = vshrl.u32 %v3723, 16
        %v4100 = vrot.slane %v4098, 2
        %v4101 = vshll.u32 %v3723, 16
        %v4103 = vrot.slane %v4101, 3
        %v4104 = vor.u32 %v4100, %v4103
        %v4105 = vsel %vm3989, %v4095, %v4104
        %v4107 = vshrl.u32 %v3724, 16
        %v4109 = vrot.slane %v4107, 2
        %v4110 = vshll.u32 %v3724, 16
        %v4112 = vrot.slane %v4110, 3
        %v4113 = vor.u32 %v4109, %v4112
        %v4114 = vsel %vm3989, %v4104, %v4113
        %v4116 = vshrl.u32 %v3725, 16
        %v4118 = vrot.slane %v4116, 2
        %v4119 = vshll.u32 %v3725, 16
        %v4121 = vrot.slane %v4119, 3
        %v4122 = vor.u32 %v4118, %v4121
        %v4123 = vsel %vm3989, %v4113, %v4122
        %v4125 = vshrl.u32 %v3726, 16
        %v4127 = vrot.slane %v4125, 2
        %v4128 = vshll.u32 %v3726, 16
        %v4130 = vrot.slane %v4128, 3
        %v4131 = vor.u32 %v4127, %v4130
        %v4132 = vsel %vm3989, %v4122, %v4131
        %v4134 = vshrl.u32 %v3727, 16
        %v4136 = vrot.slane %v4134, 2
        %v4137 = vshll.u32 %v3727, 16
        %v4139 = vrot.slane %v4137, 3
        %v4140 = vor.u32 %v4136, %v4139
        %v4141 = vsel %vm3989, %v4131, %v4140
        %v4143 = vshrl.u32 %v3728, 16
        %v4145 = vrot.slane %v4143, 2
        %v4146 = vshll.u32 %v3728, 16
        %v4148 = vrot.slane %v4146, 3
        %v4149 = vor.u32 %v4145, %v4148
        %v4150 = vsel %vm3989, %v4140, %v4149
        %v4152 = vshrl.u32 %v3988, 16
        %v4154 = vrot.slane %v4152, 2
        %v4155 = vshll.u32 %v3988, 16
        %v4157 = vrot.slane %v4155, 3
        %v4158 = vor.u32 %v4154, %v4157
        %v4159 = vsel %vm3989, %v4149, %v4158
        %v4194 = vunpack.c.l.b16 %v3970
        %v4195 = vunpack.c.l.b16 %v3971
        %v4196 = vunpack.c.l.b16 %v3972
        %v4197 = vunpack.c.l.b16 %v3973
        %v4198 = vunpack.c.l.b16 %v3974
        %v4199 = vunpack.c.l.b16 %v3975
        %v4200 = vunpack.c.l.b16 %v3976
        %v4201 = vunpack.c.l.b16 %v3977
        %v4202 = vunpack.c.l.b16 %v3978
        %v4203 = vunpack.c.l.b16 %v3979
        %v4204 = vunpack.c.l.b16 %v3980
        %v4205 = vunpack.c.l.b16 %v3981
        %v4206 = vunpack.c.l.b16 %v3982
        %v4207 = vunpack.c.l.b16 %v3983
        %v4208 = vunpack.c.l.b16 %v3984
        %v4209 = vunpack.c.l.b16 %v3985
        %v4210 = vpack.c.b16 %v4195, %v4194
        %v4211 = vpack.c.b16 %v4197, %v4196
        %v4212 = vpack.c.b16 %v4199, %v4198
        %v4213 = vpack.c.b16 %v4201, %v4200
        %v4214 = vpack.c.b16 %v4203, %v4202
        %v4215 = vpack.c.b16 %v4205, %v4204
        %v4216 = vpack.c.b16 %v4207, %v4206
        %v4217 = vpack.c.b16 %v4209, %v4208
        %4226 = vmatpush.bf16.msra.mxu0 %v4217
        %4227 = vmatpush.bf16.msra.mxu0 %v4216
        %4228 = vmatpush.bf16.msra.mxu0 %v4215
        %4229 = vmatpush.bf16.msra.mxu0 %v4214
        %4230 = vmatpush.bf16.msra.mxu0 %v4213
        %4231 = vmatpush.bf16.msra.mxu0 %v4212
        %4232 = vmatpush.bf16.msra.mxu0 %v4211
        %4233 = vmatpush.bf16.msra.mxu0 %v4210
        %4234 = vmatmul.bf16.gmra.mxu0 %v4006
        %v4235 = vpop.f32.mrf.mxu0
        %v4236 = vadd.f32 0.0, %v4235
        %v4237 = vpop.f32.mrf.mxu0
        %v4238 = vadd.f32 0.0, %v4237
        %4239 = vmatmul.bf16.gmra.mxu0 %v4015
        %v4240 = vpop.f32.mrf.mxu0
        %v4241 = vadd.f32 0.0, %v4240
        %v4242 = vpop.f32.mrf.mxu0
        %v4243 = vadd.f32 0.0, %v4242
        %4244 = vmatmul.bf16.gmra.mxu0 %v4024
        %v4245 = vpop.f32.mrf.mxu0
        %v4246 = vadd.f32 0.0, %v4245
        %v4247 = vpop.f32.mrf.mxu0
        %v4248 = vadd.f32 0.0, %v4247
        %4249 = vmatmul.bf16.gmra.mxu0 %v4033
        %v4250 = vpop.f32.mrf.mxu0
        %v4251 = vadd.f32 0.0, %v4250
        %v4252 = vpop.f32.mrf.mxu0
        %v4253 = vadd.f32 0.0, %v4252
        %4254 = vmatmul.bf16.gmra.mxu0 %v4042
        %v4255 = vpop.f32.mrf.mxu0
        %v4256 = vadd.f32 0.0, %v4255
        %v4257 = vpop.f32.mrf.mxu0
        %v4258 = vadd.f32 0.0, %v4257
        %4259 = vmatmul.bf16.gmra.mxu0 %v4051
        %v4260 = vpop.f32.mrf.mxu0
        %v4261 = vadd.f32 0.0, %v4260
        %v4262 = vpop.f32.mrf.mxu0
        %v4263 = vadd.f32 0.0, %v4262
        %4264 = vmatmul.bf16.gmra.mxu0 %v4060
        %v4265 = vpop.f32.mrf.mxu0
        %v4266 = vadd.f32 0.0, %v4265
        %v4267 = vpop.f32.mrf.mxu0
        %v4268 = vadd.f32 0.0, %v4267
        %4269 = vmatmul.bf16.gmra.mxu0 %v4069
        %v4270 = vpop.f32.mrf.mxu0
        %v4271 = vadd.f32 0.0, %v4270
        %v4272 = vpop.f32.mrf.mxu0
        %v4273 = vadd.f32 0.0, %v4272
        %4274 = vmatmul.bf16.gmra.mxu0 %v4078
        %v4275 = vpop.f32.mrf.mxu0
        %v4276 = vadd.f32 0.0, %v4275
        %v4277 = vpop.f32.mrf.mxu0
        %v4278 = vadd.f32 0.0, %v4277
        %4279 = vmatmul.bf16.gmra.mxu0 %v4087
        %v4280 = vpop.f32.mrf.mxu0
        %v4281 = vadd.f32 0.0, %v4280
        %v4282 = vpop.f32.mrf.mxu0
        %v4283 = vadd.f32 0.0, %v4282
        %4284 = vmatmul.bf16.gmra.mxu0 %v4096
        %v4285 = vpop.f32.mrf.mxu0
        %v4286 = vadd.f32 0.0, %v4285
        %v4287 = vpop.f32.mrf.mxu0
        %v4288 = vadd.f32 0.0, %v4287
        %4289 = vmatmul.bf16.gmra.mxu0 %v4105
        %v4290 = vpop.f32.mrf.mxu0
        %v4291 = vadd.f32 0.0, %v4290
        %v4292 = vpop.f32.mrf.mxu0
        %v4293 = vadd.f32 0.0, %v4292
        %4294 = vmatmul.bf16.gmra.mxu0 %v4114
        %v4295 = vpop.f32.mrf.mxu0
        %v4296 = vadd.f32 0.0, %v4295
        %v4297 = vpop.f32.mrf.mxu0
        %v4298 = vadd.f32 0.0, %v4297
        %4299 = vmatmul.bf16.gmra.mxu0 %v4123
        %v4300 = vpop.f32.mrf.mxu0
        %v4301 = vadd.f32 0.0, %v4300
        %v4302 = vpop.f32.mrf.mxu0
        %v4303 = vadd.f32 0.0, %v4302
        %4304 = vmatmul.bf16.gmra.mxu0 %v4132
        %v4305 = vpop.f32.mrf.mxu0
        %v4306 = vadd.f32 0.0, %v4305
        %v4307 = vpop.f32.mrf.mxu0
        %v4308 = vadd.f32 0.0, %v4307
        %4309 = vmatmul.bf16.gmra.mxu0 %v4141
        %v4310 = vpop.f32.mrf.mxu0
        %v4311 = vadd.f32 0.0, %v4310
        %v4312 = vpop.f32.mrf.mxu0
        %v4313 = vadd.f32 0.0, %v4312
        %4314 = vmatmul.bf16.gmra.mxu0 %v4150
        %v4315 = vpop.f32.mrf.mxu0
        %v4316 = vadd.f32 0.0, %v4315
        %v4317 = vpop.f32.mrf.mxu0
        %v4318 = vadd.f32 0.0, %v4317
        %4319 = vmatmul.bf16.gmra.mxu0 %v4159
        %v4320 = vpop.f32.mrf.mxu0
        %v4321 = vadd.f32 0.0, %v4320
        %v4322 = vpop.f32.mrf.mxu0
        %v4323 = vadd.f32 0.0, %v4322
        %4324 = vdwg.mxu0
        %v4325 = vadd.f32 %v3932, %v4236
        %v4326 = vadd.f32 %v3933, %v4238
        %v4327 = vadd.f32 %v3934, %v4241
        %v4328 = vadd.f32 %v3935, %v4243
        %v4329 = vadd.f32 %v3936, %v4246
        %v4330 = vadd.f32 %v3937, %v4248
        %v4331 = vadd.f32 %v3938, %v4251
        %v4332 = vadd.f32 %v3939, %v4253
        %v4333 = vadd.f32 %v3940, %v4256
        %v4334 = vadd.f32 %v3941, %v4258
        %v4335 = vadd.f32 %v3942, %v4261
        %v4336 = vadd.f32 %v3943, %v4263
        %v4337 = vadd.f32 %v3944, %v4266
        %v4338 = vadd.f32 %v3945, %v4268
        %v4339 = vadd.f32 %v3946, %v4271
        %v4340 = vadd.f32 %v3947, %v4273
        %v4341 = vadd.f32 %v3948, %v4276
        %v4342 = vadd.f32 %v3949, %v4278
        %v4343 = vadd.f32 %v3950, %v4281
        %v4344 = vadd.f32 %v3951, %v4283
        %v4345 = vadd.f32 %v3952, %v4286
        %v4346 = vadd.f32 %v3953, %v4288
        %v4347 = vadd.f32 %v3954, %v4291
        %v4348 = vadd.f32 %v3955, %v4293
        %v4349 = vadd.f32 %v3956, %v4296
        %v4350 = vadd.f32 %v3957, %v4298
        %v4351 = vadd.f32 %v3958, %v4301
        %v4352 = vadd.f32 %v3959, %v4303
        %v4353 = vadd.f32 %v3960, %v4306
        %v4354 = vadd.f32 %v3961, %v4308
        %v4355 = vadd.f32 %v3962, %v4311
        %v4356 = vadd.f32 %v3963, %v4313
        %v4357 = vadd.f32 %v3964, %v4316
        %v4358 = vadd.f32 %v3965, %v4318
        %v4359 = vadd.f32 %v3966, %v4321
        %v4360 = vadd.f32 %v3967, %v4323
        %v4361 = vld [vmem:[#allocation2 + $0x10] sm:$0x8]
        %s4362 = scalar_lea.vmem %s1, 512
        %v4363 = vld [vmem:[%s4362] sm:$0xf]
        %v4364 = vld [vmem:[%s4362 + $0x4] sm:$0xf]
        %v4365 = vld [vmem:[%s4362 + $0x8] sm:$0xf]
        %v4366 = vld [vmem:[%s4362 + $0xc] sm:$0xf]
        %v4367 = vld [vmem:[%s4362 + $0x10] sm:$0xf]
        %v4368 = vld [vmem:[%s4362 + $0x14] sm:$0xf]
        %v4369 = vld [vmem:[%s4362 + $0x18] sm:$0xf]
        %v4370 = vld [vmem:[%s4362 + $0x1c] sm:$0xf]
        %v4371 = vld [vmem:[%s4362 + $0x20] sm:$0xf]
        %v4372 = vld [vmem:[%s4362 + $0x24] sm:$0xf]
        %v4373 = vld [vmem:[%s4362 + $0x28] sm:$0xf]
        %v4374 = vld [vmem:[%s4362 + $0x2c] sm:$0xf]
        %v4375 = vld [vmem:[%s4362 + $0x30] sm:$0xf]
        %v4376 = vld [vmem:[%s4362 + $0x34] sm:$0xf]
        %v4377 = vld [vmem:[%s4362 + $0x38] sm:$0xf]
        %v4378 = vld [vmem:[%s4362 + $0x3c] sm:$0xf]
        %v4380 = vunpack.c.l.b16 %v4361
        %v4381 = vpack.c.b16 %v3675, %v4380
        %vm4382 = vcmask 1044480
        %v4383 = vrot.slane %v4381, 3
        %v4384 = vrot.slane %v3712, 3
        %v4385 = vsel %vm4382, %v4383, %v4384
        %v4386 = vrot.slane %v3713, 3
        %v4387 = vsel %vm4382, %v4384, %v4386
        %v4388 = vrot.slane %v3714, 3
        %v4389 = vsel %vm4382, %v4386, %v4388
        %v4390 = vrot.slane %v3715, 3
        %v4391 = vsel %vm4382, %v4388, %v4390
        %v4392 = vrot.slane %v3716, 3
        %v4393 = vsel %vm4382, %v4390, %v4392
        %v4394 = vrot.slane %v3717, 3
        %v4395 = vsel %vm4382, %v4392, %v4394
        %v4396 = vrot.slane %v3718, 3
        %v4397 = vsel %vm4382, %v4394, %v4396
        %v4398 = vrot.slane %v3719, 3
        %v4399 = vsel %vm4382, %v4396, %v4398
        %v4400 = vrot.slane %v3720, 3
        %v4401 = vsel %vm4382, %v4398, %v4400
        %v4402 = vrot.slane %v3721, 3
        %v4403 = vsel %vm4382, %v4400, %v4402
        %v4404 = vrot.slane %v3722, 3
        %v4405 = vsel %vm4382, %v4402, %v4404
        %v4406 = vrot.slane %v3723, 3
        %v4407 = vsel %vm4382, %v4404, %v4406
        %v4408 = vrot.slane %v3724, 3
        %v4409 = vsel %vm4382, %v4406, %v4408
        %v4410 = vrot.slane %v3725, 3
        %v4411 = vsel %vm4382, %v4408, %v4410
        %v4412 = vrot.slane %v3726, 3
        %v4413 = vsel %vm4382, %v4410, %v4412
        %v4414 = vrot.slane %v3727, 3
        %v4415 = vsel %vm4382, %v4412, %v4414
        %v4416 = vrot.slane %v3728, 3
        %v4417 = vsel %vm4382, %v4414, %v4416
        %v4418 = vrot.slane %v3988, 3
        %v4419 = vsel %vm4382, %v4416, %v4418
        %v4454 = vunpack.c.l.b16 %v4363
        %v4455 = vunpack.c.l.b16 %v4364
        %v4456 = vunpack.c.l.b16 %v4365
        %v4457 = vunpack.c.l.b16 %v4366
        %v4458 = vunpack.c.l.b16 %v4367
        %v4459 = vunpack.c.l.b16 %v4368
        %v4460 = vunpack.c.l.b16 %v4369
        %v4461 = vunpack.c.l.b16 %v4370
        %v4462 = vunpack.c.l.b16 %v4371
        %v4463 = vunpack.c.l.b16 %v4372
        %v4464 = vunpack.c.l.b16 %v4373
        %v4465 = vunpack.c.l.b16 %v4374
        %v4466 = vunpack.c.l.b16 %v4375
        %v4467 = vunpack.c.l.b16 %v4376
        %v4468 = vunpack.c.l.b16 %v4377
        %v4469 = vunpack.c.l.b16 %v4378
        %v4470 = vpack.c.b16 %v4455, %v4454
        %v4471 = vpack.c.b16 %v4457, %v4456
        %v4472 = vpack.c.b16 %v4459, %v4458
        %v4473 = vpack.c.b16 %v4461, %v4460
        %v4474 = vpack.c.b16 %v4463, %v4462
        %v4475 = vpack.c.b16 %v4465, %v4464
        %v4476 = vpack.c.b16 %v4467, %v4466
        %v4477 = vpack.c.b16 %v4469, %v4468
        %4486 = vmatpush.bf16.msra.mxu0 %v4477
        %4487 = vmatpush.bf16.msra.mxu0 %v4476
        %4488 = vmatpush.bf16.msra.mxu0 %v4475
        %4489 = vmatpush.bf16.msra.mxu0 %v4474
        %4490 = vmatpush.bf16.msra.mxu0 %v4473
        %4491 = vmatpush.bf16.msra.mxu0 %v4472
        %4492 = vmatpush.bf16.msra.mxu0 %v4471
        %4493 = vmatpush.bf16.msra.mxu0 %v4470
        %4494 = vmatmul.bf16.gmra.mxu0 %v4385
        %v4495 = vpop.f32.mrf.mxu0
        %v4496 = vadd.f32 0.0, %v4495
        %v4497 = vpop.f32.mrf.mxu0
        %v4498 = vadd.f32 0.0, %v4497
        %4499 = vmatmul.bf16.gmra.mxu0 %v4387
        %v4500 = vpop.f32.mrf.mxu0
        %v4501 = vadd.f32 0.0, %v4500
        %v4502 = vpop.f32.mrf.mxu0
        %v4503 = vadd.f32 0.0, %v4502
        %4504 = vmatmul.bf16.gmra.mxu0 %v4389
        %v4505 = vpop.f32.mrf.mxu0
        %v4506 = vadd.f32 0.0, %v4505
        %v4507 = vpop.f32.mrf.mxu0
        %v4508 = vadd.f32 0.0, %v4507
        %4509 = vmatmul.bf16.gmra.mxu0 %v4391
        %v4510 = vpop.f32.mrf.mxu0
        %v4511 = vadd.f32 0.0, %v4510
        %v4512 = vpop.f32.mrf.mxu0
        %v4513 = vadd.f32 0.0, %v4512
        %4514 = vmatmul.bf16.gmra.mxu0 %v4393
        %v4515 = vpop.f32.mrf.mxu0
        %v4516 = vadd.f32 0.0, %v4515
        %v4517 = vpop.f32.mrf.mxu0
        %v4518 = vadd.f32 0.0, %v4517
        %4519 = vmatmul.bf16.gmra.mxu0 %v4395
        %v4520 = vpop.f32.mrf.mxu0
        %v4521 = vadd.f32 0.0, %v4520
        %v4522 = vpop.f32.mrf.mxu0
        %v4523 = vadd.f32 0.0, %v4522
        %4524 = vmatmul.bf16.gmra.mxu0 %v4397
        %v4525 = vpop.f32.mrf.mxu0
        %v4526 = vadd.f32 0.0, %v4525
        %v4527 = vpop.f32.mrf.mxu0
        %v4528 = vadd.f32 0.0, %v4527
        %4529 = vmatmul.bf16.gmra.mxu0 %v4399
        %v4530 = vpop.f32.mrf.mxu0
        %v4531 = vadd.f32 0.0, %v4530
        %v4532 = vpop.f32.mrf.mxu0
        %v4533 = vadd.f32 0.0, %v4532
        %4534 = vmatmul.bf16.gmra.mxu0 %v4401
        %v4535 = vpop.f32.mrf.mxu0
        %v4536 = vadd.f32 0.0, %v4535
        %v4537 = vpop.f32.mrf.mxu0
        %v4538 = vadd.f32 0.0, %v4537
        %4539 = vmatmul.bf16.gmra.mxu0 %v4403
        %v4540 = vpop.f32.mrf.mxu0
        %v4541 = vadd.f32 0.0, %v4540
        %v4542 = vpop.f32.mrf.mxu0
        %v4543 = vadd.f32 0.0, %v4542
        %4544 = vmatmul.bf16.gmra.mxu0 %v4405
        %v4545 = vpop.f32.mrf.mxu0
        %v4546 = vadd.f32 0.0, %v4545
        %v4547 = vpop.f32.mrf.mxu0
        %v4548 = vadd.f32 0.0, %v4547
        %4549 = vmatmul.bf16.gmra.mxu0 %v4407
        %v4550 = vpop.f32.mrf.mxu0
        %v4551 = vadd.f32 0.0, %v4550
        %v4552 = vpop.f32.mrf.mxu0
        %v4553 = vadd.f32 0.0, %v4552
        %4554 = vmatmul.bf16.gmra.mxu0 %v4409
        %v4555 = vpop.f32.mrf.mxu0
        %v4556 = vadd.f32 0.0, %v4555
        %v4557 = vpop.f32.mrf.mxu0
        %v4558 = vadd.f32 0.0, %v4557
        %4559 = vmatmul.bf16.gmra.mxu0 %v4411
        %v4560 = vpop.f32.mrf.mxu0
        %v4561 = vadd.f32 0.0, %v4560
        %v4562 = vpop.f32.mrf.mxu0
        %v4563 = vadd.f32 0.0, %v4562
        %4564 = vmatmul.bf16.gmra.mxu0 %v4413
        %v4565 = vpop.f32.mrf.mxu0
        %v4566 = vadd.f32 0.0, %v4565
        %v4567 = vpop.f32.mrf.mxu0
        %v4568 = vadd.f32 0.0, %v4567
        %4569 = vmatmul.bf16.gmra.mxu0 %v4415
        %v4570 = vpop.f32.mrf.mxu0
        %v4571 = vadd.f32 0.0, %v4570
        %v4572 = vpop.f32.mrf.mxu0
        %v4573 = vadd.f32 0.0, %v4572
        %4574 = vmatmul.bf16.gmra.mxu0 %v4417
        %v4575 = vpop.f32.mrf.mxu0
        %v4576 = vadd.f32 0.0, %v4575
        %v4577 = vpop.f32.mrf.mxu0
        %v4578 = vadd.f32 0.0, %v4577
        %4579 = vmatmul.bf16.gmra.mxu0 %v4419
        %v4580 = vpop.f32.mrf.mxu0
        %v4581 = vadd.f32 0.0, %v4580
        %v4582 = vpop.f32.mrf.mxu0
        %v4583 = vadd.f32 0.0, %v4582
        %4584 = vdwg.mxu0
        %v4585 = vadd.f32 %v4325, %v4496
        %v4586 = vadd.f32 %v4326, %v4498
        %v4587 = vadd.f32 %v4327, %v4501
        %v4588 = vadd.f32 %v4328, %v4503
        %v4589 = vadd.f32 %v4329, %v4506
        %v4590 = vadd.f32 %v4330, %v4508
        %v4591 = vadd.f32 %v4331, %v4511
        %v4592 = vadd.f32 %v4332, %v4513
        %v4593 = vadd.f32 %v4333, %v4516
        %v4594 = vadd.f32 %v4334, %v4518
        %v4595 = vadd.f32 %v4335, %v4521
        %v4596 = vadd.f32 %v4336, %v4523
        %v4597 = vadd.f32 %v4337, %v4526
        %v4598 = vadd.f32 %v4338, %v4528
        %v4599 = vadd.f32 %v4339, %v4531
        %v4600 = vadd.f32 %v4340, %v4533
        %v4601 = vadd.f32 %v4341, %v4536
        %v4602 = vadd.f32 %v4342, %v4538
        %v4603 = vadd.f32 %v4343, %v4541
        %v4604 = vadd.f32 %v4344, %v4543
        %v4605 = vadd.f32 %v4345, %v4546
        %v4606 = vadd.f32 %v4346, %v4548
        %v4607 = vadd.f32 %v4347, %v4551
        %v4608 = vadd.f32 %v4348, %v4553
        %v4609 = vadd.f32 %v4349, %v4556
        %v4610 = vadd.f32 %v4350, %v4558
        %v4611 = vadd.f32 %v4351, %v4561
        %v4612 = vadd.f32 %v4352, %v4563
        %v4613 = vadd.f32 %v4353, %v4566
        %v4614 = vadd.f32 %v4354, %v4568
        %v4615 = vadd.f32 %v4355, %v4571
        %v4616 = vadd.f32 %v4356, %v4573
        %v4617 = vadd.f32 %v4357, %v4576
        %v4618 = vadd.f32 %v4358, %v4578
        %v4619 = vadd.f32 %v4359, %v4581
        %v4620 = vadd.f32 %v4360, %v4583
        %v4621 = vld [vmem:[%s2] sm:$0x1]
        %v4623 = vperm.slane %v4621, 0
        %v4625 = vadd.f32 %v4585, %v4623
        %v4626 = vadd.f32 %v4586, %v4623
        %v4627 = vadd.f32 %v4587, %v4623
        %v4628 = vadd.f32 %v4588, %v4623
        %v4629 = vadd.f32 %v4589, %v4623
        %v4630 = vadd.f32 %v4590, %v4623
        %v4631 = vadd.f32 %v4591, %v4623
        %v4632 = vadd.f32 %v4592, %v4623
        %v4633 = vadd.f32 %v4593, %v4623
        %v4634 = vadd.f32 %v4594, %v4623
        %v4635 = vadd.f32 %v4595, %v4623
        %v4636 = vadd.f32 %v4596, %v4623
        %v4637 = vadd.f32 %v4597, %v4623
        %v4638 = vadd.f32 %v4598, %v4623
        %v4639 = vadd.f32 %v4599, %v4623
        %v4640 = vadd.f32 %v4600, %v4623
        %v4641 = vadd.f32 %v4601, %v4623
        %v4642 = vadd.f32 %v4602, %v4623
        %v4643 = vadd.f32 %v4603, %v4623
        %v4644 = vadd.f32 %v4604, %v4623
        %v4645 = vadd.f32 %v4605, %v4623
        %v4646 = vadd.f32 %v4606, %v4623
        %v4647 = vadd.f32 %v4607, %v4623
        %v4648 = vadd.f32 %v4608, %v4623
        %v4649 = vadd.f32 %v4609, %v4623
        %v4650 = vadd.f32 %v4610, %v4623
        %v4651 = vadd.f32 %v4611, %v4623
        %v4652 = vadd.f32 %v4612, %v4623
        %v4653 = vadd.f32 %v4613, %v4623
        %v4654 = vadd.f32 %v4614, %v4623
        %v4655 = vadd.f32 %v4615, %v4623
        %v4656 = vadd.f32 %v4616, %v4623
        %v4657 = vadd.f32 %v4617, %v4623
        %v4658 = vadd.f32 %v4618, %v4623
        %v4659 = vadd.f32 %v4619, %v4623
        %v4660 = vadd.f32 %v4620, %v4623
        %v4661 = vmax.f32 %v4625, 0.0
        %v4662 = vmax.f32 %v4626, 0.0
        %v4663 = vmax.f32 %v4627, 0.0
        %v4664 = vmax.f32 %v4628, 0.0
        %v4665 = vmax.f32 %v4629, 0.0
        %v4666 = vmax.f32 %v4630, 0.0
        %v4667 = vmax.f32 %v4631, 0.0
        %v4668 = vmax.f32 %v4632, 0.0
        %v4669 = vmax.f32 %v4633, 0.0
        %v4670 = vmax.f32 %v4634, 0.0
        %v4671 = vmax.f32 %v4635, 0.0
        %v4672 = vmax.f32 %v4636, 0.0
        %v4673 = vmax.f32 %v4637, 0.0
        %v4674 = vmax.f32 %v4638, 0.0
        %v4675 = vmax.f32 %v4639, 0.0
        %v4676 = vmax.f32 %v4640, 0.0
        %v4677 = vmax.f32 %v4641, 0.0
        %v4678 = vmax.f32 %v4642, 0.0
        %v4679 = vmax.f32 %v4643, 0.0
        %v4680 = vmax.f32 %v4644, 0.0
        %v4681 = vmax.f32 %v4645, 0.0
        %v4682 = vmax.f32 %v4646, 0.0
        %v4683 = vmax.f32 %v4647, 0.0
        %v4684 = vmax.f32 %v4648, 0.0
        %v4685 = vmax.f32 %v4649, 0.0
        %v4686 = vmax.f32 %v4650, 0.0
        %v4687 = vmax.f32 %v4651, 0.0
        %v4688 = vmax.f32 %v4652, 0.0
        %v4689 = vmax.f32 %v4653, 0.0
        %v4690 = vmax.f32 %v4654, 0.0
        %v4691 = vmax.f32 %v4655, 0.0
        %v4692 = vmax.f32 %v4656, 0.0
        %v4693 = vmax.f32 %v4657, 0.0
        %v4694 = vmax.f32 %v4658, 0.0
        %v4695 = vmax.f32 %v4659, 0.0
        %v4696 = vmax.f32 %v4660, 0.0
        %v4697 = vsel %vm1607, 1, 0
        %v4698 = vsel %vm1608, 1, 0
        %v4699 = vsel %vm1609, 1, 0
        %v4700 = vsel %vm1610, 1, 0
        %v4701 = vsel %vm1611, 1, 0
        %v4702 = vsel %vm1612, 1, 0
        %v4703 = vsel %vm1613, 1, 0
        %v4704 = vsel %vm1614, 1, 0
        %v4705 = vsel %vm1615, 1, 0
        %v4706 = vsel %vm1616, 1, 0
        %v4707 = vsel %vm1617, 1, 0
        %v4708 = vsel %vm1618, 1, 0
        %v4709 = vsel %vm1619, 1, 0
        %v4710 = vsel %vm1620, 1, 0
        %v4711 = vsel %vm1621, 1, 0
        %v4712 = vsel %vm1622, 1, 0
        %v4713 = vsel %vm1623, 1, 0
        %v4714 = vsel %vm1624, 1, 0
        %v4715 = vsel %vm1625, 1, 0
        %v4716 = vsel %vm1626, 1, 0
        %v4717 = vsel %vm1627, 1, 0
        %v4718 = vsel %vm1628, 1, 0
        %v4719 = vsel %vm1629, 1, 0
        %v4720 = vsel %vm1630, 1, 0
        %v4721 = vsel %vm1631, 1, 0
        %v4722 = vsel %vm1632, 1, 0
        %v4723 = vsel %vm1633, 1, 0
        %v4724 = vsel %vm1634, 1, 0
        %v4725 = vsel %vm1635, 1, 0
        %v4726 = vsel %vm1636, 1, 0
        %v4727 = vsel %vm1637, 1, 0
        %v4728 = vsel %vm1638, 1, 0
        %v4729 = vsel %vm1639, 1, 0
        %v4730 = vsel %vm1640, 1, 0
        %v4731 = vsel %vm1641, 1, 0
        %v4732 = vsel %vm1642, 1, 0
        %vm4733 = vcmp.eq.s32.totalorder %v4697, 1
        %vm4734 = vcmp.eq.s32.totalorder %v4698, 1
        %vm4735 = vcmp.eq.s32.totalorder %v4699, 1
        %vm4736 = vcmp.eq.s32.totalorder %v4700, 1
        %vm4737 = vcmp.eq.s32.totalorder %v4701, 1
        %vm4738 = vcmp.eq.s32.totalorder %v4702, 1
        %vm4739 = vcmp.eq.s32.totalorder %v4703, 1
        %vm4740 = vcmp.eq.s32.totalorder %v4704, 1
        %vm4741 = vcmp.eq.s32.totalorder %v4705, 1
        %vm4742 = vcmp.eq.s32.totalorder %v4706, 1
        %vm4743 = vcmp.eq.s32.totalorder %v4707, 1
        %vm4744 = vcmp.eq.s32.totalorder %v4708, 1
        %vm4745 = vcmp.eq.s32.totalorder %v4709, 1
        %vm4746 = vcmp.eq.s32.totalorder %v4710, 1
        %vm4747 = vcmp.eq.s32.totalorder %v4711, 1
        %vm4748 = vcmp.eq.s32.totalorder %v4712, 1
        %vm4749 = vcmp.eq.s32.totalorder %v4713, 1
        %vm4750 = vcmp.eq.s32.totalorder %v4714, 1
        %vm4751 = vcmp.eq.s32.totalorder %v4715, 1
        %vm4752 = vcmp.eq.s32.totalorder %v4716, 1
        %vm4753 = vcmp.eq.s32.totalorder %v4717, 1
        %vm4754 = vcmp.eq.s32.totalorder %v4718, 1
        %vm4755 = vcmp.eq.s32.totalorder %v4719, 1
        %vm4756 = vcmp.eq.s32.totalorder %v4720, 1
        %vm4757 = vcmp.eq.s32.totalorder %v4721, 1
        %vm4758 = vcmp.eq.s32.totalorder %v4722, 1
        %vm4759 = vcmp.eq.s32.totalorder %v4723, 1
        %vm4760 = vcmp.eq.s32.totalorder %v4724, 1
        %vm4761 = vcmp.eq.s32.totalorder %v4725, 1
        %vm4762 = vcmp.eq.s32.totalorder %v4726, 1
        %vm4763 = vcmp.eq.s32.totalorder %v4727, 1
        %vm4764 = vcmp.eq.s32.totalorder %v4728, 1
        %vm4765 = vcmp.eq.s32.totalorder %v4729, 1
        %vm4766 = vcmp.eq.s32.totalorder %v4730, 1
        %vm4767 = vcmp.eq.s32.totalorder %v4731, 1
        %vm4768 = vcmp.eq.s32.totalorder %v4732, 1
        %v4769 = vsel %vm4733, %v4661, 0.0
        %v4770 = vsel %vm4734, %v4662, 0.0
        %v4771 = vsel %vm4735, %v4663, 0.0
        %v4772 = vsel %vm4736, %v4664, 0.0
        %v4773 = vsel %vm4737, %v4665, 0.0
        %v4774 = vsel %vm4738, %v4666, 0.0
        %v4775 = vsel %vm4739, %v4667, 0.0
        %v4776 = vsel %vm4740, %v4668, 0.0
        %v4777 = vsel %vm4741, %v4669, 0.0
        %v4778 = vsel %vm4742, %v4670, 0.0
        %v4779 = vsel %vm4743, %v4671, 0.0
        %v4780 = vsel %vm4744, %v4672, 0.0
        %v4781 = vsel %vm4745, %v4673, 0.0
        %v4782 = vsel %vm4746, %v4674, 0.0
        %v4783 = vsel %vm4747, %v4675, 0.0
        %v4784 = vsel %vm4748, %v4676, 0.0
        %v4785 = vsel %vm4749, %v4677, 0.0
        %v4786 = vsel %vm4750, %v4678, 0.0
        %v4787 = vsel %vm4751, %v4679, 0.0
        %v4788 = vsel %vm4752, %v4680, 0.0
        %v4789 = vsel %vm4753, %v4681, 0.0
        %v4790 = vsel %vm4754, %v4682, 0.0
        %v4791 = vsel %vm4755, %v4683, 0.0
        %v4792 = vsel %vm4756, %v4684, 0.0
        %v4793 = vsel %vm4757, %v4685, 0.0
        %v4794 = vsel %vm4758, %v4686, 0.0
        %v4795 = vsel %vm4759, %v4687, 0.0
        %v4796 = vsel %vm4760, %v4688, 0.0
        %v4797 = vsel %vm4761, %v4689, 0.0
        %v4798 = vsel %vm4762, %v4690, 0.0
        %v4799 = vsel %vm4763, %v4691, 0.0
        %v4800 = vsel %vm4764, %v4692, 0.0
        %v4801 = vsel %vm4765, %v4693, 0.0
        %v4802 = vsel %vm4766, %v4694, 0.0
        %v4803 = vsel %vm4767, %v4695, 0.0
        %v4804 = vsel %vm4768, %v4696, 0.0
        %v4805 = vpack.c.bf16 %v4769, %v4769
        %v4806 = vpack.c.bf16 %v4770, %v4770
        %v4807 = vpack.c.bf16 %v4771, %v4771
        %v4808 = vpack.c.bf16 %v4772, %v4772
        %v4809 = vpack.c.bf16 %v4773, %v4773
        %v4810 = vpack.c.bf16 %v4774, %v4774
        %v4811 = vpack.c.bf16 %v4775, %v4775
        %v4812 = vpack.c.bf16 %v4776, %v4776
        %v4813 = vpack.c.bf16 %v4777, %v4777
        %v4814 = vpack.c.bf16 %v4778, %v4778
        %v4815 = vpack.c.bf16 %v4779, %v4779
        %v4816 = vpack.c.bf16 %v4780, %v4780
        %v4817 = vpack.c.bf16 %v4781, %v4781
        %v4818 = vpack.c.bf16 %v4782, %v4782
        %v4819 = vpack.c.bf16 %v4783, %v4783
        %v4820 = vpack.c.bf16 %v4784, %v4784
        %v4821 = vpack.c.bf16 %v4785, %v4785
        %v4822 = vpack.c.bf16 %v4786, %v4786
        %v4823 = vpack.c.bf16 %v4787, %v4787
        %v4824 = vpack.c.bf16 %v4788, %v4788
        %v4825 = vpack.c.bf16 %v4789, %v4789
        %v4826 = vpack.c.bf16 %v4790, %v4790
        %v4827 = vpack.c.bf16 %v4791, %v4791
        %v4828 = vpack.c.bf16 %v4792, %v4792
        %v4829 = vpack.c.bf16 %v4793, %v4793
        %v4830 = vpack.c.bf16 %v4794, %v4794
        %v4831 = vpack.c.bf16 %v4795, %v4795
        %v4832 = vpack.c.bf16 %v4796, %v4796
        %v4833 = vpack.c.bf16 %v4797, %v4797
        %v4834 = vpack.c.bf16 %v4798, %v4798
        %v4835 = vpack.c.bf16 %v4799, %v4799
        %v4836 = vpack.c.bf16 %v4800, %v4800
        %v4837 = vpack.c.bf16 %v4801, %v4801
        %v4838 = vpack.c.bf16 %v4802, %v4802
        %v4839 = vpack.c.bf16 %v4803, %v4803
        %v4840 = vpack.c.bf16 %v4804, %v4804
        %vm4841 = vsmask.f32 1280
        %vm4842 = vsmask.f32 5392
        %vm4843 = vmor %vm4841, %vm4842
        %v4845 = vshrl.u32 %v4805, 16
        %v4847 = vrot.slane %v4845, 6
        %v4848 = vshll.u32 %v4805, 16
        %v4850 = vrot.slane %v4848, 7
        %v4851 = vor.u32 %v4847, %v4850
        %v4852 = vrot.slane %v4851, 4
        %v4854 = vshrl.u32 %v4806, 16
        %v4856 = vrot.slane %v4854, 6
        %v4857 = vshll.u32 %v4806, 16
        %v4859 = vrot.slane %v4857, 7
        %v4860 = vor.u32 %v4856, %v4859
        %v4861 = vsel %vm4843, %v4852, %v4860
        %v4862 = vrot.slane %v4860, 4
        %v4864 = vshrl.u32 %v4807, 16
        %v4866 = vrot.slane %v4864, 6
        %v4867 = vshll.u32 %v4807, 16
        %v4869 = vrot.slane %v4867, 7
        %v4870 = vor.u32 %v4866, %v4869
        %v4871 = vsel %vm4843, %v4862, %v4870
        %v4872 = vrot.slane %v4870, 4
        %v4874 = vshrl.u32 %v4808, 16
        %v4876 = vrot.slane %v4874, 6
        %v4877 = vshll.u32 %v4808, 16
        %v4879 = vrot.slane %v4877, 7
        %v4880 = vor.u32 %v4876, %v4879
        %v4881 = vsel %vm4843, %v4872, %v4880
        %v4882 = vrot.slane %v4880, 4
        %v4884 = vshrl.u32 %v4809, 16
        %v4886 = vrot.slane %v4884, 6
        %v4887 = vshll.u32 %v4809, 16
        %v4889 = vrot.slane %v4887, 7
        %v4890 = vor.u32 %v4886, %v4889
        %v4891 = vsel %vm4843, %v4882, %v4890
        %v4892 = vrot.slane %v4890, 4
        %v4894 = vshrl.u32 %v4810, 16
        %v4896 = vrot.slane %v4894, 6
        %v4897 = vshll.u32 %v4810, 16
        %v4899 = vrot.slane %v4897, 7
        %v4900 = vor.u32 %v4896, %v4899
        %v4901 = vsel %vm4843, %v4892, %v4900
        %v4902 = vrot.slane %v4900, 4
        %v4904 = vshrl.u32 %v4811, 16
        %v4906 = vrot.slane %v4904, 6
        %v4907 = vshll.u32 %v4811, 16
        %v4909 = vrot.slane %v4907, 7
        %v4910 = vor.u32 %v4906, %v4909
        %v4911 = vsel %vm4843, %v4902, %v4910
        %v4912 = vrot.slane %v4910, 4
        %v4914 = vshrl.u32 %v4812, 16
        %v4916 = vrot.slane %v4914, 6
        %v4917 = vshll.u32 %v4812, 16
        %v4919 = vrot.slane %v4917, 7
        %v4920 = vor.u32 %v4916, %v4919
        %v4921 = vsel %vm4843, %v4912, %v4920
        %v4922 = vrot.slane %v4920, 4
        %v4924 = vshrl.u32 %v4813, 16
        %v4926 = vrot.slane %v4924, 6
        %v4927 = vshll.u32 %v4813, 16
        %v4929 = vrot.slane %v4927, 7
        %v4930 = vor.u32 %v4926, %v4929
        %v4931 = vsel %vm4843, %v4922, %v4930
        %v4932 = vrot.slane %v4930, 4
        %v4934 = vshrl.u32 %v4814, 16
        %v4936 = vrot.slane %v4934, 6
        %v4937 = vshll.u32 %v4814, 16
        %v4939 = vrot.slane %v4937, 7
        %v4940 = vor.u32 %v4936, %v4939
        %v4941 = vsel %vm4843, %v4932, %v4940
        %v4942 = vrot.slane %v4940, 4
        %v4944 = vshrl.u32 %v4815, 16
        %v4946 = vrot.slane %v4944, 6
        %v4947 = vshll.u32 %v4815, 16
        %v4949 = vrot.slane %v4947, 7
        %v4950 = vor.u32 %v4946, %v4949
        %v4951 = vsel %vm4843, %v4942, %v4950
        %v4952 = vrot.slane %v4950, 4
        %v4954 = vshrl.u32 %v4816, 16
        %v4956 = vrot.slane %v4954, 6
        %v4957 = vshll.u32 %v4816, 16
        %v4959 = vrot.slane %v4957, 7
        %v4960 = vor.u32 %v4956, %v4959
        %v4961 = vsel %vm4843, %v4952, %v4960
        %v4962 = vrot.slane %v4960, 4
        %v4964 = vshrl.u32 %v4817, 16
        %v4966 = vrot.slane %v4964, 6
        %v4967 = vshll.u32 %v4817, 16
        %v4969 = vrot.slane %v4967, 7
        %v4970 = vor.u32 %v4966, %v4969
        %v4971 = vsel %vm4843, %v4962, %v4970
        %v4972 = vrot.slane %v4970, 4
        %v4974 = vshrl.u32 %v4818, 16
        %v4976 = vrot.slane %v4974, 6
        %v4977 = vshll.u32 %v4818, 16
        %v4979 = vrot.slane %v4977, 7
        %v4980 = vor.u32 %v4976, %v4979
        %v4981 = vsel %vm4843, %v4972, %v4980
        %v4982 = vrot.slane %v4980, 4
        %v4984 = vshrl.u32 %v4819, 16
        %v4986 = vrot.slane %v4984, 6
        %v4987 = vshll.u32 %v4819, 16
        %v4989 = vrot.slane %v4987, 7
        %v4990 = vor.u32 %v4986, %v4989
        %v4991 = vsel %vm4843, %v4982, %v4990
        %v4992 = vrot.slane %v4990, 4
        %v4994 = vshrl.u32 %v4820, 16
        %v4996 = vrot.slane %v4994, 6
        %v4997 = vshll.u32 %v4820, 16
        %v4999 = vrot.slane %v4997, 7
        %v5000 = vor.u32 %v4996, %v4999
        %v5001 = vsel %vm4843, %v4992, %v5000
        %v5002 = vrot.slane %v5000, 4
        %v5004 = vshrl.u32 %v4821, 16
        %v5006 = vrot.slane %v5004, 6
        %v5007 = vshll.u32 %v4821, 16
        %v5009 = vrot.slane %v5007, 7
        %v5010 = vor.u32 %v5006, %v5009
        %v5011 = vsel %vm4843, %v5002, %v5010
        %v5012 = vrot.slane %v5010, 4
        %v5014 = vshrl.u32 %v4822, 16
        %v5016 = vrot.slane %v5014, 6
        %v5017 = vshll.u32 %v4822, 16
        %v5019 = vrot.slane %v5017, 7
        %v5020 = vor.u32 %v5016, %v5019
        %v5021 = vsel %vm4843, %v5012, %v5020
        %v5022 = vrot.slane %v5020, 4
        %v5024 = vshrl.u32 %v4823, 16
        %v5026 = vrot.slane %v5024, 6
        %v5027 = vshll.u32 %v4823, 16
        %v5029 = vrot.slane %v5027, 7
        %v5030 = vor.u32 %v5026, %v5029
        %v5031 = vsel %vm4843, %v5022, %v5030
        %v5032 = vrot.slane %v5030, 4
        %v5034 = vshrl.u32 %v4824, 16
        %v5036 = vrot.slane %v5034, 6
        %v5037 = vshll.u32 %v4824, 16
        %v5039 = vrot.slane %v5037, 7
        %v5040 = vor.u32 %v5036, %v5039
        %v5041 = vsel %vm4843, %v5032, %v5040
        %v5042 = vrot.slane %v5040, 4
        %v5044 = vshrl.u32 %v4825, 16
        %v5046 = vrot.slane %v5044, 6
        %v5047 = vshll.u32 %v4825, 16
        %v5049 = vrot.slane %v5047, 7
        %v5050 = vor.u32 %v5046, %v5049
        %v5051 = vsel %vm4843, %v5042, %v5050
        %v5052 = vrot.slane %v5050, 4
        %v5054 = vshrl.u32 %v4826, 16
        %v5056 = vrot.slane %v5054, 6
        %v5057 = vshll.u32 %v4826, 16
        %v5059 = vrot.slane %v5057, 7
        %v5060 = vor.u32 %v5056, %v5059
        %v5061 = vsel %vm4843, %v5052, %v5060
        %v5062 = vrot.slane %v5060, 4
        %v5064 = vshrl.u32 %v4827, 16
        %v5066 = vrot.slane %v5064, 6
        %v5067 = vshll.u32 %v4827, 16
        %v5069 = vrot.slane %v5067, 7
        %v5070 = vor.u32 %v5066, %v5069
        %v5071 = vsel %vm4843, %v5062, %v5070
        %v5072 = vrot.slane %v5070, 4
        %v5074 = vshrl.u32 %v4828, 16
        %v5076 = vrot.slane %v5074, 6
        %v5077 = vshll.u32 %v4828, 16
        %v5079 = vrot.slane %v5077, 7
        %v5080 = vor.u32 %v5076, %v5079
        %v5081 = vsel %vm4843, %v5072, %v5080
        %v5082 = vrot.slane %v5080, 4
        %v5084 = vshrl.u32 %v4829, 16
        %v5086 = vrot.slane %v5084, 6
        %v5087 = vshll.u32 %v4829, 16
        %v5089 = vrot.slane %v5087, 7
        %v5090 = vor.u32 %v5086, %v5089
        %v5091 = vsel %vm4843, %v5082, %v5090
        %v5092 = vrot.slane %v5090, 4
        %v5094 = vshrl.u32 %v4830, 16
        %v5096 = vrot.slane %v5094, 6
        %v5097 = vshll.u32 %v4830, 16
        %v5099 = vrot.slane %v5097, 7
        %v5100 = vor.u32 %v5096, %v5099
        %v5101 = vsel %vm4843, %v5092, %v5100
        %v5102 = vrot.slane %v5100, 4
        %v5104 = vshrl.u32 %v4831, 16
        %v5106 = vrot.slane %v5104, 6
        %v5107 = vshll.u32 %v4831, 16
        %v5109 = vrot.slane %v5107, 7
        %v5110 = vor.u32 %v5106, %v5109
        %v5111 = vsel %vm4843, %v5102, %v5110
        %v5112 = vrot.slane %v5110, 4
        %v5114 = vshrl.u32 %v4832, 16
        %v5116 = vrot.slane %v5114, 6
        %v5117 = vshll.u32 %v4832, 16
        %v5119 = vrot.slane %v5117, 7
        %v5120 = vor.u32 %v5116, %v5119
        %v5121 = vsel %vm4843, %v5112, %v5120
        %v5122 = vrot.slane %v5120, 4
        %v5124 = vshrl.u32 %v4833, 16
        %v5126 = vrot.slane %v5124, 6
        %v5127 = vshll.u32 %v4833, 16
        %v5129 = vrot.slane %v5127, 7
        %v5130 = vor.u32 %v5126, %v5129
        %v5131 = vsel %vm4843, %v5122, %v5130
        %v5132 = vrot.slane %v5130, 4
        %v5134 = vshrl.u32 %v4834, 16
        %v5136 = vrot.slane %v5134, 6
        %v5137 = vshll.u32 %v4834, 16
        %v5139 = vrot.slane %v5137, 7
        %v5140 = vor.u32 %v5136, %v5139
        %v5141 = vsel %vm4843, %v5132, %v5140
        %v5142 = vrot.slane %v5140, 4
        %v5144 = vshrl.u32 %v4835, 16
        %v5146 = vrot.slane %v5144, 6
        %v5147 = vshll.u32 %v4835, 16
        %v5149 = vrot.slane %v5147, 7
        %v5150 = vor.u32 %v5146, %v5149
        %v5151 = vsel %vm4843, %v5142, %v5150
        %v5152 = vrot.slane %v5150, 4
        %v5154 = vshrl.u32 %v4836, 16
        %v5156 = vrot.slane %v5154, 6
        %v5157 = vshll.u32 %v4836, 16
        %v5159 = vrot.slane %v5157, 7
        %v5160 = vor.u32 %v5156, %v5159
        %v5161 = vsel %vm4843, %v5152, %v5160
        %v5162 = vrot.slane %v5160, 4
        %v5164 = vshrl.u32 %v4837, 16
        %v5166 = vrot.slane %v5164, 6
        %v5167 = vshll.u32 %v4837, 16
        %v5169 = vrot.slane %v5167, 7
        %v5170 = vor.u32 %v5166, %v5169
        %v5171 = vsel %vm4843, %v5162, %v5170
        %v5172 = vrot.slane %v5170, 4
        %v5174 = vshrl.u32 %v4838, 16
        %v5176 = vrot.slane %v5174, 6
        %v5177 = vshll.u32 %v4838, 16
        %v5179 = vrot.slane %v5177, 7
        %v5180 = vor.u32 %v5176, %v5179
        %v5181 = vsel %vm4843, %v5172, %v5180
        %v5182 = vrot.slane %v5180, 4
        %v5184 = vshrl.u32 %v4839, 16
        %v5186 = vrot.slane %v5184, 6
        %v5187 = vshll.u32 %v4839, 16
        %v5189 = vrot.slane %v5187, 7
        %v5190 = vor.u32 %v5186, %v5189
        %v5191 = vsel %vm4843, %v5182, %v5190
        %v5192 = vrot.slane %v5190, 4
        %v5194 = vshrl.u32 %v4840, 16
        %v5196 = vrot.slane %v5194, 6
        %v5197 = vshll.u32 %v4840, 16
        %v5199 = vrot.slane %v5197, 7
        %v5200 = vor.u32 %v5196, %v5199
        %v5201 = vsel %vm4843, %v5192, %v5200
        %v5202 = vrot.slane %v5200, 4
        %vm5240 = vcmask 1043457
        %vm5241 = vsmask.f32 7942
        %vm5242 = vmand %vm5240, %vm5241
        %v5243 = vsel %vm5242, %v4851, %v2545
        %5244 = vst [vmem:[#allocation2 + $0x8] sm:$0xe] %v5243
        %5245 = vst [vmem:[#allocation2 + $0xc] sm:$0xf] %v4861
        %5246 = vst [vmem:[#allocation2 + $0x10] sm:$0xf] %v4871
        %5247 = vst [vmem:[#allocation2 + $0x14] sm:$0xf] %v4881
        %5248 = vst [vmem:[#allocation2 + $0x18] sm:$0xf] %v4891
        %5249 = vst [vmem:[#allocation2 + $0x1c] sm:$0xf] %v4901
        %5250 = vst [vmem:[#allocation2 + $0x20] sm:$0xf] %v4911
        %5251 = vst [vmem:[#allocation2 + $0x24] sm:$0xf] %v4921
        %5252 = vst [vmem:[#allocation2 + $0x28] sm:$0xf] %v4931
        %5253 = vst [vmem:[#allocation2 + $0x2c] sm:$0xf] %v4941
        %5254 = vst [vmem:[#allocation2 + $0x30] sm:$0xf] %v4951
        %5255 = vst [vmem:[#allocation2 + $0x34] sm:$0xf] %v4961
        %5256 = vst [vmem:[#allocation2 + $0x38] sm:$0xf] %v4971
        %5257 = vst [vmem:[#allocation2 + $0x3c] sm:$0xf] %v4981
        %5258 = vst [vmem:[#allocation2 + $0x40] sm:$0xf] %v4991
        %5259 = vst [vmem:[#allocation2 + $0x44] sm:$0xf] %v5001
        %5260 = vst [vmem:[#allocation2 + $0x48] sm:$0xf] %v5011
        %5261 = vst [vmem:[#allocation2 + $0x4c] sm:$0xf] %v5021
        %5262 = vst [vmem:[#allocation2 + $0x50] sm:$0xf] %v5031
        %5263 = vst [vmem:[#allocation2 + $0x54] sm:$0xf] %v5041
        %5264 = vst [vmem:[#allocation2 + $0x58] sm:$0xf] %v5051
        %5265 = vst [vmem:[#allocation2 + $0x5c] sm:$0xf] %v5061
        %5266 = vst [vmem:[#allocation2 + $0x60] sm:$0xf] %v5071
        %5267 = vst [vmem:[#allocation2 + $0x64] sm:$0xf] %v5081
        %5268 = vst [vmem:[#allocation2 + $0x68] sm:$0xf] %v5091
        %5269 = vst [vmem:[#allocation2 + $0x6c] sm:$0xf] %v5101
        %5270 = vst [vmem:[#allocation2 + $0x70] sm:$0xf] %v5111
        %5271 = vst [vmem:[#allocation2 + $0x74] sm:$0xf] %v5121
        %5272 = vst [vmem:[#allocation2 + $0x78] sm:$0xf] %v5131
        %5273 = vst [vmem:[#allocation2 + $0x7c] sm:$0xf] %v5141
        %5274 = vst [vmem:[#allocation2 + $0x80] sm:$0xf] %v5151
        %5275 = vst [vmem:[#allocation2 + $0x84] sm:$0xf] %v5161
        %5276 = vst [vmem:[#allocation2 + $0x88] sm:$0xf] %v5171
        %5277 = vst [vmem:[#allocation2 + $0x8c] sm:$0xf] %v5181
        %5278 = vst [vmem:[#allocation2 + $0x90] sm:$0xf] %v5191
        %5279 = vst [vmem:[#allocation2 + $0x94] sm:$0xf] %v5201
        %vm5280 = vcmask 1041408
        %vm5281 = vmand %vm5280, %vm4841
        %v5282 = vld [vmem:[#allocation2 + $0x98] sm:$0x3]
        %v5283 = vsel %vm5281, %v5202, %v5282
        %5284 = vst [vmem:[#allocation2 + $0x98] sm:$0x3] %v5283
        %v5285 = vld [vmem:[%s222 + $0x13] sm:$0xff]
        %v5286 = vld [vmem:[%s222 + $0x1b] sm:$0xff]
        %v5287 = vld [vmem:[%s222 + $0x23] sm:$0xff]
        %v5288 = vld [vmem:[%s222 + $0x2b] sm:$0xff]
        %v5289 = vld [vmem:[%s222 + $0x33] sm:$0xff]
        %v5290 = vld [vmem:[%s222 + $0x3b] sm:$0xff]
        %v5291 = vld [vmem:[%s222 + $0x43] sm:$0xff]
        %v5292 = vld [vmem:[%s222 + $0x4b] sm:$0xff]
        %v5293 = vld [vmem:[%s222 + $0x53] sm:$0xff]
        %v5294 = vld [vmem:[%s222 + $0x5b] sm:$0xff]
        %v5295 = vld [vmem:[%s222 + $0x63] sm:$0xff]
        %v5296 = vld [vmem:[%s222 + $0x6b] sm:$0xff]
        %v5297 = vld [vmem:[%s222 + $0x73] sm:$0xff]
        %v5298 = vld [vmem:[%s222 + $0x7b] sm:$0xff]
        %v5299 = vld [vmem:[%s222 + $0x83] sm:$0xff]
        %v5300 = vld [vmem:[%s222 + $0x8b] sm:$0xff]
        %v5301 = vld [vmem:[%s222 + $0x93] sm:$0xff]
        %v5302 = vld [vmem:[%s222 + $0x9b] sm:$0xff]
        %v5303 = vld [vmem:[%s222 + $0xa3] sm:$0xff]
        %v5304 = vld [vmem:[%s222 + $0xab] sm:$0xff]
        %v5305 = vld [vmem:[%s222 + $0xb3] sm:$0xff]
        %v5306 = vld [vmem:[%s222 + $0xbb] sm:$0xff]
        %v5307 = vld [vmem:[%s222 + $0xc3] sm:$0xff]
        %v5308 = vld [vmem:[%s222 + $0xcb] sm:$0xff]
        %v5309 = vld [vmem:[%s222 + $0xd3] sm:$0xff]
        %v5310 = vld [vmem:[%s222 + $0xdb] sm:$0xff]
        %v5311 = vld [vmem:[%s222 + $0xe3] sm:$0xff]
        %v5312 = vld [vmem:[%s222 + $0xeb] sm:$0xff]
        %v5313 = vld [vmem:[%s222 + $0xf3] sm:$0xff]
        %v5314 = vld [vmem:[%s222 + $0xfb] sm:$0xff]
        %v5315 = vld [vmem:[%s222 + $0x103] sm:$0xff]
        %v5316 = vld [vmem:[%s222 + $0x10b] sm:$0xff]
        %v5317 = vld [vmem:[%s222 + $0x113] sm:$0xff]
        %v5318 = vld [vmem:[%s222 + $0x11b] sm:$0xff]
        %v5319 = vld [vmem:[%s222 + $0x123] sm:$0xff]
        %v5320 = vld [vmem:[%s222 + $0x12b] sm:$0xff]
        %v5321 = vld [vmem:[%s4] sm:$0x1]
        %v5323 = vperm.slane %v5321, 0
        %v5325 = vadd.f32 %v5285, %v5323
        %v5326 = vadd.f32 %v5286, %v5323
        %v5327 = vadd.f32 %v5287, %v5323
        %v5328 = vadd.f32 %v5288, %v5323
        %v5329 = vadd.f32 %v5289, %v5323
        %v5330 = vadd.f32 %v5290, %v5323
        %v5331 = vadd.f32 %v5291, %v5323
        %v5332 = vadd.f32 %v5292, %v5323
        %v5333 = vadd.f32 %v5293, %v5323
        %v5334 = vadd.f32 %v5294, %v5323
        %v5335 = vadd.f32 %v5295, %v5323
        %v5336 = vadd.f32 %v5296, %v5323
        %v5337 = vadd.f32 %v5297, %v5323
        %v5338 = vadd.f32 %v5298, %v5323
        %v5339 = vadd.f32 %v5299, %v5323
        %v5340 = vadd.f32 %v5300, %v5323
        %v5341 = vadd.f32 %v5301, %v5323
        %v5342 = vadd.f32 %v5302, %v5323
        %v5343 = vadd.f32 %v5303, %v5323
        %v5344 = vadd.f32 %v5304, %v5323
        %v5345 = vadd.f32 %v5305, %v5323
        %v5346 = vadd.f32 %v5306, %v5323
        %v5347 = vadd.f32 %v5307, %v5323
        %v5348 = vadd.f32 %v5308, %v5323
        %v5349 = vadd.f32 %v5309, %v5323
        %v5350 = vadd.f32 %v5310, %v5323
        %v5351 = vadd.f32 %v5311, %v5323
        %v5352 = vadd.f32 %v5312, %v5323
        %v5353 = vadd.f32 %v5313, %v5323
        %v5354 = vadd.f32 %v5314, %v5323
        %v5355 = vadd.f32 %v5315, %v5323
        %v5356 = vadd.f32 %v5316, %v5323
        %v5357 = vadd.f32 %v5317, %v5323
        %v5358 = vadd.f32 %v5318, %v5323
        %v5359 = vadd.f32 %v5319, %v5323
        %v5360 = vadd.f32 %v5320, %v5323
        %v5361 = vld [vmem:[#allocation2] sm:$0xf]
        %v5362 = vld [vmem:[#allocation2 + $0x4] sm:$0xf]
        %v5363 = vld [vmem:[#allocation2 + $0x8] sm:$0xf]
        %v5364 = vld [vmem:[#allocation2 + $0xc] sm:$0xf]
        %v5365 = vld [vmem:[#allocation2 + $0x10] sm:$0xf]
        %v5366 = vld [vmem:[#allocation2 + $0x14] sm:$0xf]
        %v5367 = vld [vmem:[#allocation2 + $0x18] sm:$0xf]
        %v5368 = vld [vmem:[#allocation2 + $0x1c] sm:$0xf]
        %v5369 = vld [vmem:[#allocation2 + $0x20] sm:$0xf]
        %v5370 = vld [vmem:[#allocation2 + $0x24] sm:$0xf]
        %v5371 = vld [vmem:[#allocation2 + $0x28] sm:$0xf]
        %v5372 = vld [vmem:[#allocation2 + $0x2c] sm:$0xf]
        %v5373 = vld [vmem:[#allocation2 + $0x30] sm:$0xf]
        %v5374 = vld [vmem:[#allocation2 + $0x34] sm:$0xf]
        %v5375 = vld [vmem:[#allocation2 + $0x38] sm:$0xf]
        %v5376 = vld [vmem:[#allocation2 + $0x3c] sm:$0xf]
        %v5377 = vld [vmem:[#allocation2 + $0x40] sm:$0xf]
        %v5378 = vld [vmem:[#allocation2 + $0x44] sm:$0xf]
        %v5379 = vld [vmem:[#allocation2 + $0x48] sm:$0xf]
        %v5380 = vld [vmem:[#allocation2 + $0x4c] sm:$0xf]
        %v5381 = vld [vmem:[#allocation2 + $0x50] sm:$0xf]
        %v5382 = vld [vmem:[#allocation2 + $0x54] sm:$0xf]
        %v5383 = vld [vmem:[#allocation2 + $0x58] sm:$0xf]
        %v5384 = vld [vmem:[#allocation2 + $0x5c] sm:$0xf]
        %v5385 = vld [vmem:[#allocation2 + $0x60] sm:$0xf]
        %v5386 = vld [vmem:[#allocation2 + $0x64] sm:$0xf]
        %v5387 = vld [vmem:[#allocation2 + $0x68] sm:$0xf]
        %v5388 = vld [vmem:[#allocation2 + $0x6c] sm:$0xf]
        %v5389 = vld [vmem:[#allocation2 + $0x70] sm:$0xf]
        %v5390 = vld [vmem:[#allocation2 + $0x74] sm:$0xf]
        %v5391 = vld [vmem:[#allocation2 + $0x78] sm:$0xf]
        %v5392 = vld [vmem:[#allocation2 + $0x7c] sm:$0xf]
        %v5393 = vld [vmem:[#allocation2 + $0x80] sm:$0xf]
        %v5394 = vld [vmem:[#allocation2 + $0x84] sm:$0xf]
        %v5395 = vld [vmem:[#allocation2 + $0x88] sm:$0xf]
        %v5396 = vld [vmem:[#allocation2 + $0x8c] sm:$0xf]
        %v5397 = vld [vmem:[%s3] sm:$0xf]
        %v5398 = vld [vmem:[%s3 + $0x4] sm:$0xf]
        %v5399 = vld [vmem:[%s3 + $0x8] sm:$0xf]
        %v5400 = vld [vmem:[%s3 + $0xc] sm:$0xf]
        %v5401 = vld [vmem:[%s3 + $0x10] sm:$0xf]
        %v5402 = vld [vmem:[%s3 + $0x14] sm:$0xf]
        %v5403 = vld [vmem:[%s3 + $0x18] sm:$0xf]
        %v5404 = vld [vmem:[%s3 + $0x1c] sm:$0xf]
        %v5405 = vld [vmem:[%s3 + $0x20] sm:$0xf]
        %v5406 = vld [vmem:[%s3 + $0x24] sm:$0xf]
        %v5407 = vld [vmem:[%s3 + $0x28] sm:$0xf]
        %v5408 = vld [vmem:[%s3 + $0x2c] sm:$0xf]
        %v5409 = vld [vmem:[%s3 + $0x30] sm:$0xf]
        %v5410 = vld [vmem:[%s3 + $0x34] sm:$0xf]
        %v5411 = vld [vmem:[%s3 + $0x38] sm:$0xf]
        %v5412 = vld [vmem:[%s3 + $0x3c] sm:$0xf]
        %v5449 = vunpack.c.l.b16 %v5361
        %v5450 = vunpack.c.l.b16 %v5362
        %v5451 = vunpack.c.l.b16 %v5363
        %v5452 = vunpack.c.l.b16 %v5364
        %v5453 = vunpack.c.l.b16 %v5365
        %v5454 = vunpack.c.l.b16 %v5366
        %v5455 = vunpack.c.l.b16 %v5367
        %v5456 = vunpack.c.l.b16 %v5368
        %v5457 = vunpack.c.l.b16 %v5369
        %v5458 = vunpack.c.l.b16 %v5370
        %v5459 = vunpack.c.l.b16 %v5371
        %v5460 = vunpack.c.l.b16 %v5372
        %v5461 = vunpack.c.l.b16 %v5373
        %v5462 = vunpack.c.l.b16 %v5374
        %v5463 = vunpack.c.l.b16 %v5375
        %v5464 = vunpack.c.l.b16 %v5376
        %v5465 = vunpack.c.l.b16 %v5377
        %v5466 = vunpack.c.l.b16 %v5378
        %v5467 = vunpack.c.l.b16 %v5379
        %v5468 = vunpack.c.l.b16 %v5380
        %v5469 = vunpack.c.l.b16 %v5381
        %v5470 = vunpack.c.l.b16 %v5382
        %v5471 = vunpack.c.l.b16 %v5383
        %v5472 = vunpack.c.l.b16 %v5384
        %v5473 = vunpack.c.l.b16 %v5385
        %v5474 = vunpack.c.l.b16 %v5386
        %v5475 = vunpack.c.l.b16 %v5387
        %v5476 = vunpack.c.l.b16 %v5388
        %v5477 = vunpack.c.l.b16 %v5389
        %v5478 = vunpack.c.l.b16 %v5390
        %v5479 = vunpack.c.l.b16 %v5391
        %v5480 = vunpack.c.l.b16 %v5392
        %v5481 = vunpack.c.l.b16 %v5393
        %v5482 = vunpack.c.l.b16 %v5394
        %v5483 = vunpack.c.l.b16 %v5395
        %v5484 = vunpack.c.l.b16 %v5396
        %v5485 = vpack.c.b16 %v5450, %v5449
        %v5486 = vpack.c.b16 %v5452, %v5451
        %v5487 = vpack.c.b16 %v5454, %v5453
        %v5488 = vpack.c.b16 %v5456, %v5455
        %v5489 = vpack.c.b16 %v5458, %v5457
        %v5490 = vpack.c.b16 %v5460, %v5459
        %v5491 = vpack.c.b16 %v5462, %v5461
        %v5492 = vpack.c.b16 %v5464, %v5463
        %v5493 = vpack.c.b16 %v5466, %v5465
        %v5494 = vpack.c.b16 %v5468, %v5467
        %v5495 = vpack.c.b16 %v5470, %v5469
        %v5496 = vpack.c.b16 %v5472, %v5471
        %v5497 = vpack.c.b16 %v5474, %v5473
        %v5498 = vpack.c.b16 %v5476, %v5475
        %v5499 = vpack.c.b16 %v5478, %v5477
        %v5500 = vpack.c.b16 %v5480, %v5479
        %v5501 = vpack.c.b16 %v5482, %v5481
        %v5502 = vpack.c.b16 %v5484, %v5483
        %v5537 = vunpack.c.l.b16 %v5397
        %v5538 = vunpack.c.l.b16 %v5398
        %v5539 = vunpack.c.l.b16 %v5399
        %v5540 = vunpack.c.l.b16 %v5400
        %v5541 = vunpack.c.l.b16 %v5401
        %v5542 = vunpack.c.l.b16 %v5402
        %v5543 = vunpack.c.l.b16 %v5403
        %v5544 = vunpack.c.l.b16 %v5404
        %v5545 = vunpack.c.l.b16 %v5405
        %v5546 = vunpack.c.l.b16 %v5406
        %v5547 = vunpack.c.l.b16 %v5407
        %v5548 = vunpack.c.l.b16 %v5408
        %v5549 = vunpack.c.l.b16 %v5409
        %v5550 = vunpack.c.l.b16 %v5410
        %v5551 = vunpack.c.l.b16 %v5411
        %v5552 = vunpack.c.l.b16 %v5412
        %v5553 = vpack.c.b16 %v5538, %v5537
        %v5554 = vpack.c.b16 %v5540, %v5539
        %v5555 = vpack.c.b16 %v5542, %v5541
        %v5556 = vpack.c.b16 %v5544, %v5543
        %v5557 = vpack.c.b16 %v5546, %v5545
        %v5558 = vpack.c.b16 %v5548, %v5547
        %v5559 = vpack.c.b16 %v5550, %v5549
        %v5560 = vpack.c.b16 %v5552, %v5551
        %5569 = vmatpush.bf16.msra.mxu0 %v5560
        %5570 = vmatpush.bf16.msra.mxu0 %v5559
        %5571 = vmatpush.bf16.msra.mxu0 %v5558
        %5572 = vmatpush.bf16.msra.mxu0 %v5557
        %5573 = vmatpush.bf16.msra.mxu0 %v5556
        %5574 = vmatpush.bf16.msra.mxu0 %v5555
        %5575 = vmatpush.bf16.msra.mxu0 %v5554
        %5576 = vmatpush.bf16.msra.mxu0 %v5553
        %5577 = vmatmul.bf16.gmra.mxu0 %v5485
        %v5578 = vpop.f32.mrf.mxu0
        %v5579 = vadd.f32 0.0, %v5578
        %v5580 = vpop.f32.mrf.mxu0
        %v5581 = vadd.f32 0.0, %v5580
        %5582 = vmatmul.bf16.gmra.mxu0 %v5486
        %v5583 = vpop.f32.mrf.mxu0
        %v5584 = vadd.f32 0.0, %v5583
        %v5585 = vpop.f32.mrf.mxu0
        %v5586 = vadd.f32 0.0, %v5585
        %5587 = vmatmul.bf16.gmra.mxu0 %v5487
        %v5588 = vpop.f32.mrf.mxu0
        %v5589 = vadd.f32 0.0, %v5588
        %v5590 = vpop.f32.mrf.mxu0
        %v5591 = vadd.f32 0.0, %v5590
        %5592 = vmatmul.bf16.gmra.mxu0 %v5488
        %v5593 = vpop.f32.mrf.mxu0
        %v5594 = vadd.f32 0.0, %v5593
        %v5595 = vpop.f32.mrf.mxu0
        %v5596 = vadd.f32 0.0, %v5595
        %5597 = vmatmul.bf16.gmra.mxu0 %v5489
        %v5598 = vpop.f32.mrf.mxu0
        %v5599 = vadd.f32 0.0, %v5598
        %v5600 = vpop.f32.mrf.mxu0
        %v5601 = vadd.f32 0.0, %v5600
        %5602 = vmatmul.bf16.gmra.mxu0 %v5490
        %v5603 = vpop.f32.mrf.mxu0
        %v5604 = vadd.f32 0.0, %v5603
        %v5605 = vpop.f32.mrf.mxu0
        %v5606 = vadd.f32 0.0, %v5605
        %5607 = vmatmul.bf16.gmra.mxu0 %v5491
        %v5608 = vpop.f32.mrf.mxu0
        %v5609 = vadd.f32 0.0, %v5608
        %v5610 = vpop.f32.mrf.mxu0
        %v5611 = vadd.f32 0.0, %v5610
        %5612 = vmatmul.bf16.gmra.mxu0 %v5492
        %v5613 = vpop.f32.mrf.mxu0
        %v5614 = vadd.f32 0.0, %v5613
        %v5615 = vpop.f32.mrf.mxu0
        %v5616 = vadd.f32 0.0, %v5615
        %5617 = vmatmul.bf16.gmra.mxu0 %v5493
        %v5618 = vpop.f32.mrf.mxu0
        %v5619 = vadd.f32 0.0, %v5618
        %v5620 = vpop.f32.mrf.mxu0
        %v5621 = vadd.f32 0.0, %v5620
        %5622 = vmatmul.bf16.gmra.mxu0 %v5494
        %v5623 = vpop.f32.mrf.mxu0
        %v5624 = vadd.f32 0.0, %v5623
        %v5625 = vpop.f32.mrf.mxu0
        %v5626 = vadd.f32 0.0, %v5625
        %5627 = vmatmul.bf16.gmra.mxu0 %v5495
        %v5628 = vpop.f32.mrf.mxu0
        %v5629 = vadd.f32 0.0, %v5628
        %v5630 = vpop.f32.mrf.mxu0
        %v5631 = vadd.f32 0.0, %v5630
        %5632 = vmatmul.bf16.gmra.mxu0 %v5496
        %v5633 = vpop.f32.mrf.mxu0
        %v5634 = vadd.f32 0.0, %v5633
        %v5635 = vpop.f32.mrf.mxu0
        %v5636 = vadd.f32 0.0, %v5635
        %5637 = vmatmul.bf16.gmra.mxu0 %v5497
        %v5638 = vpop.f32.mrf.mxu0
        %v5639 = vadd.f32 0.0, %v5638
        %v5640 = vpop.f32.mrf.mxu0
        %v5641 = vadd.f32 0.0, %v5640
        %5642 = vmatmul.bf16.gmra.mxu0 %v5498
        %v5643 = vpop.f32.mrf.mxu0
        %v5644 = vadd.f32 0.0, %v5643
        %v5645 = vpop.f32.mrf.mxu0
        %v5646 = vadd.f32 0.0, %v5645
        %5647 = vmatmul.bf16.gmra.mxu0 %v5499
        %v5648 = vpop.f32.mrf.mxu0
        %v5649 = vadd.f32 0.0, %v5648
        %v5650 = vpop.f32.mrf.mxu0
        %v5651 = vadd.f32 0.0, %v5650
        %5652 = vmatmul.bf16.gmra.mxu0 %v5500
        %v5653 = vpop.f32.mrf.mxu0
        %v5654 = vadd.f32 0.0, %v5653
        %v5655 = vpop.f32.mrf.mxu0
        %v5656 = vadd.f32 0.0, %v5655
        %5657 = vmatmul.bf16.gmra.mxu0 %v5501
        %v5658 = vpop.f32.mrf.mxu0
        %v5659 = vadd.f32 0.0, %v5658
        %v5660 = vpop.f32.mrf.mxu0
        %v5661 = vadd.f32 0.0, %v5660
        %5662 = vmatmul.bf16.gmra.mxu0 %v5502
        %v5663 = vpop.f32.mrf.mxu0
        %v5664 = vadd.f32 0.0, %v5663
        %v5665 = vpop.f32.mrf.mxu0
        %v5666 = vadd.f32 0.0, %v5665
        %5667 = vdwg.mxu0
        %v5668 = vadd.f32 %v5325, %v5579
        %v5669 = vadd.f32 %v5326, %v5581
        %v5670 = vadd.f32 %v5327, %v5584
        %v5671 = vadd.f32 %v5328, %v5586
        %v5672 = vadd.f32 %v5329, %v5589
        %v5673 = vadd.f32 %v5330, %v5591
        %v5674 = vadd.f32 %v5331, %v5594
        %v5675 = vadd.f32 %v5332, %v5596
        %v5676 = vadd.f32 %v5333, %v5599
        %v5677 = vadd.f32 %v5334, %v5601
        %v5678 = vadd.f32 %v5335, %v5604
        %v5679 = vadd.f32 %v5336, %v5606
        %v5680 = vadd.f32 %v5337, %v5609
        %v5681 = vadd.f32 %v5338, %v5611
        %v5682 = vadd.f32 %v5339, %v5614
        %v5683 = vadd.f32 %v5340, %v5616
        %v5684 = vadd.f32 %v5341, %v5619
        %v5685 = vadd.f32 %v5342, %v5621
        %v5686 = vadd.f32 %v5343, %v5624
        %v5687 = vadd.f32 %v5344, %v5626
        %v5688 = vadd.f32 %v5345, %v5629
        %v5689 = vadd.f32 %v5346, %v5631
        %v5690 = vadd.f32 %v5347, %v5634
        %v5691 = vadd.f32 %v5348, %v5636
        %v5692 = vadd.f32 %v5349, %v5639
        %v5693 = vadd.f32 %v5350, %v5641
        %v5694 = vadd.f32 %v5351, %v5644
        %v5695 = vadd.f32 %v5352, %v5646
        %v5696 = vadd.f32 %v5353, %v5649
        %v5697 = vadd.f32 %v5354, %v5651
        %v5698 = vadd.f32 %v5355, %v5654
        %v5699 = vadd.f32 %v5356, %v5656
        %v5700 = vadd.f32 %v5357, %v5659
        %v5701 = vadd.f32 %v5358, %v5661
        %v5702 = vadd.f32 %v5359, %v5664
        %v5703 = vadd.f32 %v5360, %v5666
        %v5704 = vld [vmem:[#allocation2] sm:$0xf]
        %v5705 = vld [vmem:[#allocation2 + $0x4] sm:$0xf]
        %v5706 = vld [vmem:[#allocation2 + $0x8] sm:$0xf]
        %v5707 = vld [vmem:[#allocation2 + $0xc] sm:$0xf]
        %v5708 = vld [vmem:[#allocation2 + $0x10] sm:$0xf]
        %v5709 = vld [vmem:[#allocation2 + $0x14] sm:$0xf]
        %v5710 = vld [vmem:[#allocation2 + $0x18] sm:$0xf]
        %v5711 = vld [vmem:[#allocation2 + $0x1c] sm:$0xf]
        %v5712 = vld [vmem:[#allocation2 + $0x20] sm:$0xf]
        %v5713 = vld [vmem:[#allocation2 + $0x24] sm:$0xf]
        %v5714 = vld [vmem:[#allocation2 + $0x28] sm:$0xf]
        %v5715 = vld [vmem:[#allocation2 + $0x2c] sm:$0xf]
        %v5716 = vld [vmem:[#allocation2 + $0x30] sm:$0xf]
        %v5717 = vld [vmem:[#allocation2 + $0x34] sm:$0xf]
        %v5718 = vld [vmem:[#allocation2 + $0x38] sm:$0xf]
        %v5719 = vld [vmem:[#allocation2 + $0x3c] sm:$0xf]
        %v5720 = vld [vmem:[#allocation2 + $0x40] sm:$0xf]
        %v5721 = vld [vmem:[#allocation2 + $0x44] sm:$0xf]
        %v5722 = vld [vmem:[#allocation2 + $0x48] sm:$0xf]
        %v5723 = vld [vmem:[#allocation2 + $0x4c] sm:$0xf]
        %v5724 = vld [vmem:[#allocation2 + $0x50] sm:$0xf]
        %v5725 = vld [vmem:[#allocation2 + $0x54] sm:$0xf]
        %v5726 = vld [vmem:[#allocation2 + $0x58] sm:$0xf]
        %v5727 = vld [vmem:[#allocation2 + $0x5c] sm:$0xf]
        %v5728 = vld [vmem:[#allocation2 + $0x60] sm:$0xf]
        %v5729 = vld [vmem:[#allocation2 + $0x64] sm:$0xf]
        %v5730 = vld [vmem:[#allocation2 + $0x68] sm:$0xf]
        %v5731 = vld [vmem:[#allocation2 + $0x6c] sm:$0xf]
        %v5732 = vld [vmem:[#allocation2 + $0x70] sm:$0xf]
        %v5733 = vld [vmem:[#allocation2 + $0x74] sm:$0xf]
        %v5734 = vld [vmem:[#allocation2 + $0x78] sm:$0xf]
        %v5735 = vld [vmem:[#allocation2 + $0x7c] sm:$0xf]
        %v5736 = vld [vmem:[#allocation2 + $0x80] sm:$0xf]
        %v5737 = vld [vmem:[#allocation2 + $0x84] sm:$0xf]
        %v5738 = vld [vmem:[#allocation2 + $0x88] sm:$0xf]
        %v5739 = vld [vmem:[#allocation2 + $0x8c] sm:$0xf]
        %v5740 = vld [vmem:[#allocation2 + $0x90] sm:$0x1]
        %s5741 = scalar_lea.vmem %s3, 64
        %v5742 = vld [vmem:[%s5741] sm:$0xf]
        %v5743 = vld [vmem:[%s5741 + $0x4] sm:$0xf]
        %v5744 = vld [vmem:[%s5741 + $0x8] sm:$0xf]
        %v5745 = vld [vmem:[%s5741 + $0xc] sm:$0xf]
        %v5746 = vld [vmem:[%s5741 + $0x10] sm:$0xf]
        %v5747 = vld [vmem:[%s5741 + $0x14] sm:$0xf]
        %v5748 = vld [vmem:[%s5741 + $0x18] sm:$0xf]
        %v5749 = vld [vmem:[%s5741 + $0x1c] sm:$0xf]
        %v5750 = vld [vmem:[%s5741 + $0x20] sm:$0xf]
        %v5751 = vld [vmem:[%s5741 + $0x24] sm:$0xf]
        %v5752 = vld [vmem:[%s5741 + $0x28] sm:$0xf]
        %v5753 = vld [vmem:[%s5741 + $0x2c] sm:$0xf]
        %v5754 = vld [vmem:[%s5741 + $0x30] sm:$0xf]
        %v5755 = vld [vmem:[%s5741 + $0x34] sm:$0xf]
        %v5756 = vld [vmem:[%s5741 + $0x38] sm:$0xf]
        %v5757 = vld [vmem:[%s5741 + $0x3c] sm:$0xf]
        %v5795 = vunpack.c.l.b16 %v5704
        %v5796 = vunpack.c.l.b16 %v5705
        %v5797 = vunpack.c.l.b16 %v5706
        %v5798 = vunpack.c.l.b16 %v5707
        %v5799 = vunpack.c.l.b16 %v5708
        %v5800 = vunpack.c.l.b16 %v5709
        %v5801 = vunpack.c.l.b16 %v5710
        %v5802 = vunpack.c.l.b16 %v5711
        %v5803 = vunpack.c.l.b16 %v5712
        %v5804 = vunpack.c.l.b16 %v5713
        %v5805 = vunpack.c.l.b16 %v5714
        %v5806 = vunpack.c.l.b16 %v5715
        %v5807 = vunpack.c.l.b16 %v5716
        %v5808 = vunpack.c.l.b16 %v5717
        %v5809 = vunpack.c.l.b16 %v5718
        %v5810 = vunpack.c.l.b16 %v5719
        %v5811 = vunpack.c.l.b16 %v5720
        %v5812 = vunpack.c.l.b16 %v5721
        %v5813 = vunpack.c.l.b16 %v5722
        %v5814 = vunpack.c.l.b16 %v5723
        %v5815 = vunpack.c.l.b16 %v5724
        %v5816 = vunpack.c.l.b16 %v5725
        %v5817 = vunpack.c.l.b16 %v5726
        %v5818 = vunpack.c.l.b16 %v5727
        %v5819 = vunpack.c.l.b16 %v5728
        %v5820 = vunpack.c.l.b16 %v5729
        %v5821 = vunpack.c.l.b16 %v5730
        %v5822 = vunpack.c.l.b16 %v5731
        %v5823 = vunpack.c.l.b16 %v5732
        %v5824 = vunpack.c.l.b16 %v5733
        %v5825 = vunpack.c.l.b16 %v5734
        %v5826 = vunpack.c.l.b16 %v5735
        %v5827 = vunpack.c.l.b16 %v5736
        %v5828 = vunpack.c.l.b16 %v5737
        %v5829 = vunpack.c.l.b16 %v5738
        %v5830 = vunpack.c.l.b16 %v5739
        %v5831 = vunpack.c.l.b16 %v5740
        %v5832 = vpack.c.b16 %v5796, %v5795
        %v5833 = vpack.c.b16 %v5798, %v5797
        %v5834 = vpack.c.b16 %v5800, %v5799
        %v5835 = vpack.c.b16 %v5802, %v5801
        %v5836 = vpack.c.b16 %v5804, %v5803
        %v5837 = vpack.c.b16 %v5806, %v5805
        %v5838 = vpack.c.b16 %v5808, %v5807
        %v5839 = vpack.c.b16 %v5810, %v5809
        %v5840 = vpack.c.b16 %v5812, %v5811
        %v5841 = vpack.c.b16 %v5814, %v5813
        %v5842 = vpack.c.b16 %v5816, %v5815
        %v5843 = vpack.c.b16 %v5818, %v5817
        %v5844 = vpack.c.b16 %v5820, %v5819
        %v5845 = vpack.c.b16 %v5822, %v5821
        %v5846 = vpack.c.b16 %v5824, %v5823
        %v5847 = vpack.c.b16 %v5826, %v5825
        %v5848 = vpack.c.b16 %v5828, %v5827
        %v5849 = vpack.c.b16 %v5830, %v5829
        %v5850 = vpack.c.b16 %v5831, %v5831
        %v5852 = vshrl.u32 %v5832, 16
        %v5854 = vshll.u32 %v5832, 16
        %v5856 = vrot.slane %v5854, 1
        %v5857 = vor.u32 %v5852, %v5856
        %v5859 = vshll.u32 %v5833, 16
        %v5861 = vrot.slane %v5859, 1
        %v5862 = vsel %vm1806, %v5857, %v5861
        %v5863 = vshrl.u32 %v5833, 16
        %v5865 = vor.u32 %v5863, %v5861
        %v5867 = vshll.u32 %v5834, 16
        %v5869 = vrot.slane %v5867, 1
        %v5870 = vsel %vm1806, %v5865, %v5869
        %v5871 = vshrl.u32 %v5834, 16
        %v5873 = vor.u32 %v5871, %v5869
        %v5875 = vshll.u32 %v5835, 16
        %v5877 = vrot.slane %v5875, 1
        %v5878 = vsel %vm1806, %v5873, %v5877
        %v5879 = vshrl.u32 %v5835, 16
        %v5881 = vor.u32 %v5879, %v5877
        %v5883 = vshll.u32 %v5836, 16
        %v5885 = vrot.slane %v5883, 1
        %v5886 = vsel %vm1806, %v5881, %v5885
        %v5887 = vshrl.u32 %v5836, 16
        %v5889 = vor.u32 %v5887, %v5885
        %v5891 = vshll.u32 %v5837, 16
        %v5893 = vrot.slane %v5891, 1
        %v5894 = vsel %vm1806, %v5889, %v5893
        %v5895 = vshrl.u32 %v5837, 16
        %v5897 = vor.u32 %v5895, %v5893
        %v5899 = vshll.u32 %v5838, 16
        %v5901 = vrot.slane %v5899, 1
        %v5902 = vsel %vm1806, %v5897, %v5901
        %v5903 = vshrl.u32 %v5838, 16
        %v5905 = vor.u32 %v5903, %v5901
        %v5907 = vshll.u32 %v5839, 16
        %v5909 = vrot.slane %v5907, 1
        %v5910 = vsel %vm1806, %v5905, %v5909
        %v5911 = vshrl.u32 %v5839, 16
        %v5913 = vor.u32 %v5911, %v5909
        %v5915 = vshll.u32 %v5840, 16
        %v5917 = vrot.slane %v5915, 1
        %v5918 = vsel %vm1806, %v5913, %v5917
        %v5919 = vshrl.u32 %v5840, 16
        %v5921 = vor.u32 %v5919, %v5917
        %v5923 = vshll.u32 %v5841, 16
        %v5925 = vrot.slane %v5923, 1
        %v5926 = vsel %vm1806, %v5921, %v5925
        %v5927 = vshrl.u32 %v5841, 16
        %v5929 = vor.u32 %v5927, %v5925
        %v5931 = vshll.u32 %v5842, 16
        %v5933 = vrot.slane %v5931, 1
        %v5934 = vsel %vm1806, %v5929, %v5933
        %v5935 = vshrl.u32 %v5842, 16
        %v5937 = vor.u32 %v5935, %v5933
        %v5939 = vshll.u32 %v5843, 16
        %v5941 = vrot.slane %v5939, 1
        %v5942 = vsel %vm1806, %v5937, %v5941
        %v5943 = vshrl.u32 %v5843, 16
        %v5945 = vor.u32 %v5943, %v5941
        %v5947 = vshll.u32 %v5844, 16
        %v5949 = vrot.slane %v5947, 1
        %v5950 = vsel %vm1806, %v5945, %v5949
        %v5951 = vshrl.u32 %v5844, 16
        %v5953 = vor.u32 %v5951, %v5949
        %v5955 = vshll.u32 %v5845, 16
        %v5957 = vrot.slane %v5955, 1
        %v5958 = vsel %vm1806, %v5953, %v5957
        %v5959 = vshrl.u32 %v5845, 16
        %v5961 = vor.u32 %v5959, %v5957
        %v5963 = vshll.u32 %v5846, 16
        %v5965 = vrot.slane %v5963, 1
        %v5966 = vsel %vm1806, %v5961, %v5965
        %v5967 = vshrl.u32 %v5846, 16
        %v5969 = vor.u32 %v5967, %v5965
        %v5971 = vshll.u32 %v5847, 16
        %v5973 = vrot.slane %v5971, 1
        %v5974 = vsel %vm1806, %v5969, %v5973
        %v5975 = vshrl.u32 %v5847, 16
        %v5977 = vor.u32 %v5975, %v5973
        %v5979 = vshll.u32 %v5848, 16
        %v5981 = vrot.slane %v5979, 1
        %v5982 = vsel %vm1806, %v5977, %v5981
        %v5983 = vshrl.u32 %v5848, 16
        %v5985 = vor.u32 %v5983, %v5981
        %v5987 = vshll.u32 %v5849, 16
        %v5989 = vrot.slane %v5987, 1
        %v5990 = vsel %vm1806, %v5985, %v5989
        %v5991 = vshrl.u32 %v5849, 16
        %v5993 = vor.u32 %v5991, %v5989
        %v5995 = vshll.u32 %v5850, 16
        %v5997 = vrot.slane %v5995, 1
        %v5998 = vsel %vm1806, %v5993, %v5997
        %v6033 = vunpack.c.l.b16 %v5742
        %v6034 = vunpack.c.l.b16 %v5743
        %v6035 = vunpack.c.l.b16 %v5744
        %v6036 = vunpack.c.l.b16 %v5745
        %v6037 = vunpack.c.l.b16 %v5746
        %v6038 = vunpack.c.l.b16 %v5747
        %v6039 = vunpack.c.l.b16 %v5748
        %v6040 = vunpack.c.l.b16 %v5749
        %v6041 = vunpack.c.l.b16 %v5750
        %v6042 = vunpack.c.l.b16 %v5751
        %v6043 = vunpack.c.l.b16 %v5752
        %v6044 = vunpack.c.l.b16 %v5753
        %v6045 = vunpack.c.l.b16 %v5754
        %v6046 = vunpack.c.l.b16 %v5755
        %v6047 = vunpack.c.l.b16 %v5756
        %v6048 = vunpack.c.l.b16 %v5757
        %v6049 = vpack.c.b16 %v6034, %v6033
        %v6050 = vpack.c.b16 %v6036, %v6035
        %v6051 = vpack.c.b16 %v6038, %v6037
        %v6052 = vpack.c.b16 %v6040, %v6039
        %v6053 = vpack.c.b16 %v6042, %v6041
        %v6054 = vpack.c.b16 %v6044, %v6043
        %v6055 = vpack.c.b16 %v6046, %v6045
        %v6056 = vpack.c.b16 %v6048, %v6047
        %6065 = vmatpush.bf16.msra.mxu0 %v6056
        %6066 = vmatpush.bf16.msra.mxu0 %v6055
        %6067 = vmatpush.bf16.msra.mxu0 %v6054
        %6068 = vmatpush.bf16.msra.mxu0 %v6053
        %6069 = vmatpush.bf16.msra.mxu0 %v6052
        %6070 = vmatpush.bf16.msra.mxu0 %v6051
        %6071 = vmatpush.bf16.msra.mxu0 %v6050
        %6072 = vmatpush.bf16.msra.mxu0 %v6049
        %6073 = vmatmul.bf16.gmra.mxu0 %v5862
        %v6074 = vpop.f32.mrf.mxu0
        %v6075 = vadd.f32 0.0, %v6074
        %v6076 = vpop.f32.mrf.mxu0
        %v6077 = vadd.f32 0.0, %v6076
        %6078 = vmatmul.bf16.gmra.mxu0 %v5870
        %v6079 = vpop.f32.mrf.mxu0
        %v6080 = vadd.f32 0.0, %v6079
        %v6081 = vpop.f32.mrf.mxu0
        %v6082 = vadd.f32 0.0, %v6081
        %6083 = vmatmul.bf16.gmra.mxu0 %v5878
        %v6084 = vpop.f32.mrf.mxu0
        %v6085 = vadd.f32 0.0, %v6084
        %v6086 = vpop.f32.mrf.mxu0
        %v6087 = vadd.f32 0.0, %v6086
        %6088 = vmatmul.bf16.gmra.mxu0 %v5886
        %v6089 = vpop.f32.mrf.mxu0
        %v6090 = vadd.f32 0.0, %v6089
        %v6091 = vpop.f32.mrf.mxu0
        %v6092 = vadd.f32 0.0, %v6091
        %6093 = vmatmul.bf16.gmra.mxu0 %v5894
        %v6094 = vpop.f32.mrf.mxu0
        %v6095 = vadd.f32 0.0, %v6094
        %v6096 = vpop.f32.mrf.mxu0
        %v6097 = vadd.f32 0.0, %v6096
        %6098 = vmatmul.bf16.gmra.mxu0 %v5902
        %v6099 = vpop.f32.mrf.mxu0
        %v6100 = vadd.f32 0.0, %v6099
        %v6101 = vpop.f32.mrf.mxu0
        %v6102 = vadd.f32 0.0, %v6101
        %6103 = vmatmul.bf16.gmra.mxu0 %v5910
        %v6104 = vpop.f32.mrf.mxu0
        %v6105 = vadd.f32 0.0, %v6104
        %v6106 = vpop.f32.mrf.mxu0
        %v6107 = vadd.f32 0.0, %v6106
        %6108 = vmatmul.bf16.gmra.mxu0 %v5918
        %v6109 = vpop.f32.mrf.mxu0
        %v6110 = vadd.f32 0.0, %v6109
        %v6111 = vpop.f32.mrf.mxu0
        %v6112 = vadd.f32 0.0, %v6111
        %6113 = vmatmul.bf16.gmra.mxu0 %v5926
        %v6114 = vpop.f32.mrf.mxu0
        %v6115 = vadd.f32 0.0, %v6114
        %v6116 = vpop.f32.mrf.mxu0
        %v6117 = vadd.f32 0.0, %v6116
        %6118 = vmatmul.bf16.gmra.mxu0 %v5934
        %v6119 = vpop.f32.mrf.mxu0
        %v6120 = vadd.f32 0.0, %v6119
        %v6121 = vpop.f32.mrf.mxu0
        %v6122 = vadd.f32 0.0, %v6121
        %6123 = vmatmul.bf16.gmra.mxu0 %v5942
        %v6124 = vpop.f32.mrf.mxu0
        %v6125 = vadd.f32 0.0, %v6124
        %v6126 = vpop.f32.mrf.mxu0
        %v6127 = vadd.f32 0.0, %v6126
        %6128 = vmatmul.bf16.gmra.mxu0 %v5950
        %v6129 = vpop.f32.mrf.mxu0
        %v6130 = vadd.f32 0.0, %v6129
        %v6131 = vpop.f32.mrf.mxu0
        %v6132 = vadd.f32 0.0, %v6131
        %6133 = vmatmul.bf16.gmra.mxu0 %v5958
        %v6134 = vpop.f32.mrf.mxu0
        %v6135 = vadd.f32 0.0, %v6134
        %v6136 = vpop.f32.mrf.mxu0
        %v6137 = vadd.f32 0.0, %v6136
        %6138 = vmatmul.bf16.gmra.mxu0 %v5966
        %v6139 = vpop.f32.mrf.mxu0
        %v6140 = vadd.f32 0.0, %v6139
        %v6141 = vpop.f32.mrf.mxu0
        %v6142 = vadd.f32 0.0, %v6141
        %6143 = vmatmul.bf16.gmra.mxu0 %v5974
        %v6144 = vpop.f32.mrf.mxu0
        %v6145 = vadd.f32 0.0, %v6144
        %v6146 = vpop.f32.mrf.mxu0
        %v6147 = vadd.f32 0.0, %v6146
        %6148 = vmatmul.bf16.gmra.mxu0 %v5982
        %v6149 = vpop.f32.mrf.mxu0
        %v6150 = vadd.f32 0.0, %v6149
        %v6151 = vpop.f32.mrf.mxu0
        %v6152 = vadd.f32 0.0, %v6151
        %6153 = vmatmul.bf16.gmra.mxu0 %v5990
        %v6154 = vpop.f32.mrf.mxu0
        %v6155 = vadd.f32 0.0, %v6154
        %v6156 = vpop.f32.mrf.mxu0
        %v6157 = vadd.f32 0.0, %v6156
        %6158 = vmatmul.bf16.gmra.mxu0 %v5998
        %v6159 = vpop.f32.mrf.mxu0
        %v6160 = vadd.f32 0.0, %v6159
        %v6161 = vpop.f32.mrf.mxu0
        %v6162 = vadd.f32 0.0, %v6161
        %6163 = vdwg.mxu0
        %v6164 = vadd.f32 %v5668, %v6075
        %v6165 = vadd.f32 %v5669, %v6077
        %v6166 = vadd.f32 %v5670, %v6080
        %v6167 = vadd.f32 %v5671, %v6082
        %v6168 = vadd.f32 %v5672, %v6085
        %v6169 = vadd.f32 %v5673, %v6087
        %v6170 = vadd.f32 %v5674, %v6090
        %v6171 = vadd.f32 %v5675, %v6092
        %v6172 = vadd.f32 %v5676, %v6095
        %v6173 = vadd.f32 %v5677, %v6097
        %v6174 = vadd.f32 %v5678, %v6100
        %v6175 = vadd.f32 %v5679, %v6102
        %v6176 = vadd.f32 %v5680, %v6105
        %v6177 = vadd.f32 %v5681, %v6107
        %v6178 = vadd.f32 %v5682, %v6110
        %v6179 = vadd.f32 %v5683, %v6112
        %v6180 = vadd.f32 %v5684, %v6115
        %v6181 = vadd.f32 %v5685, %v6117
        %v6182 = vadd.f32 %v5686, %v6120
        %v6183 = vadd.f32 %v5687, %v6122
        %v6184 = vadd.f32 %v5688, %v6125
        %v6185 = vadd.f32 %v5689, %v6127
        %v6186 = vadd.f32 %v5690, %v6130
        %v6187 = vadd.f32 %v5691, %v6132
        %v6188 = vadd.f32 %v5692, %v6135
        %v6189 = vadd.f32 %v5693, %v6137
        %v6190 = vadd.f32 %v5694, %v6140
        %v6191 = vadd.f32 %v5695, %v6142
        %v6192 = vadd.f32 %v5696, %v6145
        %v6193 = vadd.f32 %v5697, %v6147
        %v6194 = vadd.f32 %v5698, %v6150
        %v6195 = vadd.f32 %v5699, %v6152
        %v6196 = vadd.f32 %v5700, %v6155
        %v6197 = vadd.f32 %v5701, %v6157
        %v6198 = vadd.f32 %v5702, %v6160
        %v6199 = vadd.f32 %v5703, %v6162
        %v6200 = vld [vmem:[#allocation2] sm:$0xe]
        %s6201 = scalar_lea.vmem %s3, 128
        %v6202 = vld [vmem:[%s6201] sm:$0xf]
        %v6203 = vld [vmem:[%s6201 + $0x4] sm:$0xf]
        %v6204 = vld [vmem:[%s6201 + $0x8] sm:$0xf]
        %v6205 = vld [vmem:[%s6201 + $0xc] sm:$0xf]
        %v6206 = vld [vmem:[%s6201 + $0x10] sm:$0xf]
        %v6207 = vld [vmem:[%s6201 + $0x14] sm:$0xf]
        %v6208 = vld [vmem:[%s6201 + $0x18] sm:$0xf]
        %v6209 = vld [vmem:[%s6201 + $0x1c] sm:$0xf]
        %v6210 = vld [vmem:[%s6201 + $0x20] sm:$0xf]
        %v6211 = vld [vmem:[%s6201 + $0x24] sm:$0xf]
        %v6212 = vld [vmem:[%s6201 + $0x28] sm:$0xf]
        %v6213 = vld [vmem:[%s6201 + $0x2c] sm:$0xf]
        %v6214 = vld [vmem:[%s6201 + $0x30] sm:$0xf]
        %v6215 = vld [vmem:[%s6201 + $0x34] sm:$0xf]
        %v6216 = vld [vmem:[%s6201 + $0x38] sm:$0xf]
        %v6217 = vld [vmem:[%s6201 + $0x3c] sm:$0xf]
        %v6219 = vunpack.c.l.b16 %v6200
        %v6220 = vpack.c.b16 %v5796, %v6219
        %v6221 = vrot.slane %v6220, 1
        %v6222 = vrot.slane %v5833, 1
        %v6223 = vsel %vm2306, %v6221, %v6222
        %v6224 = vrot.slane %v5834, 1
        %v6225 = vsel %vm2306, %v6222, %v6224
        %v6226 = vrot.slane %v5835, 1
        %v6227 = vsel %vm2306, %v6224, %v6226
        %v6228 = vrot.slane %v5836, 1
        %v6229 = vsel %vm2306, %v6226, %v6228
        %v6230 = vrot.slane %v5837, 1
        %v6231 = vsel %vm2306, %v6228, %v6230
        %v6232 = vrot.slane %v5838, 1
        %v6233 = vsel %vm2306, %v6230, %v6232
        %v6234 = vrot.slane %v5839, 1
        %v6235 = vsel %vm2306, %v6232, %v6234
        %v6236 = vrot.slane %v5840, 1
        %v6237 = vsel %vm2306, %v6234, %v6236
        %v6238 = vrot.slane %v5841, 1
        %v6239 = vsel %vm2306, %v6236, %v6238
        %v6240 = vrot.slane %v5842, 1
        %v6241 = vsel %vm2306, %v6238, %v6240
        %v6242 = vrot.slane %v5843, 1
        %v6243 = vsel %vm2306, %v6240, %v6242
        %v6244 = vrot.slane %v5844, 1
        %v6245 = vsel %vm2306, %v6242, %v6244
        %v6246 = vrot.slane %v5845, 1
        %v6247 = vsel %vm2306, %v6244, %v6246
        %v6248 = vrot.slane %v5846, 1
        %v6249 = vsel %vm2306, %v6246, %v6248
        %v6250 = vrot.slane %v5847, 1
        %v6251 = vsel %vm2306, %v6248, %v6250
        %v6252 = vrot.slane %v5848, 1
        %v6253 = vsel %vm2306, %v6250, %v6252
        %v6254 = vrot.slane %v5849, 1
        %v6255 = vsel %vm2306, %v6252, %v6254
        %v6256 = vrot.slane %v5850, 1
        %v6257 = vsel %vm2306, %v6254, %v6256
        %v6292 = vunpack.c.l.b16 %v6202
        %v6293 = vunpack.c.l.b16 %v6203
        %v6294 = vunpack.c.l.b16 %v6204
        %v6295 = vunpack.c.l.b16 %v6205
        %v6296 = vunpack.c.l.b16 %v6206
        %v6297 = vunpack.c.l.b16 %v6207
        %v6298 = vunpack.c.l.b16 %v6208
        %v6299 = vunpack.c.l.b16 %v6209
        %v6300 = vunpack.c.l.b16 %v6210
        %v6301 = vunpack.c.l.b16 %v6211
        %v6302 = vunpack.c.l.b16 %v6212
        %v6303 = vunpack.c.l.b16 %v6213
        %v6304 = vunpack.c.l.b16 %v6214
        %v6305 = vunpack.c.l.b16 %v6215
        %v6306 = vunpack.c.l.b16 %v6216
        %v6307 = vunpack.c.l.b16 %v6217
        %v6308 = vpack.c.b16 %v6293, %v6292
        %v6309 = vpack.c.b16 %v6295, %v6294
        %v6310 = vpack.c.b16 %v6297, %v6296
        %v6311 = vpack.c.b16 %v6299, %v6298
        %v6312 = vpack.c.b16 %v6301, %v6300
        %v6313 = vpack.c.b16 %v6303, %v6302
        %v6314 = vpack.c.b16 %v6305, %v6304
        %v6315 = vpack.c.b16 %v6307, %v6306
        %6324 = vmatpush.bf16.msra.mxu0 %v6315
        %6325 = vmatpush.bf16.msra.mxu0 %v6314
        %6326 = vmatpush.bf16.msra.mxu0 %v6313
        %6327 = vmatpush.bf16.msra.mxu0 %v6312
        %6328 = vmatpush.bf16.msra.mxu0 %v6311
        %6329 = vmatpush.bf16.msra.mxu0 %v6310
        %6330 = vmatpush.bf16.msra.mxu0 %v6309
        %6331 = vmatpush.bf16.msra.mxu0 %v6308
        %6332 = vmatmul.bf16.gmra.mxu0 %v6223
        %v6333 = vpop.f32.mrf.mxu0
        %v6334 = vadd.f32 0.0, %v6333
        %v6335 = vpop.f32.mrf.mxu0
        %v6336 = vadd.f32 0.0, %v6335
        %6337 = vmatmul.bf16.gmra.mxu0 %v6225
        %v6338 = vpop.f32.mrf.mxu0
        %v6339 = vadd.f32 0.0, %v6338
        %v6340 = vpop.f32.mrf.mxu0
        %v6341 = vadd.f32 0.0, %v6340
        %6342 = vmatmul.bf16.gmra.mxu0 %v6227
        %v6343 = vpop.f32.mrf.mxu0
        %v6344 = vadd.f32 0.0, %v6343
        %v6345 = vpop.f32.mrf.mxu0
        %v6346 = vadd.f32 0.0, %v6345
        %6347 = vmatmul.bf16.gmra.mxu0 %v6229
        %v6348 = vpop.f32.mrf.mxu0
        %v6349 = vadd.f32 0.0, %v6348
        %v6350 = vpop.f32.mrf.mxu0
        %v6351 = vadd.f32 0.0, %v6350
        %6352 = vmatmul.bf16.gmra.mxu0 %v6231
        %v6353 = vpop.f32.mrf.mxu0
        %v6354 = vadd.f32 0.0, %v6353
        %v6355 = vpop.f32.mrf.mxu0
        %v6356 = vadd.f32 0.0, %v6355
        %6357 = vmatmul.bf16.gmra.mxu0 %v6233
        %v6358 = vpop.f32.mrf.mxu0
        %v6359 = vadd.f32 0.0, %v6358
        %v6360 = vpop.f32.mrf.mxu0
        %v6361 = vadd.f32 0.0, %v6360
        %6362 = vmatmul.bf16.gmra.mxu0 %v6235
        %v6363 = vpop.f32.mrf.mxu0
        %v6364 = vadd.f32 0.0, %v6363
        %v6365 = vpop.f32.mrf.mxu0
        %v6366 = vadd.f32 0.0, %v6365
        %6367 = vmatmul.bf16.gmra.mxu0 %v6237
        %v6368 = vpop.f32.mrf.mxu0
        %v6369 = vadd.f32 0.0, %v6368
        %v6370 = vpop.f32.mrf.mxu0
        %v6371 = vadd.f32 0.0, %v6370
        %6372 = vmatmul.bf16.gmra.mxu0 %v6239
        %v6373 = vpop.f32.mrf.mxu0
        %v6374 = vadd.f32 0.0, %v6373
        %v6375 = vpop.f32.mrf.mxu0
        %v6376 = vadd.f32 0.0, %v6375
        %6377 = vmatmul.bf16.gmra.mxu0 %v6241
        %v6378 = vpop.f32.mrf.mxu0
        %v6379 = vadd.f32 0.0, %v6378
        %v6380 = vpop.f32.mrf.mxu0
        %v6381 = vadd.f32 0.0, %v6380
        %6382 = vmatmul.bf16.gmra.mxu0 %v6243
        %v6383 = vpop.f32.mrf.mxu0
        %v6384 = vadd.f32 0.0, %v6383
        %v6385 = vpop.f32.mrf.mxu0
        %v6386 = vadd.f32 0.0, %v6385
        %6387 = vmatmul.bf16.gmra.mxu0 %v6245
        %v6388 = vpop.f32.mrf.mxu0
        %v6389 = vadd.f32 0.0, %v6388
        %v6390 = vpop.f32.mrf.mxu0
        %v6391 = vadd.f32 0.0, %v6390
        %6392 = vmatmul.bf16.gmra.mxu0 %v6247
        %v6393 = vpop.f32.mrf.mxu0
        %v6394 = vadd.f32 0.0, %v6393
        %v6395 = vpop.f32.mrf.mxu0
        %v6396 = vadd.f32 0.0, %v6395
        %6397 = vmatmul.bf16.gmra.mxu0 %v6249
        %v6398 = vpop.f32.mrf.mxu0
        %v6399 = vadd.f32 0.0, %v6398
        %v6400 = vpop.f32.mrf.mxu0
        %v6401 = vadd.f32 0.0, %v6400
        %6402 = vmatmul.bf16.gmra.mxu0 %v6251
        %v6403 = vpop.f32.mrf.mxu0
        %v6404 = vadd.f32 0.0, %v6403
        %v6405 = vpop.f32.mrf.mxu0
        %v6406 = vadd.f32 0.0, %v6405
        %6407 = vmatmul.bf16.gmra.mxu0 %v6253
        %v6408 = vpop.f32.mrf.mxu0
        %v6409 = vadd.f32 0.0, %v6408
        %v6410 = vpop.f32.mrf.mxu0
        %v6411 = vadd.f32 0.0, %v6410
        %6412 = vmatmul.bf16.gmra.mxu0 %v6255
        %v6413 = vpop.f32.mrf.mxu0
        %v6414 = vadd.f32 0.0, %v6413
        %v6415 = vpop.f32.mrf.mxu0
        %v6416 = vadd.f32 0.0, %v6415
        %6417 = vmatmul.bf16.gmra.mxu0 %v6257
        %v6418 = vpop.f32.mrf.mxu0
        %v6419 = vadd.f32 0.0, %v6418
        %v6420 = vpop.f32.mrf.mxu0
        %v6421 = vadd.f32 0.0, %v6420
        %6422 = vdwg.mxu0
        %v6423 = vadd.f32 %v6164, %v6334
        %v6424 = vadd.f32 %v6165, %v6336
        %v6425 = vadd.f32 %v6166, %v6339
        %v6426 = vadd.f32 %v6167, %v6341
        %v6427 = vadd.f32 %v6168, %v6344
        %v6428 = vadd.f32 %v6169, %v6346
        %v6429 = vadd.f32 %v6170, %v6349
        %v6430 = vadd.f32 %v6171, %v6351
        %v6431 = vadd.f32 %v6172, %v6354
        %v6432 = vadd.f32 %v6173, %v6356
        %v6433 = vadd.f32 %v6174, %v6359
        %v6434 = vadd.f32 %v6175, %v6361
        %v6435 = vadd.f32 %v6176, %v6364
        %v6436 = vadd.f32 %v6177, %v6366
        %v6437 = vadd.f32 %v6178, %v6369
        %v6438 = vadd.f32 %v6179, %v6371
        %v6439 = vadd.f32 %v6180, %v6374
        %v6440 = vadd.f32 %v6181, %v6376
        %v6441 = vadd.f32 %v6182, %v6379
        %v6442 = vadd.f32 %v6183, %v6381
        %v6443 = vadd.f32 %v6184, %v6384
        %v6444 = vadd.f32 %v6185, %v6386
        %v6445 = vadd.f32 %v6186, %v6389
        %v6446 = vadd.f32 %v6187, %v6391
        %v6447 = vadd.f32 %v6188, %v6394
        %v6448 = vadd.f32 %v6189, %v6396
        %v6449 = vadd.f32 %v6190, %v6399
        %v6450 = vadd.f32 %v6191, %v6401
        %v6451 = vadd.f32 %v6192, %v6404
        %v6452 = vadd.f32 %v6193, %v6406
        %v6453 = vadd.f32 %v6194, %v6409
        %v6454 = vadd.f32 %v6195, %v6411
        %v6455 = vadd.f32 %v6196, %v6414
        %v6456 = vadd.f32 %v6197, %v6416
        %v6457 = vadd.f32 %v6198, %v6419
        %v6458 = vadd.f32 %v6199, %v6421
        %v6459 = vld [vmem:[#allocation2 + $0x8] sm:$0xe]
        %v6460 = vld [vmem:[#allocation2 + $0xc] sm:$0xf]
        %v6461 = vld [vmem:[#allocation2 + $0x10] sm:$0xf]
        %v6462 = vld [vmem:[#allocation2 + $0x14] sm:$0xf]
        %v6463 = vld [vmem:[#allocation2 + $0x18] sm:$0xf]
        %v6464 = vld [vmem:[#allocation2 + $0x1c] sm:$0xf]
        %v6465 = vld [vmem:[#allocation2 + $0x20] sm:$0xf]
        %v6466 = vld [vmem:[#allocation2 + $0x24] sm:$0xf]
        %v6467 = vld [vmem:[#allocation2 + $0x28] sm:$0xf]
        %v6468 = vld [vmem:[#allocation2 + $0x2c] sm:$0xf]
        %v6469 = vld [vmem:[#allocation2 + $0x30] sm:$0xf]
        %v6470 = vld [vmem:[#allocation2 + $0x34] sm:$0xf]
        %v6471 = vld [vmem:[#allocation2 + $0x38] sm:$0xf]
        %v6472 = vld [vmem:[#allocation2 + $0x3c] sm:$0xf]
        %v6473 = vld [vmem:[#allocation2 + $0x40] sm:$0xf]
        %v6474 = vld [vmem:[#allocation2 + $0x44] sm:$0xf]
        %v6475 = vld [vmem:[#allocation2 + $0x48] sm:$0xf]
        %v6476 = vld [vmem:[#allocation2 + $0x4c] sm:$0xf]
        %v6477 = vld [vmem:[#allocation2 + $0x50] sm:$0xf]
        %v6478 = vld [vmem:[#allocation2 + $0x54] sm:$0xf]
        %v6479 = vld [vmem:[#allocation2 + $0x58] sm:$0xf]
        %v6480 = vld [vmem:[#allocation2 + $0x5c] sm:$0xf]
        %v6481 = vld [vmem:[#allocation2 + $0x60] sm:$0xf]
        %v6482 = vld [vmem:[#allocation2 + $0x64] sm:$0xf]
        %v6483 = vld [vmem:[#allocation2 + $0x68] sm:$0xf]
        %v6484 = vld [vmem:[#allocation2 + $0x6c] sm:$0xf]
        %v6485 = vld [vmem:[#allocation2 + $0x70] sm:$0xf]
        %v6486 = vld [vmem:[#allocation2 + $0x74] sm:$0xf]
        %v6487 = vld [vmem:[#allocation2 + $0x78] sm:$0xf]
        %v6488 = vld [vmem:[#allocation2 + $0x7c] sm:$0xf]
        %v6489 = vld [vmem:[#allocation2 + $0x80] sm:$0xf]
        %v6490 = vld [vmem:[#allocation2 + $0x84] sm:$0xf]
        %v6491 = vld [vmem:[#allocation2 + $0x88] sm:$0xf]
        %v6492 = vld [vmem:[#allocation2 + $0x8c] sm:$0xf]
        %v6493 = vld [vmem:[#allocation2 + $0x90] sm:$0xf]
        %v6494 = vld [vmem:[#allocation2 + $0x94] sm:$0xf]
        %v6495 = vld [vmem:[#allocation2 + $0x98] sm:$0x1]
        %s6496 = scalar_lea.vmem %s3, 192
        %v6497 = vld [vmem:[%s6496] sm:$0xf]
        %v6498 = vld [vmem:[%s6496 + $0x4] sm:$0xf]
        %v6499 = vld [vmem:[%s6496 + $0x8] sm:$0xf]
        %v6500 = vld [vmem:[%s6496 + $0xc] sm:$0xf]
        %v6501 = vld [vmem:[%s6496 + $0x10] sm:$0xf]
        %v6502 = vld [vmem:[%s6496 + $0x14] sm:$0xf]
        %v6503 = vld [vmem:[%s6496 + $0x18] sm:$0xf]
        %v6504 = vld [vmem:[%s6496 + $0x1c] sm:$0xf]
        %v6505 = vld [vmem:[%s6496 + $0x20] sm:$0xf]
        %v6506 = vld [vmem:[%s6496 + $0x24] sm:$0xf]
        %v6507 = vld [vmem:[%s6496 + $0x28] sm:$0xf]
        %v6508 = vld [vmem:[%s6496 + $0x2c] sm:$0xf]
        %v6509 = vld [vmem:[%s6496 + $0x30] sm:$0xf]
        %v6510 = vld [vmem:[%s6496 + $0x34] sm:$0xf]
        %v6511 = vld [vmem:[%s6496 + $0x38] sm:$0xf]
        %v6512 = vld [vmem:[%s6496 + $0x3c] sm:$0xf]
        %v6550 = vunpack.c.l.b16 %v6459
        %v6551 = vunpack.c.l.b16 %v6460
        %v6552 = vunpack.c.l.b16 %v6461
        %v6553 = vunpack.c.l.b16 %v6462
        %v6554 = vunpack.c.l.b16 %v6463
        %v6555 = vunpack.c.l.b16 %v6464
        %v6556 = vunpack.c.l.b16 %v6465
        %v6557 = vunpack.c.l.b16 %v6466
        %v6558 = vunpack.c.l.b16 %v6467
        %v6559 = vunpack.c.l.b16 %v6468
        %v6560 = vunpack.c.l.b16 %v6469
        %v6561 = vunpack.c.l.b16 %v6470
        %v6562 = vunpack.c.l.b16 %v6471
        %v6563 = vunpack.c.l.b16 %v6472
        %v6564 = vunpack.c.l.b16 %v6473
        %v6565 = vunpack.c.l.b16 %v6474
        %v6566 = vunpack.c.l.b16 %v6475
        %v6567 = vunpack.c.l.b16 %v6476
        %v6568 = vunpack.c.l.b16 %v6477
        %v6569 = vunpack.c.l.b16 %v6478
        %v6570 = vunpack.c.l.b16 %v6479
        %v6571 = vunpack.c.l.b16 %v6480
        %v6572 = vunpack.c.l.b16 %v6481
        %v6573 = vunpack.c.l.b16 %v6482
        %v6574 = vunpack.c.l.b16 %v6483
        %v6575 = vunpack.c.l.b16 %v6484
        %v6576 = vunpack.c.l.b16 %v6485
        %v6577 = vunpack.c.l.b16 %v6486
        %v6578 = vunpack.c.l.b16 %v6487
        %v6579 = vunpack.c.l.b16 %v6488
        %v6580 = vunpack.c.l.b16 %v6489
        %v6581 = vunpack.c.l.b16 %v6490
        %v6582 = vunpack.c.l.b16 %v6491
        %v6583 = vunpack.c.l.b16 %v6492
        %v6584 = vunpack.c.l.b16 %v6493
        %v6585 = vunpack.c.l.b16 %v6494
        %v6586 = vunpack.c.l.b16 %v6495
        %v6587 = vpack.c.b16 %v6551, %v6550
        %v6588 = vpack.c.b16 %v6553, %v6552
        %v6589 = vpack.c.b16 %v6555, %v6554
        %v6590 = vpack.c.b16 %v6557, %v6556
        %v6591 = vpack.c.b16 %v6559, %v6558
        %v6592 = vpack.c.b16 %v6561, %v6560
        %v6593 = vpack.c.b16 %v6563, %v6562
        %v6594 = vpack.c.b16 %v6565, %v6564
        %v6595 = vpack.c.b16 %v6567, %v6566
        %v6596 = vpack.c.b16 %v6569, %v6568
        %v6597 = vpack.c.b16 %v6571, %v6570
        %v6598 = vpack.c.b16 %v6573, %v6572
        %v6599 = vpack.c.b16 %v6575, %v6574
        %v6600 = vpack.c.b16 %v6577, %v6576
        %v6601 = vpack.c.b16 %v6579, %v6578
        %v6602 = vpack.c.b16 %v6581, %v6580
        %v6603 = vpack.c.b16 %v6583, %v6582
        %v6604 = vpack.c.b16 %v6585, %v6584
        %v6605 = vpack.c.b16 %v6586, %v6586
        %v6606 = vrot.slane %v6587, 1
        %v6607 = vrot.slane %v6588, 1
        %v6608 = vsel %vm2306, %v6606, %v6607
        %v6609 = vrot.slane %v6589, 1
        %v6610 = vsel %vm2306, %v6607, %v6609
        %v6611 = vrot.slane %v6590, 1
        %v6612 = vsel %vm2306, %v6609, %v6611
        %v6613 = vrot.slane %v6591, 1
        %v6614 = vsel %vm2306, %v6611, %v6613
        %v6615 = vrot.slane %v6592, 1
        %v6616 = vsel %vm2306, %v6613, %v6615
        %v6617 = vrot.slane %v6593, 1
        %v6618 = vsel %vm2306, %v6615, %v6617
        %v6619 = vrot.slane %v6594, 1
        %v6620 = vsel %vm2306, %v6617, %v6619
        %v6621 = vrot.slane %v6595, 1
        %v6622 = vsel %vm2306, %v6619, %v6621
        %v6623 = vrot.slane %v6596, 1
        %v6624 = vsel %vm2306, %v6621, %v6623
        %v6625 = vrot.slane %v6597, 1
        %v6626 = vsel %vm2306, %v6623, %v6625
        %v6627 = vrot.slane %v6598, 1
        %v6628 = vsel %vm2306, %v6625, %v6627
        %v6629 = vrot.slane %v6599, 1
        %v6630 = vsel %vm2306, %v6627, %v6629
        %v6631 = vrot.slane %v6600, 1
        %v6632 = vsel %vm2306, %v6629, %v6631
        %v6633 = vrot.slane %v6601, 1
        %v6634 = vsel %vm2306, %v6631, %v6633
        %v6635 = vrot.slane %v6602, 1
        %v6636 = vsel %vm2306, %v6633, %v6635
        %v6637 = vrot.slane %v6603, 1
        %v6638 = vsel %vm2306, %v6635, %v6637
        %v6639 = vrot.slane %v6604, 1
        %v6640 = vsel %vm2306, %v6637, %v6639
        %v6641 = vrot.slane %v6605, 1
        %v6642 = vsel %vm2306, %v6639, %v6641
        %v6677 = vunpack.c.l.b16 %v6497
        %v6678 = vunpack.c.l.b16 %v6498
        %v6679 = vunpack.c.l.b16 %v6499
        %v6680 = vunpack.c.l.b16 %v6500
        %v6681 = vunpack.c.l.b16 %v6501
        %v6682 = vunpack.c.l.b16 %v6502
        %v6683 = vunpack.c.l.b16 %v6503
        %v6684 = vunpack.c.l.b16 %v6504
        %v6685 = vunpack.c.l.b16 %v6505
        %v6686 = vunpack.c.l.b16 %v6506
        %v6687 = vunpack.c.l.b16 %v6507
        %v6688 = vunpack.c.l.b16 %v6508
        %v6689 = vunpack.c.l.b16 %v6509
        %v6690 = vunpack.c.l.b16 %v6510
        %v6691 = vunpack.c.l.b16 %v6511
        %v6692 = vunpack.c.l.b16 %v6512
        %v6693 = vpack.c.b16 %v6678, %v6677
        %v6694 = vpack.c.b16 %v6680, %v6679
        %v6695 = vpack.c.b16 %v6682, %v6681
        %v6696 = vpack.c.b16 %v6684, %v6683
        %v6697 = vpack.c.b16 %v6686, %v6685
        %v6698 = vpack.c.b16 %v6688, %v6687
        %v6699 = vpack.c.b16 %v6690, %v6689
        %v6700 = vpack.c.b16 %v6692, %v6691
        %6709 = vmatpush.bf16.msra.mxu0 %v6700
        %6710 = vmatpush.bf16.msra.mxu0 %v6699
        %6711 = vmatpush.bf16.msra.mxu0 %v6698
        %6712 = vmatpush.bf16.msra.mxu0 %v6697
        %6713 = vmatpush.bf16.msra.mxu0 %v6696
        %6714 = vmatpush.bf16.msra.mxu0 %v6695
        %6715 = vmatpush.bf16.msra.mxu0 %v6694
        %6716 = vmatpush.bf16.msra.mxu0 %v6693
        %6717 = vmatmul.bf16.gmra.mxu0 %v6608
        %v6718 = vpop.f32.mrf.mxu0
        %v6719 = vadd.f32 0.0, %v6718
        %v6720 = vpop.f32.mrf.mxu0
        %v6721 = vadd.f32 0.0, %v6720
        %6722 = vmatmul.bf16.gmra.mxu0 %v6610
        %v6723 = vpop.f32.mrf.mxu0
        %v6724 = vadd.f32 0.0, %v6723
        %v6725 = vpop.f32.mrf.mxu0
        %v6726 = vadd.f32 0.0, %v6725
        %6727 = vmatmul.bf16.gmra.mxu0 %v6612
        %v6728 = vpop.f32.mrf.mxu0
        %v6729 = vadd.f32 0.0, %v6728
        %v6730 = vpop.f32.mrf.mxu0
        %v6731 = vadd.f32 0.0, %v6730
        %6732 = vmatmul.bf16.gmra.mxu0 %v6614
        %v6733 = vpop.f32.mrf.mxu0
        %v6734 = vadd.f32 0.0, %v6733
        %v6735 = vpop.f32.mrf.mxu0
        %v6736 = vadd.f32 0.0, %v6735
        %6737 = vmatmul.bf16.gmra.mxu0 %v6616
        %v6738 = vpop.f32.mrf.mxu0
        %v6739 = vadd.f32 0.0, %v6738
        %v6740 = vpop.f32.mrf.mxu0
        %v6741 = vadd.f32 0.0, %v6740
        %6742 = vmatmul.bf16.gmra.mxu0 %v6618
        %v6743 = vpop.f32.mrf.mxu0
        %v6744 = vadd.f32 0.0, %v6743
        %v6745 = vpop.f32.mrf.mxu0
        %v6746 = vadd.f32 0.0, %v6745
        %6747 = vmatmul.bf16.gmra.mxu0 %v6620
        %v6748 = vpop.f32.mrf.mxu0
        %v6749 = vadd.f32 0.0, %v6748
        %v6750 = vpop.f32.mrf.mxu0
        %v6751 = vadd.f32 0.0, %v6750
        %6752 = vmatmul.bf16.gmra.mxu0 %v6622
        %v6753 = vpop.f32.mrf.mxu0
        %v6754 = vadd.f32 0.0, %v6753
        %v6755 = vpop.f32.mrf.mxu0
        %v6756 = vadd.f32 0.0, %v6755
        %6757 = vmatmul.bf16.gmra.mxu0 %v6624
        %v6758 = vpop.f32.mrf.mxu0
        %v6759 = vadd.f32 0.0, %v6758
        %v6760 = vpop.f32.mrf.mxu0
        %v6761 = vadd.f32 0.0, %v6760
        %6762 = vmatmul.bf16.gmra.mxu0 %v6626
        %v6763 = vpop.f32.mrf.mxu0
        %v6764 = vadd.f32 0.0, %v6763
        %v6765 = vpop.f32.mrf.mxu0
        %v6766 = vadd.f32 0.0, %v6765
        %6767 = vmatmul.bf16.gmra.mxu0 %v6628
        %v6768 = vpop.f32.mrf.mxu0
        %v6769 = vadd.f32 0.0, %v6768
        %v6770 = vpop.f32.mrf.mxu0
        %v6771 = vadd.f32 0.0, %v6770
        %6772 = vmatmul.bf16.gmra.mxu0 %v6630
        %v6773 = vpop.f32.mrf.mxu0
        %v6774 = vadd.f32 0.0, %v6773
        %v6775 = vpop.f32.mrf.mxu0
        %v6776 = vadd.f32 0.0, %v6775
        %6777 = vmatmul.bf16.gmra.mxu0 %v6632
        %v6778 = vpop.f32.mrf.mxu0
        %v6779 = vadd.f32 0.0, %v6778
        %v6780 = vpop.f32.mrf.mxu0
        %v6781 = vadd.f32 0.0, %v6780
        %6782 = vmatmul.bf16.gmra.mxu0 %v6634
        %v6783 = vpop.f32.mrf.mxu0
        %v6784 = vadd.f32 0.0, %v6783
        %v6785 = vpop.f32.mrf.mxu0
        %v6786 = vadd.f32 0.0, %v6785
        %6787 = vmatmul.bf16.gmra.mxu0 %v6636
        %v6788 = vpop.f32.mrf.mxu0
        %v6789 = vadd.f32 0.0, %v6788
        %v6790 = vpop.f32.mrf.mxu0
        %v6791 = vadd.f32 0.0, %v6790
        %6792 = vmatmul.bf16.gmra.mxu0 %v6638
        %v6793 = vpop.f32.mrf.mxu0
        %v6794 = vadd.f32 0.0, %v6793
        %v6795 = vpop.f32.mrf.mxu0
        %v6796 = vadd.f32 0.0, %v6795
        %6797 = vmatmul.bf16.gmra.mxu0 %v6640
        %v6798 = vpop.f32.mrf.mxu0
        %v6799 = vadd.f32 0.0, %v6798
        %v6800 = vpop.f32.mrf.mxu0
        %v6801 = vadd.f32 0.0, %v6800
        %6802 = vmatmul.bf16.gmra.mxu0 %v6642
        %v6803 = vpop.f32.mrf.mxu0
        %v6804 = vadd.f32 0.0, %v6803
        %v6805 = vpop.f32.mrf.mxu0
        %v6806 = vadd.f32 0.0, %v6805
        %6807 = vdwg.mxu0
        %v6808 = vadd.f32 %v6423, %v6719
        %v6809 = vadd.f32 %v6424, %v6721
        %v6810 = vadd.f32 %v6425, %v6724
        %v6811 = vadd.f32 %v6426, %v6726
        %v6812 = vadd.f32 %v6427, %v6729
        %v6813 = vadd.f32 %v6428, %v6731
        %v6814 = vadd.f32 %v6429, %v6734
        %v6815 = vadd.f32 %v6430, %v6736
        %v6816 = vadd.f32 %v6431, %v6739
        %v6817 = vadd.f32 %v6432, %v6741
        %v6818 = vadd.f32 %v6433, %v6744
        %v6819 = vadd.f32 %v6434, %v6746
        %v6820 = vadd.f32 %v6435, %v6749
        %v6821 = vadd.f32 %v6436, %v6751
        %v6822 = vadd.f32 %v6437, %v6754
        %v6823 = vadd.f32 %v6438, %v6756
        %v6824 = vadd.f32 %v6439, %v6759
        %v6825 = vadd.f32 %v6440, %v6761
        %v6826 = vadd.f32 %v6441, %v6764
        %v6827 = vadd.f32 %v6442, %v6766
        %v6828 = vadd.f32 %v6443, %v6769
        %v6829 = vadd.f32 %v6444, %v6771
        %v6830 = vadd.f32 %v6445, %v6774
        %v6831 = vadd.f32 %v6446, %v6776
        %v6832 = vadd.f32 %v6447, %v6779
        %v6833 = vadd.f32 %v6448, %v6781
        %v6834 = vadd.f32 %v6449, %v6784
        %v6835 = vadd.f32 %v6450, %v6786
        %v6836 = vadd.f32 %v6451, %v6789
        %v6837 = vadd.f32 %v6452, %v6791
        %v6838 = vadd.f32 %v6453, %v6794
        %v6839 = vadd.f32 %v6454, %v6796
        %v6840 = vadd.f32 %v6455, %v6799
        %v6841 = vadd.f32 %v6456, %v6801
        %v6842 = vadd.f32 %v6457, %v6804
        %v6843 = vadd.f32 %v6458, %v6806
        %v6844 = vld [vmem:[#allocation2 + $0x98] sm:$0x3]
        %s6845 = scalar_lea.vmem %s3, 256
        %v6846 = vld [vmem:[%s6845] sm:$0xf]
        %v6847 = vld [vmem:[%s6845 + $0x4] sm:$0xf]
        %v6848 = vld [vmem:[%s6845 + $0x8] sm:$0xf]
        %v6849 = vld [vmem:[%s6845 + $0xc] sm:$0xf]
        %v6850 = vld [vmem:[%s6845 + $0x10] sm:$0xf]
        %v6851 = vld [vmem:[%s6845 + $0x14] sm:$0xf]
        %v6852 = vld [vmem:[%s6845 + $0x18] sm:$0xf]
        %v6853 = vld [vmem:[%s6845 + $0x1c] sm:$0xf]
        %v6854 = vld [vmem:[%s6845 + $0x20] sm:$0xf]
        %v6855 = vld [vmem:[%s6845 + $0x24] sm:$0xf]
        %v6856 = vld [vmem:[%s6845 + $0x28] sm:$0xf]
        %v6857 = vld [vmem:[%s6845 + $0x2c] sm:$0xf]
        %v6858 = vld [vmem:[%s6845 + $0x30] sm:$0xf]
        %v6859 = vld [vmem:[%s6845 + $0x34] sm:$0xf]
        %v6860 = vld [vmem:[%s6845 + $0x38] sm:$0xf]
        %v6861 = vld [vmem:[%s6845 + $0x3c] sm:$0xf]
        %v6863 = vunpack.c.l.b16 %v6844
        %v6864 = vpack.c.b16 %v6863, %v6863
        %v6866 = vshrl.u32 %v6587, 16
        %v6868 = vrot.slane %v6866, 1
        %v6869 = vshll.u32 %v6587, 16
        %v6871 = vrot.slane %v6869, 2
        %v6872 = vor.u32 %v6868, %v6871
        %v6874 = vshrl.u32 %v6588, 16
        %v6876 = vrot.slane %v6874, 1
        %v6877 = vshll.u32 %v6588, 16
        %v6879 = vrot.slane %v6877, 2
        %v6880 = vor.u32 %v6876, %v6879
        %v6881 = vsel %vm2951, %v6872, %v6880
        %v6883 = vshrl.u32 %v6589, 16
        %v6885 = vrot.slane %v6883, 1
        %v6886 = vshll.u32 %v6589, 16
        %v6888 = vrot.slane %v6886, 2
        %v6889 = vor.u32 %v6885, %v6888
        %v6890 = vsel %vm2951, %v6880, %v6889
        %v6892 = vshrl.u32 %v6590, 16
        %v6894 = vrot.slane %v6892, 1
        %v6895 = vshll.u32 %v6590, 16
        %v6897 = vrot.slane %v6895, 2
        %v6898 = vor.u32 %v6894, %v6897
        %v6899 = vsel %vm2951, %v6889, %v6898
        %v6901 = vshrl.u32 %v6591, 16
        %v6903 = vrot.slane %v6901, 1
        %v6904 = vshll.u32 %v6591, 16
        %v6906 = vrot.slane %v6904, 2
        %v6907 = vor.u32 %v6903, %v6906
        %v6908 = vsel %vm2951, %v6898, %v6907
        %v6910 = vshrl.u32 %v6592, 16
        %v6912 = vrot.slane %v6910, 1
        %v6913 = vshll.u32 %v6592, 16
        %v6915 = vrot.slane %v6913, 2
        %v6916 = vor.u32 %v6912, %v6915
        %v6917 = vsel %vm2951, %v6907, %v6916
        %v6919 = vshrl.u32 %v6593, 16
        %v6921 = vrot.slane %v6919, 1
        %v6922 = vshll.u32 %v6593, 16
        %v6924 = vrot.slane %v6922, 2
        %v6925 = vor.u32 %v6921, %v6924
        %v6926 = vsel %vm2951, %v6916, %v6925
        %v6928 = vshrl.u32 %v6594, 16
        %v6930 = vrot.slane %v6928, 1
        %v6931 = vshll.u32 %v6594, 16
        %v6933 = vrot.slane %v6931, 2
        %v6934 = vor.u32 %v6930, %v6933
        %v6935 = vsel %vm2951, %v6925, %v6934
        %v6937 = vshrl.u32 %v6595, 16
        %v6939 = vrot.slane %v6937, 1
        %v6940 = vshll.u32 %v6595, 16
        %v6942 = vrot.slane %v6940, 2
        %v6943 = vor.u32 %v6939, %v6942
        %v6944 = vsel %vm2951, %v6934, %v6943
        %v6946 = vshrl.u32 %v6596, 16
        %v6948 = vrot.slane %v6946, 1
        %v6949 = vshll.u32 %v6596, 16
        %v6951 = vrot.slane %v6949, 2
        %v6952 = vor.u32 %v6948, %v6951
        %v6953 = vsel %vm2951, %v6943, %v6952
        %v6955 = vshrl.u32 %v6597, 16
        %v6957 = vrot.slane %v6955, 1
        %v6958 = vshll.u32 %v6597, 16
        %v6960 = vrot.slane %v6958, 2
        %v6961 = vor.u32 %v6957, %v6960
        %v6962 = vsel %vm2951, %v6952, %v6961
        %v6964 = vshrl.u32 %v6598, 16
        %v6966 = vrot.slane %v6964, 1
        %v6967 = vshll.u32 %v6598, 16
        %v6969 = vrot.slane %v6967, 2
        %v6970 = vor.u32 %v6966, %v6969
        %v6971 = vsel %vm2951, %v6961, %v6970
        %v6973 = vshrl.u32 %v6599, 16
        %v6975 = vrot.slane %v6973, 1
        %v6976 = vshll.u32 %v6599, 16
        %v6978 = vrot.slane %v6976, 2
        %v6979 = vor.u32 %v6975, %v6978
        %v6980 = vsel %vm2951, %v6970, %v6979
        %v6982 = vshrl.u32 %v6600, 16
        %v6984 = vrot.slane %v6982, 1
        %v6985 = vshll.u32 %v6600, 16
        %v6987 = vrot.slane %v6985, 2
        %v6988 = vor.u32 %v6984, %v6987
        %v6989 = vsel %vm2951, %v6979, %v6988
        %v6991 = vshrl.u32 %v6601, 16
        %v6993 = vrot.slane %v6991, 1
        %v6994 = vshll.u32 %v6601, 16
        %v6996 = vrot.slane %v6994, 2
        %v6997 = vor.u32 %v6993, %v6996
        %v6998 = vsel %vm2951, %v6988, %v6997
        %v7000 = vshrl.u32 %v6602, 16
        %v7002 = vrot.slane %v7000, 1
        %v7003 = vshll.u32 %v6602, 16
        %v7005 = vrot.slane %v7003, 2
        %v7006 = vor.u32 %v7002, %v7005
        %v7007 = vsel %vm2951, %v6997, %v7006
        %v7009 = vshrl.u32 %v6603, 16
        %v7011 = vrot.slane %v7009, 1
        %v7012 = vshll.u32 %v6603, 16
        %v7014 = vrot.slane %v7012, 2
        %v7015 = vor.u32 %v7011, %v7014
        %v7016 = vsel %vm2951, %v7006, %v7015
        %v7018 = vshrl.u32 %v6604, 16
        %v7020 = vrot.slane %v7018, 1
        %v7021 = vshll.u32 %v6604, 16
        %v7023 = vrot.slane %v7021, 2
        %v7024 = vor.u32 %v7020, %v7023
        %v7025 = vsel %vm2951, %v7015, %v7024
        %v7027 = vshrl.u32 %v6864, 16
        %v7029 = vrot.slane %v7027, 1
        %v7030 = vshll.u32 %v6864, 16
        %v7032 = vrot.slane %v7030, 2
        %v7033 = vor.u32 %v7029, %v7032
        %v7034 = vsel %vm2951, %v7024, %v7033
        %v7069 = vunpack.c.l.b16 %v6846
        %v7070 = vunpack.c.l.b16 %v6847
        %v7071 = vunpack.c.l.b16 %v6848
        %v7072 = vunpack.c.l.b16 %v6849
        %v7073 = vunpack.c.l.b16 %v6850
        %v7074 = vunpack.c.l.b16 %v6851
        %v7075 = vunpack.c.l.b16 %v6852
        %v7076 = vunpack.c.l.b16 %v6853
        %v7077 = vunpack.c.l.b16 %v6854
        %v7078 = vunpack.c.l.b16 %v6855
        %v7079 = vunpack.c.l.b16 %v6856
        %v7080 = vunpack.c.l.b16 %v6857
        %v7081 = vunpack.c.l.b16 %v6858
        %v7082 = vunpack.c.l.b16 %v6859
        %v7083 = vunpack.c.l.b16 %v6860
        %v7084 = vunpack.c.l.b16 %v6861
        %v7085 = vpack.c.b16 %v7070, %v7069
        %v7086 = vpack.c.b16 %v7072, %v7071
        %v7087 = vpack.c.b16 %v7074, %v7073
        %v7088 = vpack.c.b16 %v7076, %v7075
        %v7089 = vpack.c.b16 %v7078, %v7077
        %v7090 = vpack.c.b16 %v7080, %v7079
        %v7091 = vpack.c.b16 %v7082, %v7081
        %v7092 = vpack.c.b16 %v7084, %v7083
        %7101 = vmatpush.bf16.msra.mxu0 %v7092
        %7102 = vmatpush.bf16.msra.mxu0 %v7091
        %7103 = vmatpush.bf16.msra.mxu0 %v7090
        %7104 = vmatpush.bf16.msra.mxu0 %v7089
        %7105 = vmatpush.bf16.msra.mxu0 %v7088
        %7106 = vmatpush.bf16.msra.mxu0 %v7087
        %7107 = vmatpush.bf16.msra.mxu0 %v7086
        %7108 = vmatpush.bf16.msra.mxu0 %v7085
        %7109 = vmatmul.bf16.gmra.mxu0 %v6881
        %v7110 = vpop.f32.mrf.mxu0
        %v7111 = vadd.f32 0.0, %v7110
        %v7112 = vpop.f32.mrf.mxu0
        %v7113 = vadd.f32 0.0, %v7112
        %7114 = vmatmul.bf16.gmra.mxu0 %v6890
        %v7115 = vpop.f32.mrf.mxu0
        %v7116 = vadd.f32 0.0, %v7115
        %v7117 = vpop.f32.mrf.mxu0
        %v7118 = vadd.f32 0.0, %v7117
        %7119 = vmatmul.bf16.gmra.mxu0 %v6899
        %v7120 = vpop.f32.mrf.mxu0
        %v7121 = vadd.f32 0.0, %v7120
        %v7122 = vpop.f32.mrf.mxu0
        %v7123 = vadd.f32 0.0, %v7122
        %7124 = vmatmul.bf16.gmra.mxu0 %v6908
        %v7125 = vpop.f32.mrf.mxu0
        %v7126 = vadd.f32 0.0, %v7125
        %v7127 = vpop.f32.mrf.mxu0
        %v7128 = vadd.f32 0.0, %v7127
        %7129 = vmatmul.bf16.gmra.mxu0 %v6917
        %v7130 = vpop.f32.mrf.mxu0
        %v7131 = vadd.f32 0.0, %v7130
        %v7132 = vpop.f32.mrf.mxu0
        %v7133 = vadd.f32 0.0, %v7132
        %7134 = vmatmul.bf16.gmra.mxu0 %v6926
        %v7135 = vpop.f32.mrf.mxu0
        %v7136 = vadd.f32 0.0, %v7135
        %v7137 = vpop.f32.mrf.mxu0
        %v7138 = vadd.f32 0.0, %v7137
        %7139 = vmatmul.bf16.gmra.mxu0 %v6935
        %v7140 = vpop.f32.mrf.mxu0
        %v7141 = vadd.f32 0.0, %v7140
        %v7142 = vpop.f32.mrf.mxu0
        %v7143 = vadd.f32 0.0, %v7142
        %7144 = vmatmul.bf16.gmra.mxu0 %v6944
        %v7145 = vpop.f32.mrf.mxu0
        %v7146 = vadd.f32 0.0, %v7145
        %v7147 = vpop.f32.mrf.mxu0
        %v7148 = vadd.f32 0.0, %v7147
        %7149 = vmatmul.bf16.gmra.mxu0 %v6953
        %v7150 = vpop.f32.mrf.mxu0
        %v7151 = vadd.f32 0.0, %v7150
        %v7152 = vpop.f32.mrf.mxu0
        %v7153 = vadd.f32 0.0, %v7152
        %7154 = vmatmul.bf16.gmra.mxu0 %v6962
        %v7155 = vpop.f32.mrf.mxu0
        %v7156 = vadd.f32 0.0, %v7155
        %v7157 = vpop.f32.mrf.mxu0
        %v7158 = vadd.f32 0.0, %v7157
        %7159 = vmatmul.bf16.gmra.mxu0 %v6971
        %v7160 = vpop.f32.mrf.mxu0
        %v7161 = vadd.f32 0.0, %v7160
        %v7162 = vpop.f32.mrf.mxu0
        %v7163 = vadd.f32 0.0, %v7162
        %7164 = vmatmul.bf16.gmra.mxu0 %v6980
        %v7165 = vpop.f32.mrf.mxu0
        %v7166 = vadd.f32 0.0, %v7165
        %v7167 = vpop.f32.mrf.mxu0
        %v7168 = vadd.f32 0.0, %v7167
        %7169 = vmatmul.bf16.gmra.mxu0 %v6989
        %v7170 = vpop.f32.mrf.mxu0
        %v7171 = vadd.f32 0.0, %v7170
        %v7172 = vpop.f32.mrf.mxu0
        %v7173 = vadd.f32 0.0, %v7172
        %7174 = vmatmul.bf16.gmra.mxu0 %v6998
        %v7175 = vpop.f32.mrf.mxu0
        %v7176 = vadd.f32 0.0, %v7175
        %v7177 = vpop.f32.mrf.mxu0
        %v7178 = vadd.f32 0.0, %v7177
        %7179 = vmatmul.bf16.gmra.mxu0 %v7007
        %v7180 = vpop.f32.mrf.mxu0
        %v7181 = vadd.f32 0.0, %v7180
        %v7182 = vpop.f32.mrf.mxu0
        %v7183 = vadd.f32 0.0, %v7182
        %7184 = vmatmul.bf16.gmra.mxu0 %v7016
        %v7185 = vpop.f32.mrf.mxu0
        %v7186 = vadd.f32 0.0, %v7185
        %v7187 = vpop.f32.mrf.mxu0
        %v7188 = vadd.f32 0.0, %v7187
        %7189 = vmatmul.bf16.gmra.mxu0 %v7025
        %v7190 = vpop.f32.mrf.mxu0
        %v7191 = vadd.f32 0.0, %v7190
        %v7192 = vpop.f32.mrf.mxu0
        %v7193 = vadd.f32 0.0, %v7192
        %7194 = vmatmul.bf16.gmra.mxu0 %v7034
        %v7195 = vpop.f32.mrf.mxu0
        %v7196 = vadd.f32 0.0, %v7195
        %v7197 = vpop.f32.mrf.mxu0
        %v7198 = vadd.f32 0.0, %v7197
        %7199 = vdwg.mxu0
        %v7200 = vadd.f32 %v6808, %v7111
        %v7201 = vadd.f32 %v6809, %v7113
        %v7202 = vadd.f32 %v6810, %v7116
        %v7203 = vadd.f32 %v6811, %v7118
        %v7204 = vadd.f32 %v6812, %v7121
        %v7205 = vadd.f32 %v6813, %v7123
        %v7206 = vadd.f32 %v6814, %v7126
        %v7207 = vadd.f32 %v6815, %v7128
        %v7208 = vadd.f32 %v6816, %v7131
        %v7209 = vadd.f32 %v6817, %v7133
        %v7210 = vadd.f32 %v6818, %v7136
        %v7211 = vadd.f32 %v6819, %v7138
        %v7212 = vadd.f32 %v6820, %v7141
        %v7213 = vadd.f32 %v6821, %v7143
        %v7214 = vadd.f32 %v6822, %v7146
        %v7215 = vadd.f32 %v6823, %v7148
        %v7216 = vadd.f32 %v6824, %v7151
        %v7217 = vadd.f32 %v6825, %v7153
        %v7218 = vadd.f32 %v6826, %v7156
        %v7219 = vadd.f32 %v6827, %v7158
        %v7220 = vadd.f32 %v6828, %v7161
        %v7221 = vadd.f32 %v6829, %v7163
        %v7222 = vadd.f32 %v6830, %v7166
        %v7223 = vadd.f32 %v6831, %v7168
        %v7224 = vadd.f32 %v6832, %v7171
        %v7225 = vadd.f32 %v6833, %v7173
        %v7226 = vadd.f32 %v6834, %v7176
        %v7227 = vadd.f32 %v6835, %v7178
        %v7228 = vadd.f32 %v6836, %v7181
        %v7229 = vadd.f32 %v6837, %v7183
        %v7230 = vadd.f32 %v6838, %v7186
        %v7231 = vadd.f32 %v6839, %v7188
        %v7232 = vadd.f32 %v6840, %v7191
        %v7233 = vadd.f32 %v6841, %v7193
        %v7234 = vadd.f32 %v6842, %v7196
        %v7235 = vadd.f32 %v6843, %v7198
        %v7236 = vld [vmem:[#allocation2 + $0x8] sm:$0xc]
        %s7237 = scalar_lea.vmem %s3, 320
        %v7238 = vld [vmem:[%s7237] sm:$0xf]
        %v7239 = vld [vmem:[%s7237 + $0x4] sm:$0xf]
        %v7240 = vld [vmem:[%s7237 + $0x8] sm:$0xf]
        %v7241 = vld [vmem:[%s7237 + $0xc] sm:$0xf]
        %v7242 = vld [vmem:[%s7237 + $0x10] sm:$0xf]
        %v7243 = vld [vmem:[%s7237 + $0x14] sm:$0xf]
        %v7244 = vld [vmem:[%s7237 + $0x18] sm:$0xf]
        %v7245 = vld [vmem:[%s7237 + $0x1c] sm:$0xf]
        %v7246 = vld [vmem:[%s7237 + $0x20] sm:$0xf]
        %v7247 = vld [vmem:[%s7237 + $0x24] sm:$0xf]
        %v7248 = vld [vmem:[%s7237 + $0x28] sm:$0xf]
        %v7249 = vld [vmem:[%s7237 + $0x2c] sm:$0xf]
        %v7250 = vld [vmem:[%s7237 + $0x30] sm:$0xf]
        %v7251 = vld [vmem:[%s7237 + $0x34] sm:$0xf]
        %v7252 = vld [vmem:[%s7237 + $0x38] sm:$0xf]
        %v7253 = vld [vmem:[%s7237 + $0x3c] sm:$0xf]
        %v7255 = vunpack.c.l.b16 %v7236
        %v7256 = vpack.c.b16 %v6551, %v7255
        %v7257 = vrot.slane %v7256, 2
        %v7258 = vrot.slane %v6588, 2
        %v7259 = vsel %vm3344, %v7257, %v7258
        %v7260 = vrot.slane %v6589, 2
        %v7261 = vsel %vm3344, %v7258, %v7260
        %v7262 = vrot.slane %v6590, 2
        %v7263 = vsel %vm3344, %v7260, %v7262
        %v7264 = vrot.slane %v6591, 2
        %v7265 = vsel %vm3344, %v7262, %v7264
        %v7266 = vrot.slane %v6592, 2
        %v7267 = vsel %vm3344, %v7264, %v7266
        %v7268 = vrot.slane %v6593, 2
        %v7269 = vsel %vm3344, %v7266, %v7268
        %v7270 = vrot.slane %v6594, 2
        %v7271 = vsel %vm3344, %v7268, %v7270
        %v7272 = vrot.slane %v6595, 2
        %v7273 = vsel %vm3344, %v7270, %v7272
        %v7274 = vrot.slane %v6596, 2
        %v7275 = vsel %vm3344, %v7272, %v7274
        %v7276 = vrot.slane %v6597, 2
        %v7277 = vsel %vm3344, %v7274, %v7276
        %v7278 = vrot.slane %v6598, 2
        %v7279 = vsel %vm3344, %v7276, %v7278
        %v7280 = vrot.slane %v6599, 2
        %v7281 = vsel %vm3344, %v7278, %v7280
        %v7282 = vrot.slane %v6600, 2
        %v7283 = vsel %vm3344, %v7280, %v7282
        %v7284 = vrot.slane %v6601, 2
        %v7285 = vsel %vm3344, %v7282, %v7284
        %v7286 = vrot.slane %v6602, 2
        %v7287 = vsel %vm3344, %v7284, %v7286
        %v7288 = vrot.slane %v6603, 2
        %v7289 = vsel %vm3344, %v7286, %v7288
        %v7290 = vrot.slane %v6604, 2
        %v7291 = vsel %vm3344, %v7288, %v7290
        %v7292 = vrot.slane %v6864, 2
        %v7293 = vsel %vm3344, %v7290, %v7292
        %v7328 = vunpack.c.l.b16 %v7238
        %v7329 = vunpack.c.l.b16 %v7239
        %v7330 = vunpack.c.l.b16 %v7240
        %v7331 = vunpack.c.l.b16 %v7241
        %v7332 = vunpack.c.l.b16 %v7242
        %v7333 = vunpack.c.l.b16 %v7243
        %v7334 = vunpack.c.l.b16 %v7244
        %v7335 = vunpack.c.l.b16 %v7245
        %v7336 = vunpack.c.l.b16 %v7246
        %v7337 = vunpack.c.l.b16 %v7247
        %v7338 = vunpack.c.l.b16 %v7248
        %v7339 = vunpack.c.l.b16 %v7249
        %v7340 = vunpack.c.l.b16 %v7250
        %v7341 = vunpack.c.l.b16 %v7251
        %v7342 = vunpack.c.l.b16 %v7252
        %v7343 = vunpack.c.l.b16 %v7253
        %v7344 = vpack.c.b16 %v7329, %v7328
        %v7345 = vpack.c.b16 %v7331, %v7330
        %v7346 = vpack.c.b16 %v7333, %v7332
        %v7347 = vpack.c.b16 %v7335, %v7334
        %v7348 = vpack.c.b16 %v7337, %v7336
        %v7349 = vpack.c.b16 %v7339, %v7338
        %v7350 = vpack.c.b16 %v7341, %v7340
        %v7351 = vpack.c.b16 %v7343, %v7342
        %7360 = vmatpush.bf16.msra.mxu0 %v7351
        %7361 = vmatpush.bf16.msra.mxu0 %v7350
        %7362 = vmatpush.bf16.msra.mxu0 %v7349
        %7363 = vmatpush.bf16.msra.mxu0 %v7348
        %7364 = vmatpush.bf16.msra.mxu0 %v7347
        %7365 = vmatpush.bf16.msra.mxu0 %v7346
        %7366 = vmatpush.bf16.msra.mxu0 %v7345
        %7367 = vmatpush.bf16.msra.mxu0 %v7344
        %7368 = vmatmul.bf16.gmra.mxu0 %v7259
        %v7369 = vpop.f32.mrf.mxu0
        %v7370 = vadd.f32 0.0, %v7369
        %v7371 = vpop.f32.mrf.mxu0
        %v7372 = vadd.f32 0.0, %v7371
        %7373 = vmatmul.bf16.gmra.mxu0 %v7261
        %v7374 = vpop.f32.mrf.mxu0
        %v7375 = vadd.f32 0.0, %v7374
        %v7376 = vpop.f32.mrf.mxu0
        %v7377 = vadd.f32 0.0, %v7376
        %7378 = vmatmul.bf16.gmra.mxu0 %v7263
        %v7379 = vpop.f32.mrf.mxu0
        %v7380 = vadd.f32 0.0, %v7379
        %v7381 = vpop.f32.mrf.mxu0
        %v7382 = vadd.f32 0.0, %v7381
        %7383 = vmatmul.bf16.gmra.mxu0 %v7265
        %v7384 = vpop.f32.mrf.mxu0
        %v7385 = vadd.f32 0.0, %v7384
        %v7386 = vpop.f32.mrf.mxu0
        %v7387 = vadd.f32 0.0, %v7386
        %7388 = vmatmul.bf16.gmra.mxu0 %v7267
        %v7389 = vpop.f32.mrf.mxu0
        %v7390 = vadd.f32 0.0, %v7389
        %v7391 = vpop.f32.mrf.mxu0
        %v7392 = vadd.f32 0.0, %v7391
        %7393 = vmatmul.bf16.gmra.mxu0 %v7269
        %v7394 = vpop.f32.mrf.mxu0
        %v7395 = vadd.f32 0.0, %v7394
        %v7396 = vpop.f32.mrf.mxu0
        %v7397 = vadd.f32 0.0, %v7396
        %7398 = vmatmul.bf16.gmra.mxu0 %v7271
        %v7399 = vpop.f32.mrf.mxu0
        %v7400 = vadd.f32 0.0, %v7399
        %v7401 = vpop.f32.mrf.mxu0
        %v7402 = vadd.f32 0.0, %v7401
        %7403 = vmatmul.bf16.gmra.mxu0 %v7273
        %v7404 = vpop.f32.mrf.mxu0
        %v7405 = vadd.f32 0.0, %v7404
        %v7406 = vpop.f32.mrf.mxu0
        %v7407 = vadd.f32 0.0, %v7406
        %7408 = vmatmul.bf16.gmra.mxu0 %v7275
        %v7409 = vpop.f32.mrf.mxu0
        %v7410 = vadd.f32 0.0, %v7409
        %v7411 = vpop.f32.mrf.mxu0
        %v7412 = vadd.f32 0.0, %v7411
        %7413 = vmatmul.bf16.gmra.mxu0 %v7277
        %v7414 = vpop.f32.mrf.mxu0
        %v7415 = vadd.f32 0.0, %v7414
        %v7416 = vpop.f32.mrf.mxu0
        %v7417 = vadd.f32 0.0, %v7416
        %7418 = vmatmul.bf16.gmra.mxu0 %v7279
        %v7419 = vpop.f32.mrf.mxu0
        %v7420 = vadd.f32 0.0, %v7419
        %v7421 = vpop.f32.mrf.mxu0
        %v7422 = vadd.f32 0.0, %v7421
        %7423 = vmatmul.bf16.gmra.mxu0 %v7281
        %v7424 = vpop.f32.mrf.mxu0
        %v7425 = vadd.f32 0.0, %v7424
        %v7426 = vpop.f32.mrf.mxu0
        %v7427 = vadd.f32 0.0, %v7426
        %7428 = vmatmul.bf16.gmra.mxu0 %v7283
        %v7429 = vpop.f32.mrf.mxu0
        %v7430 = vadd.f32 0.0, %v7429
        %v7431 = vpop.f32.mrf.mxu0
        %v7432 = vadd.f32 0.0, %v7431
        %7433 = vmatmul.bf16.gmra.mxu0 %v7285
        %v7434 = vpop.f32.mrf.mxu0
        %v7435 = vadd.f32 0.0, %v7434
        %v7436 = vpop.f32.mrf.mxu0
        %v7437 = vadd.f32 0.0, %v7436
        %7438 = vmatmul.bf16.gmra.mxu0 %v7287
        %v7439 = vpop.f32.mrf.mxu0
        %v7440 = vadd.f32 0.0, %v7439
        %v7441 = vpop.f32.mrf.mxu0
        %v7442 = vadd.f32 0.0, %v7441
        %7443 = vmatmul.bf16.gmra.mxu0 %v7289
        %v7444 = vpop.f32.mrf.mxu0
        %v7445 = vadd.f32 0.0, %v7444
        %v7446 = vpop.f32.mrf.mxu0
        %v7447 = vadd.f32 0.0, %v7446
        %7448 = vmatmul.bf16.gmra.mxu0 %v7291
        %v7449 = vpop.f32.mrf.mxu0
        %v7450 = vadd.f32 0.0, %v7449
        %v7451 = vpop.f32.mrf.mxu0
        %v7452 = vadd.f32 0.0, %v7451
        %7453 = vmatmul.bf16.gmra.mxu0 %v7293
        %v7454 = vpop.f32.mrf.mxu0
        %v7455 = vadd.f32 0.0, %v7454
        %v7456 = vpop.f32.mrf.mxu0
        %v7457 = vadd.f32 0.0, %v7456
        %7458 = vdwg.mxu0
        %v7459 = vadd.f32 %v7200, %v7370
        %v7460 = vadd.f32 %v7201, %v7372
        %v7461 = vadd.f32 %v7202, %v7375
        %v7462 = vadd.f32 %v7203, %v7377
        %v7463 = vadd.f32 %v7204, %v7380
        %v7464 = vadd.f32 %v7205, %v7382
        %v7465 = vadd.f32 %v7206, %v7385
        %v7466 = vadd.f32 %v7207, %v7387
        %v7467 = vadd.f32 %v7208, %v7390
        %v7468 = vadd.f32 %v7209, %v7392
        %v7469 = vadd.f32 %v7210, %v7395
        %v7470 = vadd.f32 %v7211, %v7397
        %v7471 = vadd.f32 %v7212, %v7400
        %v7472 = vadd.f32 %v7213, %v7402
        %v7473 = vadd.f32 %v7214, %v7405
        %v7474 = vadd.f32 %v7215, %v7407
        %v7475 = vadd.f32 %v7216, %v7410
        %v7476 = vadd.f32 %v7217, %v7412
        %v7477 = vadd.f32 %v7218, %v7415
        %v7478 = vadd.f32 %v7219, %v7417
        %v7479 = vadd.f32 %v7220, %v7420
        %v7480 = vadd.f32 %v7221, %v7422
        %v7481 = vadd.f32 %v7222, %v7425
        %v7482 = vadd.f32 %v7223, %v7427
        %v7483 = vadd.f32 %v7224, %v7430
        %v7484 = vadd.f32 %v7225, %v7432
        %v7485 = vadd.f32 %v7226, %v7435
        %v7486 = vadd.f32 %v7227, %v7437
        %v7487 = vadd.f32 %v7228, %v7440
        %v7488 = vadd.f32 %v7229, %v7442
        %v7489 = vadd.f32 %v7230, %v7445
        %v7490 = vadd.f32 %v7231, %v7447
        %v7491 = vadd.f32 %v7232, %v7450
        %v7492 = vadd.f32 %v7233, %v7452
        %v7493 = vadd.f32 %v7234, %v7455
        %v7494 = vadd.f32 %v7235, %v7457
        %v7495 = vld [vmem:[#allocation2 + $0x10] sm:$0xc]
        %v7496 = vld [vmem:[#allocation2 + $0x14] sm:$0xf]
        %v7497 = vld [vmem:[#allocation2 + $0x18] sm:$0xf]
        %v7498 = vld [vmem:[#allocation2 + $0x1c] sm:$0xf]
        %v7499 = vld [vmem:[#allocation2 + $0x20] sm:$0xf]
        %v7500 = vld [vmem:[#allocation2 + $0x24] sm:$0xf]
        %v7501 = vld [vmem:[#allocation2 + $0x28] sm:$0xf]
        %v7502 = vld [vmem:[#allocation2 + $0x2c] sm:$0xf]
        %v7503 = vld [vmem:[#allocation2 + $0x30] sm:$0xf]
        %v7504 = vld [vmem:[#allocation2 + $0x34] sm:$0xf]
        %v7505 = vld [vmem:[#allocation2 + $0x38] sm:$0xf]
        %v7506 = vld [vmem:[#allocation2 + $0x3c] sm:$0xf]
        %v7507 = vld [vmem:[#allocation2 + $0x40] sm:$0xf]
        %v7508 = vld [vmem:[#allocation2 + $0x44] sm:$0xf]
        %v7509 = vld [vmem:[#allocation2 + $0x48] sm:$0xf]
        %v7510 = vld [vmem:[#allocation2 + $0x4c] sm:$0xf]
        %v7511 = vld [vmem:[#allocation2 + $0x50] sm:$0xf]
        %v7512 = vld [vmem:[#allocation2 + $0x54] sm:$0xf]
        %v7513 = vld [vmem:[#allocation2 + $0x58] sm:$0xf]
        %v7514 = vld [vmem:[#allocation2 + $0x5c] sm:$0xf]
        %v7515 = vld [vmem:[#allocation2 + $0x60] sm:$0xf]
        %v7516 = vld [vmem:[#allocation2 + $0x64] sm:$0xf]
        %v7517 = vld [vmem:[#allocation2 + $0x68] sm:$0xf]
        %v7518 = vld [vmem:[#allocation2 + $0x6c] sm:$0xf]
        %v7519 = vld [vmem:[#allocation2 + $0x70] sm:$0xf]
        %v7520 = vld [vmem:[#allocation2 + $0x74] sm:$0xf]
        %v7521 = vld [vmem:[#allocation2 + $0x78] sm:$0xf]
        %v7522 = vld [vmem:[#allocation2 + $0x7c] sm:$0xf]
        %v7523 = vld [vmem:[#allocation2 + $0x80] sm:$0xf]
        %v7524 = vld [vmem:[#allocation2 + $0x84] sm:$0xf]
        %v7525 = vld [vmem:[#allocation2 + $0x88] sm:$0xf]
        %v7526 = vld [vmem:[#allocation2 + $0x8c] sm:$0xf]
        %v7527 = vld [vmem:[#allocation2 + $0x90] sm:$0xf]
        %v7528 = vld [vmem:[#allocation2 + $0x94] sm:$0xf]
        %v7529 = vld [vmem:[#allocation2 + $0x98] sm:$0xf]
        %v7530 = vld [vmem:[#allocation2 + $0x9c] sm:$0xf]
        %v7531 = vld [vmem:[#allocation2 + $0xa0] sm:$0x3]
        %s7532 = scalar_lea.vmem %s3, 384
        %v7533 = vld [vmem:[%s7532] sm:$0xf]
        %v7534 = vld [vmem:[%s7532 + $0x4] sm:$0xf]
        %v7535 = vld [vmem:[%s7532 + $0x8] sm:$0xf]
        %v7536 = vld [vmem:[%s7532 + $0xc] sm:$0xf]
        %v7537 = vld [vmem:[%s7532 + $0x10] sm:$0xf]
        %v7538 = vld [vmem:[%s7532 + $0x14] sm:$0xf]
        %v7539 = vld [vmem:[%s7532 + $0x18] sm:$0xf]
        %v7540 = vld [vmem:[%s7532 + $0x1c] sm:$0xf]
        %v7541 = vld [vmem:[%s7532 + $0x20] sm:$0xf]
        %v7542 = vld [vmem:[%s7532 + $0x24] sm:$0xf]
        %v7543 = vld [vmem:[%s7532 + $0x28] sm:$0xf]
        %v7544 = vld [vmem:[%s7532 + $0x2c] sm:$0xf]
        %v7545 = vld [vmem:[%s7532 + $0x30] sm:$0xf]
        %v7546 = vld [vmem:[%s7532 + $0x34] sm:$0xf]
        %v7547 = vld [vmem:[%s7532 + $0x38] sm:$0xf]
        %v7548 = vld [vmem:[%s7532 + $0x3c] sm:$0xf]
        %v7586 = vunpack.c.l.b16 %v7495
        %v7587 = vunpack.c.l.b16 %v7496
        %v7588 = vunpack.c.l.b16 %v7497
        %v7589 = vunpack.c.l.b16 %v7498
        %v7590 = vunpack.c.l.b16 %v7499
        %v7591 = vunpack.c.l.b16 %v7500
        %v7592 = vunpack.c.l.b16 %v7501
        %v7593 = vunpack.c.l.b16 %v7502
        %v7594 = vunpack.c.l.b16 %v7503
        %v7595 = vunpack.c.l.b16 %v7504
        %v7596 = vunpack.c.l.b16 %v7505
        %v7597 = vunpack.c.l.b16 %v7506
        %v7598 = vunpack.c.l.b16 %v7507
        %v7599 = vunpack.c.l.b16 %v7508
        %v7600 = vunpack.c.l.b16 %v7509
        %v7601 = vunpack.c.l.b16 %v7510
        %v7602 = vunpack.c.l.b16 %v7511
        %v7603 = vunpack.c.l.b16 %v7512
        %v7604 = vunpack.c.l.b16 %v7513
        %v7605 = vunpack.c.l.b16 %v7514
        %v7606 = vunpack.c.l.b16 %v7515
        %v7607 = vunpack.c.l.b16 %v7516
        %v7608 = vunpack.c.l.b16 %v7517
        %v7609 = vunpack.c.l.b16 %v7518
        %v7610 = vunpack.c.l.b16 %v7519
        %v7611 = vunpack.c.l.b16 %v7520
        %v7612 = vunpack.c.l.b16 %v7521
        %v7613 = vunpack.c.l.b16 %v7522
        %v7614 = vunpack.c.l.b16 %v7523
        %v7615 = vunpack.c.l.b16 %v7524
        %v7616 = vunpack.c.l.b16 %v7525
        %v7617 = vunpack.c.l.b16 %v7526
        %v7618 = vunpack.c.l.b16 %v7527
        %v7619 = vunpack.c.l.b16 %v7528
        %v7620 = vunpack.c.l.b16 %v7529
        %v7621 = vunpack.c.l.b16 %v7530
        %v7622 = vunpack.c.l.b16 %v7531
        %v7623 = vpack.c.b16 %v7587, %v7586
        %v7624 = vpack.c.b16 %v7589, %v7588
        %v7625 = vpack.c.b16 %v7591, %v7590
        %v7626 = vpack.c.b16 %v7593, %v7592
        %v7627 = vpack.c.b16 %v7595, %v7594
        %v7628 = vpack.c.b16 %v7597, %v7596
        %v7629 = vpack.c.b16 %v7599, %v7598
        %v7630 = vpack.c.b16 %v7601, %v7600
        %v7631 = vpack.c.b16 %v7603, %v7602
        %v7632 = vpack.c.b16 %v7605, %v7604
        %v7633 = vpack.c.b16 %v7607, %v7606
        %v7634 = vpack.c.b16 %v7609, %v7608
        %v7635 = vpack.c.b16 %v7611, %v7610
        %v7636 = vpack.c.b16 %v7613, %v7612
        %v7637 = vpack.c.b16 %v7615, %v7614
        %v7638 = vpack.c.b16 %v7617, %v7616
        %v7639 = vpack.c.b16 %v7619, %v7618
        %v7640 = vpack.c.b16 %v7621, %v7620
        %v7641 = vpack.c.b16 %v7622, %v7622
        %v7642 = vrot.slane %v7623, 2
        %v7643 = vrot.slane %v7624, 2
        %v7644 = vsel %vm3344, %v7642, %v7643
        %v7645 = vrot.slane %v7625, 2
        %v7646 = vsel %vm3344, %v7643, %v7645
        %v7647 = vrot.slane %v7626, 2
        %v7648 = vsel %vm3344, %v7645, %v7647
        %v7649 = vrot.slane %v7627, 2
        %v7650 = vsel %vm3344, %v7647, %v7649
        %v7651 = vrot.slane %v7628, 2
        %v7652 = vsel %vm3344, %v7649, %v7651
        %v7653 = vrot.slane %v7629, 2
        %v7654 = vsel %vm3344, %v7651, %v7653
        %v7655 = vrot.slane %v7630, 2
        %v7656 = vsel %vm3344, %v7653, %v7655
        %v7657 = vrot.slane %v7631, 2
        %v7658 = vsel %vm3344, %v7655, %v7657
        %v7659 = vrot.slane %v7632, 2
        %v7660 = vsel %vm3344, %v7657, %v7659
        %v7661 = vrot.slane %v7633, 2
        %v7662 = vsel %vm3344, %v7659, %v7661
        %v7663 = vrot.slane %v7634, 2
        %v7664 = vsel %vm3344, %v7661, %v7663
        %v7665 = vrot.slane %v7635, 2
        %v7666 = vsel %vm3344, %v7663, %v7665
        %v7667 = vrot.slane %v7636, 2
        %v7668 = vsel %vm3344, %v7665, %v7667
        %v7669 = vrot.slane %v7637, 2
        %v7670 = vsel %vm3344, %v7667, %v7669
        %v7671 = vrot.slane %v7638, 2
        %v7672 = vsel %vm3344, %v7669, %v7671
        %v7673 = vrot.slane %v7639, 2
        %v7674 = vsel %vm3344, %v7671, %v7673
        %v7675 = vrot.slane %v7640, 2
        %v7676 = vsel %vm3344, %v7673, %v7675
        %v7677 = vrot.slane %v7641, 2
        %v7678 = vsel %vm3344, %v7675, %v7677
        %v7713 = vunpack.c.l.b16 %v7533
        %v7714 = vunpack.c.l.b16 %v7534
        %v7715 = vunpack.c.l.b16 %v7535
        %v7716 = vunpack.c.l.b16 %v7536
        %v7717 = vunpack.c.l.b16 %v7537
        %v7718 = vunpack.c.l.b16 %v7538
        %v7719 = vunpack.c.l.b16 %v7539
        %v7720 = vunpack.c.l.b16 %v7540
        %v7721 = vunpack.c.l.b16 %v7541
        %v7722 = vunpack.c.l.b16 %v7542
        %v7723 = vunpack.c.l.b16 %v7543
        %v7724 = vunpack.c.l.b16 %v7544
        %v7725 = vunpack.c.l.b16 %v7545
        %v7726 = vunpack.c.l.b16 %v7546
        %v7727 = vunpack.c.l.b16 %v7547
        %v7728 = vunpack.c.l.b16 %v7548
        %v7729 = vpack.c.b16 %v7714, %v7713
        %v7730 = vpack.c.b16 %v7716, %v7715
        %v7731 = vpack.c.b16 %v7718, %v7717
        %v7732 = vpack.c.b16 %v7720, %v7719
        %v7733 = vpack.c.b16 %v7722, %v7721
        %v7734 = vpack.c.b16 %v7724, %v7723
        %v7735 = vpack.c.b16 %v7726, %v7725
        %v7736 = vpack.c.b16 %v7728, %v7727
        %7745 = vmatpush.bf16.msra.mxu0 %v7736
        %7746 = vmatpush.bf16.msra.mxu0 %v7735
        %7747 = vmatpush.bf16.msra.mxu0 %v7734
        %7748 = vmatpush.bf16.msra.mxu0 %v7733
        %7749 = vmatpush.bf16.msra.mxu0 %v7732
        %7750 = vmatpush.bf16.msra.mxu0 %v7731
        %7751 = vmatpush.bf16.msra.mxu0 %v7730
        %7752 = vmatpush.bf16.msra.mxu0 %v7729
        %7753 = vmatmul.bf16.gmra.mxu0 %v7644
        %v7754 = vpop.f32.mrf.mxu0
        %v7755 = vadd.f32 0.0, %v7754
        %v7756 = vpop.f32.mrf.mxu0
        %v7757 = vadd.f32 0.0, %v7756
        %7758 = vmatmul.bf16.gmra.mxu0 %v7646
        %v7759 = vpop.f32.mrf.mxu0
        %v7760 = vadd.f32 0.0, %v7759
        %v7761 = vpop.f32.mrf.mxu0
        %v7762 = vadd.f32 0.0, %v7761
        %7763 = vmatmul.bf16.gmra.mxu0 %v7648
        %v7764 = vpop.f32.mrf.mxu0
        %v7765 = vadd.f32 0.0, %v7764
        %v7766 = vpop.f32.mrf.mxu0
        %v7767 = vadd.f32 0.0, %v7766
        %7768 = vmatmul.bf16.gmra.mxu0 %v7650
        %v7769 = vpop.f32.mrf.mxu0
        %v7770 = vadd.f32 0.0, %v7769
        %v7771 = vpop.f32.mrf.mxu0
        %v7772 = vadd.f32 0.0, %v7771
        %7773 = vmatmul.bf16.gmra.mxu0 %v7652
        %v7774 = vpop.f32.mrf.mxu0
        %v7775 = vadd.f32 0.0, %v7774
        %v7776 = vpop.f32.mrf.mxu0
        %v7777 = vadd.f32 0.0, %v7776
        %7778 = vmatmul.bf16.gmra.mxu0 %v7654
        %v7779 = vpop.f32.mrf.mxu0
        %v7780 = vadd.f32 0.0, %v7779
        %v7781 = vpop.f32.mrf.mxu0
        %v7782 = vadd.f32 0.0, %v7781
        %7783 = vmatmul.bf16.gmra.mxu0 %v7656
        %v7784 = vpop.f32.mrf.mxu0
        %v7785 = vadd.f32 0.0, %v7784
        %v7786 = vpop.f32.mrf.mxu0
        %v7787 = vadd.f32 0.0, %v7786
        %7788 = vmatmul.bf16.gmra.mxu0 %v7658
        %v7789 = vpop.f32.mrf.mxu0
        %v7790 = vadd.f32 0.0, %v7789
        %v7791 = vpop.f32.mrf.mxu0
        %v7792 = vadd.f32 0.0, %v7791
        %7793 = vmatmul.bf16.gmra.mxu0 %v7660
        %v7794 = vpop.f32.mrf.mxu0
        %v7795 = vadd.f32 0.0, %v7794
        %v7796 = vpop.f32.mrf.mxu0
        %v7797 = vadd.f32 0.0, %v7796
        %7798 = vmatmul.bf16.gmra.mxu0 %v7662
        %v7799 = vpop.f32.mrf.mxu0
        %v7800 = vadd.f32 0.0, %v7799
        %v7801 = vpop.f32.mrf.mxu0
        %v7802 = vadd.f32 0.0, %v7801
        %7803 = vmatmul.bf16.gmra.mxu0 %v7664
        %v7804 = vpop.f32.mrf.mxu0
        %v7805 = vadd.f32 0.0, %v7804
        %v7806 = vpop.f32.mrf.mxu0
        %v7807 = vadd.f32 0.0, %v7806
        %7808 = vmatmul.bf16.gmra.mxu0 %v7666
        %v7809 = vpop.f32.mrf.mxu0
        %v7810 = vadd.f32 0.0, %v7809
        %v7811 = vpop.f32.mrf.mxu0
        %v7812 = vadd.f32 0.0, %v7811
        %7813 = vmatmul.bf16.gmra.mxu0 %v7668
        %v7814 = vpop.f32.mrf.mxu0
        %v7815 = vadd.f32 0.0, %v7814
        %v7816 = vpop.f32.mrf.mxu0
        %v7817 = vadd.f32 0.0, %v7816
        %7818 = vmatmul.bf16.gmra.mxu0 %v7670
        %v7819 = vpop.f32.mrf.mxu0
        %v7820 = vadd.f32 0.0, %v7819
        %v7821 = vpop.f32.mrf.mxu0
        %v7822 = vadd.f32 0.0, %v7821
        %7823 = vmatmul.bf16.gmra.mxu0 %v7672
        %v7824 = vpop.f32.mrf.mxu0
        %v7825 = vadd.f32 0.0, %v7824
        %v7826 = vpop.f32.mrf.mxu0
        %v7827 = vadd.f32 0.0, %v7826
        %7828 = vmatmul.bf16.gmra.mxu0 %v7674
        %v7829 = vpop.f32.mrf.mxu0
        %v7830 = vadd.f32 0.0, %v7829
        %v7831 = vpop.f32.mrf.mxu0
        %v7832 = vadd.f32 0.0, %v7831
        %7833 = vmatmul.bf16.gmra.mxu0 %v7676
        %v7834 = vpop.f32.mrf.mxu0
        %v7835 = vadd.f32 0.0, %v7834
        %v7836 = vpop.f32.mrf.mxu0
        %v7837 = vadd.f32 0.0, %v7836
        %7838 = vmatmul.bf16.gmra.mxu0 %v7678
        %v7839 = vpop.f32.mrf.mxu0
        %v7840 = vadd.f32 0.0, %v7839
        %v7841 = vpop.f32.mrf.mxu0
        %v7842 = vadd.f32 0.0, %v7841
        %7843 = vdwg.mxu0
        %v7844 = vadd.f32 %v7459, %v7755
        %v7845 = vadd.f32 %v7460, %v7757
        %v7846 = vadd.f32 %v7461, %v7760
        %v7847 = vadd.f32 %v7462, %v7762
        %v7848 = vadd.f32 %v7463, %v7765
        %v7849 = vadd.f32 %v7464, %v7767
        %v7850 = vadd.f32 %v7465, %v7770
        %v7851 = vadd.f32 %v7466, %v7772
        %v7852 = vadd.f32 %v7467, %v7775
        %v7853 = vadd.f32 %v7468, %v7777
        %v7854 = vadd.f32 %v7469, %v7780
        %v7855 = vadd.f32 %v7470, %v7782
        %v7856 = vadd.f32 %v7471, %v7785
        %v7857 = vadd.f32 %v7472, %v7787
        %v7858 = vadd.f32 %v7473, %v7790
        %v7859 = vadd.f32 %v7474, %v7792
        %v7860 = vadd.f32 %v7475, %v7795
        %v7861 = vadd.f32 %v7476, %v7797
        %v7862 = vadd.f32 %v7477, %v7800
        %v7863 = vadd.f32 %v7478, %v7802
        %v7864 = vadd.f32 %v7479, %v7805
        %v7865 = vadd.f32 %v7480, %v7807
        %v7866 = vadd.f32 %v7481, %v7810
        %v7867 = vadd.f32 %v7482, %v7812
        %v7868 = vadd.f32 %v7483, %v7815
        %v7869 = vadd.f32 %v7484, %v7817
        %v7870 = vadd.f32 %v7485, %v7820
        %v7871 = vadd.f32 %v7486, %v7822
        %v7872 = vadd.f32 %v7487, %v7825
        %v7873 = vadd.f32 %v7488, %v7827
        %v7874 = vadd.f32 %v7489, %v7830
        %v7875 = vadd.f32 %v7490, %v7832
        %v7876 = vadd.f32 %v7491, %v7835
        %v7877 = vadd.f32 %v7492, %v7837
        %v7878 = vadd.f32 %v7493, %v7840
        %v7879 = vadd.f32 %v7494, %v7842
        %v7880 = vld [vmem:[#allocation2 + $0xa0] sm:$0x7]
        %s7881 = scalar_lea.vmem %s3, 448
        %v7882 = vld [vmem:[%s7881] sm:$0xf]
        %v7883 = vld [vmem:[%s7881 + $0x4] sm:$0xf]
        %v7884 = vld [vmem:[%s7881 + $0x8] sm:$0xf]
        %v7885 = vld [vmem:[%s7881 + $0xc] sm:$0xf]
        %v7886 = vld [vmem:[%s7881 + $0x10] sm:$0xf]
        %v7887 = vld [vmem:[%s7881 + $0x14] sm:$0xf]
        %v7888 = vld [vmem:[%s7881 + $0x18] sm:$0xf]
        %v7889 = vld [vmem:[%s7881 + $0x1c] sm:$0xf]
        %v7890 = vld [vmem:[%s7881 + $0x20] sm:$0xf]
        %v7891 = vld [vmem:[%s7881 + $0x24] sm:$0xf]
        %v7892 = vld [vmem:[%s7881 + $0x28] sm:$0xf]
        %v7893 = vld [vmem:[%s7881 + $0x2c] sm:$0xf]
        %v7894 = vld [vmem:[%s7881 + $0x30] sm:$0xf]
        %v7895 = vld [vmem:[%s7881 + $0x34] sm:$0xf]
        %v7896 = vld [vmem:[%s7881 + $0x38] sm:$0xf]
        %v7897 = vld [vmem:[%s7881 + $0x3c] sm:$0xf]
        %v7899 = vunpack.c.l.b16 %v7880
        %v7900 = vpack.c.b16 %v7899, %v7899
        %v7902 = vshrl.u32 %v7623, 16
        %v7904 = vrot.slane %v7902, 2
        %v7905 = vshll.u32 %v7623, 16
        %v7907 = vrot.slane %v7905, 3
        %v7908 = vor.u32 %v7904, %v7907
        %v7910 = vshrl.u32 %v7624, 16
        %v7912 = vrot.slane %v7910, 2
        %v7913 = vshll.u32 %v7624, 16
        %v7915 = vrot.slane %v7913, 3
        %v7916 = vor.u32 %v7912, %v7915
        %v7917 = vsel %vm3989, %v7908, %v7916
        %v7919 = vshrl.u32 %v7625, 16
        %v7921 = vrot.slane %v7919, 2
        %v7922 = vshll.u32 %v7625, 16
        %v7924 = vrot.slane %v7922, 3
        %v7925 = vor.u32 %v7921, %v7924
        %v7926 = vsel %vm3989, %v7916, %v7925
        %v7928 = vshrl.u32 %v7626, 16
        %v7930 = vrot.slane %v7928, 2
        %v7931 = vshll.u32 %v7626, 16
        %v7933 = vrot.slane %v7931, 3
        %v7934 = vor.u32 %v7930, %v7933
        %v7935 = vsel %vm3989, %v7925, %v7934
        %v7937 = vshrl.u32 %v7627, 16
        %v7939 = vrot.slane %v7937, 2
        %v7940 = vshll.u32 %v7627, 16
        %v7942 = vrot.slane %v7940, 3
        %v7943 = vor.u32 %v7939, %v7942
        %v7944 = vsel %vm3989, %v7934, %v7943
        %v7946 = vshrl.u32 %v7628, 16
        %v7948 = vrot.slane %v7946, 2
        %v7949 = vshll.u32 %v7628, 16
        %v7951 = vrot.slane %v7949, 3
        %v7952 = vor.u32 %v7948, %v7951
        %v7953 = vsel %vm3989, %v7943, %v7952
        %v7955 = vshrl.u32 %v7629, 16
        %v7957 = vrot.slane %v7955, 2
        %v7958 = vshll.u32 %v7629, 16
        %v7960 = vrot.slane %v7958, 3
        %v7961 = vor.u32 %v7957, %v7960
        %v7962 = vsel %vm3989, %v7952, %v7961
        %v7964 = vshrl.u32 %v7630, 16
        %v7966 = vrot.slane %v7964, 2
        %v7967 = vshll.u32 %v7630, 16
        %v7969 = vrot.slane %v7967, 3
        %v7970 = vor.u32 %v7966, %v7969
        %v7971 = vsel %vm3989, %v7961, %v7970
        %v7973 = vshrl.u32 %v7631, 16
        %v7975 = vrot.slane %v7973, 2
        %v7976 = vshll.u32 %v7631, 16
        %v7978 = vrot.slane %v7976, 3
        %v7979 = vor.u32 %v7975, %v7978
        %v7980 = vsel %vm3989, %v7970, %v7979
        %v7982 = vshrl.u32 %v7632, 16
        %v7984 = vrot.slane %v7982, 2
        %v7985 = vshll.u32 %v7632, 16
        %v7987 = vrot.slane %v7985, 3
        %v7988 = vor.u32 %v7984, %v7987
        %v7989 = vsel %vm3989, %v7979, %v7988
        %v7991 = vshrl.u32 %v7633, 16
        %v7993 = vrot.slane %v7991, 2
        %v7994 = vshll.u32 %v7633, 16
        %v7996 = vrot.slane %v7994, 3
        %v7997 = vor.u32 %v7993, %v7996
        %v7998 = vsel %vm3989, %v7988, %v7997
        %v8000 = vshrl.u32 %v7634, 16
        %v8002 = vrot.slane %v8000, 2
        %v8003 = vshll.u32 %v7634, 16
        %v8005 = vrot.slane %v8003, 3
        %v8006 = vor.u32 %v8002, %v8005
        %v8007 = vsel %vm3989, %v7997, %v8006
        %v8009 = vshrl.u32 %v7635, 16
        %v8011 = vrot.slane %v8009, 2
        %v8012 = vshll.u32 %v7635, 16
        %v8014 = vrot.slane %v8012, 3
        %v8015 = vor.u32 %v8011, %v8014
        %v8016 = vsel %vm3989, %v8006, %v8015
        %v8018 = vshrl.u32 %v7636, 16
        %v8020 = vrot.slane %v8018, 2
        %v8021 = vshll.u32 %v7636, 16
        %v8023 = vrot.slane %v8021, 3
        %v8024 = vor.u32 %v8020, %v8023
        %v8025 = vsel %vm3989, %v8015, %v8024
        %v8027 = vshrl.u32 %v7637, 16
        %v8029 = vrot.slane %v8027, 2
        %v8030 = vshll.u32 %v7637, 16
        %v8032 = vrot.slane %v8030, 3
        %v8033 = vor.u32 %v8029, %v8032
        %v8034 = vsel %vm3989, %v8024, %v8033
        %v8036 = vshrl.u32 %v7638, 16
        %v8038 = vrot.slane %v8036, 2
        %v8039 = vshll.u32 %v7638, 16
        %v8041 = vrot.slane %v8039, 3
        %v8042 = vor.u32 %v8038, %v8041
        %v8043 = vsel %vm3989, %v8033, %v8042
        %v8045 = vshrl.u32 %v7639, 16
        %v8047 = vrot.slane %v8045, 2
        %v8048 = vshll.u32 %v7639, 16
        %v8050 = vrot.slane %v8048, 3
        %v8051 = vor.u32 %v8047, %v8050
        %v8052 = vsel %vm3989, %v8042, %v8051
        %v8054 = vshrl.u32 %v7640, 16
        %v8056 = vrot.slane %v8054, 2
        %v8057 = vshll.u32 %v7640, 16
        %v8059 = vrot.slane %v8057, 3
        %v8060 = vor.u32 %v8056, %v8059
        %v8061 = vsel %vm3989, %v8051, %v8060
        %v8063 = vshrl.u32 %v7900, 16
        %v8065 = vrot.slane %v8063, 2
        %v8066 = vshll.u32 %v7900, 16
        %v8068 = vrot.slane %v8066, 3
        %v8069 = vor.u32 %v8065, %v8068
        %v8070 = vsel %vm3989, %v8060, %v8069
        %v8105 = vunpack.c.l.b16 %v7882
        %v8106 = vunpack.c.l.b16 %v7883
        %v8107 = vunpack.c.l.b16 %v7884
        %v8108 = vunpack.c.l.b16 %v7885
        %v8109 = vunpack.c.l.b16 %v7886
        %v8110 = vunpack.c.l.b16 %v7887
        %v8111 = vunpack.c.l.b16 %v7888
        %v8112 = vunpack.c.l.b16 %v7889
        %v8113 = vunpack.c.l.b16 %v7890
        %v8114 = vunpack.c.l.b16 %v7891
        %v8115 = vunpack.c.l.b16 %v7892
        %v8116 = vunpack.c.l.b16 %v7893
        %v8117 = vunpack.c.l.b16 %v7894
        %v8118 = vunpack.c.l.b16 %v7895
        %v8119 = vunpack.c.l.b16 %v7896
        %v8120 = vunpack.c.l.b16 %v7897
        %v8121 = vpack.c.b16 %v8106, %v8105
        %v8122 = vpack.c.b16 %v8108, %v8107
        %v8123 = vpack.c.b16 %v8110, %v8109
        %v8124 = vpack.c.b16 %v8112, %v8111
        %v8125 = vpack.c.b16 %v8114, %v8113
        %v8126 = vpack.c.b16 %v8116, %v8115
        %v8127 = vpack.c.b16 %v8118, %v8117
        %v8128 = vpack.c.b16 %v8120, %v8119
        %8137 = vmatpush.bf16.msra.mxu0 %v8128
        %8138 = vmatpush.bf16.msra.mxu0 %v8127
        %8139 = vmatpush.bf16.msra.mxu0 %v8126
        %8140 = vmatpush.bf16.msra.mxu0 %v8125
        %8141 = vmatpush.bf16.msra.mxu0 %v8124
        %8142 = vmatpush.bf16.msra.mxu0 %v8123
        %8143 = vmatpush.bf16.msra.mxu0 %v8122
        %8144 = vmatpush.bf16.msra.mxu0 %v8121
        %8145 = vmatmul.bf16.gmra.mxu0 %v7917
        %v8146 = vpop.f32.mrf.mxu0
        %v8147 = vadd.f32 0.0, %v8146
        %v8148 = vpop.f32.mrf.mxu0
        %v8149 = vadd.f32 0.0, %v8148
        %8150 = vmatmul.bf16.gmra.mxu0 %v7926
        %v8151 = vpop.f32.mrf.mxu0
        %v8152 = vadd.f32 0.0, %v8151
        %v8153 = vpop.f32.mrf.mxu0
        %v8154 = vadd.f32 0.0, %v8153
        %8155 = vmatmul.bf16.gmra.mxu0 %v7935
        %v8156 = vpop.f32.mrf.mxu0
        %v8157 = vadd.f32 0.0, %v8156
        %v8158 = vpop.f32.mrf.mxu0
        %v8159 = vadd.f32 0.0, %v8158
        %8160 = vmatmul.bf16.gmra.mxu0 %v7944
        %v8161 = vpop.f32.mrf.mxu0
        %v8162 = vadd.f32 0.0, %v8161
        %v8163 = vpop.f32.mrf.mxu0
        %v8164 = vadd.f32 0.0, %v8163
        %8165 = vmatmul.bf16.gmra.mxu0 %v7953
        %v8166 = vpop.f32.mrf.mxu0
        %v8167 = vadd.f32 0.0, %v8166
        %v8168 = vpop.f32.mrf.mxu0
        %v8169 = vadd.f32 0.0, %v8168
        %8170 = vmatmul.bf16.gmra.mxu0 %v7962
        %v8171 = vpop.f32.mrf.mxu0
        %v8172 = vadd.f32 0.0, %v8171
        %v8173 = vpop.f32.mrf.mxu0
        %v8174 = vadd.f32 0.0, %v8173
        %8175 = vmatmul.bf16.gmra.mxu0 %v7971
        %v8176 = vpop.f32.mrf.mxu0
        %v8177 = vadd.f32 0.0, %v8176
        %v8178 = vpop.f32.mrf.mxu0
        %v8179 = vadd.f32 0.0, %v8178
        %8180 = vmatmul.bf16.gmra.mxu0 %v7980
        %v8181 = vpop.f32.mrf.mxu0
        %v8182 = vadd.f32 0.0, %v8181
        %v8183 = vpop.f32.mrf.mxu0
        %v8184 = vadd.f32 0.0, %v8183
        %8185 = vmatmul.bf16.gmra.mxu0 %v7989
        %v8186 = vpop.f32.mrf.mxu0
        %v8187 = vadd.f32 0.0, %v8186
        %v8188 = vpop.f32.mrf.mxu0
        %v8189 = vadd.f32 0.0, %v8188
        %8190 = vmatmul.bf16.gmra.mxu0 %v7998
        %v8191 = vpop.f32.mrf.mxu0
        %v8192 = vadd.f32 0.0, %v8191
        %v8193 = vpop.f32.mrf.mxu0
        %v8194 = vadd.f32 0.0, %v8193
        %8195 = vmatmul.bf16.gmra.mxu0 %v8007
        %v8196 = vpop.f32.mrf.mxu0
        %v8197 = vadd.f32 0.0, %v8196
        %v8198 = vpop.f32.mrf.mxu0
        %v8199 = vadd.f32 0.0, %v8198
        %8200 = vmatmul.bf16.gmra.mxu0 %v8016
        %v8201 = vpop.f32.mrf.mxu0
        %v8202 = vadd.f32 0.0, %v8201
        %v8203 = vpop.f32.mrf.mxu0
        %v8204 = vadd.f32 0.0, %v8203
        %8205 = vmatmul.bf16.gmra.mxu0 %v8025
        %v8206 = vpop.f32.mrf.mxu0
        %v8207 = vadd.f32 0.0, %v8206
        %v8208 = vpop.f32.mrf.mxu0
        %v8209 = vadd.f32 0.0, %v8208
        %8210 = vmatmul.bf16.gmra.mxu0 %v8034
        %v8211 = vpop.f32.mrf.mxu0
        %v8212 = vadd.f32 0.0, %v8211
        %v8213 = vpop.f32.mrf.mxu0
        %v8214 = vadd.f32 0.0, %v8213
        %8215 = vmatmul.bf16.gmra.mxu0 %v8043
        %v8216 = vpop.f32.mrf.mxu0
        %v8217 = vadd.f32 0.0, %v8216
        %v8218 = vpop.f32.mrf.mxu0
        %v8219 = vadd.f32 0.0, %v8218
        %8220 = vmatmul.bf16.gmra.mxu0 %v8052
        %v8221 = vpop.f32.mrf.mxu0
        %v8222 = vadd.f32 0.0, %v8221
        %v8223 = vpop.f32.mrf.mxu0
        %v8224 = vadd.f32 0.0, %v8223
        %8225 = vmatmul.bf16.gmra.mxu0 %v8061
        %v8226 = vpop.f32.mrf.mxu0
        %v8227 = vadd.f32 0.0, %v8226
        %v8228 = vpop.f32.mrf.mxu0
        %v8229 = vadd.f32 0.0, %v8228
        %8230 = vmatmul.bf16.gmra.mxu0 %v8070
        %v8231 = vpop.f32.mrf.mxu0
        %v8232 = vadd.f32 0.0, %v8231
        %v8233 = vpop.f32.mrf.mxu0
        %v8234 = vadd.f32 0.0, %v8233
        %8235 = vdwg.mxu0
        %v8236 = vadd.f32 %v7844, %v8147
        %v8237 = vadd.f32 %v7845, %v8149
        %v8238 = vadd.f32 %v7846, %v8152
        %v8239 = vadd.f32 %v7847, %v8154
        %v8240 = vadd.f32 %v7848, %v8157
        %v8241 = vadd.f32 %v7849, %v8159
        %v8242 = vadd.f32 %v7850, %v8162
        %v8243 = vadd.f32 %v7851, %v8164
        %v8244 = vadd.f32 %v7852, %v8167
        %v8245 = vadd.f32 %v7853, %v8169
        %v8246 = vadd.f32 %v7854, %v8172
        %v8247 = vadd.f32 %v7855, %v8174
        %v8248 = vadd.f32 %v7856, %v8177
        %v8249 = vadd.f32 %v7857, %v8179
        %v8250 = vadd.f32 %v7858, %v8182
        %v8251 = vadd.f32 %v7859, %v8184
        %v8252 = vadd.f32 %v7860, %v8187
        %v8253 = vadd.f32 %v7861, %v8189
        %v8254 = vadd.f32 %v7862, %v8192
        %v8255 = vadd.f32 %v7863, %v8194
        %v8256 = vadd.f32 %v7864, %v8197
        %v8257 = vadd.f32 %v7865, %v8199
        %v8258 = vadd.f32 %v7866, %v8202
        %v8259 = vadd.f32 %v7867, %v8204
        %v8260 = vadd.f32 %v7868, %v8207
        %v8261 = vadd.f32 %v7869, %v8209
        %v8262 = vadd.f32 %v7870, %v8212
        %v8263 = vadd.f32 %v7871, %v8214
        %v8264 = vadd.f32 %v7872, %v8217
        %v8265 = vadd.f32 %v7873, %v8219
        %v8266 = vadd.f32 %v7874, %v8222
        %v8267 = vadd.f32 %v7875, %v8224
        %v8268 = vadd.f32 %v7876, %v8227
        %v8269 = vadd.f32 %v7877, %v8229
        %v8270 = vadd.f32 %v7878, %v8232
        %v8271 = vadd.f32 %v7879, %v8234
        %v8272 = vld [vmem:[#allocation2 + $0x10] sm:$0x8]
        %s8273 = scalar_lea.vmem %s3, 512
        %v8274 = vld [vmem:[%s8273] sm:$0xf]
        %v8275 = vld [vmem:[%s8273 + $0x4] sm:$0xf]
        %v8276 = vld [vmem:[%s8273 + $0x8] sm:$0xf]
        %v8277 = vld [vmem:[%s8273 + $0xc] sm:$0xf]
        %v8278 = vld [vmem:[%s8273 + $0x10] sm:$0xf]
        %v8279 = vld [vmem:[%s8273 + $0x14] sm:$0xf]
        %v8280 = vld [vmem:[%s8273 + $0x18] sm:$0xf]
        %v8281 = vld [vmem:[%s8273 + $0x1c] sm:$0xf]
        %v8282 = vld [vmem:[%s8273 + $0x20] sm:$0xf]
        %v8283 = vld [vmem:[%s8273 + $0x24] sm:$0xf]
        %v8284 = vld [vmem:[%s8273 + $0x28] sm:$0xf]
        %v8285 = vld [vmem:[%s8273 + $0x2c] sm:$0xf]
        %v8286 = vld [vmem:[%s8273 + $0x30] sm:$0xf]
        %v8287 = vld [vmem:[%s8273 + $0x34] sm:$0xf]
        %v8288 = vld [vmem:[%s8273 + $0x38] sm:$0xf]
        %v8289 = vld [vmem:[%s8273 + $0x3c] sm:$0xf]
        %v8291 = vunpack.c.l.b16 %v8272
        %v8292 = vpack.c.b16 %v7587, %v8291
        %v8293 = vrot.slane %v8292, 3
        %v8294 = vrot.slane %v7624, 3
        %v8295 = vsel %vm4382, %v8293, %v8294
        %v8296 = vrot.slane %v7625, 3
        %v8297 = vsel %vm4382, %v8294, %v8296
        %v8298 = vrot.slane %v7626, 3
        %v8299 = vsel %vm4382, %v8296, %v8298
        %v8300 = vrot.slane %v7627, 3
        %v8301 = vsel %vm4382, %v8298, %v8300
        %v8302 = vrot.slane %v7628, 3
        %v8303 = vsel %vm4382, %v8300, %v8302
        %v8304 = vrot.slane %v7629, 3
        %v8305 = vsel %vm4382, %v8302, %v8304
        %v8306 = vrot.slane %v7630, 3
        %v8307 = vsel %vm4382, %v8304, %v8306
        %v8308 = vrot.slane %v7631, 3
        %v8309 = vsel %vm4382, %v8306, %v8308
        %v8310 = vrot.slane %v7632, 3
        %v8311 = vsel %vm4382, %v8308, %v8310
        %v8312 = vrot.slane %v7633, 3
        %v8313 = vsel %vm4382, %v8310, %v8312
        %v8314 = vrot.slane %v7634, 3
        %v8315 = vsel %vm4382, %v8312, %v8314
        %v8316 = vrot.slane %v7635, 3
        %v8317 = vsel %vm4382, %v8314, %v8316
        %v8318 = vrot.slane %v7636, 3
        %v8319 = vsel %vm4382, %v8316, %v8318
        %v8320 = vrot.slane %v7637, 3
        %v8321 = vsel %vm4382, %v8318, %v8320
        %v8322 = vrot.slane %v7638, 3
        %v8323 = vsel %vm4382, %v8320, %v8322
        %v8324 = vrot.slane %v7639, 3
        %v8325 = vsel %vm4382, %v8322, %v8324
        %v8326 = vrot.slane %v7640, 3
        %v8327 = vsel %vm4382, %v8324, %v8326
        %v8328 = vrot.slane %v7900, 3
        %v8329 = vsel %vm4382, %v8326, %v8328
        %v8364 = vunpack.c.l.b16 %v8274
        %v8365 = vunpack.c.l.b16 %v8275
        %v8366 = vunpack.c.l.b16 %v8276
        %v8367 = vunpack.c.l.b16 %v8277
        %v8368 = vunpack.c.l.b16 %v8278
        %v8369 = vunpack.c.l.b16 %v8279
        %v8370 = vunpack.c.l.b16 %v8280
        %v8371 = vunpack.c.l.b16 %v8281
        %v8372 = vunpack.c.l.b16 %v8282
        %v8373 = vunpack.c.l.b16 %v8283
        %v8374 = vunpack.c.l.b16 %v8284
        %v8375 = vunpack.c.l.b16 %v8285
        %v8376 = vunpack.c.l.b16 %v8286
        %v8377 = vunpack.c.l.b16 %v8287
        %v8378 = vunpack.c.l.b16 %v8288
        %v8379 = vunpack.c.l.b16 %v8289
        %v8380 = vpack.c.b16 %v8365, %v8364
        %v8381 = vpack.c.b16 %v8367, %v8366
        %v8382 = vpack.c.b16 %v8369, %v8368
        %v8383 = vpack.c.b16 %v8371, %v8370
        %v8384 = vpack.c.b16 %v8373, %v8372
        %v8385 = vpack.c.b16 %v8375, %v8374
        %v8386 = vpack.c.b16 %v8377, %v8376
        %v8387 = vpack.c.b16 %v8379, %v8378
        %8396 = vmatpush.bf16.msra.mxu0 %v8387
        %8397 = vmatpush.bf16.msra.mxu0 %v8386
        %8398 = vmatpush.bf16.msra.mxu0 %v8385
        %8399 = vmatpush.bf16.msra.mxu0 %v8384
        %8400 = vmatpush.bf16.msra.mxu0 %v8383
        %8401 = vmatpush.bf16.msra.mxu0 %v8382
        %8402 = vmatpush.bf16.msra.mxu0 %v8381
        %8403 = vmatpush.bf16.msra.mxu0 %v8380
        %8404 = vmatmul.bf16.gmra.mxu0 %v8295
        %v8405 = vpop.f32.mrf.mxu0
        %v8406 = vadd.f32 0.0, %v8405
        %v8407 = vpop.f32.mrf.mxu0
        %v8408 = vadd.f32 0.0, %v8407
        %8409 = vmatmul.bf16.gmra.mxu0 %v8297
        %v8410 = vpop.f32.mrf.mxu0
        %v8411 = vadd.f32 0.0, %v8410
        %v8412 = vpop.f32.mrf.mxu0
        %v8413 = vadd.f32 0.0, %v8412
        %8414 = vmatmul.bf16.gmra.mxu0 %v8299
        %v8415 = vpop.f32.mrf.mxu0
        %v8416 = vadd.f32 0.0, %v8415
        %v8417 = vpop.f32.mrf.mxu0
        %v8418 = vadd.f32 0.0, %v8417
        %8419 = vmatmul.bf16.gmra.mxu0 %v8301
        %v8420 = vpop.f32.mrf.mxu0
        %v8421 = vadd.f32 0.0, %v8420
        %v8422 = vpop.f32.mrf.mxu0
        %v8423 = vadd.f32 0.0, %v8422
        %8424 = vmatmul.bf16.gmra.mxu0 %v8303
        %v8425 = vpop.f32.mrf.mxu0
        %v8426 = vadd.f32 0.0, %v8425
        %v8427 = vpop.f32.mrf.mxu0
        %v8428 = vadd.f32 0.0, %v8427
        %8429 = vmatmul.bf16.gmra.mxu0 %v8305
        %v8430 = vpop.f32.mrf.mxu0
        %v8431 = vadd.f32 0.0, %v8430
        %v8432 = vpop.f32.mrf.mxu0
        %v8433 = vadd.f32 0.0, %v8432
        %8434 = vmatmul.bf16.gmra.mxu0 %v8307
        %v8435 = vpop.f32.mrf.mxu0
        %v8436 = vadd.f32 0.0, %v8435
        %v8437 = vpop.f32.mrf.mxu0
        %v8438 = vadd.f32 0.0, %v8437
        %8439 = vmatmul.bf16.gmra.mxu0 %v8309
        %v8440 = vpop.f32.mrf.mxu0
        %v8441 = vadd.f32 0.0, %v8440
        %v8442 = vpop.f32.mrf.mxu0
        %v8443 = vadd.f32 0.0, %v8442
        %8444 = vmatmul.bf16.gmra.mxu0 %v8311
        %v8445 = vpop.f32.mrf.mxu0
        %v8446 = vadd.f32 0.0, %v8445
        %v8447 = vpop.f32.mrf.mxu0
        %v8448 = vadd.f32 0.0, %v8447
        %8449 = vmatmul.bf16.gmra.mxu0 %v8313
        %v8450 = vpop.f32.mrf.mxu0
        %v8451 = vadd.f32 0.0, %v8450
        %v8452 = vpop.f32.mrf.mxu0
        %v8453 = vadd.f32 0.0, %v8452
        %8454 = vmatmul.bf16.gmra.mxu0 %v8315
        %v8455 = vpop.f32.mrf.mxu0
        %v8456 = vadd.f32 0.0, %v8455
        %v8457 = vpop.f32.mrf.mxu0
        %v8458 = vadd.f32 0.0, %v8457
        %8459 = vmatmul.bf16.gmra.mxu0 %v8317
        %v8460 = vpop.f32.mrf.mxu0
        %v8461 = vadd.f32 0.0, %v8460
        %v8462 = vpop.f32.mrf.mxu0
        %v8463 = vadd.f32 0.0, %v8462
        %8464 = vmatmul.bf16.gmra.mxu0 %v8319
        %v8465 = vpop.f32.mrf.mxu0
        %v8466 = vadd.f32 0.0, %v8465
        %v8467 = vpop.f32.mrf.mxu0
        %v8468 = vadd.f32 0.0, %v8467
        %8469 = vmatmul.bf16.gmra.mxu0 %v8321
        %v8470 = vpop.f32.mrf.mxu0
        %v8471 = vadd.f32 0.0, %v8470
        %v8472 = vpop.f32.mrf.mxu0
        %v8473 = vadd.f32 0.0, %v8472
        %8474 = vmatmul.bf16.gmra.mxu0 %v8323
        %v8475 = vpop.f32.mrf.mxu0
        %v8476 = vadd.f32 0.0, %v8475
        %v8477 = vpop.f32.mrf.mxu0
        %v8478 = vadd.f32 0.0, %v8477
        %8479 = vmatmul.bf16.gmra.mxu0 %v8325
        %v8480 = vpop.f32.mrf.mxu0
        %v8481 = vadd.f32 0.0, %v8480
        %v8482 = vpop.f32.mrf.mxu0
        %v8483 = vadd.f32 0.0, %v8482
        %8484 = vmatmul.bf16.gmra.mxu0 %v8327
        %v8485 = vpop.f32.mrf.mxu0
        %v8486 = vadd.f32 0.0, %v8485
        %v8487 = vpop.f32.mrf.mxu0
        %v8488 = vadd.f32 0.0, %v8487
        %8489 = vmatmul.bf16.gmra.mxu0 %v8329
        %v8490 = vpop.f32.mrf.mxu0
        %v8491 = vadd.f32 0.0, %v8490
        %v8492 = vpop.f32.mrf.mxu0
        %v8493 = vadd.f32 0.0, %v8492
        %8494 = vdwg.mxu0
        %v8495 = vadd.f32 %v8236, %v8406
        %v8496 = vadd.f32 %v8237, %v8408
        %v8497 = vadd.f32 %v8238, %v8411
        %v8498 = vadd.f32 %v8239, %v8413
        %v8499 = vadd.f32 %v8240, %v8416
        %v8500 = vadd.f32 %v8241, %v8418
        %v8501 = vadd.f32 %v8242, %v8421
        %v8502 = vadd.f32 %v8243, %v8423
        %v8503 = vadd.f32 %v8244, %v8426
        %v8504 = vadd.f32 %v8245, %v8428
        %v8505 = vadd.f32 %v8246, %v8431
        %v8506 = vadd.f32 %v8247, %v8433
        %v8507 = vadd.f32 %v8248, %v8436
        %v8508 = vadd.f32 %v8249, %v8438
        %v8509 = vadd.f32 %v8250, %v8441
        %v8510 = vadd.f32 %v8251, %v8443
        %v8511 = vadd.f32 %v8252, %v8446
        %v8512 = vadd.f32 %v8253, %v8448
        %v8513 = vadd.f32 %v8254, %v8451
        %v8514 = vadd.f32 %v8255, %v8453
        %v8515 = vadd.f32 %v8256, %v8456
        %v8516 = vadd.f32 %v8257, %v8458
        %v8517 = vadd.f32 %v8258, %v8461
        %v8518 = vadd.f32 %v8259, %v8463
        %v8519 = vadd.f32 %v8260, %v8466
        %v8520 = vadd.f32 %v8261, %v8468
        %v8521 = vadd.f32 %v8262, %v8471
        %v8522 = vadd.f32 %v8263, %v8473
        %v8523 = vadd.f32 %v8264, %v8476
        %v8524 = vadd.f32 %v8265, %v8478
        %v8525 = vadd.f32 %v8266, %v8481
        %v8526 = vadd.f32 %v8267, %v8483
        %v8527 = vadd.f32 %v8268, %v8486
        %v8528 = vadd.f32 %v8269, %v8488
        %v8529 = vadd.f32 %v8270, %v8491
        %v8530 = vadd.f32 %v8271, %v8493
        %v8531 = vmax.f32 %v8495, 0.0
        %v8532 = vmax.f32 %v8496, 0.0
        %v8533 = vmax.f32 %v8497, 0.0
        %v8534 = vmax.f32 %v8498, 0.0
        %v8535 = vmax.f32 %v8499, 0.0
        %v8536 = vmax.f32 %v8500, 0.0
        %v8537 = vmax.f32 %v8501, 0.0
        %v8538 = vmax.f32 %v8502, 0.0
        %v8539 = vmax.f32 %v8503, 0.0
        %v8540 = vmax.f32 %v8504, 0.0
        %v8541 = vmax.f32 %v8505, 0.0
        %v8542 = vmax.f32 %v8506, 0.0
        %v8543 = vmax.f32 %v8507, 0.0
        %v8544 = vmax.f32 %v8508, 0.0
        %v8545 = vmax.f32 %v8509, 0.0
        %v8546 = vmax.f32 %v8510, 0.0
        %v8547 = vmax.f32 %v8511, 0.0
        %v8548 = vmax.f32 %v8512, 0.0
        %v8549 = vmax.f32 %v8513, 0.0
        %v8550 = vmax.f32 %v8514, 0.0
        %v8551 = vmax.f32 %v8515, 0.0
        %v8552 = vmax.f32 %v8516, 0.0
        %v8553 = vmax.f32 %v8517, 0.0
        %v8554 = vmax.f32 %v8518, 0.0
        %v8555 = vmax.f32 %v8519, 0.0
        %v8556 = vmax.f32 %v8520, 0.0
        %v8557 = vmax.f32 %v8521, 0.0
        %v8558 = vmax.f32 %v8522, 0.0
        %v8559 = vmax.f32 %v8523, 0.0
        %v8560 = vmax.f32 %v8524, 0.0
        %v8561 = vmax.f32 %v8525, 0.0
        %v8562 = vmax.f32 %v8526, 0.0
        %v8563 = vmax.f32 %v8527, 0.0
        %v8564 = vmax.f32 %v8528, 0.0
        %v8565 = vmax.f32 %v8529, 0.0
        %v8566 = vmax.f32 %v8530, 0.0
        %8567 = vst [vmem:[%s217] sm:$0xff] %v8531
        %8568 = vst [vmem:[%s217 + $0x8] sm:$0xff] %v8532
        %8569 = vst [vmem:[%s217 + $0x10] sm:$0xff] %v8533
        %8570 = vst [vmem:[%s217 + $0x18] sm:$0xff] %v8534
        %8571 = vst [vmem:[%s217 + $0x20] sm:$0xff] %v8535
        %8572 = vst [vmem:[%s217 + $0x28] sm:$0xff] %v8536
        %8573 = vst [vmem:[%s217 + $0x30] sm:$0xff] %v8537
        %8574 = vst [vmem:[%s217 + $0x38] sm:$0xff] %v8538
        %8575 = vst [vmem:[%s217 + $0x40] sm:$0xff] %v8539
        %8576 = vst [vmem:[%s217 + $0x48] sm:$0xff] %v8540
        %8577 = vst [vmem:[%s217 + $0x50] sm:$0xff] %v8541
        %8578 = vst [vmem:[%s217 + $0x58] sm:$0xff] %v8542
        %8579 = vst [vmem:[%s217 + $0x60] sm:$0xff] %v8543
        %8580 = vst [vmem:[%s217 + $0x68] sm:$0xff] %v8544
        %8581 = vst [vmem:[%s217 + $0x70] sm:$0xff] %v8545
        %8582 = vst [vmem:[%s217 + $0x78] sm:$0xff] %v8546
        %8583 = vst [vmem:[%s217 + $0x80] sm:$0xff] %v8547
        %8584 = vst [vmem:[%s217 + $0x88] sm:$0xff] %v8548
        %8585 = vst [vmem:[%s217 + $0x90] sm:$0xff] %v8549
        %8586 = vst [vmem:[%s217 + $0x98] sm:$0xff] %v8550
        %8587 = vst [vmem:[%s217 + $0xa0] sm:$0xff] %v8551
        %8588 = vst [vmem:[%s217 + $0xa8] sm:$0xff] %v8552
        %8589 = vst [vmem:[%s217 + $0xb0] sm:$0xff] %v8553
        %8590 = vst [vmem:[%s217 + $0xb8] sm:$0xff] %v8554
        %8591 = vst [vmem:[%s217 + $0xc0] sm:$0xff] %v8555
        %8592 = vst [vmem:[%s217 + $0xc8] sm:$0xff] %v8556
        %8593 = vst [vmem:[%s217 + $0xd0] sm:$0xff] %v8557
        %8594 = vst [vmem:[%s217 + $0xd8] sm:$0xff] %v8558
        %8595 = vst [vmem:[%s217 + $0xe0] sm:$0xff] %v8559
        %8596 = vst [vmem:[%s217 + $0xe8] sm:$0xff] %v8560
        %8597 = vst [vmem:[%s217 + $0xf0] sm:$0xff] %v8561
        %8598 = vst [vmem:[%s217 + $0xf8] sm:$0xff] %v8562
        %8599 = vst [vmem:[%s217 + $0x100] sm:$0xff] %v8563
        %8600 = vst [vmem:[%s217 + $0x108] sm:$0xff] %v8564
        %8601 = vst [vmem:[%s217 + $0x110] sm:$0xff] %v8565
        %8602 = vst [vmem:[%s217 + $0x118] sm:$0xff] %v8566
        %s8603 = sand.u32 %s137, 1
        %s8604 = scalar_lea.sflag [#allocation4], %s8603
        %s8605 = sand.u32 %s137, 1
        %s8606 = smul.addr %s8605, 288
        %s8607 = scalar_lea.vmem [#allocation3], %s8606
        // Predicated region
        $region41: #{tpu_custom_call.1} parent=39 // pred_check
          %p8608 = pneg %p147
        $region42: #{tpu_custom_call.1} parent=39 // pred_check_branch
          %8610 = sbr.rel (%p8608) target = $region44
        $region43: #{tpu_custom_call.1} parent=39 // pred_region
          %8612 = vsyncadd %s8604, 0
          %s8613 = smul.addr %s19, 36
          %s8614 = smul.addr %s8613, 8
          %s8615 = scalar_lea.hbm %s5, %s8614
          %s8616 = sshll.u32 %s8607, 4
          %s8617 = int_to_ptr.vmem [resolvable:$true] %s8616
          %s8618 = sshll.u32 %s8615, 4
          %s8619 = int_to_ptr.hbm [resolvable:$true] %s8618
          %8624 = dma.vmem_to_hbm [thread:$0]  %s8617, 4608, %s8619, %s8604, 128, 128, 8
        $region44: #{tpu_custom_call.1} parent=39 // pred_fallthru
          _
      $region40: #{tpu_custom_call.1} parent=5 // pred_fallthru
        _
      %p8625 = scmp.le.s32.totalorder 2, %s14
      // Predicated region
      $region45: #{tpu_custom_call.1} parent=5 // pred_check
        %p8626 = pneg %p8625
      $region46: #{tpu_custom_call.1} parent=5 // pred_check_branch
        %8628 = sbr.rel (%p8626) target = $region48
      $region47: #{tpu_custom_call.1} parent=5 // pred_region
        %s8629 = ssub.s32 %s14, 2
        // Predicated region
        $region49: #{tpu_custom_call.1} parent=47 // pred_check
          %p8630 = pneg %p153
        $region50: #{tpu_custom_call.1} parent=47 // pred_check_branch
          %8632 = sbr.rel (%p8630) target = $region52
        $region51: #{tpu_custom_call.1} parent=47 // pred_region
          %s8633 = sand.u32 %s138, 1
          %s8634 = scalar_lea.sflag [#allocation4], %s8633
          %s8635 = sand.u32 %s138, 1
          %s8636 = smul.addr %s8635, 288
          %s8637 = scalar_lea.vmem [#allocation3], %s8636
          %8639 = dma.done %s8634, 4608
        $region52: #{tpu_custom_call.1} parent=47 // pred_fallthru
          _
      $region48: #{tpu_custom_call.1} parent=5 // pred_fallthru
        _
    $region6: #{tpu_custom_call.1} parent=1 // loop_footer
      %s18 = sadd.s32 1, %s14
    $region7: #{tpu_custom_call.1} parent=1 // loop_footer_branch
      %13 = sbr.rel target = $region3
    $region8: #{tpu_custom_call.1} parent=1 // loop_exit
      _
    %8640 = vsyncpa [#allocation4], 1
    %s8641 = scalar_lea.sflag [#allocation4], 1
    %8642 = vsyncpa %s8641, 1

</llo_original>
